<compile_context>
chip_gen: v5e
topology: v5e:2x2
jax: 0.10.0
libtpu: 0.0.40
codegen_flags: <defaults>
</compile_context>

<pallas_src>
import jax
import jax.numpy as jnp
from jax.experimental import pallas as pl
from jax.experimental.pallas import tpu as pltpu

# ---- scaled-down ELMo hyperparameters (real 2x4096_512_2048cnn_2xhighway sizes in comments) ----
CHAR_VOCAB = 262                        # ELMoCharacterMapper vocab size (same as real model)
MAX_CHARS = 50                          # max characters per token (same as real model)
CHAR_EMB = 16                           # char embedding dim (real: 16)
FILTERS = [(1, 64), (2, 64), (3, 128)]  # real: [[1,32],[2,32],...,[7,1024]] -> 2048 filters
N_FILTERS = sum(nf for _, nf in FILTERS)    # 256   (real: 2048)
MAX_W = max(w for w, _ in FILTERS)          # widest conv filter (3)
N_HIGHWAY = 2                           # real: 2
PROJ = 128                              # LSTM projection dim / half of output (real: 512)
CELL = 256                              # LSTM cell dim (real: 4096); multiple of 128 -> aligned gates
N_LAYERS = 2                            # real: 2
OUT_DIM = 2 * PROJ                      # real: 1024

TOK_TILE = 128                          # tokens per grid step for the fused token kernel
ROW_TILE = 256                          # rows per grid step for the LSTM input-projection matmul


def _round_up(n, m):
    return ((n + m - 1) // m) * m


# ----------------------------------------------------------------------------------
# Kernel 1 (fused): char-CNN filter bank (single fused MXU pass) -> max-pool ->
#                   tanh(+bias) hoisted after the pool -> 2x highway -> projection
# ----------------------------------------------------------------------------------
def _token_encoder_kernel(emb_ref, wc_ref, bc_ref, hww_ref, hwb_ref, pw_ref, pb_ref,
                          out_ref):
    emb = emb_ref[...]                       # (tile, MAX_CHARS + MAX_W - 1, CHAR_EMB) bf16
    tile = emb.shape[0]

    # One shared width-MAX_W im2col patch for ALL filter widths.  The fused conv weight
    # has zero rows for the narrower filters, so every column of the single matmul is a
    # valid convolution at that position.
    patch = jnp.concatenate(
        [emb[:, off:off + MAX_CHARS, :] for off in range(MAX_W)], axis=-1)
    x2d = patch.reshape(tile * MAX_CHARS, MAX_W * CHAR_EMB)
    y = jnp.dot(x2d, wc_ref[...], preferred_element_type=jnp.float32)
    y3 = y.reshape(tile, MAX_CHARS, N_FILTERS)

    # max-pool: positions 0..MAX_CHARS-MAX_W are valid for every filter width; the
    # narrower filters pick up their 1-2 extra tail positions in a tiny static epilogue.
    n_shared = MAX_CHARS - MAX_W + 1
    pooled_shared = jnp.max(y3[:, :n_shared, :], axis=1)       # (tile, N_FILTERS)
    parts, col = [], 0
    for w, nf in FILTERS:
        g = pooled_shared[:, col:col + nf]
        n_valid = MAX_CHARS - w + 1
        if n_valid > n_shared:
            g = jnp.maximum(g, jnp.max(y3[:, n_shared:n_valid, col:col + nf], axis=1))
        parts.append(g)
        col += nf
    pooled = jnp.concatenate(parts, axis=-1)

    # tanh + bias hoisted AFTER the max-pool (exact: tanh monotone, per-channel bias)
    x = jnp.tanh(pooled + bc_ref[...])                          # (tile, N_FILTERS) f32

    # 2x highway layers (gate math in f32, matmuls in bf16)
    for l in range(N_HIGHWAY):
        pr = jnp.dot(x.astype(jnp.bfloat16), hww_ref[l],
                     preferred_element_type=jnp.float32) + hwb_ref[l]
        nonlin = jax.nn.relu(pr[:, :N_FILTERS])
        gate = jax.nn.sigmoid(pr[:, N_FILTERS:])
        x = gate * x + (1.0 - gate) * nonlin

    # linear projection N_FILTERS -> PROJ (lane-dense 128-wide output)
    out_ref[...] = (jnp.dot(x.astype(jnp.bfloat16), pw_ref[...],
                            preferred_element_type=jnp.float32) + pb_ref[...])


def token_encoder(emb, params):
    # emb: (ntok, MAX_CHARS + MAX_W - 1, CHAR_EMB) bf16, char positions already zero-padded
    ntok, n_chars_pad, _ = emb.shape
    tile = min(TOK_TILE, _round_up(ntok, 8))
    ntok_pad = _round_up(ntok, tile)
    if ntok_pad != ntok:
        emb = jnp.pad(emb, ((0, ntok_pad - ntok), (0, 0), (0, 0)))

    out = pl.pallas_call(
        _token_encoder_kernel,
        out_shape=jax.ShapeDtypeStruct((ntok_pad, PROJ), jnp.float32),
        grid=(ntok_pad // tile,),
        in_specs=[
            pl.BlockSpec((tile, n_chars_pad, CHAR_EMB), lambda i: (i, 0, 0)),
            pl.BlockSpec((MAX_W * CHAR_EMB, N_FILTERS), lambda i: (0, 0)),
            pl.BlockSpec((1, N_FILTERS), lambda i: (0, 0)),
            pl.BlockSpec((N_HIGHWAY, N_FILTERS, 2 * N_FILTERS), lambda i: (0, 0, 0)),
            pl.BlockSpec((N_HIGHWAY, 1, 2 * N_FILTERS), lambda i: (0, 0, 0)),
            pl.BlockSpec((N_FILTERS, PROJ), lambda i: (0, 0)),
            pl.BlockSpec((1, PROJ), lambda i: (0, 0)),
        ],
        out_specs=pl.BlockSpec((tile, PROJ), lambda i: (i, 0)),
        compiler_params=pltpu.CompilerParams(
            dimension_semantics=("parallel",),
            vmem_limit_bytes=40 * 1024 * 1024),
    )(emb, params["conv_w"], params["conv_b"], params["hw_w"], params["hw_b"],
      params["proj_w"], params["proj_b"])
    return out[:ntok]


# ----------------------------------------------------------------------------------
# Kernel 2: LSTM input projection xg = x @ wx + b, hoisted out of the time loop.
#           Grid = (direction, row tiles); one big MXU matmul per tile.
# ----------------------------------------------------------------------------------
def _input_proj_kernel(x_ref, w_ref, b_ref, out_ref):
    out_ref[0] = (jnp.dot(x_ref[0].astype(jnp.bfloat16), w_ref[0],
                          preferred_element_type=jnp.float32) + b_ref[0])


def lstm_input_proj(x_dir, wx, b):
    # x_dir: (2, rows, PROJ) f32 ; wx: (2, PROJ, 4*CELL) bf16 ; b: (2, 1, 4*CELL) f32
    _, rows, _ = x_dir.shape
    tile = min(ROW_TILE, _round_up(rows, 8))
    rows_pad = _round_up(rows, tile)
    if rows_pad != rows:
        x_dir = jnp.pad(x_dir, ((0, 0), (0, rows_pad - rows), (0, 0)))

    out = pl.pallas_call(
        _input_proj_kernel,
        out_shape=jax.ShapeDtypeStruct((2, rows_pad, 4 * CELL), jnp.float32),
        grid=(2, rows_pad // tile),
        in_specs=[
            pl.BlockSpec((1, tile, PROJ), lambda d, i: (d, i, 0)),
            pl.BlockSpec((1, PROJ, 4 * CELL), lambda d, i: (d, 0, 0)),
            pl.BlockSpec((1, 1, 4 * CELL), lambda d, i: (d, 0, 0)),
        ],
        out_specs=pl.BlockSpec((1, tile, 4 * CELL), lambda d, i: (d, i, 0)),
        compiler_params=pltpu.CompilerParams(
            dimension_semantics=("parallel", "parallel")),
    )(x_dir, wx, b)
    return out[:, :rows]


# ----------------------------------------------------------------------------------
# Kernel 3: bidirectional LSTM-with-projection layer.
#   grid = (direction, time).  xg is streamed one time-step block at a time (bounded
#   VMEM, DMA overlapped with the recurrence); h/c live in persistent scratch that is
#   re-initialized at t == 0.  The direction axis is "parallel" so on v7x the two
#   directions run on the two TensorCores; weights are per-direction (no block-diag
#   zero-MAC waste).  Only the recurrent matmuls live on the serial chain.
# ----------------------------------------------------------------------------------
def _bilstm_kernel(xg_ref, wh_ref, wp_ref, out_ref, h_scr, c_scr):
    @pl.when(pl.program_id(1) == 0)
    def _():
        h_scr[...] = jnp.zeros_like(h_scr)
        c_scr[...] = jnp.zeros_like(c_scr)

    h = h_scr[...]                                              # (B, PROJ) f32
    c = c_scr[...]                                              # (B, CELL) f32
    gates = xg_ref[0, 0] + jnp.dot(h.astype(jnp.bfloat16), wh_ref[0],
                                   preferred_element_type=jnp.float32)
    i_g = jax.nn.sigmoid(gates[:, 0 * CELL:1 * CELL])
    f_g = jax.nn.sigmoid(gates[:, 1 * CELL:2 * CELL])
    g_g = jnp.tanh(gates[:, 2 * CELL:3 * CELL])
    o_g = jax.nn.sigmoid(gates[:, 3 * CELL:4 * CELL])
    c_new = f_g * c + i_g * g_g
    hm = o_g * jnp.tanh(c_new)
    h_new = jnp.dot(hm.astype(jnp.bfloat16), wp_ref[0],
                    preferred_element_type=jnp.float32)         # CELL -> PROJ
    c_scr[...] = c_new
    h_scr[...] = h_new
    out_ref[0, 0] = h_new


def bilstm_layer(xg, wh, wp):
    # xg: (2, T, B, 4*CELL) f32 ; wh: (2, PROJ, 4*CELL) bf16 ; wp: (2, CELL, PROJ) bf16
    _, t_steps, bsz, _ = xg.shape
    flops = 2 * 2 * t_steps * bsz * (PROJ * 4 * CELL + CELL * PROJ)
    return pl.pallas_call(
        _bilstm_kernel,
        out_shape=jax.ShapeDtypeStruct((2, t_steps, bsz, PROJ), jnp.float32),
        grid=(2, t_steps),
        in_specs=[
            pl.BlockSpec((1, 1, bsz, 4 * CELL), lambda d, t: (d, t, 0, 0)),
            pl.BlockSpec((1, PROJ, 4 * CELL), lambda d, t: (d, 0, 0)),
            pl.BlockSpec((1, CELL, PROJ), lambda d, t: (d, 0, 0)),
        ],
        out_specs=pl.BlockSpec((1, 1, bsz, PROJ), lambda d, t: (d, t, 0, 0)),
        scratch_shapes=[pltpu.VMEM((bsz, PROJ), jnp.float32),
                        pltpu.VMEM((bsz, CELL), jnp.float32)],
        cost_estimate=pl.CostEstimate(
            flops=flops,
            transcendentals=2 * t_steps * bsz * 5 * CELL,
            bytes_accessed=int(xg.size * 4 + wh.size * 2 + wp.size * 2
                               + 2 * t_steps * bsz * PROJ * 4)),
        compiler_params=pltpu.CompilerParams(
            dimension_semantics=("parallel", "arbitrary")),
    )(xg, wh, wp)


# ----------------------------------------------------------------------------------
# Parameter init (deterministic, synthetic) + forward wrapper (glue in plain JAX)
# ----------------------------------------------------------------------------------
def init_params(key):
    keys = iter(jax.random.split(key, 64))

    def nrm(shape, scale=0.1, dtype=jnp.float32):
        return (scale * jax.random.normal(next(keys), shape, jnp.float32)).astype(dtype)

    # fused conv weight: per-filter weights stacked along N, zero-padded along K so a
    # single width-MAX_W im2col patch serves every filter width with one matmul.
    wc_blocks, bc_blocks = [], []
    for w, nf in FILTERS:
        wk = nrm((w * CHAR_EMB, nf))
        wk = jnp.pad(wk, ((0, (MAX_W - w) * CHAR_EMB), (0, 0)))
        wc_blocks.append(wk)
        bc_blocks.append(nrm((1, nf), 0.01))

    params = {
        "char_emb": nrm((CHAR_VOCAB, CHAR_EMB), dtype=jnp.bfloat16),
        "conv_w": jnp.concatenate(wc_blocks, axis=1).astype(jnp.bfloat16),  # (MAX_W*CHAR_EMB, N_FILTERS)
        "conv_b": jnp.concatenate(bc_blocks, axis=1),                        # (1, N_FILTERS)
        "hw_w": nrm((N_HIGHWAY, N_FILTERS, 2 * N_FILTERS), dtype=jnp.bfloat16),
        "hw_b": nrm((N_HIGHWAY, 1, 2 * N_FILTERS), 0.01),
        "proj_w": nrm((N_FILTERS, PROJ), dtype=jnp.bfloat16),
        "proj_b": nrm((1, PROJ), 0.01),
        "lstm_wx": [],   # per layer: (2, PROJ, 4*CELL) bf16  (fwd/bwd stacked)
        "lstm_b": [],    # per layer: (2, 1, 4*CELL) f32
        "lstm_wh": [],   # per layer: (2, PROJ, 4*CELL) bf16  (per-direction recurrent)
        "lstm_wp": [],   # per layer: (2, CELL, PROJ) bf16    (per-direction projection)
        "mix_s": nrm((3,), 1.0),
        "gamma": jnp.array(1.0, jnp.float32),
    }
    for _ in range(N_LAYERS):
        params["lstm_wx"].append(
            jnp.stack([nrm((PROJ, 4 * CELL), dtype=jnp.bfloat16) for _ in range(2)]))
        params["lstm_b"].append(
            jnp.stack([nrm((1, 4 * CELL), 0.01) for _ in range(2)]))
        params["lstm_wh"].append(
            jnp.stack([nrm((PROJ, 4 * CELL), dtype=jnp.bfloat16) for _ in range(2)]))
        params["lstm_wp"].append(
            jnp.stack([nrm((CELL, PROJ), dtype=jnp.bfloat16) for _ in range(2)]))
    return params


def elmo_layer_forward(params, char_ids):
    bsz, seq, n_chars = char_ids.shape
    ntok = bsz * seq

    # char embedding lookup (glue gather; table in bf16 to halve DMA bytes), then pad
    # MAX_W - 1 zero char positions so the fused width-MAX_W im2col covers every width.
    emb = jnp.take(params["char_emb"], char_ids.reshape(ntok, n_chars), axis=0)
    emb = jnp.pad(emb, ((0, 0), (0, MAX_W - 1), (0, 0)))

    # fused char-CNN + 2x highway + projection (Pallas, token-tiled)
    token_proj = token_encoder(emb, params).reshape(bsz, seq, PROJ)   # (B, T, PROJ) f32

    # 2-layer biLM, time-major, direction-major layout (no HBM transposes between kernels)
    x_fwd = jnp.transpose(token_proj, (1, 0, 2))                  # (T, B, PROJ)
    x_bwd = x_fwd[::-1]                                           # reversed time for bwd dir
    layer_in = jnp.stack([x_fwd, x_bwd], axis=0)                  # (2, T, B, PROJ)

    lstm_outs = []
    for l in range(N_LAYERS):
        xr = layer_in.reshape(2, seq * bsz, PROJ)
        xg = lstm_input_proj(xr, params["lstm_wx"][l], params["lstm_b"][l])
        xg = xg.reshape(2, seq, bsz, 4 * CELL)                    # free (contiguous) reshape
        o_dir = bilstm_layer(xg, params["lstm_wh"][l], params["lstm_wp"][l])  # (2, T, B, PROJ)
        if l > 0:
            o_dir = o_dir + layer_in                              # residual between LSTM layers
        lstm_outs.append(o_dir)
        layer_in = o_dir

    # assemble biLM layer representations (B, T, 2*PROJ); scalar mix in plain JAX glue
    def dir_to_btd(o_dir):
        fwd = jnp.transpose(o_dir[0], (1, 0, 2))                  # (B, T, PROJ)
        bwd = jnp.transpose(o_dir[1][::-1], (1, 0, 2))            # un-reverse bwd time
        return jnp.concatenate([fwd, bwd], axis=-1)

    layer0 = jnp.concatenate([token_proj, token_proj], axis=-1)   # duplicated token layer
    layer1 = dir_to_btd(lstm_outs[0])
    layer2 = dir_to_btd(lstm_outs[1])

    mix_w = jax.nn.softmax(params["mix_s"]) * params["gamma"]
    return mix_w[0] * layer0 + mix_w[1] * layer1 + mix_w[2] * layer2   # (B, T, OUT_DIM)


if __name__ == "__main__":
    key = jax.random.PRNGKey(0)
    pkey, dkey = jax.random.split(key)
    params = init_params(pkey)

    B, T = 2, 8
    char_ids = jax.random.randint(dkey, (B, T, MAX_CHARS), 0, CHAR_VOCAB, dtype=jnp.int32)

    fwd = jax.jit(elmo_layer_forward)
    out = fwd(params, char_ids)
    out = jax.block_until_ready(out)

    assert out.shape == (B, T, OUT_DIM), out.shape
    assert bool(jnp.all(jnp.isfinite(out)))
    print("KERNEL_OK")
</pallas_src>

<mosaic_0001>
module attributes {stable_mosaic.version = 11 : i64} {
  func.func @_token_encoder_kernel(%arg0: i32, %arg1: memref<16x52x16xbf16, #tpu.memory_space<vmem>>, %arg2: memref<48x256xbf16, #tpu.memory_space<vmem>>, %arg3: memref<1x256xf32, #tpu.memory_space<vmem>>, %arg4: memref<2x256x512xbf16, #tpu.memory_space<vmem>>, %arg5: memref<2x1x512xf32, #tpu.memory_space<vmem>>, %arg6: memref<256x128xbf16, #tpu.memory_space<vmem>>, %arg7: memref<1x128xf32, #tpu.memory_space<vmem>>, %arg8: memref<16x128xf32, #tpu.memory_space<vmem>>) attributes {dimension_semantics = [#tpu.dimension_semantics<parallel>], iteration_bounds = array<i64: 1>, scalar_prefetch = 0 : i64, scratch_operands = 0 : i64, tpu.core_type = #tpu.core_type<tc>, window_params = [{transform_indices = @transform_0, window_bounds = array<i64: 16, 52, 16>}, {pipeline_mode = #tpu.pipeline_mode<synchronous>, transform_indices = @transform_1, window_bounds = array<i64: 48, 256>}, {pipeline_mode = #tpu.pipeline_mode<synchronous>, transform_indices = @transform_2, window_bounds = array<i64: 1, 256>}, {pipeline_mode = #tpu.pipeline_mode<synchronous>, transform_indices = @transform_3, window_bounds = array<i64: 2, 256, 512>}, {pipeline_mode = #tpu.pipeline_mode<synchronous>, transform_indices = @transform_4, window_bounds = array<i64: 2, 1, 512>}, {pipeline_mode = #tpu.pipeline_mode<synchronous>, transform_indices = @transform_5, window_bounds = array<i64: 256, 128>}, {pipeline_mode = #tpu.pipeline_mode<synchronous>, transform_indices = @transform_6, window_bounds = array<i64: 1, 128>}, {transform_indices = @transform_7, window_bounds = array<i64: 16, 128>}]} {
    %c0 = arith.constant 0 : index
    %c0_0 = arith.constant 0 : index
    %c0_1 = arith.constant 0 : index
    %0 = vector.load %arg1[%c0, %c0_0, %c0_1] : memref<16x52x16xbf16, #tpu.memory_space<vmem>>, vector<16x52x16xbf16>
    %1 = vector.extract_strided_slice %0 {offsets = [0, 0, 0], sizes = [16, 50, 16], strides = [1, 1, 1]} : vector<16x52x16xbf16> to vector<16x50x16xbf16>
    %2 = vector.extract_strided_slice %0 {offsets = [0, 1, 0], sizes = [16, 50, 16], strides = [1, 1, 1]} : vector<16x52x16xbf16> to vector<16x50x16xbf16>
    %3 = vector.extract_strided_slice %0 {offsets = [0, 2, 0], sizes = [16, 50, 16], strides = [1, 1, 1]} : vector<16x52x16xbf16> to vector<16x50x16xbf16>
    %4 = tpu.concatenate %1, %2, %3 in 2 : vector<16x50x16xbf16>, vector<16x50x16xbf16>, vector<16x50x16xbf16> -> vector<16x50x48xbf16>
    %5 = vector.shape_cast %4 : vector<16x50x48xbf16> to vector<800x48xbf16>
    %c0_2 = arith.constant 0 : index
    %c0_3 = arith.constant 0 : index
    %6 = vector.load %arg2[%c0_2, %c0_3] : memref<48x256xbf16, #tpu.memory_space<vmem>>, vector<48x256xbf16>
    %cst = arith.constant dense<0.000000e+00> : vector<800x256xf32>
    %7 = tpu.matmul %5, %6, %cst {dimension_numbers = #tpu.dot_dimension_numbers<[1], [0], [0], [1], [0, 0, 1, 1], [], []>} : vector<800x48xbf16>, vector<48x256xbf16>, vector<800x256xf32> -> vector<800x256xf32>
    %8 = vector.shape_cast %7 : vector<800x256xf32> to vector<16x50x256xf32>
    %9 = vector.extract_strided_slice %8 {offsets = [0, 0, 0], sizes = [16, 48, 256], strides = [1, 1, 1]} : vector<16x50x256xf32> to vector<16x48x256xf32>
    %cst_4 = arith.constant dense<0xFF800000> : vector<16x256xf32>
    %10 = vector.multi_reduction <maximumf>, %9, %cst_4 [1] : vector<16x48x256xf32> to vector<16x256xf32>
    %11 = vector.extract_strided_slice %10 {offsets = [0, 0], sizes = [16, 64], strides = [1, 1]} : vector<16x256xf32> to vector<16x64xf32>
    %12 = vector.extract_strided_slice %8 {offsets = [0, 48, 0], sizes = [16, 2, 64], strides = [1, 1, 1]} : vector<16x50x256xf32> to vector<16x2x64xf32>
    %cst_5 = arith.constant dense<0xFF800000> : vector<16x64xf32>
    %13 = vector.multi_reduction <maximumf>, %12, %cst_5 [1] : vector<16x2x64xf32> to vector<16x64xf32>
    %14 = arith.maximumf %11, %13 : vector<16x64xf32>
    %15 = vector.extract_strided_slice %10 {offsets = [0, 64], sizes = [16, 64], strides = [1, 1]} : vector<16x256xf32> to vector<16x64xf32>
    %16 = vector.extract_strided_slice %8 {offsets = [0, 48, 64], sizes = [16, 1, 64], strides = [1, 1, 1]} : vector<16x50x256xf32> to vector<16x1x64xf32>
    %cst_6 = arith.constant dense<0xFF800000> : vector<16x64xf32>
    %17 = vector.multi_reduction <maximumf>, %16, %cst_6 [1] : vector<16x1x64xf32> to vector<16x64xf32>
    %18 = arith.maximumf %15, %17 : vector<16x64xf32>
    %19 = vector.extract_strided_slice %10 {offsets = [0, 128], sizes = [16, 128], strides = [1, 1]} : vector<16x256xf32> to vector<16x128xf32>
    %20 = tpu.concatenate %14, %18, %19 in 1 : vector<16x64xf32>, vector<16x64xf32>, vector<16x128xf32> -> vector<16x256xf32>
    %c0_7 = arith.constant 0 : index
    %c0_8 = arith.constant 0 : index
    %21 = vector.load %arg3[%c0_7, %c0_8] : memref<1x256xf32, #tpu.memory_space<vmem>>, vector<1x256xf32>
    %22 = vector.broadcast %21 : vector<1x256xf32> to vector<16x256xf32>
    %23 = arith.addf %20, %22 : vector<16x256xf32>
    %24 = math.tanh %23 : vector<16x256xf32>
    %25 = arith.truncf %24 : vector<16x256xf32> to vector<16x256xbf16>
    %c0_9 = arith.constant 0 : index
    %c0_10 = arith.constant 0 : index
    %c0_11 = arith.constant 0 : index
    %26 = vector.load %arg4[%c0_9, %c0_10, %c0_11] : memref<2x256x512xbf16, #tpu.memory_space<vmem>>, vector<1x256x512xbf16>
    %27 = vector.shape_cast %26 : vector<1x256x512xbf16> to vector<256x512xbf16>
    %cst_12 = arith.constant dense<0.000000e+00> : vector<16x512xf32>
    %28 = tpu.matmul %25, %27, %cst_12 {dimension_numbers = #tpu.dot_dimension_numbers<[1], [0], [0], [1], [0, 0, 1, 1], [], []>} : vector<16x256xbf16>, vector<256x512xbf16>, vector<16x512xf32> -> vector<16x512xf32>
    %c0_13 = arith.constant 0 : index
    %c0_14 = arith.constant 0 : index
    %c0_15 = arith.constant 0 : index
    %29 = vector.load %arg5[%c0_13, %c0_14, %c0_15] : memref<2x1x512xf32, #tpu.memory_space<vmem>>, vector<1x1x512xf32>
    %30 = vector.shape_cast %29 : vector<1x1x512xf32> to vector<1x512xf32>
    %31 = vector.broadcast %30 : vector<1x512xf32> to vector<16x512xf32>
    %32 = arith.addf %28, %31 : vector<16x512xf32>
    %33 = vector.extract_strided_slice %32 {offsets = [0, 0], sizes = [16, 256], strides = [1, 1]} : vector<16x512xf32> to vector<16x256xf32>
    %cst_16 = arith.constant 0.000000e+00 : f32
    %34 = vector.broadcast %cst_16 : f32 to vector<16x256xf32>
    %35 = arith.maximumf %33, %34 : vector<16x256xf32>
    %36 = vector.extract_strided_slice %32 {offsets = [0, 256], sizes = [16, 256], strides = [1, 1]} : vector<16x512xf32> to vector<16x256xf32>
    %37 = arith.negf %36 : vector<16x256xf32>
    %38 = math.exp %37 : vector<16x256xf32>
    %cst_17 = arith.constant 1.000000e+00 : f32
    %39 = vector.broadcast %cst_17 : f32 to vector<16x256xf32>
    %40 = arith.addf %39, %38 : vector<16x256xf32>
    %41 = arith.divf %39, %40 : vector<16x256xf32>
    %42 = arith.mulf %41, %24 : vector<16x256xf32>
    %cst_18 = arith.constant 1.000000e+00 : f32
    %43 = vector.broadcast %cst_18 : f32 to vector<16x256xf32>
    %44 = arith.subf %43, %41 : vector<16x256xf32>
    %45 = arith.mulf %44, %35 : vector<16x256xf32>
    %46 = arith.addf %42, %45 : vector<16x256xf32>
    %47 = arith.truncf %46 : vector<16x256xf32> to vector<16x256xbf16>
    %c1 = arith.constant 1 : index
    %c0_19 = arith.constant 0 : index
    %c0_20 = arith.constant 0 : index
    %48 = vector.load %arg4[%c1, %c0_19, %c0_20] : memref<2x256x512xbf16, #tpu.memory_space<vmem>>, vector<1x256x512xbf16>
    %49 = vector.shape_cast %48 : vector<1x256x512xbf16> to vector<256x512xbf16>
    %cst_21 = arith.constant dense<0.000000e+00> : vector<16x512xf32>
    %50 = tpu.matmul %47, %49, %cst_21 {dimension_numbers = #tpu.dot_dimension_numbers<[1], [0], [0], [1], [0, 0, 1, 1], [], []>} : vector<16x256xbf16>, vector<256x512xbf16>, vector<16x512xf32> -> vector<16x512xf32>
    %c1_22 = arith.constant 1 : index
    %c0_23 = arith.constant 0 : index
    %c0_24 = arith.constant 0 : index
    %51 = vector.load %arg5[%c1_22, %c0_23, %c0_24] : memref<2x1x512xf32, #tpu.memory_space<vmem>>, vector<1x1x512xf32>
    %52 = vector.shape_cast %51 : vector<1x1x512xf32> to vector<1x512xf32>
    %53 = vector.broadcast %52 : vector<1x512xf32> to vector<16x512xf32>
    %54 = arith.addf %50, %53 : vector<16x512xf32>
    %55 = vector.extract_strided_slice %54 {offsets = [0, 0], sizes = [16, 256], strides = [1, 1]} : vector<16x512xf32> to vector<16x256xf32>
    %cst_25 = arith.constant 0.000000e+00 : f32
    %56 = vector.broadcast %cst_25 : f32 to vector<16x256xf32>
    %57 = arith.maximumf %55, %56 : vector<16x256xf32>
    %58 = vector.extract_strided_slice %54 {offsets = [0, 256], sizes = [16, 256], strides = [1, 1]} : vector<16x512xf32> to vector<16x256xf32>
    %59 = arith.negf %58 : vector<16x256xf32>
    %60 = math.exp %59 : vector<16x256xf32>
    %cst_26 = arith.constant 1.000000e+00 : f32
    %61 = vector.broadcast %cst_26 : f32 to vector<16x256xf32>
    %62 = arith.addf %61, %60 : vector<16x256xf32>
    %63 = arith.divf %61, %62 : vector<16x256xf32>
    %64 = arith.mulf %63, %46 : vector<16x256xf32>
    %cst_27 = arith.constant 1.000000e+00 : f32
    %65 = vector.broadcast %cst_27 : f32 to vector<16x256xf32>
    %66 = arith.subf %65, %63 : vector<16x256xf32>
    %67 = arith.mulf %66, %57 : vector<16x256xf32>
    %68 = arith.addf %64, %67 : vector<16x256xf32>
    %69 = arith.truncf %68 : vector<16x256xf32> to vector<16x256xbf16>
    %c0_28 = arith.constant 0 : index
    %c0_29 = arith.constant 0 : index
    %70 = vector.load %arg6[%c0_28, %c0_29] : memref<256x128xbf16, #tpu.memory_space<vmem>>, vector<256x128xbf16>
    %cst_30 = arith.constant dense<0.000000e+00> : vector<16x128xf32>
    %71 = tpu.matmul %69, %70, %cst_30 {dimension_numbers = #tpu.dot_dimension_numbers<[1], [0], [0], [1], [0, 0, 1, 1], [], []>} : vector<16x256xbf16>, vector<256x128xbf16>, vector<16x128xf32> -> vector<16x128xf32>
    %c0_31 = arith.constant 0 : index
    %c0_32 = arith.constant 0 : index
    %72 = vector.load %arg7[%c0_31, %c0_32] : memref<1x128xf32, #tpu.memory_space<vmem>>, vector<1x128xf32>
    %73 = vector.broadcast %72 : vector<1x128xf32> to vector<16x128xf32>
    %74 = arith.addf %71, %73 : vector<16x128xf32>
    %c0_33 = arith.constant 0 : index
    %c0_34 = arith.constant 0 : index
    %75 = vector.load %arg8[%c0_33, %c0_34] : memref<16x128xf32, #tpu.memory_space<vmem>>, vector<16x128xf32>
    tpu.vector_store %arg8[%c0_33, %c0_34], %74 {strides = array<i32>} : memref<16x128xf32, #tpu.memory_space<vmem>>, vector<16x128xf32>,
    return
  }
  func.func @transform_0(%arg0: i32) -> (i32, i32, i32) {
    %c0_i32 = arith.constant 0 : i32
    %c0_i32_0 = arith.constant 0 : i32
    %c0_i32_1 = arith.constant 0 : i32
    return %arg0, %c0_i32, %c0_i32_0 : i32, i32, i32
  }
  func.func @transform_1(%arg0: i32) -> (i32, i32) {
    %c0_i32 = arith.constant 0 : i32
    %c0_i32_0 = arith.constant 0 : i32
    %c0_i32_1 = arith.constant 0 : i32
    return %c0_i32, %c0_i32_0 : i32, i32
  }
  func.func @transform_2(%arg0: i32) -> (i32, i32) {
    %c0_i32 = arith.constant 0 : i32
    %c0_i32_0 = arith.constant 0 : i32
    %c0_i32_1 = arith.constant 0 : i32
    return %c0_i32, %c0_i32_0 : i32, i32
  }
  func.func @transform_3(%arg0: i32) -> (i32, i32, i32) {
    %c0_i32 = arith.constant 0 : i32
    %c0_i32_0 = arith.constant 0 : i32
    %c0_i32_1 = arith.constant 0 : i32
    %c0_i32_2 = arith.constant 0 : i32
    return %c0_i32, %c0_i32_0, %c0_i32_1 : i32, i32, i32
  }
  func.func @transform_4(%arg0: i32) -> (i32, i32, i32) {
    %c0_i32 = arith.constant 0 : i32
    %c0_i32_0 = arith.constant 0 : i32
    %c0_i32_1 = arith.constant 0 : i32
    %c0_i32_2 = arith.constant 0 : i32
    return %c0_i32, %c0_i32_0, %c0_i32_1 : i32, i32, i32
  }
  func.func @transform_5(%arg0: i32) -> (i32, i32) {
    %c0_i32 = arith.constant 0 : i32
    %c0_i32_0 = arith.constant 0 : i32
    %c0_i32_1 = arith.constant 0 : i32
    return %c0_i32, %c0_i32_0 : i32, i32
  }
  func.func @transform_6(%arg0: i32) -> (i32, i32) {
    %c0_i32 = arith.constant 0 : i32
    %c0_i32_0 = arith.constant 0 : i32
    %c0_i32_1 = arith.constant 0 : i32
    return %c0_i32, %c0_i32_0 : i32, i32
  }
  func.func @transform_7(%arg0: i32) -> (i32, i32) {
    %c0_i32 = arith.constant 0 : i32
    %c0_i32_0 = arith.constant 0 : i32
    return %arg0, %c0_i32 : i32, i32
  }
}

module attributes {stable_mosaic.version = 11 : i64} {
  func.func @_input_proj_kernel(%arg0: i32, %arg1: i32, %arg2: memref<1x16x128xf32, #tpu.memory_space<vmem>>, %arg3: memref<1x128x1024xbf16, #tpu.memory_space<vmem>>, %arg4: memref<1x1x1024xf32, #tpu.memory_space<vmem>>, %arg5: memref<1x16x1024xf32, #tpu.memory_space<vmem>>) attributes {dimension_semantics = [#tpu.dimension_semantics<parallel>, #tpu.dimension_semantics<parallel>], iteration_bounds = array<i64: 2, 1>, scalar_prefetch = 0 : i64, scratch_operands = 0 : i64, tpu.core_type = #tpu.core_type<tc>, window_params = [{transform_indices = @transform_0, window_bounds = array<i64: 1, 16, 128>}, {transform_indices = @transform_1, window_bounds = array<i64: 1, 128, 1024>}, {transform_indices = @transform_2, window_bounds = array<i64: 1, 1, 1024>}, {transform_indices = @transform_3, window_bounds = array<i64: 1, 16, 1024>}]} {
    %c0 = arith.constant 0 : index
    %c0_0 = arith.constant 0 : index
    %c0_1 = arith.constant 0 : index
    %0 = vector.load %arg2[%c0, %c0_0, %c0_1] : memref<1x16x128xf32, #tpu.memory_space<vmem>>, vector<1x16x128xf32>
    %1 = vector.shape_cast %0 : vector<1x16x128xf32> to vector<16x128xf32>
    %2 = arith.truncf %1 : vector<16x128xf32> to vector<16x128xbf16>
    %c0_2 = arith.constant 0 : index
    %c0_3 = arith.constant 0 : index
    %c0_4 = arith.constant 0 : index
    %3 = vector.load %arg3[%c0_2, %c0_3, %c0_4] : memref<1x128x1024xbf16, #tpu.memory_space<vmem>>, vector<1x128x1024xbf16>
    %4 = vector.shape_cast %3 : vector<1x128x1024xbf16> to vector<128x1024xbf16>
    %cst = arith.constant dense<0.000000e+00> : vector<16x1024xf32>
    %5 = tpu.matmul %2, %4, %cst {dimension_numbers = #tpu.dot_dimension_numbers<[1], [0], [0], [1], [0, 0, 1, 1], [], []>} : vector<16x128xbf16>, vector<128x1024xbf16>, vector<16x1024xf32> -> vector<16x1024xf32>
    %c0_5 = arith.constant 0 : index
    %c0_6 = arith.constant 0 : index
    %c0_7 = arith.constant 0 : index
    %6 = vector.load %arg4[%c0_5, %c0_6, %c0_7] : memref<1x1x1024xf32, #tpu.memory_space<vmem>>, vector<1x1x1024xf32>
    %7 = vector.shape_cast %6 : vector<1x1x1024xf32> to vector<1x1024xf32>
    %8 = vector.broadcast %7 : vector<1x1024xf32> to vector<16x1024xf32>
    %9 = arith.addf %5, %8 : vector<16x1024xf32>
    %c0_8 = arith.constant 0 : index
    %c0_9 = arith.constant 0 : index
    %c0_10 = arith.constant 0 : index
    %10 = vector.load %arg5[%c0_8, %c0_9, %c0_10] : memref<1x16x1024xf32, #tpu.memory_space<vmem>>, vector<1x16x1024xf32>
    %11 = vector.shape_cast %10 : vector<1x16x1024xf32> to vector<16x1024xf32>
    %12 = vector.shape_cast %9 : vector<16x1024xf32> to vector<1x16x1024xf32>
    tpu.vector_store %arg5[%c0_8, %c0_9, %c0_10], %12 {strides = array<i32>} : memref<1x16x1024xf32, #tpu.memory_space<vmem>>, vector<1x16x1024xf32>,
    return
  }
  func.func @transform_0(%arg0: i32, %arg1: i32) -> (i32, i32, i32) {
    %c0_i32 = arith.constant 0 : i32
    %c0_i32_0 = arith.constant 0 : i32
    return %arg0, %arg1, %c0_i32 : i32, i32, i32
  }
  func.func @transform_1(%arg0: i32, %arg1: i32) -> (i32, i32, i32) {
    %c0_i32 = arith.constant 0 : i32
    %c0_i32_0 = arith.constant 0 : i32
    %c0_i32_1 = arith.constant 0 : i32
    return %arg0, %c0_i32, %c0_i32_0 : i32, i32, i32
  }
  func.func @transform_2(%arg0: i32, %arg1: i32) -> (i32, i32, i32) {
    %c0_i32 = arith.constant 0 : i32
    %c0_i32_0 = arith.constant 0 : i32
    %c0_i32_1 = arith.constant 0 : i32
    return %arg0, %c0_i32, %c0_i32_0 : i32, i32, i32
  }
  func.func @transform_3(%arg0: i32, %arg1: i32) -> (i32, i32, i32) {
    %c0_i32 = arith.constant 0 : i32
    %c0_i32_0 = arith.constant 0 : i32
    return %arg0, %arg1, %c0_i32 : i32, i32, i32
  }
}

module attributes {stable_mosaic.version = 11 : i64} {
  func.func @_bilstm_kernel(%arg0: i32, %arg1: i32, %arg2: memref<1x1x2x1024xf32, #tpu.memory_space<vmem>>, %arg3: memref<1x128x1024xbf16, #tpu.memory_space<vmem>>, %arg4: memref<1x256x128xbf16, #tpu.memory_space<vmem>>, %arg5: memref<1x1x2x128xf32, #tpu.memory_space<vmem>>, %arg6: memref<2x128xf32, #tpu.memory_space<vmem>>, %arg7: memref<2x256xf32, #tpu.memory_space<vmem>>) attributes {dimension_semantics = [#tpu.dimension_semantics<parallel>, #tpu.dimension_semantics<arbitrary>], iteration_bounds = array<i64: 2, 8>, scalar_prefetch = 0 : i64, scratch_operands = 2 : i64, tpu.core_type = #tpu.core_type<tc>, window_params = [{transform_indices = @transform_0, window_bounds = array<i64: 1, 1, 2, 1024>}, {transform_indices = @transform_1, window_bounds = array<i64: 1, 128, 1024>}, {transform_indices = @transform_2, window_bounds = array<i64: 1, 256, 128>}, {transform_indices = @transform_3, window_bounds = array<i64: 1, 1, 2, 128>}]} {
    %c0_i32 = arith.constant 0 : i32
    %0 = arith.cmpi eq, %arg1, %c0_i32 : i32
    %1 = arith.extui %0 : i1 to i32
    %c0_i32_0 = arith.constant 0 : i32
    %2 = arith.cmpi ne, %1, %c0_i32_0 : i32
    scf.if %2 {
      %cst_26 = arith.constant 0.000000e+00 : f32
      %46 = vector.broadcast %cst_26 : f32 to vector<2x128xf32>
      %c0_27 = arith.constant 0 : index
      %c0_28 = arith.constant 0 : index
      %47 = vector.load %arg6[%c0_27, %c0_28] : memref<2x128xf32, #tpu.memory_space<vmem>>, vector<2x128xf32>
      tpu.vector_store %arg6[%c0_27, %c0_28], %46 {strides = array<i32>} : memref<2x128xf32, #tpu.memory_space<vmem>>, vector<2x128xf32>,
      %cst_29 = arith.constant 0.000000e+00 : f32
      %48 = vector.broadcast %cst_29 : f32 to vector<2x256xf32>
      %c0_30 = arith.constant 0 : index
      %c0_31 = arith.constant 0 : index
      %49 = vector.load %arg7[%c0_30, %c0_31] : memref<2x256xf32, #tpu.memory_space<vmem>>, vector<2x256xf32>
      tpu.vector_store %arg7[%c0_30, %c0_31], %48 {strides = array<i32>} : memref<2x256xf32, #tpu.memory_space<vmem>>, vector<2x256xf32>,
    } else {
    }
    %c0 = arith.constant 0 : index
    %c0_1 = arith.constant 0 : index
    %3 = vector.load %arg6[%c0, %c0_1] : memref<2x128xf32, #tpu.memory_space<vmem>>, vector<2x128xf32>
    %c0_2 = arith.constant 0 : index
    %c0_3 = arith.constant 0 : index
    %4 = vector.load %arg7[%c0_2, %c0_3] : memref<2x256xf32, #tpu.memory_space<vmem>>, vector<2x256xf32>
    %c0_4 = arith.constant 0 : index
    %c0_5 = arith.constant 0 : index
    %c0_6 = arith.constant 0 : index
    %c0_7 = arith.constant 0 : index
    %5 = vector.load %arg2[%c0_4, %c0_5, %c0_6, %c0_7] : memref<1x1x2x1024xf32, #tpu.memory_space<vmem>>, vector<1x1x2x1024xf32>
    %6 = vector.shape_cast %5 : vector<1x1x2x1024xf32> to vector<2x1024xf32>
    %7 = arith.truncf %3 : vector<2x128xf32> to vector<2x128xbf16>
    %c0_8 = arith.constant 0 : index
    %c0_9 = arith.constant 0 : index
    %c0_10 = arith.constant 0 : index
    %8 = vector.load %arg3[%c0_8, %c0_9, %c0_10] : memref<1x128x1024xbf16, #tpu.memory_space<vmem>>, vector<1x128x1024xbf16>
    %9 = vector.shape_cast %8 : vector<1x128x1024xbf16> to vector<128x1024xbf16>
    %cst = arith.constant dense<0.000000e+00> : vector<2x1024xf32>
    %10 = tpu.matmul %7, %9, %cst {dimension_numbers = #tpu.dot_dimension_numbers<[1], [0], [0], [1], [0, 0, 1, 1], [], []>} : vector<2x128xbf16>, vector<128x1024xbf16>, vector<2x1024xf32> -> vector<2x1024xf32>
    %11 = arith.addf %6, %10 : vector<2x1024xf32>
    %12 = vector.extract_strided_slice %11 {offsets = [0, 0], sizes = [2, 256], strides = [1, 1]} : vector<2x1024xf32> to vector<2x256xf32>
    %13 = arith.negf %12 : vector<2x256xf32>
    %14 = math.exp %13 : vector<2x256xf32>
    %cst_11 = arith.constant 1.000000e+00 : f32
    %15 = vector.broadcast %cst_11 : f32 to vector<2x256xf32>
    %16 = arith.addf %15, %14 : vector<2x256xf32>
    %17 = arith.divf %15, %16 : vector<2x256xf32>
    %18 = vector.extract_strided_slice %11 {offsets = [0, 256], sizes = [2, 256], strides = [1, 1]} : vector<2x1024xf32> to vector<2x256xf32>
    %19 = arith.negf %18 : vector<2x256xf32>
    %20 = math.exp %19 : vector<2x256xf32>
    %cst_12 = arith.constant 1.000000e+00 : f32
    %21 = vector.broadcast %cst_12 : f32 to vector<2x256xf32>
    %22 = arith.addf %21, %20 : vector<2x256xf32>
    %23 = arith.divf %21, %22 : vector<2x256xf32>
    %24 = vector.extract_strided_slice %11 {offsets = [0, 512], sizes = [2, 256], strides = [1, 1]} : vector<2x1024xf32> to vector<2x256xf32>
    %25 = math.tanh %24 : vector<2x256xf32>
    %26 = vector.extract_strided_slice %11 {offsets = [0, 768], sizes = [2, 256], strides = [1, 1]} : vector<2x1024xf32> to vector<2x256xf32>
    %27 = arith.negf %26 : vector<2x256xf32>
    %28 = math.exp %27 : vector<2x256xf32>
    %cst_13 = arith.constant 1.000000e+00 : f32
    %29 = vector.broadcast %cst_13 : f32 to vector<2x256xf32>
    %30 = arith.addf %29, %28 : vector<2x256xf32>
    %31 = arith.divf %29, %30 : vector<2x256xf32>
    %32 = arith.mulf %23, %4 : vector<2x256xf32>
    %33 = arith.mulf %17, %25 : vector<2x256xf32>
    %34 = arith.addf %32, %33 : vector<2x256xf32>
    %35 = math.tanh %34 : vector<2x256xf32>
    %36 = arith.mulf %31, %35 : vector<2x256xf32>
    %37 = arith.truncf %36 : vector<2x256xf32> to vector<2x256xbf16>
    %c0_14 = arith.constant 0 : index
    %c0_15 = arith.constant 0 : index
    %c0_16 = arith.constant 0 : index
    %38 = vector.load %arg4[%c0_14, %c0_15, %c0_16] : memref<1x256x128xbf16, #tpu.memory_space<vmem>>, vector<1x256x128xbf16>
    %39 = vector.shape_cast %38 : vector<1x256x128xbf16> to vector<256x128xbf16>
    %cst_17 = arith.constant dense<0.000000e+00> : vector<2x128xf32>
    %40 = tpu.matmul %37, %39, %cst_17 {dimension_numbers = #tpu.dot_dimension_numbers<[1], [0], [0], [1], [0, 0, 1, 1], [], []>} : vector<2x256xbf16>, vector<256x128xbf16>, vector<2x128xf32> -> vector<2x128xf32>
    %c0_18 = arith.constant 0 : index
    %c0_19 = arith.constant 0 : index
    %41 = vector.load %arg7[%c0_18, %c0_19] : memref<2x256xf32, #tpu.memory_space<vmem>>, vector<2x256xf32>
    tpu.vector_store %arg7[%c0_18, %c0_19], %34 {strides = array<i32>} : memref<2x256xf32, #tpu.memory_space<vmem>>, vector<2x256xf32>,
    %c0_20 = arith.constant 0 : index
    %c0_21 = arith.constant 0 : index
    %42 = vector.load %arg6[%c0_20, %c0_21] : memref<2x128xf32, #tpu.memory_space<vmem>>, vector<2x128xf32>
    tpu.vector_store %arg6[%c0_20, %c0_21], %40 {strides = array<i32>} : memref<2x128xf32, #tpu.memory_space<vmem>>, vector<2x128xf32>,
    %c0_22 = arith.constant 0 : index
    %c0_23 = arith.constant 0 : index
    %c0_24 = arith.constant 0 : index
    %c0_25 = arith.constant 0 : index
    %43 = vector.load %arg5[%c0_22, %c0_23, %c0_24, %c0_25] : memref<1x1x2x128xf32, #tpu.memory_space<vmem>>, vector<1x1x2x128xf32>
    %44 = vector.shape_cast %43 : vector<1x1x2x128xf32> to vector<2x128xf32>
    %45 = vector.shape_cast %40 : vector<2x128xf32> to vector<1x1x2x128xf32>
    tpu.vector_store %arg5[%c0_22, %c0_23, %c0_24, %c0_25], %45 {strides = array<i32>} : memref<1x1x2x128xf32, #tpu.memory_space<vmem>>, vector<1x1x2x128xf32>,
    return
  }
  func.func @transform_0(%arg0: i32, %arg1: i32) -> (i32, i32, i32, i32) {
    %c0_i32 = arith.constant 0 : i32
    %c0_i32_0 = arith.constant 0 : i32
    %c0_i32_1 = arith.constant 0 : i32
    return %arg0, %arg1, %c0_i32, %c0_i32_0 : i32, i32, i32, i32
  }
  func.func @transform_1(%arg0: i32, %arg1: i32) -> (i32, i32, i32) {
    %c0_i32 = arith.constant 0 : i32
    %c0_i32_0 = arith.constant 0 : i32
    %c0_i32_1 = arith.constant 0 : i32
    return %arg0, %c0_i32, %c0_i32_0 : i32, i32, i32
  }
  func.func @transform_2(%arg0: i32, %arg1: i32) -> (i32, i32, i32) {
    %c0_i32 = arith.constant 0 : i32
    %c0_i32_0 = arith.constant 0 : i32
    %c0_i32_1 = arith.constant 0 : i32
    return %arg0, %c0_i32, %c0_i32_0 : i32, i32, i32
  }
  func.func @transform_3(%arg0: i32, %arg1: i32) -> (i32, i32, i32, i32) {
    %c0_i32 = arith.constant 0 : i32
    %c0_i32_0 = arith.constant 0 : i32
    %c0_i32_1 = arith.constant 0 : i32
    return %arg0, %arg1, %c0_i32, %c0_i32_0 : i32, i32, i32, i32
  }
}

</mosaic_0001>

<llo_original>
// kernel: elmo_layer_forward.6
$region0: #{elmo_layer_forward.6}
  #allocation0 [shape = 'u32[]', space=smem, size = 0x4, offset = 0x4, fixed_abs, tag = 'smem constant byte address 0x4 - core index']
  #allocation1 [shape = 'u32[72,128]{1,0:T(1,128)}', space=vmem, size = 0x9000, scoped, tag = 'internal scratch']
  %s0 = inlined_call_operand.vmem [shape: f32[2,16,128], index: 0, kind: input, shape index: {}]
  %s1 = inlined_call_operand.vmem [shape: bf16[2,128,1024], index: 1, kind: input, shape index: {}]
  %s2 = inlined_call_operand.vmem [shape: f32[2,1,1024], index: 2, kind: input, shape index: {}]
  %s3 = inlined_call_operand.vmem [shape: f32[2,16,1024], index: 3, kind: output, shape index: {}]
  %s4 = sld [smem:[#allocation0]]
  $region45: #{elmo_layer_forward.6} parent=0
    _
  %s6 = ssub.s32 1, %s4
  %s7 = scalar_select 0, %s6, %s4
  loop: start=0, step=1, limit=4
  $region2: #{elmo_layer_forward.6} parent=0 // loop_pre_header
    _
  $region3: #{elmo_layer_forward.6} parent=0 // loop_header
    %s9 = sphi 0, %s13
    %p10 = scmp.ge.s32.totalorder %s9, 4
    %s16 = sphi 0, %s28
    %s17 = sphi 0, %s24
    %s18 = sphi 0, %s16
    %s19 = sphi 0, %s17
    %s20 = sphi 0, %s18
    %s21 = sphi 0, %s19
    %s33 = sphi 0, %s35
    %s36 = sphi 0, %s33
    %s37 = sphi 0, %s36
    %s53 = sphi 0, %s37
    %s59 = sphi 0, %s61
    %s62 = sphi 0, %s59
    %s63 = sphi 0, %s62
    %s79 = sphi 0, %s63
    %s85 = sphi 0, %s87
    %s88 = sphi 0, %s85
    %s89 = sphi 0, %s88
    %s105 = sphi 0, %s89
    %s113 = sphi 0, %s115
    %s116 = sphi 0, %s113
    %s117 = sphi 0, %s116
    %s133 = sphi 0, %s117
  $region4: #{elmo_layer_forward.6} parent=0 // loop_header_branch
    %12 = sbr.rel (%p10) target = $region8
  $region5: #{elmo_layer_forward.6} parent=0 // loop_body
    %s14 = ssub.s32 %s9, 1
    %s15 = ssub.s32 %s9, 2
    %s22 = sadd.s32 1, %s17
    %p23 = scmp.ge.s32.totalorder %s22, 1
    %s24 = scalar_select %p23, 0, %s22
    %s25 = sadd.s32 1, %s16
    %s26 = scalar_select %p23, %s25, %s16
    %p27 = scmp.ge.s32.totalorder %s26, 2
    %s28 = scalar_select %p27, 0, %s26
    %s29 = ssub.s32 %s16, %s28
    %s30 = ssub.s32 %s17, %s24
    %s31 = sor.u32 %s29, %s30
    %p32 = scmp.eq.s32.totalorder %s31, 0
    %s34 = sadd.s32 %s33, 1
    %s35 = scalar_select %p32, %s33, %s34
    %p38 = pneg %p32
    %p39 = scmp.eq.s32.totalorder %s9, 1
    %p40 = por %p38, %p39
    %p41 = scmp.ne.s32.totalorder %s33, %s36
    %p42 = scmp.eq.s32.totalorder %s9, 0
    %p43 = por %p41, %p42
    %p44 = scmp.ne.s32.totalorder %s33, %s36
    %p45 = scmp.eq.s32.totalorder %s14, 1
    %p46 = por %p44, %p45
    %p47 = scmp.ne.s32.totalorder %s36, %s37
    %p48 = scmp.eq.s32.totalorder %s14, 0
    %p49 = por %p47, %p48
    %p50 = scmp.ne.s32.totalorder %s36, %s37
    %p51 = scmp.eq.s32.totalorder %s15, 1
    %p52 = por %p50, %p51
    %p54 = scmp.ne.s32.totalorder %s37, %s53
    %p55 = scmp.eq.s32.totalorder %s15, 0
    %p56 = por %p54, %p55
    %s57 = ssub.s32 %s16, %s28
    %p58 = scmp.eq.s32.totalorder %s57, 0
    %s60 = sadd.s32 %s59, 1
    %s61 = scalar_select %p58, %s59, %s60
    %p64 = pneg %p58
    %p65 = scmp.eq.s32.totalorder %s9, 1
    %p66 = por %p64, %p65
    %p67 = scmp.ne.s32.totalorder %s59, %s62
    %p68 = scmp.eq.s32.totalorder %s9, 0
    %p69 = por %p67, %p68
    %p70 = scmp.ne.s32.totalorder %s59, %s62
    %p71 = scmp.eq.s32.totalorder %s14, 1
    %p72 = por %p70, %p71
    %p73 = scmp.ne.s32.totalorder %s62, %s63
    %p74 = scmp.eq.s32.totalorder %s14, 0
    %p75 = por %p73, %p74
    %p76 = scmp.ne.s32.totalorder %s62, %s63
    %p77 = scmp.eq.s32.totalorder %s15, 1
    %p78 = por %p76, %p77
    %p80 = scmp.ne.s32.totalorder %s63, %s79
    %p81 = scmp.eq.s32.totalorder %s15, 0
    %p82 = por %p80, %p81
    %s83 = ssub.s32 %s16, %s28
    %p84 = scmp.eq.s32.totalorder %s83, 0
    %s86 = sadd.s32 %s85, 1
    %s87 = scalar_select %p84, %s85, %s86
    %p90 = pneg %p84
    %p91 = scmp.eq.s32.totalorder %s9, 1
    %p92 = por %p90, %p91
    %p93 = scmp.ne.s32.totalorder %s85, %s88
    %p94 = scmp.eq.s32.totalorder %s9, 0
    %p95 = por %p93, %p94
    %p96 = scmp.ne.s32.totalorder %s85, %s88
    %p97 = scmp.eq.s32.totalorder %s14, 1
    %p98 = por %p96, %p97
    %p99 = scmp.ne.s32.totalorder %s88, %s89
    %p100 = scmp.eq.s32.totalorder %s14, 0
    %p101 = por %p99, %p100
    %p102 = scmp.ne.s32.totalorder %s88, %s89
    %p103 = scmp.eq.s32.totalorder %s15, 1
    %p104 = por %p102, %p103
    %p106 = scmp.ne.s32.totalorder %s89, %s105
    %p107 = scmp.eq.s32.totalorder %s15, 0
    %p108 = por %p106, %p107
    %s109 = ssub.s32 %s16, %s28
    %s110 = ssub.s32 %s17, %s24
    %s111 = sor.u32 %s109, %s110
    %p112 = scmp.eq.s32.totalorder %s111, 0
    %s114 = sadd.s32 %s113, 1
    %s115 = scalar_select %p112, %s113, %s114
    %p118 = pneg %p112
    %p119 = scmp.eq.s32.totalorder %s9, 1
    %p120 = por %p118, %p119
    %p121 = scmp.ne.s32.totalorder %s113, %s116
    %p122 = scmp.eq.s32.totalorder %s9, 0
    %p123 = por %p121, %p122
    %p124 = scmp.ne.s32.totalorder %s113, %s116
    %p125 = scmp.eq.s32.totalorder %s14, 1
    %p126 = por %p124, %p125
    %p127 = scmp.ne.s32.totalorder %s116, %s117
    %p128 = scmp.eq.s32.totalorder %s14, 0
    %p129 = por %p127, %p128
    %p130 = scmp.ne.s32.totalorder %s116, %s117
    %p131 = scmp.eq.s32.totalorder %s15, 1
    %p132 = por %p130, %p131
    %p134 = scmp.ne.s32.totalorder %s117, %s133
    %p135 = scmp.eq.s32.totalorder %s15, 0
    %p136 = por %p134, %p135
    %p137 = scmp.le.s32.totalorder 1, %s9
    %p138 = scmp.lt.s32.totalorder %s9, 3
    %p139 = pnand %p137, %p138
    %p140 = pneg %p139
    // Predicated region
    $region9: #{elmo_layer_forward.6} parent=5 // pred_check
      _
    $region10: #{elmo_layer_forward.6} parent=5 // pred_check_branch
      %142 = sbr.rel (%p139) target = $region12
    $region11: #{elmo_layer_forward.6} parent=5 // pred_region
      %s143 = ssub.s32 %s9, 1
    $region12: #{elmo_layer_forward.6} parent=5 // pred_fallthru
      _
    %p144 = scmp.lt.s32.totalorder %s9, 2
    // Predicated region
    $region13: #{elmo_layer_forward.6} parent=5 // pred_check
      %p145 = pneg %p144
    $region14: #{elmo_layer_forward.6} parent=5 // pred_check_branch
      %147 = sbr.rel (%p145) target = $region16
    $region15: #{elmo_layer_forward.6} parent=5 // pred_region
      // Predicated region
      $region17: #{elmo_layer_forward.6} parent=15 // pred_check
        %p148 = pneg %p43
      $region18: #{elmo_layer_forward.6} parent=15 // pred_check_branch
        %150 = sbr.rel (%p148) target = $region20
      $region19: #{elmo_layer_forward.6} parent=15 // pred_region
        %s151 = smul.u32 2, %s17
        %p152 = scmp.lt.s32.totalorder %s16, 1
        %s153 = scalar_select %p152, %s16, 1
        %p154 = scmp.lt.s32.totalorder %s151, 1
        %s155 = scalar_select %p154, %s151, 1
        %s156 = smul.addr %s153, 2
        %s157 = sadd.s32 %s155, %s156
        %s158 = smul.addr %s157, 8
        %s159 = scalar_lea.vmem %s0, %s158
        %s160 = smul.u32 2, %s17
      $region20: #{elmo_layer_forward.6} parent=15 // pred_fallthru
        _
      // Predicated region
      $region21: #{elmo_layer_forward.6} parent=15 // pred_check
        %p161 = pneg %p69
      $region22: #{elmo_layer_forward.6} parent=15 // pred_check_branch
        %163 = sbr.rel (%p161) target = $region24
      $region23: #{elmo_layer_forward.6} parent=15 // pred_region
        %p164 = scmp.lt.s32.totalorder %s16, 1
        %s165 = scalar_select %p164, %s16, 1
        %s166 = smul.addr %s165, 128
        %s167 = smul.addr %s166, 4
        %s168 = scalar_lea.vmem %s1, %s167
      $region24: #{elmo_layer_forward.6} parent=15 // pred_fallthru
        _
      // Predicated region
      $region25: #{elmo_layer_forward.6} parent=15 // pred_check
        %p169 = pneg %p95
      $region26: #{elmo_layer_forward.6} parent=15 // pred_check_branch
        %171 = sbr.rel (%p169) target = $region28
      $region27: #{elmo_layer_forward.6} parent=15 // pred_region
        %p172 = scmp.lt.s32.totalorder %s16, 1
        %s173 = scalar_select %p172, %s16, 1
        %s174 = smul.addr %s173, 8
        %s175 = scalar_lea.vmem %s2, %s174
      $region28: #{elmo_layer_forward.6} parent=15 // pred_fallthru
        _
    $region16: #{elmo_layer_forward.6} parent=5 // pred_fallthru
      _
    %p176 = scmp.le.s32.totalorder 1, %s9
    %p177 = scmp.lt.s32.totalorder %s9, 3
    %p178 = pnand %p176, %p177
    %p179 = pneg %p178
    // Predicated region
    $region29: #{elmo_layer_forward.6} parent=5 // pred_check
      _
    $region30: #{elmo_layer_forward.6} parent=5 // pred_check_branch
      %181 = sbr.rel (%p178) target = $region32
    $region31: #{elmo_layer_forward.6} parent=5 // pred_region
      %s182 = ssub.s32 %s9, 1
      %s183 = smul.u32 2, %s19
      %p184 = scmp.lt.s32.totalorder %s18, 1
      %s185 = scalar_select %p184, %s18, 1
      %p186 = scmp.lt.s32.totalorder %s183, 1
      %s187 = scalar_select %p186, %s183, 1
      %s188 = smul.addr %s185, 2
      %s189 = sadd.s32 %s187, %s188
      %s190 = smul.addr %s189, 8
      %s191 = scalar_lea.vmem %s0, %s190
      %p192 = pneg %p49
      %p193 = pneg %p46
      %p194 = scmp.lt.s32.totalorder %s18, 1
      %s195 = scalar_select %p194, %s18, 1
      %s196 = smul.addr %s195, 128
      %s197 = smul.addr %s196, 4
      %s198 = scalar_lea.vmem %s1, %s197
      %p199 = pneg %p75
      %p200 = pneg %p72
      %p201 = scmp.lt.s32.totalorder %s18, 1
      %s202 = scalar_select %p201, %s18, 1
      %s203 = smul.addr %s202, 8
      %s204 = scalar_lea.vmem %s2, %s203
      %p205 = pneg %p101
      %p206 = pneg %p98
      %p207 = pneg %p129
      %p208 = pneg %p126
      %s209 = smul.u32 2, %s19
      %p210 = scmp.lt.s32.totalorder %s18, 1
      %s211 = scalar_select %p210, %s18, 1
      %p212 = scmp.lt.s32.totalorder %s209, 1
      %s213 = scalar_select %p212, %s209, 1
      %s214 = smul.addr %s213, 8
      %s215 = smul.addr %s211, 16
      %s216 = sadd.s32 %s214, %s215
      %s217 = smul.addr %s216, 8
      %s218 = scalar_lea.vmem %s3, %s217
      %s219 = smul.u32 2, %s19
      %p220 = scmp.lt.s32.totalorder %s18, 1
      %s221 = scalar_select %p220, %s18, 1
      %p222 = scmp.lt.s32.totalorder %s219, 1
      %s223 = scalar_select %p222, %s219, 1
      %s224 = smul.addr %s221, 2
      %s225 = sadd.s32 %s223, %s224
      %s226 = smul.addr %s225, 8
      %s227 = scalar_lea.vmem %s0, %s226
      %s228 = smul.u32 2, %s19
      %p229 = scmp.lt.s32.totalorder %s18, 1
      %s230 = scalar_select %p229, %s18, 1
      %s231 = smul.addr %s230, 128
      %s232 = smul.addr %s231, 4
      %s233 = scalar_lea.vmem %s1, %s232
      %p234 = scmp.lt.s32.totalorder %s18, 1
      %s235 = scalar_select %p234, %s18, 1
      %s236 = smul.addr %s235, 8
      %s237 = scalar_lea.vmem %s2, %s236
      %s238 = smul.u32 2, %s19
      %p239 = scmp.lt.s32.totalorder %s18, 1
      %s240 = scalar_select %p239, %s18, 1
      %p241 = scmp.lt.s32.totalorder %s238, 1
      %s242 = scalar_select %p241, %s238, 1
      %s243 = smul.addr %s242, 8
      %s244 = smul.addr %s240, 16
      %s245 = sadd.s32 %s243, %s244
      %s246 = smul.addr %s245, 8
      %s247 = scalar_lea.vmem %s3, %s246
      %s248 = smul.u32 2, %s19
      %v249 = vld [vmem:[%s227] sm:$0xff]
      %v250 = vld [vmem:[%s227 + $0x8] sm:$0xff]
      %v251 = vpack.c.bf16 %v250, %v249
      %v252 = vld [vmem:[%s233] sm:$0xff]
      %v253 = vld [vmem:[%s233 + $0x8] sm:$0xff]
      %v254 = vld [vmem:[%s233 + $0x10] sm:$0xff]
      %v255 = vld [vmem:[%s233 + $0x18] sm:$0xff]
      %v256 = vld [vmem:[%s233 + $0x20] sm:$0xff]
      %v257 = vld [vmem:[%s233 + $0x28] sm:$0xff]
      %v258 = vld [vmem:[%s233 + $0x30] sm:$0xff]
      %v259 = vld [vmem:[%s233 + $0x38] sm:$0xff]
      %v260 = vld [vmem:[%s233 + $0x40] sm:$0xff]
      %v261 = vld [vmem:[%s233 + $0x48] sm:$0xff]
      %v262 = vld [vmem:[%s233 + $0x50] sm:$0xff]
      %v263 = vld [vmem:[%s233 + $0x58] sm:$0xff]
      %v264 = vld [vmem:[%s233 + $0x60] sm:$0xff]
      %v265 = vld [vmem:[%s233 + $0x68] sm:$0xff]
      %v266 = vld [vmem:[%s233 + $0x70] sm:$0xff]
      %v267 = vld [vmem:[%s233 + $0x78] sm:$0xff]
      %v268 = vld [vmem:[%s233 + $0x80] sm:$0xff]
      %v269 = vld [vmem:[%s233 + $0x88] sm:$0xff]
      %v270 = vld [vmem:[%s233 + $0x90] sm:$0xff]
      %v271 = vld [vmem:[%s233 + $0x98] sm:$0xff]
      %v272 = vld [vmem:[%s233 + $0xa0] sm:$0xff]
      %v273 = vld [vmem:[%s233 + $0xa8] sm:$0xff]
      %v274 = vld [vmem:[%s233 + $0xb0] sm:$0xff]
      %v275 = vld [vmem:[%s233 + $0xb8] sm:$0xff]
      %v276 = vld [vmem:[%s233 + $0xc0] sm:$0xff]
      %v277 = vld [vmem:[%s233 + $0xc8] sm:$0xff]
      %v278 = vld [vmem:[%s233 + $0xd0] sm:$0xff]
      %v279 = vld [vmem:[%s233 + $0xd8] sm:$0xff]
      %v280 = vld [vmem:[%s233 + $0xe0] sm:$0xff]
      %v281 = vld [vmem:[%s233 + $0xe8] sm:$0xff]
      %v282 = vld [vmem:[%s233 + $0xf0] sm:$0xff]
      %v283 = vld [vmem:[%s233 + $0xf8] sm:$0xff]
      %v284 = vld [vmem:[%s233 + $0x100] sm:$0xff]
      %v285 = vld [vmem:[%s233 + $0x108] sm:$0xff]
      %v286 = vld [vmem:[%s233 + $0x110] sm:$0xff]
      %v287 = vld [vmem:[%s233 + $0x118] sm:$0xff]
      %v288 = vld [vmem:[%s233 + $0x120] sm:$0xff]
      %v289 = vld [vmem:[%s233 + $0x128] sm:$0xff]
      %v290 = vld [vmem:[%s233 + $0x130] sm:$0xff]
      %v291 = vld [vmem:[%s233 + $0x138] sm:$0xff]
      %v292 = vld [vmem:[%s233 + $0x140] sm:$0xff]
      %v293 = vld [vmem:[%s233 + $0x148] sm:$0xff]
      %v294 = vld [vmem:[%s233 + $0x150] sm:$0xff]
      %v295 = vld [vmem:[%s233 + $0x158] sm:$0xff]
      %v296 = vld [vmem:[%s233 + $0x160] sm:$0xff]
      %v297 = vld [vmem:[%s233 + $0x168] sm:$0xff]
      %v298 = vld [vmem:[%s233 + $0x170] sm:$0xff]
      %v299 = vld [vmem:[%s233 + $0x178] sm:$0xff]
      %v300 = vld [vmem:[%s233 + $0x180] sm:$0xff]
      %v301 = vld [vmem:[%s233 + $0x188] sm:$0xff]
      %v302 = vld [vmem:[%s233 + $0x190] sm:$0xff]
      %v303 = vld [vmem:[%s233 + $0x198] sm:$0xff]
      %v304 = vld [vmem:[%s233 + $0x1a0] sm:$0xff]
      %v305 = vld [vmem:[%s233 + $0x1a8] sm:$0xff]
      %v306 = vld [vmem:[%s233 + $0x1b0] sm:$0xff]
      %v307 = vld [vmem:[%s233 + $0x1b8] sm:$0xff]
      %v308 = vld [vmem:[%s233 + $0x1c0] sm:$0xff]
      %v309 = vld [vmem:[%s233 + $0x1c8] sm:$0xff]
      %v310 = vld [vmem:[%s233 + $0x1d0] sm:$0xff]
      %v311 = vld [vmem:[%s233 + $0x1d8] sm:$0xff]
      %v312 = vld [vmem:[%s233 + $0x1e0] sm:$0xff]
      %v313 = vld [vmem:[%s233 + $0x1e8] sm:$0xff]
      %v314 = vld [vmem:[%s233 + $0x1f0] sm:$0xff]
      %v315 = vld [vmem:[%s233 + $0x1f8] sm:$0xff]
      %v316 = vld [vmem:[%s237] sm:$0xff]
      %v318 = vperm.slane %v316, 0
      %v319 = vperm.slane %v316, 1
      %v320 = vperm.slane %v316, 2
      %v321 = vperm.slane %v316, 3
      %v322 = vperm.slane %v316, 4
      %v323 = vperm.slane %v316, 5
      %v324 = vperm.slane %v316, 6
      %v325 = vperm.slane %v316, 7
      %v398 = vunpack.c.l.b16 %v252
      %v399 = vunpack.c.h.b16 %v252
      %v400 = vunpack.c.l.b16 %v253
      %v401 = vunpack.c.h.b16 %v253
      %v402 = vunpack.c.l.b16 %v254
      %v403 = vunpack.c.h.b16 %v254
      %v404 = vunpack.c.l.b16 %v255
      %v405 = vunpack.c.h.b16 %v255
      %v406 = vunpack.c.l.b16 %v256
      %v407 = vunpack.c.h.b16 %v256
      %v408 = vunpack.c.l.b16 %v257
      %v409 = vunpack.c.h.b16 %v257
      %v410 = vunpack.c.l.b16 %v258
      %v411 = vunpack.c.h.b16 %v258
      %v412 = vunpack.c.l.b16 %v259
      %v413 = vunpack.c.h.b16 %v259
      %v414 = vunpack.c.l.b16 %v260
      %v415 = vunpack.c.h.b16 %v260
      %v416 = vunpack.c.l.b16 %v261
      %v417 = vunpack.c.h.b16 %v261
      %v418 = vunpack.c.l.b16 %v262
      %v419 = vunpack.c.h.b16 %v262
      %v420 = vunpack.c.l.b16 %v263
      %v421 = vunpack.c.h.b16 %v263
      %v422 = vunpack.c.l.b16 %v264
      %v423 = vunpack.c.h.b16 %v264
      %v424 = vunpack.c.l.b16 %v265
      %v425 = vunpack.c.h.b16 %v265
      %v426 = vunpack.c.l.b16 %v266
      %v427 = vunpack.c.h.b16 %v266
      %v428 = vunpack.c.l.b16 %v267
      %v429 = vunpack.c.h.b16 %v267
      %v430 = vunpack.c.l.b16 %v268
      %v431 = vunpack.c.h.b16 %v268
      %v432 = vunpack.c.l.b16 %v269
      %v433 = vunpack.c.h.b16 %v269
      %v434 = vunpack.c.l.b16 %v270
      %v435 = vunpack.c.h.b16 %v270
      %v436 = vunpack.c.l.b16 %v271
      %v437 = vunpack.c.h.b16 %v271
      %v438 = vunpack.c.l.b16 %v272
      %v439 = vunpack.c.h.b16 %v272
      %v440 = vunpack.c.l.b16 %v273
      %v441 = vunpack.c.h.b16 %v273
      %v442 = vunpack.c.l.b16 %v274
      %v443 = vunpack.c.h.b16 %v274
      %v444 = vunpack.c.l.b16 %v275
      %v445 = vunpack.c.h.b16 %v275
      %v446 = vunpack.c.l.b16 %v276
      %v447 = vunpack.c.h.b16 %v276
      %v448 = vunpack.c.l.b16 %v277
      %v449 = vunpack.c.h.b16 %v277
      %v450 = vunpack.c.l.b16 %v278
      %v451 = vunpack.c.h.b16 %v278
      %v452 = vunpack.c.l.b16 %v279
      %v453 = vunpack.c.h.b16 %v279
      %v454 = vunpack.c.l.b16 %v280
      %v455 = vunpack.c.h.b16 %v280
      %v456 = vunpack.c.l.b16 %v281
      %v457 = vunpack.c.h.b16 %v281
      %v458 = vunpack.c.l.b16 %v282
      %v459 = vunpack.c.h.b16 %v282
      %v460 = vunpack.c.l.b16 %v283
      %v461 = vunpack.c.h.b16 %v283
      %v462 = vunpack.c.l.b16 %v284
      %v463 = vunpack.c.h.b16 %v284
      %v464 = vunpack.c.l.b16 %v285
      %v465 = vunpack.c.h.b16 %v285
      %v466 = vunpack.c.l.b16 %v286
      %v467 = vunpack.c.h.b16 %v286
      %v468 = vunpack.c.l.b16 %v287
      %v469 = vunpack.c.h.b16 %v287
      %v470 = vunpack.c.l.b16 %v288
      %v471 = vunpack.c.h.b16 %v288
      %v472 = vunpack.c.l.b16 %v289
      %v473 = vunpack.c.h.b16 %v289
      %v474 = vunpack.c.l.b16 %v290
      %v475 = vunpack.c.h.b16 %v290
      %v476 = vunpack.c.l.b16 %v291
      %v477 = vunpack.c.h.b16 %v291
      %v478 = vunpack.c.l.b16 %v292
      %v479 = vunpack.c.h.b16 %v292
      %v480 = vunpack.c.l.b16 %v293
      %v481 = vunpack.c.h.b16 %v293
      %v482 = vunpack.c.l.b16 %v294
      %v483 = vunpack.c.h.b16 %v294
      %v484 = vunpack.c.l.b16 %v295
      %v485 = vunpack.c.h.b16 %v295
      %v486 = vunpack.c.l.b16 %v296
      %v487 = vunpack.c.h.b16 %v296
      %v488 = vunpack.c.l.b16 %v297
      %v489 = vunpack.c.h.b16 %v297
      %v490 = vunpack.c.l.b16 %v298
      %v491 = vunpack.c.h.b16 %v298
      %v492 = vunpack.c.l.b16 %v299
      %v493 = vunpack.c.h.b16 %v299
      %v494 = vunpack.c.l.b16 %v300
      %v495 = vunpack.c.h.b16 %v300
      %v496 = vunpack.c.l.b16 %v301
      %v497 = vunpack.c.h.b16 %v301
      %v498 = vunpack.c.l.b16 %v302
      %v499 = vunpack.c.h.b16 %v302
      %v500 = vunpack.c.l.b16 %v303
      %v501 = vunpack.c.h.b16 %v303
      %v502 = vunpack.c.l.b16 %v304
      %v503 = vunpack.c.h.b16 %v304
      %v504 = vunpack.c.l.b16 %v305
      %v505 = vunpack.c.h.b16 %v305
      %v506 = vunpack.c.l.b16 %v306
      %v507 = vunpack.c.h.b16 %v306
      %v508 = vunpack.c.l.b16 %v307
      %v509 = vunpack.c.h.b16 %v307
      %v510 = vunpack.c.l.b16 %v308
      %v511 = vunpack.c.h.b16 %v308
      %v512 = vunpack.c.l.b16 %v309
      %v513 = vunpack.c.h.b16 %v309
      %v514 = vunpack.c.l.b16 %v310
      %v515 = vunpack.c.h.b16 %v310
      %v516 = vunpack.c.l.b16 %v311
      %v517 = vunpack.c.h.b16 %v311
      %v518 = vunpack.c.l.b16 %v312
      %v519 = vunpack.c.h.b16 %v312
      %v520 = vunpack.c.l.b16 %v313
      %v521 = vunpack.c.h.b16 %v313
      %v522 = vunpack.c.l.b16 %v314
      %v523 = vunpack.c.h.b16 %v314
      %v524 = vunpack.c.l.b16 %v315
      %v525 = vunpack.c.h.b16 %v315
      %v526 = vpack.c.b16 %v406, %v398
      %v527 = vpack.c.b16 %v407, %v399
      %v528 = vpack.c.b16 %v408, %v400
      %v529 = vpack.c.b16 %v409, %v401
      %v530 = vpack.c.b16 %v410, %v402
      %v531 = vpack.c.b16 %v411, %v403
      %v532 = vpack.c.b16 %v412, %v404
      %v533 = vpack.c.b16 %v413, %v405
      %v534 = vpack.c.b16 %v422, %v414
      %v535 = vpack.c.b16 %v423, %v415
      %v536 = vpack.c.b16 %v424, %v416
      %v537 = vpack.c.b16 %v425, %v417
      %v538 = vpack.c.b16 %v426, %v418
      %v539 = vpack.c.b16 %v427, %v419
      %v540 = vpack.c.b16 %v428, %v420
      %v541 = vpack.c.b16 %v429, %v421
      %v542 = vpack.c.b16 %v438, %v430
      %v543 = vpack.c.b16 %v439, %v431
      %v544 = vpack.c.b16 %v440, %v432
      %v545 = vpack.c.b16 %v441, %v433
      %v546 = vpack.c.b16 %v442, %v434
      %v547 = vpack.c.b16 %v443, %v435
      %v548 = vpack.c.b16 %v444, %v436
      %v549 = vpack.c.b16 %v445, %v437
      %v550 = vpack.c.b16 %v454, %v446
      %v551 = vpack.c.b16 %v455, %v447
      %v552 = vpack.c.b16 %v456, %v448
      %v553 = vpack.c.b16 %v457, %v449
      %v554 = vpack.c.b16 %v458, %v450
      %v555 = vpack.c.b16 %v459, %v451
      %v556 = vpack.c.b16 %v460, %v452
      %v557 = vpack.c.b16 %v461, %v453
      %v558 = vpack.c.b16 %v470, %v462
      %v559 = vpack.c.b16 %v471, %v463
      %v560 = vpack.c.b16 %v472, %v464
      %v561 = vpack.c.b16 %v473, %v465
      %v562 = vpack.c.b16 %v474, %v466
      %v563 = vpack.c.b16 %v475, %v467
      %v564 = vpack.c.b16 %v476, %v468
      %v565 = vpack.c.b16 %v477, %v469
      %v566 = vpack.c.b16 %v486, %v478
      %v567 = vpack.c.b16 %v487, %v479
      %v568 = vpack.c.b16 %v488, %v480
      %v569 = vpack.c.b16 %v489, %v481
      %v570 = vpack.c.b16 %v490, %v482
      %v571 = vpack.c.b16 %v491, %v483
      %v572 = vpack.c.b16 %v492, %v484
      %v573 = vpack.c.b16 %v493, %v485
      %v574 = vpack.c.b16 %v502, %v494
      %v575 = vpack.c.b16 %v503, %v495
      %v576 = vpack.c.b16 %v504, %v496
      %v577 = vpack.c.b16 %v505, %v497
      %v578 = vpack.c.b16 %v506, %v498
      %v579 = vpack.c.b16 %v507, %v499
      %v580 = vpack.c.b16 %v508, %v500
      %v581 = vpack.c.b16 %v509, %v501
      %v582 = vpack.c.b16 %v518, %v510
      %v583 = vpack.c.b16 %v519, %v511
      %v584 = vpack.c.b16 %v520, %v512
      %v585 = vpack.c.b16 %v521, %v513
      %v586 = vpack.c.b16 %v522, %v514
      %v587 = vpack.c.b16 %v523, %v515
      %v588 = vpack.c.b16 %v524, %v516
      %v589 = vpack.c.b16 %v525, %v517
      %654 = vmatpush.bf16.msra.mxu0 %v582
      %655 = vmatpush.bf16.msra.mxu0 %v574
      %656 = vmatpush.bf16.msra.mxu0 %v566
      %657 = vmatpush.bf16.msra.mxu0 %v558
      %658 = vmatpush.bf16.msra.mxu0 %v550
      %659 = vmatpush.bf16.msra.mxu0 %v542
      %660 = vmatpush.bf16.msra.mxu0 %v534
      %661 = vmatpush.bf16.msra.mxu0 %v526
      %662 = vmatmul.bf16.gmra.mxu0 %v251
      %v663 = vpop.f32.mrf.mxu0
      %v664 = vadd.f32 %v318, %v663
      %v665 = vpop.f32.mrf.mxu0
      %v666 = vadd.f32 %v318, %v665
      %667 = vdwg.mxu0
      %668 = vmatpush.bf16.msra.mxu0 %v583
      %669 = vmatpush.bf16.msra.mxu0 %v575
      %670 = vmatpush.bf16.msra.mxu0 %v567
      %671 = vmatpush.bf16.msra.mxu0 %v559
      %672 = vmatpush.bf16.msra.mxu0 %v551
      %673 = vmatpush.bf16.msra.mxu0 %v543
      %674 = vmatpush.bf16.msra.mxu0 %v535
      %675 = vmatpush.bf16.msra.mxu0 %v527
      %676 = vmatmul.bf16.gmra.mxu0 %v251
      %v677 = vpop.f32.mrf.mxu0
      %v678 = vadd.f32 %v319, %v677
      %v679 = vpop.f32.mrf.mxu0
      %v680 = vadd.f32 %v319, %v679
      %681 = vdwg.mxu0
      %682 = vmatpush.bf16.msra.mxu0 %v584
      %683 = vmatpush.bf16.msra.mxu0 %v576
      %684 = vmatpush.bf16.msra.mxu0 %v568
      %685 = vmatpush.bf16.msra.mxu0 %v560
      %686 = vmatpush.bf16.msra.mxu0 %v552
      %687 = vmatpush.bf16.msra.mxu0 %v544
      %688 = vmatpush.bf16.msra.mxu0 %v536
      %689 = vmatpush.bf16.msra.mxu0 %v528
      %690 = vmatmul.bf16.gmra.mxu0 %v251
      %v691 = vpop.f32.mrf.mxu0
      %v692 = vadd.f32 %v320, %v691
      %v693 = vpop.f32.mrf.mxu0
      %v694 = vadd.f32 %v320, %v693
      %695 = vdwg.mxu0
      %696 = vmatpush.bf16.msra.mxu0 %v585
      %697 = vmatpush.bf16.msra.mxu0 %v577
      %698 = vmatpush.bf16.msra.mxu0 %v569
      %699 = vmatpush.bf16.msra.mxu0 %v561
      %700 = vmatpush.bf16.msra.mxu0 %v553
      %701 = vmatpush.bf16.msra.mxu0 %v545
      %702 = vmatpush.bf16.msra.mxu0 %v537
      %703 = vmatpush.bf16.msra.mxu0 %v529
      %704 = vmatmul.bf16.gmra.mxu0 %v251
      %v705 = vpop.f32.mrf.mxu0
      %v706 = vadd.f32 %v321, %v705
      %v707 = vpop.f32.mrf.mxu0
      %v708 = vadd.f32 %v321, %v707
      %709 = vdwg.mxu0
      %710 = vmatpush.bf16.msra.mxu0 %v586
      %711 = vmatpush.bf16.msra.mxu0 %v578
      %712 = vmatpush.bf16.msra.mxu0 %v570
      %713 = vmatpush.bf16.msra.mxu0 %v562
      %714 = vmatpush.bf16.msra.mxu0 %v554
      %715 = vmatpush.bf16.msra.mxu0 %v546
      %716 = vmatpush.bf16.msra.mxu0 %v538
      %717 = vmatpush.bf16.msra.mxu0 %v530
      %718 = vmatmul.bf16.gmra.mxu0 %v251
      %v719 = vpop.f32.mrf.mxu0
      %v720 = vadd.f32 %v322, %v719
      %v721 = vpop.f32.mrf.mxu0
      %v722 = vadd.f32 %v322, %v721
      %723 = vdwg.mxu0
      %724 = vmatpush.bf16.msra.mxu0 %v587
      %725 = vmatpush.bf16.msra.mxu0 %v579
      %726 = vmatpush.bf16.msra.mxu0 %v571
      %727 = vmatpush.bf16.msra.mxu0 %v563
      %728 = vmatpush.bf16.msra.mxu0 %v555
      %729 = vmatpush.bf16.msra.mxu0 %v547
      %730 = vmatpush.bf16.msra.mxu0 %v539
      %731 = vmatpush.bf16.msra.mxu0 %v531
      %732 = vmatmul.bf16.gmra.mxu0 %v251
      %v733 = vpop.f32.mrf.mxu0
      %v734 = vadd.f32 %v323, %v733
      %v735 = vpop.f32.mrf.mxu0
      %v736 = vadd.f32 %v323, %v735
      %737 = vdwg.mxu0
      %738 = vmatpush.bf16.msra.mxu0 %v588
      %739 = vmatpush.bf16.msra.mxu0 %v580
      %740 = vmatpush.bf16.msra.mxu0 %v572
      %741 = vmatpush.bf16.msra.mxu0 %v564
      %742 = vmatpush.bf16.msra.mxu0 %v556
      %743 = vmatpush.bf16.msra.mxu0 %v548
      %744 = vmatpush.bf16.msra.mxu0 %v540
      %745 = vmatpush.bf16.msra.mxu0 %v532
      %746 = vmatmul.bf16.gmra.mxu0 %v251
      %v747 = vpop.f32.mrf.mxu0
      %v748 = vadd.f32 %v324, %v747
      %v749 = vpop.f32.mrf.mxu0
      %v750 = vadd.f32 %v324, %v749
      %751 = vdwg.mxu0
      %752 = vmatpush.bf16.msra.mxu0 %v589
      %753 = vmatpush.bf16.msra.mxu0 %v581
      %754 = vmatpush.bf16.msra.mxu0 %v573
      %755 = vmatpush.bf16.msra.mxu0 %v565
      %756 = vmatpush.bf16.msra.mxu0 %v557
      %757 = vmatpush.bf16.msra.mxu0 %v549
      %758 = vmatpush.bf16.msra.mxu0 %v541
      %759 = vmatpush.bf16.msra.mxu0 %v533
      %760 = vmatmul.bf16.gmra.mxu0 %v251
      %v761 = vpop.f32.mrf.mxu0
      %v762 = vadd.f32 %v325, %v761
      %v763 = vpop.f32.mrf.mxu0
      %v764 = vadd.f32 %v325, %v763
      %765 = vdwg.mxu0
      %766 = vst [vmem:[%s247] sm:$0xff] %v664
      %767 = vst [vmem:[%s247 + $0x8] sm:$0xff] %v678
      %768 = vst [vmem:[%s247 + $0x10] sm:$0xff] %v692
      %769 = vst [vmem:[%s247 + $0x18] sm:$0xff] %v706
      %770 = vst [vmem:[%s247 + $0x20] sm:$0xff] %v720
      %771 = vst [vmem:[%s247 + $0x28] sm:$0xff] %v734
      %772 = vst [vmem:[%s247 + $0x30] sm:$0xff] %v748
      %773 = vst [vmem:[%s247 + $0x38] sm:$0xff] %v762
      %774 = vst [vmem:[%s247 + $0x40] sm:$0xff] %v666
      %775 = vst [vmem:[%s247 + $0x48] sm:$0xff] %v680
      %776 = vst [vmem:[%s247 + $0x50] sm:$0xff] %v694
      %777 = vst [vmem:[%s247 + $0x58] sm:$0xff] %v708
      %778 = vst [vmem:[%s247 + $0x60] sm:$0xff] %v722
      %779 = vst [vmem:[%s247 + $0x68] sm:$0xff] %v736
      %780 = vst [vmem:[%s247 + $0x70] sm:$0xff] %v750
      %781 = vst [vmem:[%s247 + $0x78] sm:$0xff] %v764
      %s782 = smul.u32 2, %s19
      %p783 = scmp.lt.s32.totalorder %s18, 1
      %s784 = scalar_select %p783, %s18, 1
      %p785 = scmp.lt.s32.totalorder %s782, 1
      %s786 = scalar_select %p785, %s782, 1
      %s787 = smul.addr %s786, 8
      %s788 = smul.addr %s784, 16
      %s789 = sadd.s32 %s787, %s788
      %s790 = smul.addr %s789, 8
      %s791 = scalar_lea.vmem %s3, %s790
      // Predicated region
      $region33: #{elmo_layer_forward.6} parent=31 // pred_check
        %p792 = pneg %p126
      $region34: #{elmo_layer_forward.6} parent=31 // pred_check_branch
        %794 = sbr.rel (%p792) target = $region36
      $region35: #{elmo_layer_forward.6} parent=31 // pred_region
        %s795 = smul.u32 2, %s19
      $region36: #{elmo_layer_forward.6} parent=31 // pred_fallthru
        _
    $region32: #{elmo_layer_forward.6} parent=5 // pred_fallthru
      _
    %p796 = scmp.le.s32.totalorder 2, %s9
    // Predicated region
    $region37: #{elmo_layer_forward.6} parent=5 // pred_check
      %p797 = pneg %p796
    $region38: #{elmo_layer_forward.6} parent=5 // pred_check_branch
      %799 = sbr.rel (%p797) target = $region40
    $region39: #{elmo_layer_forward.6} parent=5 // pred_region
      %s800 = ssub.s32 %s9, 2
      // Predicated region
      $region41: #{elmo_layer_forward.6} parent=39 // pred_check
        %p801 = pneg %p132
      $region42: #{elmo_layer_forward.6} parent=39 // pred_check_branch
        %803 = sbr.rel (%p801) target = $region44
      $region43: #{elmo_layer_forward.6} parent=39 // pred_region
        %s804 = smul.u32 2, %s21
        %p805 = scmp.lt.s32.totalorder %s20, 1
        %s806 = scalar_select %p805, %s20, 1
        %p807 = scmp.lt.s32.totalorder %s804, 1
        %s808 = scalar_select %p807, %s804, 1
        %s809 = smul.addr %s808, 8
        %s810 = smul.addr %s806, 16
        %s811 = sadd.s32 %s809, %s810
        %s812 = smul.addr %s811, 8
        %s813 = scalar_lea.vmem %s3, %s812
      $region44: #{elmo_layer_forward.6} parent=39 // pred_fallthru
        _
    $region40: #{elmo_layer_forward.6} parent=5 // pred_fallthru
      _
  $region6: #{elmo_layer_forward.6} parent=0 // loop_footer
    %s13 = sadd.s32 1, %s9
  $region7: #{elmo_layer_forward.6} parent=0 // loop_footer_branch
    %8 = sbr.rel target = $region3
  $region8: #{elmo_layer_forward.6} parent=0 // loop_exit
    _

// kernel: elmo_layer_forward.7
$region0: #{elmo_layer_forward.7}
  #allocation0 [shape = 'u32[]', space=smem, size = 0x4, offset = 0x4, fixed_abs, tag = 'smem constant byte address 0x4 - core index']
  #allocation1 [shape = 'u32[72,128]{1,0:T(1,128)}', space=vmem, size = 0x9000, scoped, tag = 'internal scratch']
  #allocation2 [shape = 'f32[2,128]{1,0:T(2,128)}', space=vmem, size = 0x400, scoped, tag = 'scratch operand']
  #allocation3 [shape = 'f32[2,256]{1,0:T(2,128)}', space=vmem, size = 0x800, scoped, tag = 'scratch operand']
  %s0 = inlined_call_operand.vmem [shape: f32[2,8,2,1024], index: 0, kind: input, shape index: {}]
  %s1 = inlined_call_operand.vmem [shape: bf16[2,128,1024], index: 1, kind: input, shape index: {}]
  %s2 = inlined_call_operand.vmem [shape: bf16[2,256,128], index: 2, kind: input, shape index: {}]
  %s3 = inlined_call_operand.vmem [shape: f32[2,8,2,128], index: 3, kind: output, shape index: {}]
  %s4 = sld [smem:[#allocation0]]
  $region49: #{elmo_layer_forward.7} parent=0
    _
  %s6 = ssub.s32 1, %s4
  %s7 = scalar_select 0, %s6, %s4
  loop: start=0, step=1, limit=18
  $region2: #{elmo_layer_forward.7} parent=0 // loop_pre_header
    _
  $region3: #{elmo_layer_forward.7} parent=0 // loop_header
    %s9 = sphi 0, %s13
    %p10 = scmp.ge.s32.totalorder %s9, 18
    %s16 = sphi 0, %s28
    %s17 = sphi 0, %s24
    %s18 = sphi 0, %s16
    %s19 = sphi 0, %s17
    %s20 = sphi 0, %s18
    %s21 = sphi 0, %s19
    %s33 = sphi 0, %s35
    %s36 = sphi 0, %s33
    %s37 = sphi 0, %s36
    %s53 = sphi 0, %s37
    %s59 = sphi 0, %s61
    %s62 = sphi 0, %s59
    %s63 = sphi 0, %s62
    %s79 = sphi 0, %s63
    %s85 = sphi 0, %s87
    %s88 = sphi 0, %s85
    %s89 = sphi 0, %s88
    %s105 = sphi 0, %s89
    %s113 = sphi 0, %s115
    %s116 = sphi 0, %s113
    %s117 = sphi 0, %s116
    %s133 = sphi 0, %s117
  $region4: #{elmo_layer_forward.7} parent=0 // loop_header_branch
    %12 = sbr.rel (%p10) target = $region8
  $region5: #{elmo_layer_forward.7} parent=0 // loop_body
    %s14 = ssub.s32 %s9, 1
    %s15 = ssub.s32 %s9, 2
    %s22 = sadd.s32 1, %s17
    %p23 = scmp.ge.s32.totalorder %s22, 8
    %s24 = scalar_select %p23, 0, %s22
    %s25 = sadd.s32 1, %s16
    %s26 = scalar_select %p23, %s25, %s16
    %p27 = scmp.ge.s32.totalorder %s26, 2
    %s28 = scalar_select %p27, 0, %s26
    %s29 = ssub.s32 %s16, %s28
    %s30 = ssub.s32 %s17, %s24
    %s31 = sor.u32 %s29, %s30
    %p32 = scmp.eq.s32.totalorder %s31, 0
    %s34 = sadd.s32 %s33, 1
    %s35 = scalar_select %p32, %s33, %s34
    %p38 = pneg %p32
    %p39 = scmp.eq.s32.totalorder %s9, 15
    %p40 = por %p38, %p39
    %p41 = scmp.ne.s32.totalorder %s33, %s36
    %p42 = scmp.eq.s32.totalorder %s9, 0
    %p43 = por %p41, %p42
    %p44 = scmp.ne.s32.totalorder %s33, %s36
    %p45 = scmp.eq.s32.totalorder %s14, 15
    %p46 = por %p44, %p45
    %p47 = scmp.ne.s32.totalorder %s36, %s37
    %p48 = scmp.eq.s32.totalorder %s14, 0
    %p49 = por %p47, %p48
    %p50 = scmp.ne.s32.totalorder %s36, %s37
    %p51 = scmp.eq.s32.totalorder %s15, 15
    %p52 = por %p50, %p51
    %p54 = scmp.ne.s32.totalorder %s37, %s53
    %p55 = scmp.eq.s32.totalorder %s15, 0
    %p56 = por %p54, %p55
    %s57 = ssub.s32 %s16, %s28
    %p58 = scmp.eq.s32.totalorder %s57, 0
    %s60 = sadd.s32 %s59, 1
    %s61 = scalar_select %p58, %s59, %s60
    %p64 = pneg %p58
    %p65 = scmp.eq.s32.totalorder %s9, 15
    %p66 = por %p64, %p65
    %p67 = scmp.ne.s32.totalorder %s59, %s62
    %p68 = scmp.eq.s32.totalorder %s9, 0
    %p69 = por %p67, %p68
    %p70 = scmp.ne.s32.totalorder %s59, %s62
    %p71 = scmp.eq.s32.totalorder %s14, 15
    %p72 = por %p70, %p71
    %p73 = scmp.ne.s32.totalorder %s62, %s63
    %p74 = scmp.eq.s32.totalorder %s14, 0
    %p75 = por %p73, %p74
    %p76 = scmp.ne.s32.totalorder %s62, %s63
    %p77 = scmp.eq.s32.totalorder %s15, 15
    %p78 = por %p76, %p77
    %p80 = scmp.ne.s32.totalorder %s63, %s79
    %p81 = scmp.eq.s32.totalorder %s15, 0
    %p82 = por %p80, %p81
    %s83 = ssub.s32 %s16, %s28
    %p84 = scmp.eq.s32.totalorder %s83, 0
    %s86 = sadd.s32 %s85, 1
    %s87 = scalar_select %p84, %s85, %s86
    %p90 = pneg %p84
    %p91 = scmp.eq.s32.totalorder %s9, 15
    %p92 = por %p90, %p91
    %p93 = scmp.ne.s32.totalorder %s85, %s88
    %p94 = scmp.eq.s32.totalorder %s9, 0
    %p95 = por %p93, %p94
    %p96 = scmp.ne.s32.totalorder %s85, %s88
    %p97 = scmp.eq.s32.totalorder %s14, 15
    %p98 = por %p96, %p97
    %p99 = scmp.ne.s32.totalorder %s88, %s89
    %p100 = scmp.eq.s32.totalorder %s14, 0
    %p101 = por %p99, %p100
    %p102 = scmp.ne.s32.totalorder %s88, %s89
    %p103 = scmp.eq.s32.totalorder %s15, 15
    %p104 = por %p102, %p103
    %p106 = scmp.ne.s32.totalorder %s89, %s105
    %p107 = scmp.eq.s32.totalorder %s15, 0
    %p108 = por %p106, %p107
    %s109 = ssub.s32 %s16, %s28
    %s110 = ssub.s32 %s17, %s24
    %s111 = sor.u32 %s109, %s110
    %p112 = scmp.eq.s32.totalorder %s111, 0
    %s114 = sadd.s32 %s113, 1
    %s115 = scalar_select %p112, %s113, %s114
    %p118 = pneg %p112
    %p119 = scmp.eq.s32.totalorder %s9, 15
    %p120 = por %p118, %p119
    %p121 = scmp.ne.s32.totalorder %s113, %s116
    %p122 = scmp.eq.s32.totalorder %s9, 0
    %p123 = por %p121, %p122
    %p124 = scmp.ne.s32.totalorder %s113, %s116
    %p125 = scmp.eq.s32.totalorder %s14, 15
    %p126 = por %p124, %p125
    %p127 = scmp.ne.s32.totalorder %s116, %s117
    %p128 = scmp.eq.s32.totalorder %s14, 0
    %p129 = por %p127, %p128
    %p130 = scmp.ne.s32.totalorder %s116, %s117
    %p131 = scmp.eq.s32.totalorder %s15, 15
    %p132 = por %p130, %p131
    %p134 = scmp.ne.s32.totalorder %s117, %s133
    %p135 = scmp.eq.s32.totalorder %s15, 0
    %p136 = por %p134, %p135
    %p137 = scmp.le.s32.totalorder 1, %s9
    %p138 = scmp.lt.s32.totalorder %s9, 17
    %p139 = pnand %p137, %p138
    %p140 = pneg %p139
    // Predicated region
    $region9: #{elmo_layer_forward.7} parent=5 // pred_check
      _
    $region10: #{elmo_layer_forward.7} parent=5 // pred_check_branch
      %142 = sbr.rel (%p139) target = $region12
    $region11: #{elmo_layer_forward.7} parent=5 // pred_region
      %s143 = ssub.s32 %s9, 1
    $region12: #{elmo_layer_forward.7} parent=5 // pred_fallthru
      _
    %p144 = scmp.lt.s32.totalorder %s9, 16
    // Predicated region
    $region13: #{elmo_layer_forward.7} parent=5 // pred_check
      %p145 = pneg %p144
    $region14: #{elmo_layer_forward.7} parent=5 // pred_check_branch
      %147 = sbr.rel (%p145) target = $region16
    $region15: #{elmo_layer_forward.7} parent=5 // pred_region
      // Predicated region
      $region17: #{elmo_layer_forward.7} parent=15 // pred_check
        %p148 = pneg %p43
      $region18: #{elmo_layer_forward.7} parent=15 // pred_check_branch
        %150 = sbr.rel (%p148) target = $region20
      $region19: #{elmo_layer_forward.7} parent=15 // pred_region
        %p151 = scmp.lt.s32.totalorder %s16, 1
        %s152 = scalar_select %p151, %s16, 1
        %p153 = scmp.lt.s32.totalorder %s17, 7
        %s154 = scalar_select %p153, %s17, 7
        %s155 = smul.addr %s154, 8
        %s156 = smul.addr %s152, 64
        %s157 = sadd.s32 %s155, %s156
        %s158 = smul.addr %s157, 2
        %s159 = scalar_lea.vmem %s0, %s158
      $region20: #{elmo_layer_forward.7} parent=15 // pred_fallthru
        _
      // Predicated region
      $region21: #{elmo_layer_forward.7} parent=15 // pred_check
        %p160 = pneg %p69
      $region22: #{elmo_layer_forward.7} parent=15 // pred_check_branch
        %162 = sbr.rel (%p160) target = $region24
      $region23: #{elmo_layer_forward.7} parent=15 // pred_region
        %p163 = scmp.lt.s32.totalorder %s16, 1
        %s164 = scalar_select %p163, %s16, 1
        %s165 = smul.addr %s164, 128
        %s166 = smul.addr %s165, 4
        %s167 = scalar_lea.vmem %s1, %s166
      $region24: #{elmo_layer_forward.7} parent=15 // pred_fallthru
        _
      // Predicated region
      $region25: #{elmo_layer_forward.7} parent=15 // pred_check
        %p168 = pneg %p95
      $region26: #{elmo_layer_forward.7} parent=15 // pred_check_branch
        %170 = sbr.rel (%p168) target = $region28
      $region27: #{elmo_layer_forward.7} parent=15 // pred_region
        %p171 = scmp.lt.s32.totalorder %s16, 1
        %s172 = scalar_select %p171, %s16, 1
        %s173 = smul.addr %s172, 32
        %s174 = smul.addr %s173, 4
        %s175 = scalar_lea.vmem %s2, %s174
      $region28: #{elmo_layer_forward.7} parent=15 // pred_fallthru
        _
    $region16: #{elmo_layer_forward.7} parent=5 // pred_fallthru
      _
    %p176 = scmp.le.s32.totalorder 1, %s9
    %p177 = scmp.lt.s32.totalorder %s9, 17
    %p178 = pnand %p176, %p177
    %p179 = pneg %p178
    // Predicated region
    $region29: #{elmo_layer_forward.7} parent=5 // pred_check
      _
    $region30: #{elmo_layer_forward.7} parent=5 // pred_check_branch
      %181 = sbr.rel (%p178) target = $region32
    $region31: #{elmo_layer_forward.7} parent=5 // pred_region
      %s182 = ssub.s32 %s9, 1
      %p183 = scmp.lt.s32.totalorder %s18, 1
      %s184 = scalar_select %p183, %s18, 1
      %p185 = scmp.lt.s32.totalorder %s19, 7
      %s186 = scalar_select %p185, %s19, 7
      %s187 = smul.addr %s186, 8
      %s188 = smul.addr %s184, 64
      %s189 = sadd.s32 %s187, %s188
      %s190 = smul.addr %s189, 2
      %s191 = scalar_lea.vmem %s0, %s190
      %p192 = pneg %p49
      %p193 = pneg %p46
      %p194 = scmp.lt.s32.totalorder %s18, 1
      %s195 = scalar_select %p194, %s18, 1
      %s196 = smul.addr %s195, 128
      %s197 = smul.addr %s196, 4
      %s198 = scalar_lea.vmem %s1, %s197
      %p199 = pneg %p75
      %p200 = pneg %p72
      %p201 = scmp.lt.s32.totalorder %s18, 1
      %s202 = scalar_select %p201, %s18, 1
      %s203 = smul.addr %s202, 32
      %s204 = smul.addr %s203, 4
      %s205 = scalar_lea.vmem %s2, %s204
      %p206 = pneg %p101
      %p207 = pneg %p98
      %p208 = pneg %p129
      %p209 = pneg %p126
      %p210 = scmp.lt.s32.totalorder %s18, 1
      %s211 = scalar_select %p210, %s18, 1
      %p212 = scmp.lt.s32.totalorder %s19, 7
      %s213 = scalar_select %p212, %s19, 7
      %s214 = smul.addr %s211, 8
      %s215 = sadd.s32 %s213, %s214
      %s216 = smul.addr %s215, 2
      %s217 = scalar_lea.vmem %s3, %s216
      %p218 = scmp.lt.s32.totalorder %s18, 1
      %s219 = scalar_select %p218, %s18, 1
      %p220 = scmp.lt.s32.totalorder %s19, 7
      %s221 = scalar_select %p220, %s19, 7
      %s222 = smul.addr %s221, 8
      %s223 = smul.addr %s219, 64
      %s224 = sadd.s32 %s222, %s223
      %s225 = smul.addr %s224, 2
      %s226 = scalar_lea.vmem %s0, %s225
      %p227 = scmp.lt.s32.totalorder %s18, 1
      %s228 = scalar_select %p227, %s18, 1
      %s229 = smul.addr %s228, 128
      %s230 = smul.addr %s229, 4
      %s231 = scalar_lea.vmem %s1, %s230
      %p232 = scmp.lt.s32.totalorder %s18, 1
      %s233 = scalar_select %p232, %s18, 1
      %s234 = smul.addr %s233, 32
      %s235 = smul.addr %s234, 4
      %s236 = scalar_lea.vmem %s2, %s235
      %p237 = scmp.lt.s32.totalorder %s18, 1
      %s238 = scalar_select %p237, %s18, 1
      %p239 = scmp.lt.s32.totalorder %s19, 7
      %s240 = scalar_select %p239, %s19, 7
      %s241 = smul.addr %s238, 8
      %s242 = sadd.s32 %s240, %s241
      %s243 = smul.addr %s242, 2
      %s244 = scalar_lea.vmem %s3, %s243
      %p245 = scmp.eq.s32.totalorder %s19, 0
      // Predicated region
      $region33: #{elmo_layer_forward.7} parent=31 // pred_check
        %p246 = pneg %p245
      $region34: #{elmo_layer_forward.7} parent=31 // pred_check_branch
        %248 = sbr.rel (%p246) target = $region36
      $region35: #{elmo_layer_forward.7} parent=31 // pred_region
        %249 = vst [vmem:[#allocation2] sm:$0x3] 0.0
        %250 = vst [vmem:[#allocation3] sm:$0xf] 0.0
      $region36: #{elmo_layer_forward.7} parent=31 // pred_fallthru
        _
      %v251 = vld [vmem:[#allocation2] sm:$0x3]
      %v252 = vld [vmem:[#allocation3] sm:$0xf]
      %v253 = vld [vmem:[%s226] sm:$0xff]
      %v254 = vld [vmem:[%s226 + $0x8] sm:$0xff]
      %v255 = vpack.c.bf16 %v251, %v251
      %v256 = vld [vmem:[%s231] sm:$0xff]
      %v257 = vld [vmem:[%s231 + $0x8] sm:$0xff]
      %v258 = vld [vmem:[%s231 + $0x10] sm:$0xff]
      %v259 = vld [vmem:[%s231 + $0x18] sm:$0xff]
      %v260 = vld [vmem:[%s231 + $0x20] sm:$0xff]
      %v261 = vld [vmem:[%s231 + $0x28] sm:$0xff]
      %v262 = vld [vmem:[%s231 + $0x30] sm:$0xff]
      %v263 = vld [vmem:[%s231 + $0x38] sm:$0xff]
      %v264 = vld [vmem:[%s231 + $0x40] sm:$0xff]
      %v265 = vld [vmem:[%s231 + $0x48] sm:$0xff]
      %v266 = vld [vmem:[%s231 + $0x50] sm:$0xff]
      %v267 = vld [vmem:[%s231 + $0x58] sm:$0xff]
      %v268 = vld [vmem:[%s231 + $0x60] sm:$0xff]
      %v269 = vld [vmem:[%s231 + $0x68] sm:$0xff]
      %v270 = vld [vmem:[%s231 + $0x70] sm:$0xff]
      %v271 = vld [vmem:[%s231 + $0x78] sm:$0xff]
      %v272 = vld [vmem:[%s231 + $0x80] sm:$0xff]
      %v273 = vld [vmem:[%s231 + $0x88] sm:$0xff]
      %v274 = vld [vmem:[%s231 + $0x90] sm:$0xff]
      %v275 = vld [vmem:[%s231 + $0x98] sm:$0xff]
      %v276 = vld [vmem:[%s231 + $0xa0] sm:$0xff]
      %v277 = vld [vmem:[%s231 + $0xa8] sm:$0xff]
      %v278 = vld [vmem:[%s231 + $0xb0] sm:$0xff]
      %v279 = vld [vmem:[%s231 + $0xb8] sm:$0xff]
      %v280 = vld [vmem:[%s231 + $0xc0] sm:$0xff]
      %v281 = vld [vmem:[%s231 + $0xc8] sm:$0xff]
      %v282 = vld [vmem:[%s231 + $0xd0] sm:$0xff]
      %v283 = vld [vmem:[%s231 + $0xd8] sm:$0xff]
      %v284 = vld [vmem:[%s231 + $0xe0] sm:$0xff]
      %v285 = vld [vmem:[%s231 + $0xe8] sm:$0xff]
      %v286 = vld [vmem:[%s231 + $0xf0] sm:$0xff]
      %v287 = vld [vmem:[%s231 + $0xf8] sm:$0xff]
      %v288 = vld [vmem:[%s231 + $0x100] sm:$0xff]
      %v289 = vld [vmem:[%s231 + $0x108] sm:$0xff]
      %v290 = vld [vmem:[%s231 + $0x110] sm:$0xff]
      %v291 = vld [vmem:[%s231 + $0x118] sm:$0xff]
      %v292 = vld [vmem:[%s231 + $0x120] sm:$0xff]
      %v293 = vld [vmem:[%s231 + $0x128] sm:$0xff]
      %v294 = vld [vmem:[%s231 + $0x130] sm:$0xff]
      %v295 = vld [vmem:[%s231 + $0x138] sm:$0xff]
      %v296 = vld [vmem:[%s231 + $0x140] sm:$0xff]
      %v297 = vld [vmem:[%s231 + $0x148] sm:$0xff]
      %v298 = vld [vmem:[%s231 + $0x150] sm:$0xff]
      %v299 = vld [vmem:[%s231 + $0x158] sm:$0xff]
      %v300 = vld [vmem:[%s231 + $0x160] sm:$0xff]
      %v301 = vld [vmem:[%s231 + $0x168] sm:$0xff]
      %v302 = vld [vmem:[%s231 + $0x170] sm:$0xff]
      %v303 = vld [vmem:[%s231 + $0x178] sm:$0xff]
      %v304 = vld [vmem:[%s231 + $0x180] sm:$0xff]
      %v305 = vld [vmem:[%s231 + $0x188] sm:$0xff]
      %v306 = vld [vmem:[%s231 + $0x190] sm:$0xff]
      %v307 = vld [vmem:[%s231 + $0x198] sm:$0xff]
      %v308 = vld [vmem:[%s231 + $0x1a0] sm:$0xff]
      %v309 = vld [vmem:[%s231 + $0x1a8] sm:$0xff]
      %v310 = vld [vmem:[%s231 + $0x1b0] sm:$0xff]
      %v311 = vld [vmem:[%s231 + $0x1b8] sm:$0xff]
      %v312 = vld [vmem:[%s231 + $0x1c0] sm:$0xff]
      %v313 = vld [vmem:[%s231 + $0x1c8] sm:$0xff]
      %v314 = vld [vmem:[%s231 + $0x1d0] sm:$0xff]
      %v315 = vld [vmem:[%s231 + $0x1d8] sm:$0xff]
      %v316 = vld [vmem:[%s231 + $0x1e0] sm:$0xff]
      %v317 = vld [vmem:[%s231 + $0x1e8] sm:$0xff]
      %v318 = vld [vmem:[%s231 + $0x1f0] sm:$0xff]
      %v319 = vld [vmem:[%s231 + $0x1f8] sm:$0xff]
      %v384 = vunpack.c.l.b16 %v256
      %v385 = vunpack.c.h.b16 %v256
      %v386 = vunpack.c.l.b16 %v257
      %v387 = vunpack.c.h.b16 %v257
      %v388 = vunpack.c.l.b16 %v258
      %v389 = vunpack.c.h.b16 %v258
      %v390 = vunpack.c.l.b16 %v259
      %v391 = vunpack.c.h.b16 %v259
      %v392 = vunpack.c.l.b16 %v260
      %v393 = vunpack.c.h.b16 %v260
      %v394 = vunpack.c.l.b16 %v261
      %v395 = vunpack.c.h.b16 %v261
      %v396 = vunpack.c.l.b16 %v262
      %v397 = vunpack.c.h.b16 %v262
      %v398 = vunpack.c.l.b16 %v263
      %v399 = vunpack.c.h.b16 %v263
      %v400 = vunpack.c.l.b16 %v264
      %v401 = vunpack.c.h.b16 %v264
      %v402 = vunpack.c.l.b16 %v265
      %v403 = vunpack.c.h.b16 %v265
      %v404 = vunpack.c.l.b16 %v266
      %v405 = vunpack.c.h.b16 %v266
      %v406 = vunpack.c.l.b16 %v267
      %v407 = vunpack.c.h.b16 %v267
      %v408 = vunpack.c.l.b16 %v268
      %v409 = vunpack.c.h.b16 %v268
      %v410 = vunpack.c.l.b16 %v269
      %v411 = vunpack.c.h.b16 %v269
      %v412 = vunpack.c.l.b16 %v270
      %v413 = vunpack.c.h.b16 %v270
      %v414 = vunpack.c.l.b16 %v271
      %v415 = vunpack.c.h.b16 %v271
      %v416 = vunpack.c.l.b16 %v272
      %v417 = vunpack.c.h.b16 %v272
      %v418 = vunpack.c.l.b16 %v273
      %v419 = vunpack.c.h.b16 %v273
      %v420 = vunpack.c.l.b16 %v274
      %v421 = vunpack.c.h.b16 %v274
      %v422 = vunpack.c.l.b16 %v275
      %v423 = vunpack.c.h.b16 %v275
      %v424 = vunpack.c.l.b16 %v276
      %v425 = vunpack.c.h.b16 %v276
      %v426 = vunpack.c.l.b16 %v277
      %v427 = vunpack.c.h.b16 %v277
      %v428 = vunpack.c.l.b16 %v278
      %v429 = vunpack.c.h.b16 %v278
      %v430 = vunpack.c.l.b16 %v279
      %v431 = vunpack.c.h.b16 %v279
      %v432 = vunpack.c.l.b16 %v280
      %v433 = vunpack.c.h.b16 %v280
      %v434 = vunpack.c.l.b16 %v281
      %v435 = vunpack.c.h.b16 %v281
      %v436 = vunpack.c.l.b16 %v282
      %v437 = vunpack.c.h.b16 %v282
      %v438 = vunpack.c.l.b16 %v283
      %v439 = vunpack.c.h.b16 %v283
      %v440 = vunpack.c.l.b16 %v284
      %v441 = vunpack.c.h.b16 %v284
      %v442 = vunpack.c.l.b16 %v285
      %v443 = vunpack.c.h.b16 %v285
      %v444 = vunpack.c.l.b16 %v286
      %v445 = vunpack.c.h.b16 %v286
      %v446 = vunpack.c.l.b16 %v287
      %v447 = vunpack.c.h.b16 %v287
      %v448 = vunpack.c.l.b16 %v288
      %v449 = vunpack.c.h.b16 %v288
      %v450 = vunpack.c.l.b16 %v289
      %v451 = vunpack.c.h.b16 %v289
      %v452 = vunpack.c.l.b16 %v290
      %v453 = vunpack.c.h.b16 %v290
      %v454 = vunpack.c.l.b16 %v291
      %v455 = vunpack.c.h.b16 %v291
      %v456 = vunpack.c.l.b16 %v292
      %v457 = vunpack.c.h.b16 %v292
      %v458 = vunpack.c.l.b16 %v293
      %v459 = vunpack.c.h.b16 %v293
      %v460 = vunpack.c.l.b16 %v294
      %v461 = vunpack.c.h.b16 %v294
      %v462 = vunpack.c.l.b16 %v295
      %v463 = vunpack.c.h.b16 %v295
      %v464 = vunpack.c.l.b16 %v296
      %v465 = vunpack.c.h.b16 %v296
      %v466 = vunpack.c.l.b16 %v297
      %v467 = vunpack.c.h.b16 %v297
      %v468 = vunpack.c.l.b16 %v298
      %v469 = vunpack.c.h.b16 %v298
      %v470 = vunpack.c.l.b16 %v299
      %v471 = vunpack.c.h.b16 %v299
      %v472 = vunpack.c.l.b16 %v300
      %v473 = vunpack.c.h.b16 %v300
      %v474 = vunpack.c.l.b16 %v301
      %v475 = vunpack.c.h.b16 %v301
      %v476 = vunpack.c.l.b16 %v302
      %v477 = vunpack.c.h.b16 %v302
      %v478 = vunpack.c.l.b16 %v303
      %v479 = vunpack.c.h.b16 %v303
      %v480 = vunpack.c.l.b16 %v304
      %v481 = vunpack.c.h.b16 %v304
      %v482 = vunpack.c.l.b16 %v305
      %v483 = vunpack.c.h.b16 %v305
      %v484 = vunpack.c.l.b16 %v306
      %v485 = vunpack.c.h.b16 %v306
      %v486 = vunpack.c.l.b16 %v307
      %v487 = vunpack.c.h.b16 %v307
      %v488 = vunpack.c.l.b16 %v308
      %v489 = vunpack.c.h.b16 %v308
      %v490 = vunpack.c.l.b16 %v309
      %v491 = vunpack.c.h.b16 %v309
      %v492 = vunpack.c.l.b16 %v310
      %v493 = vunpack.c.h.b16 %v310
      %v494 = vunpack.c.l.b16 %v311
      %v495 = vunpack.c.h.b16 %v311
      %v496 = vunpack.c.l.b16 %v312
      %v497 = vunpack.c.h.b16 %v312
      %v498 = vunpack.c.l.b16 %v313
      %v499 = vunpack.c.h.b16 %v313
      %v500 = vunpack.c.l.b16 %v314
      %v501 = vunpack.c.h.b16 %v314
      %v502 = vunpack.c.l.b16 %v315
      %v503 = vunpack.c.h.b16 %v315
      %v504 = vunpack.c.l.b16 %v316
      %v505 = vunpack.c.h.b16 %v316
      %v506 = vunpack.c.l.b16 %v317
      %v507 = vunpack.c.h.b16 %v317
      %v508 = vunpack.c.l.b16 %v318
      %v509 = vunpack.c.h.b16 %v318
      %v510 = vunpack.c.l.b16 %v319
      %v511 = vunpack.c.h.b16 %v319
      %v512 = vpack.c.b16 %v392, %v384
      %v513 = vpack.c.b16 %v393, %v385
      %v514 = vpack.c.b16 %v394, %v386
      %v515 = vpack.c.b16 %v395, %v387
      %v516 = vpack.c.b16 %v396, %v388
      %v517 = vpack.c.b16 %v397, %v389
      %v518 = vpack.c.b16 %v398, %v390
      %v519 = vpack.c.b16 %v399, %v391
      %v520 = vpack.c.b16 %v408, %v400
      %v521 = vpack.c.b16 %v409, %v401
      %v522 = vpack.c.b16 %v410, %v402
      %v523 = vpack.c.b16 %v411, %v403
      %v524 = vpack.c.b16 %v412, %v404
      %v525 = vpack.c.b16 %v413, %v405
      %v526 = vpack.c.b16 %v414, %v406
      %v527 = vpack.c.b16 %v415, %v407
      %v528 = vpack.c.b16 %v424, %v416
      %v529 = vpack.c.b16 %v425, %v417
      %v530 = vpack.c.b16 %v426, %v418
      %v531 = vpack.c.b16 %v427, %v419
      %v532 = vpack.c.b16 %v428, %v420
      %v533 = vpack.c.b16 %v429, %v421
      %v534 = vpack.c.b16 %v430, %v422
      %v535 = vpack.c.b16 %v431, %v423
      %v536 = vpack.c.b16 %v440, %v432
      %v537 = vpack.c.b16 %v441, %v433
      %v538 = vpack.c.b16 %v442, %v434
      %v539 = vpack.c.b16 %v443, %v435
      %v540 = vpack.c.b16 %v444, %v436
      %v541 = vpack.c.b16 %v445, %v437
      %v542 = vpack.c.b16 %v446, %v438
      %v543 = vpack.c.b16 %v447, %v439
      %v544 = vpack.c.b16 %v456, %v448
      %v545 = vpack.c.b16 %v457, %v449
      %v546 = vpack.c.b16 %v458, %v450
      %v547 = vpack.c.b16 %v459, %v451
      %v548 = vpack.c.b16 %v460, %v452
      %v549 = vpack.c.b16 %v461, %v453
      %v550 = vpack.c.b16 %v462, %v454
      %v551 = vpack.c.b16 %v463, %v455
      %v552 = vpack.c.b16 %v472, %v464
      %v553 = vpack.c.b16 %v473, %v465
      %v554 = vpack.c.b16 %v474, %v466
      %v555 = vpack.c.b16 %v475, %v467
      %v556 = vpack.c.b16 %v476, %v468
      %v557 = vpack.c.b16 %v477, %v469
      %v558 = vpack.c.b16 %v478, %v470
      %v559 = vpack.c.b16 %v479, %v471
      %v560 = vpack.c.b16 %v488, %v480
      %v561 = vpack.c.b16 %v489, %v481
      %v562 = vpack.c.b16 %v490, %v482
      %v563 = vpack.c.b16 %v491, %v483
      %v564 = vpack.c.b16 %v492, %v484
      %v565 = vpack.c.b16 %v493, %v485
      %v566 = vpack.c.b16 %v494, %v486
      %v567 = vpack.c.b16 %v495, %v487
      %v568 = vpack.c.b16 %v504, %v496
      %v569 = vpack.c.b16 %v505, %v497
      %v570 = vpack.c.b16 %v506, %v498
      %v571 = vpack.c.b16 %v507, %v499
      %v572 = vpack.c.b16 %v508, %v500
      %v573 = vpack.c.b16 %v509, %v501
      %v574 = vpack.c.b16 %v510, %v502
      %v575 = vpack.c.b16 %v511, %v503
      %640 = vmatpush.bf16.msra.mxu0 %v568
      %641 = vmatpush.bf16.msra.mxu0 %v560
      %642 = vmatpush.bf16.msra.mxu0 %v552
      %643 = vmatpush.bf16.msra.mxu0 %v544
      %644 = vmatpush.bf16.msra.mxu0 %v536
      %645 = vmatpush.bf16.msra.mxu0 %v528
      %646 = vmatpush.bf16.msra.mxu0 %v520
      %647 = vmatpush.bf16.msra.mxu0 %v512
      %648 = vmatmul.bf16.gmra.mxu0 %v255
      %v649 = vpop.f32.mrf.mxu0
      %v650 = vadd.f32 0.0, %v649
      %v651 = vpop.f32.mrf.mxu0
      %652 = vdwg.mxu0
      %653 = vmatpush.bf16.msra.mxu0 %v569
      %654 = vmatpush.bf16.msra.mxu0 %v561
      %655 = vmatpush.bf16.msra.mxu0 %v553
      %656 = vmatpush.bf16.msra.mxu0 %v545
      %657 = vmatpush.bf16.msra.mxu0 %v537
      %658 = vmatpush.bf16.msra.mxu0 %v529
      %659 = vmatpush.bf16.msra.mxu0 %v521
      %660 = vmatpush.bf16.msra.mxu0 %v513
      %661 = vmatmul.bf16.gmra.mxu0 %v255
      %v662 = vpop.f32.mrf.mxu0
      %v663 = vadd.f32 0.0, %v662
      %v664 = vpop.f32.mrf.mxu0
      %665 = vdwg.mxu0
      %666 = vmatpush.bf16.msra.mxu0 %v570
      %667 = vmatpush.bf16.msra.mxu0 %v562
      %668 = vmatpush.bf16.msra.mxu0 %v554
      %669 = vmatpush.bf16.msra.mxu0 %v546
      %670 = vmatpush.bf16.msra.mxu0 %v538
      %671 = vmatpush.bf16.msra.mxu0 %v530
      %672 = vmatpush.bf16.msra.mxu0 %v522
      %673 = vmatpush.bf16.msra.mxu0 %v514
      %674 = vmatmul.bf16.gmra.mxu0 %v255
      %v675 = vpop.f32.mrf.mxu0
      %v676 = vadd.f32 0.0, %v675
      %v677 = vpop.f32.mrf.mxu0
      %678 = vdwg.mxu0
      %679 = vmatpush.bf16.msra.mxu0 %v571
      %680 = vmatpush.bf16.msra.mxu0 %v563
      %681 = vmatpush.bf16.msra.mxu0 %v555
      %682 = vmatpush.bf16.msra.mxu0 %v547
      %683 = vmatpush.bf16.msra.mxu0 %v539
      %684 = vmatpush.bf16.msra.mxu0 %v531
      %685 = vmatpush.bf16.msra.mxu0 %v523
      %686 = vmatpush.bf16.msra.mxu0 %v515
      %687 = vmatmul.bf16.gmra.mxu0 %v255
      %v688 = vpop.f32.mrf.mxu0
      %v689 = vadd.f32 0.0, %v688
      %v690 = vpop.f32.mrf.mxu0
      %691 = vdwg.mxu0
      %692 = vmatpush.bf16.msra.mxu0 %v572
      %693 = vmatpush.bf16.msra.mxu0 %v564
      %694 = vmatpush.bf16.msra.mxu0 %v556
      %695 = vmatpush.bf16.msra.mxu0 %v548
      %696 = vmatpush.bf16.msra.mxu0 %v540
      %697 = vmatpush.bf16.msra.mxu0 %v532
      %698 = vmatpush.bf16.msra.mxu0 %v524
      %699 = vmatpush.bf16.msra.mxu0 %v516
      %700 = vmatmul.bf16.gmra.mxu0 %v255
      %v701 = vpop.f32.mrf.mxu0
      %v702 = vadd.f32 0.0, %v701
      %v703 = vpop.f32.mrf.mxu0
      %704 = vdwg.mxu0
      %705 = vmatpush.bf16.msra.mxu0 %v573
      %706 = vmatpush.bf16.msra.mxu0 %v565
      %707 = vmatpush.bf16.msra.mxu0 %v557
      %708 = vmatpush.bf16.msra.mxu0 %v549
      %709 = vmatpush.bf16.msra.mxu0 %v541
      %710 = vmatpush.bf16.msra.mxu0 %v533
      %711 = vmatpush.bf16.msra.mxu0 %v525
      %712 = vmatpush.bf16.msra.mxu0 %v517
      %713 = vmatmul.bf16.gmra.mxu0 %v255
      %v714 = vpop.f32.mrf.mxu0
      %v715 = vadd.f32 0.0, %v714
      %v716 = vpop.f32.mrf.mxu0
      %717 = vdwg.mxu0
      %718 = vmatpush.bf16.msra.mxu0 %v574
      %719 = vmatpush.bf16.msra.mxu0 %v566
      %720 = vmatpush.bf16.msra.mxu0 %v558
      %721 = vmatpush.bf16.msra.mxu0 %v550
      %722 = vmatpush.bf16.msra.mxu0 %v542
      %723 = vmatpush.bf16.msra.mxu0 %v534
      %724 = vmatpush.bf16.msra.mxu0 %v526
      %725 = vmatpush.bf16.msra.mxu0 %v518
      %726 = vmatmul.bf16.gmra.mxu0 %v255
      %v727 = vpop.f32.mrf.mxu0
      %v728 = vadd.f32 0.0, %v727
      %v729 = vpop.f32.mrf.mxu0
      %730 = vdwg.mxu0
      %731 = vmatpush.bf16.msra.mxu0 %v575
      %732 = vmatpush.bf16.msra.mxu0 %v567
      %733 = vmatpush.bf16.msra.mxu0 %v559
      %734 = vmatpush.bf16.msra.mxu0 %v551
      %735 = vmatpush.bf16.msra.mxu0 %v543
      %736 = vmatpush.bf16.msra.mxu0 %v535
      %737 = vmatpush.bf16.msra.mxu0 %v527
      %738 = vmatpush.bf16.msra.mxu0 %v519
      %739 = vmatmul.bf16.gmra.mxu0 %v255
      %v740 = vpop.f32.mrf.mxu0
      %v741 = vadd.f32 0.0, %v740
      %v742 = vpop.f32.mrf.mxu0
      %743 = vdwg.mxu0
      %v752 = vrot.slane %v663, 6
      %v753 = vrot.slane %v676, 4
      %v754 = vrot.slane %v689, 2
      %v755 = vrot.slane %v715, 6
      %v756 = vrot.slane %v728, 4
      %v757 = vrot.slane %v741, 2
      %vm758 = vcmask 1041408
      %v759 = vsel %vm758, %v650, %v752
      %vm760 = vcmask 1045508
      %v761 = vsel %vm760, %v753, %v754
      %vm762 = vcmask 1043456
      %v763 = vsel %vm762, %v759, %v761
      %v764 = vsel %vm758, %v702, %v755
      %v765 = vsel %vm760, %v756, %v757
      %v766 = vsel %vm762, %v764, %v765
      %v769 = vadd.f32 %v253, %v763
      %v770 = vadd.f32 %v254, %v766
      %v771 = vxor.u32 %v769, 2147483648
      %v772 = vmul.f32 %v771, 1.442695
      %v773 = vpow.pop %v772
      %v774 = vadd.f32 %v773, 1.0
      %v775 = vrcp.pop %v774
      %v776 = vmul.f32 %v774, %v775
      %v777 = vsub.f32 1.0, %v776
      %v778 = vmul.f32 %v775, %v777
      %v779 = vadd.f32 %v775, %v778
      %vm780 = vweird.f32 %v774
      %vm781 = vweird.f32 %v775
      %vm782 = vmor %vm780, %vm781
      %v783 = vsel %vm782, %v775, %v779
      %v784 = vand.u32 2147483647, %v774
      %vm785 = vcmp.eq.f32.partialorder %v784, 8.507059e+37
      %v786 = vand.u32 %v774, 2147483648
      %v787 = vor.u32 1.1754944e-38, %v786
      %v788 = vsel %vm785, %v787, %v783
      %v789 = vmul.f32 1.0, %v788
      %v791 = vrot.slane %v769, 4
      %v793 = vxor.u32 %v791, 2147483648
      %v794 = vmul.f32 %v793, 1.442695
      %v795 = vpow.pop %v794
      %v796 = vadd.f32 %v795, 1.0
      %v797 = vrcp.pop %v796
      %v798 = vmul.f32 %v796, %v797
      %v799 = vsub.f32 1.0, %v798
      %v800 = vmul.f32 %v797, %v799
      %v801 = vadd.f32 %v797, %v800
      %vm802 = vweird.f32 %v796
      %vm803 = vweird.f32 %v797
      %vm804 = vmor %vm802, %vm803
      %v805 = vsel %vm804, %v797, %v801
      %v806 = vand.u32 2147483647, %v796
      %vm807 = vcmp.eq.f32.partialorder %v806, 8.507059e+37
      %v808 = vand.u32 %v796, 2147483648
      %v809 = vor.u32 1.1754944e-38, %v808
      %v810 = vsel %vm807, %v809, %v805
      %v811 = vmul.f32 1.0, %v810
      %v812 = vtanh.pop %v770
      %v814 = vrot.slane %v770, 4
      %v816 = vxor.u32 %v814, 2147483648
      %v817 = vmul.f32 %v816, 1.442695
      %v818 = vpow.pop %v817
      %v819 = vadd.f32 %v818, 1.0
      %v820 = vrcp.pop %v819
      %v821 = vmul.f32 %v819, %v820
      %v822 = vsub.f32 1.0, %v821
      %v823 = vmul.f32 %v820, %v822
      %v824 = vadd.f32 %v820, %v823
      %vm825 = vweird.f32 %v819
      %vm826 = vweird.f32 %v820
      %vm827 = vmor %vm825, %vm826
      %v828 = vsel %vm827, %v820, %v824
      %v829 = vand.u32 2147483647, %v819
      %vm830 = vcmp.eq.f32.partialorder %v829, 8.507059e+37
      %v831 = vand.u32 %v819, 2147483648
      %v832 = vor.u32 1.1754944e-38, %v831
      %v833 = vsel %vm830, %v832, %v828
      %v834 = vmul.f32 1.0, %v833
      %v835 = vmul.f32 %v811, %v252
      %v836 = vmul.f32 %v789, %v812
      %v837 = vadd.f32 %v835, %v836
      %v838 = vtanh.pop %v837
      %v839 = vmul.f32 %v834, %v838
      %841 = vst [vmem:[#allocation1] ss:$4 sm:$0xff] %v839
      %v842 = vld.sshfl [vmem:[#allocation1] sm:$0xff pattern:$0x73625140]
      %v843 = vld.sshfl [vmem:[#allocation1 + $0x8] sm:$0xff pattern:$0x73625140]
      %v846 = vpack.c.bf16 %v842, %v842
      %v847 = vpack.c.bf16 %v843, %v843
      %v848 = vld [vmem:[%s236] sm:$0xf]
      %v849 = vld [vmem:[%s236 + $0x4] sm:$0xf]
      %v850 = vld [vmem:[%s236 + $0x8] sm:$0xf]
      %v851 = vld [vmem:[%s236 + $0xc] sm:$0xf]
      %v852 = vld [vmem:[%s236 + $0x10] sm:$0xf]
      %v853 = vld [vmem:[%s236 + $0x14] sm:$0xf]
      %v854 = vld [vmem:[%s236 + $0x18] sm:$0xf]
      %v855 = vld [vmem:[%s236 + $0x1c] sm:$0xf]
      %v856 = vld [vmem:[%s236 + $0x20] sm:$0xf]
      %v857 = vld [vmem:[%s236 + $0x24] sm:$0xf]
      %v858 = vld [vmem:[%s236 + $0x28] sm:$0xf]
      %v859 = vld [vmem:[%s236 + $0x2c] sm:$0xf]
      %v860 = vld [vmem:[%s236 + $0x30] sm:$0xf]
      %v861 = vld [vmem:[%s236 + $0x34] sm:$0xf]
      %v862 = vld [vmem:[%s236 + $0x38] sm:$0xf]
      %v863 = vld [vmem:[%s236 + $0x3c] sm:$0xf]
      %v864 = vld [vmem:[%s236 + $0x40] sm:$0xf]
      %v865 = vld [vmem:[%s236 + $0x44] sm:$0xf]
      %v866 = vld [vmem:[%s236 + $0x48] sm:$0xf]
      %v867 = vld [vmem:[%s236 + $0x4c] sm:$0xf]
      %v868 = vld [vmem:[%s236 + $0x50] sm:$0xf]
      %v869 = vld [vmem:[%s236 + $0x54] sm:$0xf]
      %v870 = vld [vmem:[%s236 + $0x58] sm:$0xf]
      %v871 = vld [vmem:[%s236 + $0x5c] sm:$0xf]
      %v872 = vld [vmem:[%s236 + $0x60] sm:$0xf]
      %v873 = vld [vmem:[%s236 + $0x64] sm:$0xf]
      %v874 = vld [vmem:[%s236 + $0x68] sm:$0xf]
      %v875 = vld [vmem:[%s236 + $0x6c] sm:$0xf]
      %v876 = vld [vmem:[%s236 + $0x70] sm:$0xf]
      %v877 = vld [vmem:[%s236 + $0x74] sm:$0xf]
      %v878 = vld [vmem:[%s236 + $0x78] sm:$0xf]
      %v879 = vld [vmem:[%s236 + $0x7c] sm:$0xf]
      %v912 = vunpack.c.l.b16 %v848
      %v913 = vunpack.c.l.b16 %v849
      %v914 = vunpack.c.l.b16 %v850
      %v915 = vunpack.c.l.b16 %v851
      %v916 = vunpack.c.l.b16 %v852
      %v917 = vunpack.c.l.b16 %v853
      %v918 = vunpack.c.l.b16 %v854
      %v919 = vunpack.c.l.b16 %v855
      %v920 = vunpack.c.l.b16 %v856
      %v921 = vunpack.c.l.b16 %v857
      %v922 = vunpack.c.l.b16 %v858
      %v923 = vunpack.c.l.b16 %v859
      %v924 = vunpack.c.l.b16 %v860
      %v925 = vunpack.c.l.b16 %v861
      %v926 = vunpack.c.l.b16 %v862
      %v927 = vunpack.c.l.b16 %v863
      %v928 = vunpack.c.l.b16 %v864
      %v929 = vunpack.c.l.b16 %v865
      %v930 = vunpack.c.l.b16 %v866
      %v931 = vunpack.c.l.b16 %v867
      %v932 = vunpack.c.l.b16 %v868
      %v933 = vunpack.c.l.b16 %v869
      %v934 = vunpack.c.l.b16 %v870
      %v935 = vunpack.c.l.b16 %v871
      %v936 = vunpack.c.l.b16 %v872
      %v937 = vunpack.c.l.b16 %v873
      %v938 = vunpack.c.l.b16 %v874
      %v939 = vunpack.c.l.b16 %v875
      %v940 = vunpack.c.l.b16 %v876
      %v941 = vunpack.c.l.b16 %v877
      %v942 = vunpack.c.l.b16 %v878
      %v943 = vunpack.c.l.b16 %v879
      %v944 = vpack.c.b16 %v913, %v912
      %v945 = vpack.c.b16 %v915, %v914
      %v946 = vpack.c.b16 %v917, %v916
      %v947 = vpack.c.b16 %v919, %v918
      %v948 = vpack.c.b16 %v921, %v920
      %v949 = vpack.c.b16 %v923, %v922
      %v950 = vpack.c.b16 %v925, %v924
      %v951 = vpack.c.b16 %v927, %v926
      %v952 = vpack.c.b16 %v929, %v928
      %v953 = vpack.c.b16 %v931, %v930
      %v954 = vpack.c.b16 %v933, %v932
      %v955 = vpack.c.b16 %v935, %v934
      %v956 = vpack.c.b16 %v937, %v936
      %v957 = vpack.c.b16 %v939, %v938
      %v958 = vpack.c.b16 %v941, %v940
      %v959 = vpack.c.b16 %v943, %v942
      %976 = vmatpush.bf16.msra.mxu0 %v951
      %977 = vmatpush.bf16.msra.mxu0 %v950
      %978 = vmatpush.bf16.msra.mxu0 %v949
      %979 = vmatpush.bf16.msra.mxu0 %v948
      %980 = vmatpush.bf16.msra.mxu0 %v947
      %981 = vmatpush.bf16.msra.mxu0 %v946
      %982 = vmatpush.bf16.msra.mxu0 %v945
      %983 = vmatpush.bf16.msra.mxu0 %v944
      %984 = vmatmul.bf16.gmra.mxu0 %v846
      %v985 = vpop.f32.mrf.mxu0
      %v986 = vadd.f32 0.0, %v985
      %v987 = vpop.f32.mrf.mxu0
      %988 = vdwg.mxu0
      %989 = vmatpush.bf16.msra.mxu0 %v959
      %990 = vmatpush.bf16.msra.mxu0 %v958
      %991 = vmatpush.bf16.msra.mxu0 %v957
      %992 = vmatpush.bf16.msra.mxu0 %v956
      %993 = vmatpush.bf16.msra.mxu0 %v955
      %994 = vmatpush.bf16.msra.mxu0 %v954
      %995 = vmatpush.bf16.msra.mxu0 %v953
      %996 = vmatpush.bf16.msra.mxu0 %v952
      %997 = vmatmul.bf16.gmra.mxu0 %v847
      %v998 = vpop.f32.mrf.mxu0
      %v999 = vadd.f32 %v986, %v998
      %v1000 = vpop.f32.mrf.mxu0
      %1001 = vdwg.mxu0
      %1002 = vst [vmem:[#allocation3] sm:$0xf] %v837
      %1003 = vst [vmem:[#allocation2] sm:$0x3] %v999
      %1004 = vst [vmem:[%s244] sm:$0x3] %v999
      %p1005 = scmp.lt.s32.totalorder %s18, 1
      %s1006 = scalar_select %p1005, %s18, 1
      %p1007 = scmp.lt.s32.totalorder %s19, 7
      %s1008 = scalar_select %p1007, %s19, 7
      %s1009 = smul.addr %s1006, 8
      %s1010 = sadd.s32 %s1008, %s1009
      %s1011 = smul.addr %s1010, 2
      %s1012 = scalar_lea.vmem %s3, %s1011
      // Predicated region
      $region37: #{elmo_layer_forward.7} parent=31 // pred_check
        %p1013 = pneg %p126
      $region38: #{elmo_layer_forward.7} parent=31 // pred_check_branch
        %1015 = sbr.rel (%p1013) target = $region40
      $region39: #{elmo_layer_forward.7} parent=31 // pred_region
        _
      $region40: #{elmo_layer_forward.7} parent=31 // pred_fallthru
        _
    $region32: #{elmo_layer_forward.7} parent=5 // pred_fallthru
      _
    %p1016 = scmp.le.s32.totalorder 2, %s9
    // Predicated region
    $region41: #{elmo_layer_forward.7} parent=5 // pred_check
      %p1017 = pneg %p1016
    $region42: #{elmo_layer_forward.7} parent=5 // pred_check_branch
      %1019 = sbr.rel (%p1017) target = $region44
    $region43: #{elmo_layer_forward.7} parent=5 // pred_region
      %s1020 = ssub.s32 %s9, 2
      // Predicated region
      $region45: #{elmo_layer_forward.7} parent=43 // pred_check
        %p1021 = pneg %p132
      $region46: #{elmo_layer_forward.7} parent=43 // pred_check_branch
        %1023 = sbr.rel (%p1021) target = $region48
      $region47: #{elmo_layer_forward.7} parent=43 // pred_region
        %p1024 = scmp.lt.s32.totalorder %s20, 1
        %s1025 = scalar_select %p1024, %s20, 1
        %p1026 = scmp.lt.s32.totalorder %s21, 7
        %s1027 = scalar_select %p1026, %s21, 7
        %s1028 = smul.addr %s1025, 8
        %s1029 = sadd.s32 %s1027, %s1028
        %s1030 = smul.addr %s1029, 2
        %s1031 = scalar_lea.vmem %s3, %s1030
      $region48: #{elmo_layer_forward.7} parent=43 // pred_fallthru
        _
    $region44: #{elmo_layer_forward.7} parent=5 // pred_fallthru
      _
  $region6: #{elmo_layer_forward.7} parent=0 // loop_footer
    %s13 = sadd.s32 1, %s9
  $region7: #{elmo_layer_forward.7} parent=0 // loop_footer_branch
    %8 = sbr.rel target = $region3
  $region8: #{elmo_layer_forward.7} parent=0 // loop_exit
    _

// kernel: elmo_layer_forward.5
$region0: #{elmo_layer_forward.5}
  #allocation0 [shape = 'u32[]', space=smem, size = 0x4, offset = 0x4, fixed_abs, tag = 'smem constant byte address 0x4 - core index']
  #allocation1 [shape = 'u32[72,128]{1,0:T(1,128)}', space=vmem, size = 0x9000, scoped, tag = 'internal scratch']
  %s0 = inlined_call_operand.vmem [shape: bf16[16,52,16], index: 0, kind: input, shape index: {}]
  %s1 = inlined_call_operand.vmem [shape: bf16[48,256], index: 1, kind: input, shape index: {}]
  %s2 = inlined_call_operand.vmem [shape: f32[1,256], index: 2, kind: input, shape index: {}]
  %s3 = inlined_call_operand.vmem [shape: bf16[2,256,512], index: 3, kind: input, shape index: {}]
  %s4 = inlined_call_operand.vmem [shape: f32[2,1,512], index: 4, kind: input, shape index: {}]
  %s5 = inlined_call_operand.vmem [shape: bf16[256,128], index: 5, kind: input, shape index: {}]
  %s6 = inlined_call_operand.vmem [shape: f32[1,128], index: 6, kind: input, shape index: {}]
  %s7 = inlined_call_operand.vmem [shape: f32[16,128], index: 7, kind: output, shape index: {}]
  %s8 = sld [smem:[#allocation0]]
  $region38: #{elmo_layer_forward.5} parent=0
    _
  %s10 = ssub.s32 1, %s8
  %s11 = scalar_select 0, %s10, %s8
  // Predicated region
  $region2: #{elmo_layer_forward.5} parent=0 // pred_check
    _
  $region3: #{elmo_layer_forward.5} parent=0 // pred_check_branch
    %13 = sbr.rel (0) target = $region5
  $region4: #{elmo_layer_forward.5} parent=0 // pred_region
    _
  $region5: #{elmo_layer_forward.5} parent=0 // pred_fallthru
    _
  // Predicated region
  $region6: #{elmo_layer_forward.5} parent=0 // pred_check
    _
  $region7: #{elmo_layer_forward.5} parent=0 // pred_check_branch
    %15 = sbr.rel (0) target = $region9
  $region8: #{elmo_layer_forward.5} parent=0 // pred_region
    _
  $region9: #{elmo_layer_forward.5} parent=0 // pred_fallthru
    _
  // Predicated region
  $region10: #{elmo_layer_forward.5} parent=0 // pred_check
    _
  $region11: #{elmo_layer_forward.5} parent=0 // pred_check_branch
    %17 = sbr.rel (0) target = $region13
  $region12: #{elmo_layer_forward.5} parent=0 // pred_region
    _
  $region13: #{elmo_layer_forward.5} parent=0 // pred_fallthru
    _
  // Predicated region
  $region14: #{elmo_layer_forward.5} parent=0 // pred_check
    _
  $region15: #{elmo_layer_forward.5} parent=0 // pred_check_branch
    %19 = sbr.rel (0) target = $region17
  $region16: #{elmo_layer_forward.5} parent=0 // pred_region
    _
  $region17: #{elmo_layer_forward.5} parent=0 // pred_fallthru
    _
  // Predicated region
  $region18: #{elmo_layer_forward.5} parent=0 // pred_check
    _
  $region19: #{elmo_layer_forward.5} parent=0 // pred_check_branch
    %21 = sbr.rel (0) target = $region21
  $region20: #{elmo_layer_forward.5} parent=0 // pred_region
    _
  $region21: #{elmo_layer_forward.5} parent=0 // pred_fallthru
    _
  // Predicated region
  $region22: #{elmo_layer_forward.5} parent=0 // pred_check
    _
  $region23: #{elmo_layer_forward.5} parent=0 // pred_check_branch
    %23 = sbr.rel (0) target = $region25
  $region24: #{elmo_layer_forward.5} parent=0 // pred_region
    _
  $region25: #{elmo_layer_forward.5} parent=0 // pred_fallthru
    _
  // Predicated region
  $region26: #{elmo_layer_forward.5} parent=0 // pred_check
    _
  $region27: #{elmo_layer_forward.5} parent=0 // pred_check_branch
    %25 = sbr.rel (0) target = $region29
  $region28: #{elmo_layer_forward.5} parent=0 // pred_region
    _
  $region29: #{elmo_layer_forward.5} parent=0 // pred_fallthru
    _
  %v27 = vld [vmem:[%s0] sm:$0xf]
  %v28 = vld [vmem:[%s0 + $0x4] sm:$0xf]
  %v29 = vld [vmem:[%s0 + $0x8] sm:$0xf]
  %v30 = vld [vmem:[%s0 + $0xc] sm:$0xf]
  %v31 = vld [vmem:[%s0 + $0x10] sm:$0xf]
  %v32 = vld [vmem:[%s0 + $0x14] sm:$0xf]
  %v33 = vld [vmem:[%s0 + $0x18] sm:$0x3]
  %v34 = vld [vmem:[%s0 + $0x1c] sm:$0xf]
  %v35 = vld [vmem:[%s0 + $0x20] sm:$0xf]
  %v36 = vld [vmem:[%s0 + $0x24] sm:$0xf]
  %v37 = vld [vmem:[%s0 + $0x28] sm:$0xf]
  %v38 = vld [vmem:[%s0 + $0x2c] sm:$0xf]
  %v39 = vld [vmem:[%s0 + $0x30] sm:$0xf]
  %v40 = vld [vmem:[%s0 + $0x34] sm:$0x3]
  %v41 = vld [vmem:[%s0 + $0x38] sm:$0xf]
  %v42 = vld [vmem:[%s0 + $0x3c] sm:$0xf]
  %v43 = vld [vmem:[%s0 + $0x40] sm:$0xf]
  %v44 = vld [vmem:[%s0 + $0x44] sm:$0xf]
  %v45 = vld [vmem:[%s0 + $0x48] sm:$0xf]
  %v46 = vld [vmem:[%s0 + $0x4c] sm:$0xf]
  %v47 = vld [vmem:[%s0 + $0x50] sm:$0x3]
  %v48 = vld [vmem:[%s0 + $0x54] sm:$0xf]
  %v49 = vld [vmem:[%s0 + $0x58] sm:$0xf]
  %v50 = vld [vmem:[%s0 + $0x5c] sm:$0xf]
  %v51 = vld [vmem:[%s0 + $0x60] sm:$0xf]
  %v52 = vld [vmem:[%s0 + $0x64] sm:$0xf]
  %v53 = vld [vmem:[%s0 + $0x68] sm:$0xf]
  %v54 = vld [vmem:[%s0 + $0x6c] sm:$0x3]
  %v55 = vld [vmem:[%s0 + $0x70] sm:$0xf]
  %v56 = vld [vmem:[%s0 + $0x74] sm:$0xf]
  %v57 = vld [vmem:[%s0 + $0x78] sm:$0xf]
  %v58 = vld [vmem:[%s0 + $0x7c] sm:$0xf]
  %v59 = vld [vmem:[%s0 + $0x80] sm:$0xf]
  %v60 = vld [vmem:[%s0 + $0x84] sm:$0xf]
  %v61 = vld [vmem:[%s0 + $0x88] sm:$0x3]
  %v62 = vld [vmem:[%s0 + $0x8c] sm:$0xf]
  %v63 = vld [vmem:[%s0 + $0x90] sm:$0xf]
  %v64 = vld [vmem:[%s0 + $0x94] sm:$0xf]
  %v65 = vld [vmem:[%s0 + $0x98] sm:$0xf]
  %v66 = vld [vmem:[%s0 + $0x9c] sm:$0xf]
  %v67 = vld [vmem:[%s0 + $0xa0] sm:$0xf]
  %v68 = vld [vmem:[%s0 + $0xa4] sm:$0x3]
  %v69 = vld [vmem:[%s0 + $0xa8] sm:$0xf]
  %v70 = vld [vmem:[%s0 + $0xac] sm:$0xf]
  %v71 = vld [vmem:[%s0 + $0xb0] sm:$0xf]
  %v72 = vld [vmem:[%s0 + $0xb4] sm:$0xf]
  %v73 = vld [vmem:[%s0 + $0xb8] sm:$0xf]
  %v74 = vld [vmem:[%s0 + $0xbc] sm:$0xf]
  %v75 = vld [vmem:[%s0 + $0xc0] sm:$0x3]
  %v76 = vld [vmem:[%s0 + $0xc4] sm:$0xf]
  %v77 = vld [vmem:[%s0 + $0xc8] sm:$0xf]
  %v78 = vld [vmem:[%s0 + $0xcc] sm:$0xf]
  %v79 = vld [vmem:[%s0 + $0xd0] sm:$0xf]
  %v80 = vld [vmem:[%s0 + $0xd4] sm:$0xf]
  %v81 = vld [vmem:[%s0 + $0xd8] sm:$0xf]
  %v82 = vld [vmem:[%s0 + $0xdc] sm:$0x3]
  %v83 = vld [vmem:[%s0 + $0xe0] sm:$0xf]
  %v84 = vld [vmem:[%s0 + $0xe4] sm:$0xf]
  %v85 = vld [vmem:[%s0 + $0xe8] sm:$0xf]
  %v86 = vld [vmem:[%s0 + $0xec] sm:$0xf]
  %v87 = vld [vmem:[%s0 + $0xf0] sm:$0xf]
  %v88 = vld [vmem:[%s0 + $0xf4] sm:$0xf]
  %v89 = vld [vmem:[%s0 + $0xf8] sm:$0x3]
  %v90 = vld [vmem:[%s0 + $0xfc] sm:$0xf]
  %v91 = vld [vmem:[%s0 + $0x100] sm:$0xf]
  %v92 = vld [vmem:[%s0 + $0x104] sm:$0xf]
  %v93 = vld [vmem:[%s0 + $0x108] sm:$0xf]
  %v94 = vld [vmem:[%s0 + $0x10c] sm:$0xf]
  %v95 = vld [vmem:[%s0 + $0x110] sm:$0xf]
  %v96 = vld [vmem:[%s0 + $0x114] sm:$0x3]
  %v97 = vld [vmem:[%s0 + $0x118] sm:$0xf]
  %v98 = vld [vmem:[%s0 + $0x11c] sm:$0xf]
  %v99 = vld [vmem:[%s0 + $0x120] sm:$0xf]
  %v100 = vld [vmem:[%s0 + $0x124] sm:$0xf]
  %v101 = vld [vmem:[%s0 + $0x128] sm:$0xf]
  %v102 = vld [vmem:[%s0 + $0x12c] sm:$0xf]
  %v103 = vld [vmem:[%s0 + $0x130] sm:$0x3]
  %v104 = vld [vmem:[%s0 + $0x134] sm:$0xf]
  %v105 = vld [vmem:[%s0 + $0x138] sm:$0xf]
  %v106 = vld [vmem:[%s0 + $0x13c] sm:$0xf]
  %v107 = vld [vmem:[%s0 + $0x140] sm:$0xf]
  %v108 = vld [vmem:[%s0 + $0x144] sm:$0xf]
  %v109 = vld [vmem:[%s0 + $0x148] sm:$0xf]
  %v110 = vld [vmem:[%s0 + $0x14c] sm:$0x3]
  %v111 = vld [vmem:[%s0 + $0x150] sm:$0xf]
  %v112 = vld [vmem:[%s0 + $0x154] sm:$0xf]
  %v113 = vld [vmem:[%s0 + $0x158] sm:$0xf]
  %v114 = vld [vmem:[%s0 + $0x15c] sm:$0xf]
  %v115 = vld [vmem:[%s0 + $0x160] sm:$0xf]
  %v116 = vld [vmem:[%s0 + $0x164] sm:$0xf]
  %v117 = vld [vmem:[%s0 + $0x168] sm:$0x3]
  %v118 = vld [vmem:[%s0 + $0x16c] sm:$0xf]
  %v119 = vld [vmem:[%s0 + $0x170] sm:$0xf]
  %v120 = vld [vmem:[%s0 + $0x174] sm:$0xf]
  %v121 = vld [vmem:[%s0 + $0x178] sm:$0xf]
  %v122 = vld [vmem:[%s0 + $0x17c] sm:$0xf]
  %v123 = vld [vmem:[%s0 + $0x180] sm:$0xf]
  %v124 = vld [vmem:[%s0 + $0x184] sm:$0x3]
  %v125 = vld [vmem:[%s0 + $0x188] sm:$0xf]
  %v126 = vld [vmem:[%s0 + $0x18c] sm:$0xf]
  %v127 = vld [vmem:[%s0 + $0x190] sm:$0xf]
  %v128 = vld [vmem:[%s0 + $0x194] sm:$0xf]
  %v129 = vld [vmem:[%s0 + $0x198] sm:$0xf]
  %v130 = vld [vmem:[%s0 + $0x19c] sm:$0xf]
  %v131 = vld [vmem:[%s0 + $0x1a0] sm:$0x3]
  %v132 = vld [vmem:[%s0 + $0x1a4] sm:$0xf]
  %v133 = vld [vmem:[%s0 + $0x1a8] sm:$0xf]
  %v134 = vld [vmem:[%s0 + $0x1ac] sm:$0xf]
  %v135 = vld [vmem:[%s0 + $0x1b0] sm:$0xf]
  %v136 = vld [vmem:[%s0 + $0x1b4] sm:$0xf]
  %v137 = vld [vmem:[%s0 + $0x1b8] sm:$0xf]
  %v138 = vld [vmem:[%s0 + $0x1bc] sm:$0x3]
  %v251 = vunpack.c.l.b16 %v27
  %v252 = vunpack.c.l.b16 %v28
  %v253 = vunpack.c.l.b16 %v29
  %v254 = vunpack.c.l.b16 %v30
  %v255 = vunpack.c.l.b16 %v31
  %v256 = vunpack.c.l.b16 %v32
  %v257 = vunpack.c.l.b16 %v33
  %v258 = vunpack.c.l.b16 %v34
  %v259 = vunpack.c.l.b16 %v35
  %v260 = vunpack.c.l.b16 %v36
  %v261 = vunpack.c.l.b16 %v37
  %v262 = vunpack.c.l.b16 %v38
  %v263 = vunpack.c.l.b16 %v39
  %v264 = vunpack.c.l.b16 %v40
  %v265 = vunpack.c.l.b16 %v41
  %v266 = vunpack.c.l.b16 %v42
  %v267 = vunpack.c.l.b16 %v43
  %v268 = vunpack.c.l.b16 %v44
  %v269 = vunpack.c.l.b16 %v45
  %v270 = vunpack.c.l.b16 %v46
  %v271 = vunpack.c.l.b16 %v47
  %v272 = vunpack.c.l.b16 %v48
  %v273 = vunpack.c.l.b16 %v49
  %v274 = vunpack.c.l.b16 %v50
  %v275 = vunpack.c.l.b16 %v51
  %v276 = vunpack.c.l.b16 %v52
  %v277 = vunpack.c.l.b16 %v53
  %v278 = vunpack.c.l.b16 %v54
  %v279 = vunpack.c.l.b16 %v55
  %v280 = vunpack.c.l.b16 %v56
  %v281 = vunpack.c.l.b16 %v57
  %v282 = vunpack.c.l.b16 %v58
  %v283 = vunpack.c.l.b16 %v59
  %v284 = vunpack.c.l.b16 %v60
  %v285 = vunpack.c.l.b16 %v61
  %v286 = vunpack.c.l.b16 %v62
  %v287 = vunpack.c.l.b16 %v63
  %v288 = vunpack.c.l.b16 %v64
  %v289 = vunpack.c.l.b16 %v65
  %v290 = vunpack.c.l.b16 %v66
  %v291 = vunpack.c.l.b16 %v67
  %v292 = vunpack.c.l.b16 %v68
  %v293 = vunpack.c.l.b16 %v69
  %v294 = vunpack.c.l.b16 %v70
  %v295 = vunpack.c.l.b16 %v71
  %v296 = vunpack.c.l.b16 %v72
  %v297 = vunpack.c.l.b16 %v73
  %v298 = vunpack.c.l.b16 %v74
  %v299 = vunpack.c.l.b16 %v75
  %v300 = vunpack.c.l.b16 %v76
  %v301 = vunpack.c.l.b16 %v77
  %v302 = vunpack.c.l.b16 %v78
  %v303 = vunpack.c.l.b16 %v79
  %v304 = vunpack.c.l.b16 %v80
  %v305 = vunpack.c.l.b16 %v81
  %v306 = vunpack.c.l.b16 %v82
  %v307 = vunpack.c.l.b16 %v83
  %v308 = vunpack.c.l.b16 %v84
  %v309 = vunpack.c.l.b16 %v85
  %v310 = vunpack.c.l.b16 %v86
  %v311 = vunpack.c.l.b16 %v87
  %v312 = vunpack.c.l.b16 %v88
  %v313 = vunpack.c.l.b16 %v89
  %v314 = vunpack.c.l.b16 %v90
  %v315 = vunpack.c.l.b16 %v91
  %v316 = vunpack.c.l.b16 %v92
  %v317 = vunpack.c.l.b16 %v93
  %v318 = vunpack.c.l.b16 %v94
  %v319 = vunpack.c.l.b16 %v95
  %v320 = vunpack.c.l.b16 %v96
  %v321 = vunpack.c.l.b16 %v97
  %v322 = vunpack.c.l.b16 %v98
  %v323 = vunpack.c.l.b16 %v99
  %v324 = vunpack.c.l.b16 %v100
  %v325 = vunpack.c.l.b16 %v101
  %v326 = vunpack.c.l.b16 %v102
  %v327 = vunpack.c.l.b16 %v103
  %v328 = vunpack.c.l.b16 %v104
  %v329 = vunpack.c.l.b16 %v105
  %v330 = vunpack.c.l.b16 %v106
  %v331 = vunpack.c.l.b16 %v107
  %v332 = vunpack.c.l.b16 %v108
  %v333 = vunpack.c.l.b16 %v109
  %v334 = vunpack.c.l.b16 %v110
  %v335 = vunpack.c.l.b16 %v111
  %v336 = vunpack.c.l.b16 %v112
  %v337 = vunpack.c.l.b16 %v113
  %v338 = vunpack.c.l.b16 %v114
  %v339 = vunpack.c.l.b16 %v115
  %v340 = vunpack.c.l.b16 %v116
  %v341 = vunpack.c.l.b16 %v117
  %v342 = vunpack.c.l.b16 %v118
  %v343 = vunpack.c.l.b16 %v119
  %v344 = vunpack.c.l.b16 %v120
  %v345 = vunpack.c.l.b16 %v121
  %v346 = vunpack.c.l.b16 %v122
  %v347 = vunpack.c.l.b16 %v123
  %v348 = vunpack.c.l.b16 %v124
  %v349 = vunpack.c.l.b16 %v125
  %v350 = vunpack.c.l.b16 %v126
  %v351 = vunpack.c.l.b16 %v127
  %v352 = vunpack.c.l.b16 %v128
  %v353 = vunpack.c.l.b16 %v129
  %v354 = vunpack.c.l.b16 %v130
  %v355 = vunpack.c.l.b16 %v131
  %v356 = vunpack.c.l.b16 %v132
  %v357 = vunpack.c.l.b16 %v133
  %v358 = vunpack.c.l.b16 %v134
  %v359 = vunpack.c.l.b16 %v135
  %v360 = vunpack.c.l.b16 %v136
  %v361 = vunpack.c.l.b16 %v137
  %v362 = vunpack.c.l.b16 %v138
  %v363 = vpack.c.b16 %v252, %v251
  %v364 = vpack.c.b16 %v254, %v253
  %v365 = vpack.c.b16 %v256, %v255
  %v366 = vpack.c.b16 %v257, %v257
  %v367 = vpack.c.b16 %v259, %v258
  %v368 = vpack.c.b16 %v261, %v260
  %v369 = vpack.c.b16 %v263, %v262
  %v370 = vpack.c.b16 %v264, %v264
  %v371 = vpack.c.b16 %v266, %v265
  %v372 = vpack.c.b16 %v268, %v267
  %v373 = vpack.c.b16 %v270, %v269
  %v374 = vpack.c.b16 %v271, %v271
  %v375 = vpack.c.b16 %v273, %v272
  %v376 = vpack.c.b16 %v275, %v274
  %v377 = vpack.c.b16 %v277, %v276
  %v378 = vpack.c.b16 %v278, %v278
  %v379 = vpack.c.b16 %v280, %v279
  %v380 = vpack.c.b16 %v282, %v281
  %v381 = vpack.c.b16 %v284, %v283
  %v382 = vpack.c.b16 %v285, %v285
  %v383 = vpack.c.b16 %v287, %v286
  %v384 = vpack.c.b16 %v289, %v288
  %v385 = vpack.c.b16 %v291, %v290
  %v386 = vpack.c.b16 %v292, %v292
  %v387 = vpack.c.b16 %v294, %v293
  %v388 = vpack.c.b16 %v296, %v295
  %v389 = vpack.c.b16 %v298, %v297
  %v390 = vpack.c.b16 %v299, %v299
  %v391 = vpack.c.b16 %v301, %v300
  %v392 = vpack.c.b16 %v303, %v302
  %v393 = vpack.c.b16 %v305, %v304
  %v394 = vpack.c.b16 %v306, %v306
  %v395 = vpack.c.b16 %v308, %v307
  %v396 = vpack.c.b16 %v310, %v309
  %v397 = vpack.c.b16 %v312, %v311
  %v398 = vpack.c.b16 %v313, %v313
  %v399 = vpack.c.b16 %v315, %v314
  %v400 = vpack.c.b16 %v317, %v316
  %v401 = vpack.c.b16 %v319, %v318
  %v402 = vpack.c.b16 %v320, %v320
  %v403 = vpack.c.b16 %v322, %v321
  %v404 = vpack.c.b16 %v324, %v323
  %v405 = vpack.c.b16 %v326, %v325
  %v406 = vpack.c.b16 %v327, %v327
  %v407 = vpack.c.b16 %v329, %v328
  %v408 = vpack.c.b16 %v331, %v330
  %v409 = vpack.c.b16 %v333, %v332
  %v410 = vpack.c.b16 %v334, %v334
  %v411 = vpack.c.b16 %v336, %v335
  %v412 = vpack.c.b16 %v338, %v337
  %v413 = vpack.c.b16 %v340, %v339
  %v414 = vpack.c.b16 %v341, %v341
  %v415 = vpack.c.b16 %v343, %v342
  %v416 = vpack.c.b16 %v345, %v344
  %v417 = vpack.c.b16 %v347, %v346
  %v418 = vpack.c.b16 %v348, %v348
  %v419 = vpack.c.b16 %v350, %v349
  %v420 = vpack.c.b16 %v352, %v351
  %v421 = vpack.c.b16 %v354, %v353
  %v422 = vpack.c.b16 %v355, %v355
  %v423 = vpack.c.b16 %v357, %v356
  %v424 = vpack.c.b16 %v359, %v358
  %v425 = vpack.c.b16 %v361, %v360
  %v426 = vpack.c.b16 %v362, %v362
  %vm427 = vsmask.f32 7424
  %v429 = vshrl.u32 %v363, 16
  %v431 = vshll.u32 %v363, 16
  %v433 = vrot.slane %v431, 1
  %v434 = vor.u32 %v429, %v433
  %v436 = vshll.u32 %v364, 16
  %v438 = vrot.slane %v436, 1
  %v439 = vsel %vm427, %v434, %v438
  %v440 = vshrl.u32 %v364, 16
  %v442 = vor.u32 %v440, %v438
  %v444 = vshll.u32 %v365, 16
  %v446 = vrot.slane %v444, 1
  %v447 = vsel %vm427, %v442, %v446
  %v448 = vshrl.u32 %v365, 16
  %v450 = vor.u32 %v448, %v446
  %v452 = vshll.u32 %v366, 16
  %v454 = vrot.slane %v452, 1
  %v455 = vsel %vm427, %v450, %v454
  %v456 = vshrl.u32 %v366, 16
  %v458 = vor.u32 %v456, %v454
  %v460 = vshrl.u32 %v367, 16
  %v462 = vshll.u32 %v367, 16
  %v464 = vrot.slane %v462, 1
  %v465 = vor.u32 %v460, %v464
  %v467 = vshll.u32 %v368, 16
  %v469 = vrot.slane %v467, 1
  %v470 = vsel %vm427, %v465, %v469
  %v471 = vshrl.u32 %v368, 16
  %v473 = vor.u32 %v471, %v469
  %v475 = vshll.u32 %v369, 16
  %v477 = vrot.slane %v475, 1
  %v478 = vsel %vm427, %v473, %v477
  %v479 = vshrl.u32 %v369, 16
  %v481 = vor.u32 %v479, %v477
  %v483 = vshll.u32 %v370, 16
  %v485 = vrot.slane %v483, 1
  %v486 = vsel %vm427, %v481, %v485
  %v487 = vshrl.u32 %v370, 16
  %v489 = vor.u32 %v487, %v485
  %v491 = vshrl.u32 %v371, 16
  %v493 = vshll.u32 %v371, 16
  %v495 = vrot.slane %v493, 1
  %v496 = vor.u32 %v491, %v495
  %v498 = vshll.u32 %v372, 16
  %v500 = vrot.slane %v498, 1
  %v501 = vsel %vm427, %v496, %v500
  %v502 = vshrl.u32 %v372, 16
  %v504 = vor.u32 %v502, %v500
  %v506 = vshll.u32 %v373, 16
  %v508 = vrot.slane %v506, 1
  %v509 = vsel %vm427, %v504, %v508
  %v510 = vshrl.u32 %v373, 16
  %v512 = vor.u32 %v510, %v508
  %v514 = vshll.u32 %v374, 16
  %v516 = vrot.slane %v514, 1
  %v517 = vsel %vm427, %v512, %v516
  %v518 = vshrl.u32 %v374, 16
  %v520 = vor.u32 %v518, %v516
  %v522 = vshrl.u32 %v375, 16
  %v524 = vshll.u32 %v375, 16
  %v526 = vrot.slane %v524, 1
  %v527 = vor.u32 %v522, %v526
  %v529 = vshll.u32 %v376, 16
  %v531 = vrot.slane %v529, 1
  %v532 = vsel %vm427, %v527, %v531
  %v533 = vshrl.u32 %v376, 16
  %v535 = vor.u32 %v533, %v531
  %v537 = vshll.u32 %v377, 16
  %v539 = vrot.slane %v537, 1
  %v540 = vsel %vm427, %v535, %v539
  %v541 = vshrl.u32 %v377, 16
  %v543 = vor.u32 %v541, %v539
  %v545 = vshll.u32 %v378, 16
  %v547 = vrot.slane %v545, 1
  %v548 = vsel %vm427, %v543, %v547
  %v549 = vshrl.u32 %v378, 16
  %v551 = vor.u32 %v549, %v547
  %v553 = vshrl.u32 %v379, 16
  %v555 = vshll.u32 %v379, 16
  %v557 = vrot.slane %v555, 1
  %v558 = vor.u32 %v553, %v557
  %v560 = vshll.u32 %v380, 16
  %v562 = vrot.slane %v560, 1
  %v563 = vsel %vm427, %v558, %v562
  %v564 = vshrl.u32 %v380, 16
  %v566 = vor.u32 %v564, %v562
  %v568 = vshll.u32 %v381, 16
  %v570 = vrot.slane %v568, 1
  %v571 = vsel %vm427, %v566, %v570
  %v572 = vshrl.u32 %v381, 16
  %v574 = vor.u32 %v572, %v570
  %v576 = vshll.u32 %v382, 16
  %v578 = vrot.slane %v576, 1
  %v579 = vsel %vm427, %v574, %v578
  %v580 = vshrl.u32 %v382, 16
  %v582 = vor.u32 %v580, %v578
  %v584 = vshrl.u32 %v383, 16
  %v586 = vshll.u32 %v383, 16
  %v588 = vrot.slane %v586, 1
  %v589 = vor.u32 %v584, %v588
  %v591 = vshll.u32 %v384, 16
  %v593 = vrot.slane %v591, 1
  %v594 = vsel %vm427, %v589, %v593
  %v595 = vshrl.u32 %v384, 16
  %v597 = vor.u32 %v595, %v593
  %v599 = vshll.u32 %v385, 16
  %v601 = vrot.slane %v599, 1
  %v602 = vsel %vm427, %v597, %v601
  %v603 = vshrl.u32 %v385, 16
  %v605 = vor.u32 %v603, %v601
  %v607 = vshll.u32 %v386, 16
  %v609 = vrot.slane %v607, 1
  %v610 = vsel %vm427, %v605, %v609
  %v611 = vshrl.u32 %v386, 16
  %v613 = vor.u32 %v611, %v609
  %v615 = vshrl.u32 %v387, 16
  %v617 = vshll.u32 %v387, 16
  %v619 = vrot.slane %v617, 1
  %v620 = vor.u32 %v615, %v619
  %v622 = vshll.u32 %v388, 16
  %v624 = vrot.slane %v622, 1
  %v625 = vsel %vm427, %v620, %v624
  %v626 = vshrl.u32 %v388, 16
  %v628 = vor.u32 %v626, %v624
  %v630 = vshll.u32 %v389, 16
  %v632 = vrot.slane %v630, 1
  %v633 = vsel %vm427, %v628, %v632
  %v634 = vshrl.u32 %v389, 16
  %v636 = vor.u32 %v634, %v632
  %v638 = vshll.u32 %v390, 16
  %v640 = vrot.slane %v638, 1
  %v641 = vsel %vm427, %v636, %v640
  %v642 = vshrl.u32 %v390, 16
  %v644 = vor.u32 %v642, %v640
  %v646 = vshrl.u32 %v391, 16
  %v648 = vshll.u32 %v391, 16
  %v650 = vrot.slane %v648, 1
  %v651 = vor.u32 %v646, %v650
  %v653 = vshll.u32 %v392, 16
  %v655 = vrot.slane %v653, 1
  %v656 = vsel %vm427, %v651, %v655
  %v657 = vshrl.u32 %v392, 16
  %v659 = vor.u32 %v657, %v655
  %v661 = vshll.u32 %v393, 16
  %v663 = vrot.slane %v661, 1
  %v664 = vsel %vm427, %v659, %v663
  %v665 = vshrl.u32 %v393, 16
  %v667 = vor.u32 %v665, %v663
  %v669 = vshll.u32 %v394, 16
  %v671 = vrot.slane %v669, 1
  %v672 = vsel %vm427, %v667, %v671
  %v673 = vshrl.u32 %v394, 16
  %v675 = vor.u32 %v673, %v671
  %v677 = vshrl.u32 %v395, 16
  %v679 = vshll.u32 %v395, 16
  %v681 = vrot.slane %v679, 1
  %v682 = vor.u32 %v677, %v681
  %v684 = vshll.u32 %v396, 16
  %v686 = vrot.slane %v684, 1
  %v687 = vsel %vm427, %v682, %v686
  %v688 = vshrl.u32 %v396, 16
  %v690 = vor.u32 %v688, %v686
  %v692 = vshll.u32 %v397, 16
  %v694 = vrot.slane %v692, 1
  %v695 = vsel %vm427, %v690, %v694
  %v696 = vshrl.u32 %v397, 16
  %v698 = vor.u32 %v696, %v694
  %v700 = vshll.u32 %v398, 16
  %v702 = vrot.slane %v700, 1
  %v703 = vsel %vm427, %v698, %v702
  %v704 = vshrl.u32 %v398, 16
  %v706 = vor.u32 %v704, %v702
  %v708 = vshrl.u32 %v399, 16
  %v710 = vshll.u32 %v399, 16
  %v712 = vrot.slane %v710, 1
  %v713 = vor.u32 %v708, %v712
  %v715 = vshll.u32 %v400, 16
  %v717 = vrot.slane %v715, 1
  %v718 = vsel %vm427, %v713, %v717
  %v719 = vshrl.u32 %v400, 16
  %v721 = vor.u32 %v719, %v717
  %v723 = vshll.u32 %v401, 16
  %v725 = vrot.slane %v723, 1
  %v726 = vsel %vm427, %v721, %v725
  %v727 = vshrl.u32 %v401, 16
  %v729 = vor.u32 %v727, %v725
  %v731 = vshll.u32 %v402, 16
  %v733 = vrot.slane %v731, 1
  %v734 = vsel %vm427, %v729, %v733
  %v735 = vshrl.u32 %v402, 16
  %v737 = vor.u32 %v735, %v733
  %v739 = vshrl.u32 %v403, 16
  %v741 = vshll.u32 %v403, 16
  %v743 = vrot.slane %v741, 1
  %v744 = vor.u32 %v739, %v743
  %v746 = vshll.u32 %v404, 16
  %v748 = vrot.slane %v746, 1
  %v749 = vsel %vm427, %v744, %v748
  %v750 = vshrl.u32 %v404, 16
  %v752 = vor.u32 %v750, %v748
  %v754 = vshll.u32 %v405, 16
  %v756 = vrot.slane %v754, 1
  %v757 = vsel %vm427, %v752, %v756
  %v758 = vshrl.u32 %v405, 16
  %v760 = vor.u32 %v758, %v756
  %v762 = vshll.u32 %v406, 16
  %v764 = vrot.slane %v762, 1
  %v765 = vsel %vm427, %v760, %v764
  %v766 = vshrl.u32 %v406, 16
  %v768 = vor.u32 %v766, %v764
  %v770 = vshrl.u32 %v407, 16
  %v772 = vshll.u32 %v407, 16
  %v774 = vrot.slane %v772, 1
  %v775 = vor.u32 %v770, %v774
  %v777 = vshll.u32 %v408, 16
  %v779 = vrot.slane %v777, 1
  %v780 = vsel %vm427, %v775, %v779
  %v781 = vshrl.u32 %v408, 16
  %v783 = vor.u32 %v781, %v779
  %v785 = vshll.u32 %v409, 16
  %v787 = vrot.slane %v785, 1
  %v788 = vsel %vm427, %v783, %v787
  %v789 = vshrl.u32 %v409, 16
  %v791 = vor.u32 %v789, %v787
  %v793 = vshll.u32 %v410, 16
  %v795 = vrot.slane %v793, 1
  %v796 = vsel %vm427, %v791, %v795
  %v797 = vshrl.u32 %v410, 16
  %v799 = vor.u32 %v797, %v795
  %v801 = vshrl.u32 %v411, 16
  %v803 = vshll.u32 %v411, 16
  %v805 = vrot.slane %v803, 1
  %v806 = vor.u32 %v801, %v805
  %v808 = vshll.u32 %v412, 16
  %v810 = vrot.slane %v808, 1
  %v811 = vsel %vm427, %v806, %v810
  %v812 = vshrl.u32 %v412, 16
  %v814 = vor.u32 %v812, %v810
  %v816 = vshll.u32 %v413, 16
  %v818 = vrot.slane %v816, 1
  %v819 = vsel %vm427, %v814, %v818
  %v820 = vshrl.u32 %v413, 16
  %v822 = vor.u32 %v820, %v818
  %v824 = vshll.u32 %v414, 16
  %v826 = vrot.slane %v824, 1
  %v827 = vsel %vm427, %v822, %v826
  %v828 = vshrl.u32 %v414, 16
  %v830 = vor.u32 %v828, %v826
  %v832 = vshrl.u32 %v415, 16
  %v834 = vshll.u32 %v415, 16
  %v836 = vrot.slane %v834, 1
  %v837 = vor.u32 %v832, %v836
  %v839 = vshll.u32 %v416, 16
  %v841 = vrot.slane %v839, 1
  %v842 = vsel %vm427, %v837, %v841
  %v843 = vshrl.u32 %v416, 16
  %v845 = vor.u32 %v843, %v841
  %v847 = vshll.u32 %v417, 16
  %v849 = vrot.slane %v847, 1
  %v850 = vsel %vm427, %v845, %v849
  %v851 = vshrl.u32 %v417, 16
  %v853 = vor.u32 %v851, %v849
  %v855 = vshll.u32 %v418, 16
  %v857 = vrot.slane %v855, 1
  %v858 = vsel %vm427, %v853, %v857
  %v859 = vshrl.u32 %v418, 16
  %v861 = vor.u32 %v859, %v857
  %v863 = vshrl.u32 %v419, 16
  %v865 = vshll.u32 %v419, 16
  %v867 = vrot.slane %v865, 1
  %v868 = vor.u32 %v863, %v867
  %v870 = vshll.u32 %v420, 16
  %v872 = vrot.slane %v870, 1
  %v873 = vsel %vm427, %v868, %v872
  %v874 = vshrl.u32 %v420, 16
  %v876 = vor.u32 %v874, %v872
  %v878 = vshll.u32 %v421, 16
  %v880 = vrot.slane %v878, 1
  %v881 = vsel %vm427, %v876, %v880
  %v882 = vshrl.u32 %v421, 16
  %v884 = vor.u32 %v882, %v880
  %v886 = vshll.u32 %v422, 16
  %v888 = vrot.slane %v886, 1
  %v889 = vsel %vm427, %v884, %v888
  %v890 = vshrl.u32 %v422, 16
  %v892 = vor.u32 %v890, %v888
  %v894 = vshrl.u32 %v423, 16
  %v896 = vshll.u32 %v423, 16
  %v898 = vrot.slane %v896, 1
  %v899 = vor.u32 %v894, %v898
  %v901 = vshll.u32 %v424, 16
  %v903 = vrot.slane %v901, 1
  %v904 = vsel %vm427, %v899, %v903
  %v905 = vshrl.u32 %v424, 16
  %v907 = vor.u32 %v905, %v903
  %v909 = vshll.u32 %v425, 16
  %v911 = vrot.slane %v909, 1
  %v912 = vsel %vm427, %v907, %v911
  %v913 = vshrl.u32 %v425, 16
  %v915 = vor.u32 %v913, %v911
  %v917 = vshll.u32 %v426, 16
  %v919 = vrot.slane %v917, 1
  %v920 = vsel %vm427, %v915, %v919
  %v921 = vshrl.u32 %v426, 16
  %v923 = vor.u32 %v921, %v919
  %924 = vrot.lane.b32.xlu0 %v439, 16
  %v925 = vpop.permute.xlu0 %924
  %926 = vrot.lane.b32.xlu0 %v447, 16
  %v927 = vpop.permute.xlu0 %926
  %928 = vrot.lane.b32.xlu0 %v455, 16
  %v929 = vpop.permute.xlu0 %928
  %930 = vrot.lane.b32.xlu0 %v458, 16
  %v931 = vpop.permute.xlu0 %930
  %932 = vrot.lane.b32.xlu0 %v470, 16
  %v933 = vpop.permute.xlu0 %932
  %934 = vrot.lane.b32.xlu0 %v478, 16
  %v935 = vpop.permute.xlu0 %934
  %936 = vrot.lane.b32.xlu0 %v486, 16
  %v937 = vpop.permute.xlu0 %936
  %938 = vrot.lane.b32.xlu0 %v489, 16
  %v939 = vpop.permute.xlu0 %938
  %940 = vrot.lane.b32.xlu0 %v501, 16
  %v941 = vpop.permute.xlu0 %940
  %942 = vrot.lane.b32.xlu0 %v509, 16
  %v943 = vpop.permute.xlu0 %942
  %944 = vrot.lane.b32.xlu0 %v517, 16
  %v945 = vpop.permute.xlu0 %944
  %946 = vrot.lane.b32.xlu0 %v520, 16
  %v947 = vpop.permute.xlu0 %946
  %948 = vrot.lane.b32.xlu0 %v532, 16
  %v949 = vpop.permute.xlu0 %948
  %950 = vrot.lane.b32.xlu0 %v540, 16
  %v951 = vpop.permute.xlu0 %950
  %952 = vrot.lane.b32.xlu0 %v548, 16
  %v953 = vpop.permute.xlu0 %952
  %954 = vrot.lane.b32.xlu0 %v551, 16
  %v955 = vpop.permute.xlu0 %954
  %956 = vrot.lane.b32.xlu0 %v563, 16
  %v957 = vpop.permute.xlu0 %956
  %958 = vrot.lane.b32.xlu0 %v571, 16
  %v959 = vpop.permute.xlu0 %958
  %960 = vrot.lane.b32.xlu0 %v579, 16
  %v961 = vpop.permute.xlu0 %960
  %962 = vrot.lane.b32.xlu0 %v582, 16
  %v963 = vpop.permute.xlu0 %962
  %964 = vrot.lane.b32.xlu0 %v594, 16
  %v965 = vpop.permute.xlu0 %964
  %966 = vrot.lane.b32.xlu0 %v602, 16
  %v967 = vpop.permute.xlu0 %966
  %968 = vrot.lane.b32.xlu0 %v610, 16
  %v969 = vpop.permute.xlu0 %968
  %970 = vrot.lane.b32.xlu0 %v613, 16
  %v971 = vpop.permute.xlu0 %970
  %972 = vrot.lane.b32.xlu0 %v625, 16
  %v973 = vpop.permute.xlu0 %972
  %974 = vrot.lane.b32.xlu0 %v633, 16
  %v975 = vpop.permute.xlu0 %974
  %976 = vrot.lane.b32.xlu0 %v641, 16
  %v977 = vpop.permute.xlu0 %976
  %978 = vrot.lane.b32.xlu0 %v644, 16
  %v979 = vpop.permute.xlu0 %978
  %980 = vrot.lane.b32.xlu0 %v656, 16
  %v981 = vpop.permute.xlu0 %980
  %982 = vrot.lane.b32.xlu0 %v664, 16
  %v983 = vpop.permute.xlu0 %982
  %984 = vrot.lane.b32.xlu0 %v672, 16
  %v985 = vpop.permute.xlu0 %984
  %986 = vrot.lane.b32.xlu0 %v675, 16
  %v987 = vpop.permute.xlu0 %986
  %988 = vrot.lane.b32.xlu0 %v687, 16
  %v989 = vpop.permute.xlu0 %988
  %990 = vrot.lane.b32.xlu0 %v695, 16
  %v991 = vpop.permute.xlu0 %990
  %992 = vrot.lane.b32.xlu0 %v703, 16
  %v993 = vpop.permute.xlu0 %992
  %994 = vrot.lane.b32.xlu0 %v706, 16
  %v995 = vpop.permute.xlu0 %994
  %996 = vrot.lane.b32.xlu0 %v718, 16
  %v997 = vpop.permute.xlu0 %996
  %998 = vrot.lane.b32.xlu0 %v726, 16
  %v999 = vpop.permute.xlu0 %998
  %1000 = vrot.lane.b32.xlu0 %v734, 16
  %v1001 = vpop.permute.xlu0 %1000
  %1002 = vrot.lane.b32.xlu0 %v737, 16
  %v1003 = vpop.permute.xlu0 %1002
  %1004 = vrot.lane.b32.xlu0 %v749, 16
  %v1005 = vpop.permute.xlu0 %1004
  %1006 = vrot.lane.b32.xlu0 %v757, 16
  %v1007 = vpop.permute.xlu0 %1006
  %1008 = vrot.lane.b32.xlu0 %v765, 16
  %v1009 = vpop.permute.xlu0 %1008
  %1010 = vrot.lane.b32.xlu0 %v768, 16
  %v1011 = vpop.permute.xlu0 %1010
  %1012 = vrot.lane.b32.xlu0 %v780, 16
  %v1013 = vpop.permute.xlu0 %1012
  %1014 = vrot.lane.b32.xlu0 %v788, 16
  %v1015 = vpop.permute.xlu0 %1014
  %1016 = vrot.lane.b32.xlu0 %v796, 16
  %v1017 = vpop.permute.xlu0 %1016
  %1018 = vrot.lane.b32.xlu0 %v799, 16
  %v1019 = vpop.permute.xlu0 %1018
  %1020 = vrot.lane.b32.xlu0 %v811, 16
  %v1021 = vpop.permute.xlu0 %1020
  %1022 = vrot.lane.b32.xlu0 %v819, 16
  %v1023 = vpop.permute.xlu0 %1022
  %1024 = vrot.lane.b32.xlu0 %v827, 16
  %v1025 = vpop.permute.xlu0 %1024
  %1026 = vrot.lane.b32.xlu0 %v830, 16
  %v1027 = vpop.permute.xlu0 %1026
  %1028 = vrot.lane.b32.xlu0 %v842, 16
  %v1029 = vpop.permute.xlu0 %1028
  %1030 = vrot.lane.b32.xlu0 %v850, 16
  %v1031 = vpop.permute.xlu0 %1030
  %1032 = vrot.lane.b32.xlu0 %v858, 16
  %v1033 = vpop.permute.xlu0 %1032
  %1034 = vrot.lane.b32.xlu0 %v861, 16
  %v1035 = vpop.permute.xlu0 %1034
  %1036 = vrot.lane.b32.xlu0 %v873, 16
  %v1037 = vpop.permute.xlu0 %1036
  %1038 = vrot.lane.b32.xlu0 %v881, 16
  %v1039 = vpop.permute.xlu0 %1038
  %1040 = vrot.lane.b32.xlu0 %v889, 16
  %v1041 = vpop.permute.xlu0 %1040
  %1042 = vrot.lane.b32.xlu0 %v892, 16
  %v1043 = vpop.permute.xlu0 %1042
  %1044 = vrot.lane.b32.xlu0 %v904, 16
  %v1045 = vpop.permute.xlu0 %1044
  %1046 = vrot.lane.b32.xlu0 %v912, 16
  %v1047 = vpop.permute.xlu0 %1046
  %1048 = vrot.lane.b32.xlu0 %v920, 16
  %v1049 = vpop.permute.xlu0 %1048
  %1050 = vrot.lane.b32.xlu0 %v923, 16
  %v1051 = vpop.permute.xlu0 %1050
  %vm1052 = vcmask 1046528
  %v1053 = vrot.slane %v363, 1
  %v1054 = vrot.slane %v364, 1
  %v1055 = vsel %vm1052, %v1053, %v1054
  %v1056 = vrot.slane %v365, 1
  %v1057 = vsel %vm1052, %v1054, %v1056
  %v1058 = vrot.slane %v366, 1
  %v1059 = vsel %vm1052, %v1056, %v1058
  %v1060 = vrot.slane %v367, 1
  %v1061 = vrot.slane %v368, 1
  %v1062 = vsel %vm1052, %v1060, %v1061
  %v1063 = vrot.slane %v369, 1
  %v1064 = vsel %vm1052, %v1061, %v1063
  %v1065 = vrot.slane %v370, 1
  %v1066 = vsel %vm1052, %v1063, %v1065
  %v1067 = vrot.slane %v371, 1
  %v1068 = vrot.slane %v372, 1
  %v1069 = vsel %vm1052, %v1067, %v1068
  %v1070 = vrot.slane %v373, 1
  %v1071 = vsel %vm1052, %v1068, %v1070
  %v1072 = vrot.slane %v374, 1
  %v1073 = vsel %vm1052, %v1070, %v1072
  %v1074 = vrot.slane %v375, 1
  %v1075 = vrot.slane %v376, 1
  %v1076 = vsel %vm1052, %v1074, %v1075
  %v1077 = vrot.slane %v377, 1
  %v1078 = vsel %vm1052, %v1075, %v1077
  %v1079 = vrot.slane %v378, 1
  %v1080 = vsel %vm1052, %v1077, %v1079
  %v1081 = vrot.slane %v379, 1
  %v1082 = vrot.slane %v380, 1
  %v1083 = vsel %vm1052, %v1081, %v1082
  %v1084 = vrot.slane %v381, 1
  %v1085 = vsel %vm1052, %v1082, %v1084
  %v1086 = vrot.slane %v382, 1
  %v1087 = vsel %vm1052, %v1084, %v1086
  %v1088 = vrot.slane %v383, 1
  %v1089 = vrot.slane %v384, 1
  %v1090 = vsel %vm1052, %v1088, %v1089
  %v1091 = vrot.slane %v385, 1
  %v1092 = vsel %vm1052, %v1089, %v1091
  %v1093 = vrot.slane %v386, 1
  %v1094 = vsel %vm1052, %v1091, %v1093
  %v1095 = vrot.slane %v387, 1
  %v1096 = vrot.slane %v388, 1
  %v1097 = vsel %vm1052, %v1095, %v1096
  %v1098 = vrot.slane %v389, 1
  %v1099 = vsel %vm1052, %v1096, %v1098
  %v1100 = vrot.slane %v390, 1
  %v1101 = vsel %vm1052, %v1098, %v1100
  %v1102 = vrot.slane %v391, 1
  %v1103 = vrot.slane %v392, 1
  %v1104 = vsel %vm1052, %v1102, %v1103
  %v1105 = vrot.slane %v393, 1
  %v1106 = vsel %vm1052, %v1103, %v1105
  %v1107 = vrot.slane %v394, 1
  %v1108 = vsel %vm1052, %v1105, %v1107
  %v1109 = vrot.slane %v395, 1
  %v1110 = vrot.slane %v396, 1
  %v1111 = vsel %vm1052, %v1109, %v1110
  %v1112 = vrot.slane %v397, 1
  %v1113 = vsel %vm1052, %v1110, %v1112
  %v1114 = vrot.slane %v398, 1
  %v1115 = vsel %vm1052, %v1112, %v1114
  %v1116 = vrot.slane %v399, 1
  %v1117 = vrot.slane %v400, 1
  %v1118 = vsel %vm1052, %v1116, %v1117
  %v1119 = vrot.slane %v401, 1
  %v1120 = vsel %vm1052, %v1117, %v1119
  %v1121 = vrot.slane %v402, 1
  %v1122 = vsel %vm1052, %v1119, %v1121
  %v1123 = vrot.slane %v403, 1
  %v1124 = vrot.slane %v404, 1
  %v1125 = vsel %vm1052, %v1123, %v1124
  %v1126 = vrot.slane %v405, 1
  %v1127 = vsel %vm1052, %v1124, %v1126
  %v1128 = vrot.slane %v406, 1
  %v1129 = vsel %vm1052, %v1126, %v1128
  %v1130 = vrot.slane %v407, 1
  %v1131 = vrot.slane %v408, 1
  %v1132 = vsel %vm1052, %v1130, %v1131
  %v1133 = vrot.slane %v409, 1
  %v1134 = vsel %vm1052, %v1131, %v1133
  %v1135 = vrot.slane %v410, 1
  %v1136 = vsel %vm1052, %v1133, %v1135
  %v1137 = vrot.slane %v411, 1
  %v1138 = vrot.slane %v412, 1
  %v1139 = vsel %vm1052, %v1137, %v1138
  %v1140 = vrot.slane %v413, 1
  %v1141 = vsel %vm1052, %v1138, %v1140
  %v1142 = vrot.slane %v414, 1
  %v1143 = vsel %vm1052, %v1140, %v1142
  %v1144 = vrot.slane %v415, 1
  %v1145 = vrot.slane %v416, 1
  %v1146 = vsel %vm1052, %v1144, %v1145
  %v1147 = vrot.slane %v417, 1
  %v1148 = vsel %vm1052, %v1145, %v1147
  %v1149 = vrot.slane %v418, 1
  %v1150 = vsel %vm1052, %v1147, %v1149
  %v1151 = vrot.slane %v419, 1
  %v1152 = vrot.slane %v420, 1
  %v1153 = vsel %vm1052, %v1151, %v1152
  %v1154 = vrot.slane %v421, 1
  %v1155 = vsel %vm1052, %v1152, %v1154
  %v1156 = vrot.slane %v422, 1
  %v1157 = vsel %vm1052, %v1154, %v1156
  %v1158 = vrot.slane %v423, 1
  %v1159 = vrot.slane %v424, 1
  %v1160 = vsel %vm1052, %v1158, %v1159
  %v1161 = vrot.slane %v425, 1
  %v1162 = vsel %vm1052, %v1159, %v1161
  %v1163 = vrot.slane %v426, 1
  %v1164 = vsel %vm1052, %v1161, %v1163
  %1165 = vrot.lane.b32.xlu0 %v1055, 32
  %v1166 = vpop.permute.xlu0 %1165
  %1167 = vrot.lane.b32.xlu0 %v1057, 32
  %v1168 = vpop.permute.xlu0 %1167
  %1169 = vrot.lane.b32.xlu0 %v1059, 32
  %v1170 = vpop.permute.xlu0 %1169
  %1171 = vrot.lane.b32.xlu0 %v1058, 32
  %v1172 = vpop.permute.xlu0 %1171
  %1173 = vrot.lane.b32.xlu0 %v1062, 32
  %v1174 = vpop.permute.xlu0 %1173
  %1175 = vrot.lane.b32.xlu0 %v1064, 32
  %v1176 = vpop.permute.xlu0 %1175
  %1177 = vrot.lane.b32.xlu0 %v1066, 32
  %v1178 = vpop.permute.xlu0 %1177
  %1179 = vrot.lane.b32.xlu0 %v1065, 32
  %v1180 = vpop.permute.xlu0 %1179
  %1181 = vrot.lane.b32.xlu0 %v1069, 32
  %v1182 = vpop.permute.xlu0 %1181
  %1183 = vrot.lane.b32.xlu0 %v1071, 32
  %v1184 = vpop.permute.xlu0 %1183
  %1185 = vrot.lane.b32.xlu0 %v1073, 32
  %v1186 = vpop.permute.xlu0 %1185
  %1187 = vrot.lane.b32.xlu0 %v1072, 32
  %v1188 = vpop.permute.xlu0 %1187
  %1189 = vrot.lane.b32.xlu0 %v1076, 32
  %v1190 = vpop.permute.xlu0 %1189
  %1191 = vrot.lane.b32.xlu0 %v1078, 32
  %v1192 = vpop.permute.xlu0 %1191
  %1193 = vrot.lane.b32.xlu0 %v1080, 32
  %v1194 = vpop.permute.xlu0 %1193
  %1195 = vrot.lane.b32.xlu0 %v1079, 32
  %v1196 = vpop.permute.xlu0 %1195
  %1197 = vrot.lane.b32.xlu0 %v1083, 32
  %v1198 = vpop.permute.xlu0 %1197
  %1199 = vrot.lane.b32.xlu0 %v1085, 32
  %v1200 = vpop.permute.xlu0 %1199
  %1201 = vrot.lane.b32.xlu0 %v1087, 32
  %v1202 = vpop.permute.xlu0 %1201
  %1203 = vrot.lane.b32.xlu0 %v1086, 32
  %v1204 = vpop.permute.xlu0 %1203
  %1205 = vrot.lane.b32.xlu0 %v1090, 32
  %v1206 = vpop.permute.xlu0 %1205
  %1207 = vrot.lane.b32.xlu0 %v1092, 32
  %v1208 = vpop.permute.xlu0 %1207
  %1209 = vrot.lane.b32.xlu0 %v1094, 32
  %v1210 = vpop.permute.xlu0 %1209
  %1211 = vrot.lane.b32.xlu0 %v1093, 32
  %v1212 = vpop.permute.xlu0 %1211
  %1213 = vrot.lane.b32.xlu0 %v1097, 32
  %v1214 = vpop.permute.xlu0 %1213
  %1215 = vrot.lane.b32.xlu0 %v1099, 32
  %v1216 = vpop.permute.xlu0 %1215
  %1217 = vrot.lane.b32.xlu0 %v1101, 32
  %v1218 = vpop.permute.xlu0 %1217
  %1219 = vrot.lane.b32.xlu0 %v1100, 32
  %v1220 = vpop.permute.xlu0 %1219
  %1221 = vrot.lane.b32.xlu0 %v1104, 32
  %v1222 = vpop.permute.xlu0 %1221
  %1223 = vrot.lane.b32.xlu0 %v1106, 32
  %v1224 = vpop.permute.xlu0 %1223
  %1225 = vrot.lane.b32.xlu0 %v1108, 32
  %v1226 = vpop.permute.xlu0 %1225
  %1227 = vrot.lane.b32.xlu0 %v1107, 32
  %v1228 = vpop.permute.xlu0 %1227
  %1229 = vrot.lane.b32.xlu0 %v1111, 32
  %v1230 = vpop.permute.xlu0 %1229
  %1231 = vrot.lane.b32.xlu0 %v1113, 32
  %v1232 = vpop.permute.xlu0 %1231
  %1233 = vrot.lane.b32.xlu0 %v1115, 32
  %v1234 = vpop.permute.xlu0 %1233
  %1235 = vrot.lane.b32.xlu0 %v1114, 32
  %v1236 = vpop.permute.xlu0 %1235
  %1237 = vrot.lane.b32.xlu0 %v1118, 32
  %v1238 = vpop.permute.xlu0 %1237
  %1239 = vrot.lane.b32.xlu0 %v1120, 32
  %v1240 = vpop.permute.xlu0 %1239
  %1241 = vrot.lane.b32.xlu0 %v1122, 32
  %v1242 = vpop.permute.xlu0 %1241
  %1243 = vrot.lane.b32.xlu0 %v1121, 32
  %v1244 = vpop.permute.xlu0 %1243
  %1245 = vrot.lane.b32.xlu0 %v1125, 32
  %v1246 = vpop.permute.xlu0 %1245
  %1247 = vrot.lane.b32.xlu0 %v1127, 32
  %v1248 = vpop.permute.xlu0 %1247
  %1249 = vrot.lane.b32.xlu0 %v1129, 32
  %v1250 = vpop.permute.xlu0 %1249
  %1251 = vrot.lane.b32.xlu0 %v1128, 32
  %v1252 = vpop.permute.xlu0 %1251
  %1253 = vrot.lane.b32.xlu0 %v1132, 32
  %v1254 = vpop.permute.xlu0 %1253
  %1255 = vrot.lane.b32.xlu0 %v1134, 32
  %v1256 = vpop.permute.xlu0 %1255
  %1257 = vrot.lane.b32.xlu0 %v1136, 32
  %v1258 = vpop.permute.xlu0 %1257
  %1259 = vrot.lane.b32.xlu0 %v1135, 32
  %v1260 = vpop.permute.xlu0 %1259
  %1261 = vrot.lane.b32.xlu0 %v1139, 32
  %v1262 = vpop.permute.xlu0 %1261
  %1263 = vrot.lane.b32.xlu0 %v1141, 32
  %v1264 = vpop.permute.xlu0 %1263
  %1265 = vrot.lane.b32.xlu0 %v1143, 32
  %v1266 = vpop.permute.xlu0 %1265
  %1267 = vrot.lane.b32.xlu0 %v1142, 32
  %v1268 = vpop.permute.xlu0 %1267
  %1269 = vrot.lane.b32.xlu0 %v1146, 32
  %v1270 = vpop.permute.xlu0 %1269
  %1271 = vrot.lane.b32.xlu0 %v1148, 32
  %v1272 = vpop.permute.xlu0 %1271
  %1273 = vrot.lane.b32.xlu0 %v1150, 32
  %v1274 = vpop.permute.xlu0 %1273
  %1275 = vrot.lane.b32.xlu0 %v1149, 32
  %v1276 = vpop.permute.xlu0 %1275
  %1277 = vrot.lane.b32.xlu0 %v1153, 32
  %v1278 = vpop.permute.xlu0 %1277
  %1279 = vrot.lane.b32.xlu0 %v1155, 32
  %v1280 = vpop.permute.xlu0 %1279
  %1281 = vrot.lane.b32.xlu0 %v1157, 32
  %v1282 = vpop.permute.xlu0 %1281
  %1283 = vrot.lane.b32.xlu0 %v1156, 32
  %v1284 = vpop.permute.xlu0 %1283
  %1285 = vrot.lane.b32.xlu0 %v1160, 32
  %v1286 = vpop.permute.xlu0 %1285
  %1287 = vrot.lane.b32.xlu0 %v1162, 32
  %v1288 = vpop.permute.xlu0 %1287
  %1289 = vrot.lane.b32.xlu0 %v1164, 32
  %v1290 = vpop.permute.xlu0 %1289
  %1291 = vrot.lane.b32.xlu0 %v1163, 32
  %v1292 = vpop.permute.xlu0 %1291
  %vm1293 = vcmask 130048
  %v1295 = vsel %vm1293, %v363, %v925
  %v1297 = vsel %vm1293, %v364, %v927
  %v1299 = vsel %vm1293, %v365, %v929
  %v1301 = vsel %vm1293, %v366, %v931
  %v1303 = vsel %vm1293, %v367, %v933
  %v1305 = vsel %vm1293, %v368, %v935
  %v1307 = vsel %vm1293, %v369, %v937
  %v1309 = vsel %vm1293, %v370, %v939
  %v1311 = vsel %vm1293, %v371, %v941
  %v1313 = vsel %vm1293, %v372, %v943
  %v1315 = vsel %vm1293, %v373, %v945
  %v1317 = vsel %vm1293, %v374, %v947
  %v1319 = vsel %vm1293, %v375, %v949
  %v1321 = vsel %vm1293, %v376, %v951
  %v1323 = vsel %vm1293, %v377, %v953
  %v1325 = vsel %vm1293, %v378, %v955
  %v1327 = vsel %vm1293, %v379, %v957
  %v1329 = vsel %vm1293, %v380, %v959
  %v1331 = vsel %vm1293, %v381, %v961
  %v1333 = vsel %vm1293, %v382, %v963
  %v1335 = vsel %vm1293, %v383, %v965
  %v1337 = vsel %vm1293, %v384, %v967
  %v1339 = vsel %vm1293, %v385, %v969
  %v1341 = vsel %vm1293, %v386, %v971
  %v1343 = vsel %vm1293, %v387, %v973
  %v1345 = vsel %vm1293, %v388, %v975
  %v1347 = vsel %vm1293, %v389, %v977
  %v1349 = vsel %vm1293, %v390, %v979
  %v1351 = vsel %vm1293, %v391, %v981
  %v1353 = vsel %vm1293, %v392, %v983
  %v1355 = vsel %vm1293, %v393, %v985
  %v1357 = vsel %vm1293, %v394, %v987
  %v1359 = vsel %vm1293, %v395, %v989
  %v1361 = vsel %vm1293, %v396, %v991
  %v1363 = vsel %vm1293, %v397, %v993
  %v1365 = vsel %vm1293, %v398, %v995
  %v1367 = vsel %vm1293, %v399, %v997
  %v1369 = vsel %vm1293, %v400, %v999
  %v1371 = vsel %vm1293, %v401, %v1001
  %v1373 = vsel %vm1293, %v402, %v1003
  %v1375 = vsel %vm1293, %v403, %v1005
  %v1377 = vsel %vm1293, %v404, %v1007
  %v1379 = vsel %vm1293, %v405, %v1009
  %v1381 = vsel %vm1293, %v406, %v1011
  %v1383 = vsel %vm1293, %v407, %v1013
  %v1385 = vsel %vm1293, %v408, %v1015
  %v1387 = vsel %vm1293, %v409, %v1017
  %v1389 = vsel %vm1293, %v410, %v1019
  %v1391 = vsel %vm1293, %v411, %v1021
  %v1393 = vsel %vm1293, %v412, %v1023
  %v1395 = vsel %vm1293, %v413, %v1025
  %v1397 = vsel %vm1293, %v414, %v1027
  %v1399 = vsel %vm1293, %v415, %v1029
  %v1401 = vsel %vm1293, %v416, %v1031
  %v1403 = vsel %vm1293, %v417, %v1033
  %v1405 = vsel %vm1293, %v418, %v1035
  %v1407 = vsel %vm1293, %v419, %v1037
  %v1409 = vsel %vm1293, %v420, %v1039
  %v1411 = vsel %vm1293, %v421, %v1041
  %v1413 = vsel %vm1293, %v422, %v1043
  %v1415 = vsel %vm1293, %v423, %v1045
  %v1417 = vsel %vm1293, %v424, %v1047
  %v1419 = vsel %vm1293, %v425, %v1049
  %v1421 = vsel %vm1293, %v426, %v1051
  %vm1422 = vcmask 261120
  %v1424 = vsel %vm1422, %v1295, %v1166
  %v1426 = vsel %vm1422, %v1297, %v1168
  %v1428 = vsel %vm1422, %v1299, %v1170
  %v1430 = vsel %vm1422, %v1301, %v1172
  %v1432 = vsel %vm1422, %v1303, %v1174
  %v1434 = vsel %vm1422, %v1305, %v1176
  %v1436 = vsel %vm1422, %v1307, %v1178
  %v1438 = vsel %vm1422, %v1309, %v1180
  %v1440 = vsel %vm1422, %v1311, %v1182
  %v1442 = vsel %vm1422, %v1313, %v1184
  %v1444 = vsel %vm1422, %v1315, %v1186
  %v1446 = vsel %vm1422, %v1317, %v1188
  %v1448 = vsel %vm1422, %v1319, %v1190
  %v1450 = vsel %vm1422, %v1321, %v1192
  %v1452 = vsel %vm1422, %v1323, %v1194
  %v1454 = vsel %vm1422, %v1325, %v1196
  %v1456 = vsel %vm1422, %v1327, %v1198
  %v1458 = vsel %vm1422, %v1329, %v1200
  %v1460 = vsel %vm1422, %v1331, %v1202
  %v1462 = vsel %vm1422, %v1333, %v1204
  %v1464 = vsel %vm1422, %v1335, %v1206
  %v1466 = vsel %vm1422, %v1337, %v1208
  %v1468 = vsel %vm1422, %v1339, %v1210
  %v1470 = vsel %vm1422, %v1341, %v1212
  %v1472 = vsel %vm1422, %v1343, %v1214
  %v1474 = vsel %vm1422, %v1345, %v1216
  %v1476 = vsel %vm1422, %v1347, %v1218
  %v1478 = vsel %vm1422, %v1349, %v1220
  %v1480 = vsel %vm1422, %v1351, %v1222
  %v1482 = vsel %vm1422, %v1353, %v1224
  %v1484 = vsel %vm1422, %v1355, %v1226
  %v1486 = vsel %vm1422, %v1357, %v1228
  %v1488 = vsel %vm1422, %v1359, %v1230
  %v1490 = vsel %vm1422, %v1361, %v1232
  %v1492 = vsel %vm1422, %v1363, %v1234
  %v1494 = vsel %vm1422, %v1365, %v1236
  %v1496 = vsel %vm1422, %v1367, %v1238
  %v1498 = vsel %vm1422, %v1369, %v1240
  %v1500 = vsel %vm1422, %v1371, %v1242
  %v1502 = vsel %vm1422, %v1373, %v1244
  %v1504 = vsel %vm1422, %v1375, %v1246
  %v1506 = vsel %vm1422, %v1377, %v1248
  %v1508 = vsel %vm1422, %v1379, %v1250
  %v1510 = vsel %vm1422, %v1381, %v1252
  %v1512 = vsel %vm1422, %v1383, %v1254
  %v1514 = vsel %vm1422, %v1385, %v1256
  %v1516 = vsel %vm1422, %v1387, %v1258
  %v1518 = vsel %vm1422, %v1389, %v1260
  %v1520 = vsel %vm1422, %v1391, %v1262
  %v1522 = vsel %vm1422, %v1393, %v1264
  %v1524 = vsel %vm1422, %v1395, %v1266
  %v1526 = vsel %vm1422, %v1397, %v1268
  %v1528 = vsel %vm1422, %v1399, %v1270
  %v1530 = vsel %vm1422, %v1401, %v1272
  %v1532 = vsel %vm1422, %v1403, %v1274
  %v1534 = vsel %vm1422, %v1405, %v1276
  %v1536 = vsel %vm1422, %v1407, %v1278
  %v1538 = vsel %vm1422, %v1409, %v1280
  %v1540 = vsel %vm1422, %v1411, %v1282
  %v1542 = vsel %vm1422, %v1413, %v1284
  %v1544 = vsel %vm1422, %v1415, %v1286
  %v1546 = vsel %vm1422, %v1417, %v1288
  %v1548 = vsel %vm1422, %v1419, %v1290
  %v1550 = vsel %vm1422, %v1421, %v1292
  %v1599 = vrot.slane %v1424, 1
  %v1600 = vrot.slane %v1424, 2
  %v1601 = vrot.slane %v1424, 3
  %v1602 = vrot.slane %v1424, 4
  %v1603 = vrot.slane %v1424, 5
  %v1604 = vrot.slane %v1424, 6
  %v1605 = vrot.slane %v1424, 7
  %v1606 = vrot.slane %v1426, 1
  %v1607 = vrot.slane %v1426, 2
  %v1608 = vrot.slane %v1426, 3
  %v1609 = vrot.slane %v1426, 4
  %v1610 = vrot.slane %v1426, 5
  %v1611 = vrot.slane %v1426, 6
  %v1612 = vrot.slane %v1426, 7
  %v1613 = vrot.slane %v1428, 1
  %v1614 = vrot.slane %v1428, 2
  %v1615 = vrot.slane %v1428, 3
  %v1616 = vrot.slane %v1428, 4
  %v1617 = vrot.slane %v1428, 5
  %v1618 = vrot.slane %v1428, 6
  %v1619 = vrot.slane %v1428, 7
  %v1620 = vrot.slane %v1432, 1
  %v1621 = vrot.slane %v1432, 2
  %v1622 = vrot.slane %v1432, 3
  %v1623 = vrot.slane %v1432, 4
  %v1624 = vrot.slane %v1432, 5
  %v1625 = vrot.slane %v1432, 6
  %v1626 = vrot.slane %v1432, 7
  %v1627 = vrot.slane %v1434, 1
  %v1628 = vrot.slane %v1434, 2
  %v1629 = vrot.slane %v1434, 3
  %v1630 = vrot.slane %v1434, 4
  %v1631 = vrot.slane %v1434, 5
  %v1632 = vrot.slane %v1434, 6
  %v1633 = vrot.slane %v1434, 7
  %v1634 = vrot.slane %v1436, 1
  %v1635 = vrot.slane %v1436, 2
  %v1636 = vrot.slane %v1436, 3
  %v1637 = vrot.slane %v1436, 4
  %v1638 = vrot.slane %v1436, 5
  %v1639 = vrot.slane %v1436, 6
  %v1640 = vrot.slane %v1436, 7
  %v1641 = vrot.slane %v1440, 1
  %v1642 = vrot.slane %v1440, 2
  %v1643 = vrot.slane %v1440, 3
  %v1644 = vrot.slane %v1440, 4
  %v1645 = vrot.slane %v1440, 5
  %v1646 = vrot.slane %v1440, 6
  %v1647 = vrot.slane %v1440, 7
  %v1648 = vrot.slane %v1442, 1
  %v1649 = vrot.slane %v1442, 2
  %v1650 = vrot.slane %v1442, 3
  %v1651 = vrot.slane %v1442, 4
  %v1652 = vrot.slane %v1442, 5
  %v1653 = vrot.slane %v1442, 6
  %v1654 = vrot.slane %v1442, 7
  %v1655 = vrot.slane %v1444, 1
  %v1656 = vrot.slane %v1444, 2
  %v1657 = vrot.slane %v1444, 3
  %v1658 = vrot.slane %v1444, 4
  %v1659 = vrot.slane %v1444, 5
  %v1660 = vrot.slane %v1444, 6
  %v1661 = vrot.slane %v1444, 7
  %v1662 = vrot.slane %v1448, 1
  %v1663 = vrot.slane %v1448, 2
  %v1664 = vrot.slane %v1448, 3
  %v1665 = vrot.slane %v1448, 4
  %v1666 = vrot.slane %v1448, 5
  %v1667 = vrot.slane %v1448, 6
  %v1668 = vrot.slane %v1448, 7
  %v1669 = vrot.slane %v1450, 1
  %v1670 = vrot.slane %v1450, 2
  %v1671 = vrot.slane %v1450, 3
  %v1672 = vrot.slane %v1450, 4
  %v1673 = vrot.slane %v1450, 5
  %v1674 = vrot.slane %v1450, 6
  %v1675 = vrot.slane %v1450, 7
  %v1676 = vrot.slane %v1452, 1
  %v1677 = vrot.slane %v1452, 2
  %v1678 = vrot.slane %v1452, 3
  %v1679 = vrot.slane %v1452, 4
  %v1680 = vrot.slane %v1452, 5
  %v1681 = vrot.slane %v1452, 6
  %v1682 = vrot.slane %v1452, 7
  %v1683 = vrot.slane %v1456, 1
  %v1684 = vrot.slane %v1456, 2
  %v1685 = vrot.slane %v1456, 3
  %v1686 = vrot.slane %v1456, 4
  %v1687 = vrot.slane %v1456, 5
  %v1688 = vrot.slane %v1456, 6
  %v1689 = vrot.slane %v1456, 7
  %v1690 = vrot.slane %v1458, 1
  %v1691 = vrot.slane %v1458, 2
  %v1692 = vrot.slane %v1458, 3
  %v1693 = vrot.slane %v1458, 4
  %v1694 = vrot.slane %v1458, 5
  %v1695 = vrot.slane %v1458, 6
  %v1696 = vrot.slane %v1458, 7
  %v1697 = vrot.slane %v1460, 1
  %v1698 = vrot.slane %v1460, 2
  %v1699 = vrot.slane %v1460, 3
  %v1700 = vrot.slane %v1460, 4
  %v1701 = vrot.slane %v1460, 5
  %v1702 = vrot.slane %v1460, 6
  %v1703 = vrot.slane %v1460, 7
  %v1704 = vrot.slane %v1464, 1
  %v1705 = vrot.slane %v1464, 2
  %v1706 = vrot.slane %v1464, 3
  %v1707 = vrot.slane %v1464, 4
  %v1708 = vrot.slane %v1464, 5
  %v1709 = vrot.slane %v1464, 6
  %v1710 = vrot.slane %v1464, 7
  %v1711 = vrot.slane %v1466, 1
  %v1712 = vrot.slane %v1466, 2
  %v1713 = vrot.slane %v1466, 3
  %v1714 = vrot.slane %v1466, 4
  %v1715 = vrot.slane %v1466, 5
  %v1716 = vrot.slane %v1466, 6
  %v1717 = vrot.slane %v1466, 7
  %v1718 = vrot.slane %v1468, 1
  %v1719 = vrot.slane %v1468, 2
  %v1720 = vrot.slane %v1468, 3
  %v1721 = vrot.slane %v1468, 4
  %v1722 = vrot.slane %v1468, 5
  %v1723 = vrot.slane %v1468, 6
  %v1724 = vrot.slane %v1468, 7
  %v1725 = vrot.slane %v1472, 1
  %v1726 = vrot.slane %v1472, 2
  %v1727 = vrot.slane %v1472, 3
  %v1728 = vrot.slane %v1472, 4
  %v1729 = vrot.slane %v1472, 5
  %v1730 = vrot.slane %v1472, 6
  %v1731 = vrot.slane %v1472, 7
  %v1732 = vrot.slane %v1474, 1
  %v1733 = vrot.slane %v1474, 2
  %v1734 = vrot.slane %v1474, 3
  %v1735 = vrot.slane %v1474, 4
  %v1736 = vrot.slane %v1474, 5
  %v1737 = vrot.slane %v1474, 6
  %v1738 = vrot.slane %v1474, 7
  %v1739 = vrot.slane %v1476, 1
  %v1740 = vrot.slane %v1476, 2
  %v1741 = vrot.slane %v1476, 3
  %v1742 = vrot.slane %v1476, 4
  %v1743 = vrot.slane %v1476, 5
  %v1744 = vrot.slane %v1476, 6
  %v1745 = vrot.slane %v1476, 7
  %v1746 = vrot.slane %v1480, 1
  %v1747 = vrot.slane %v1480, 2
  %v1748 = vrot.slane %v1480, 3
  %v1749 = vrot.slane %v1480, 4
  %v1750 = vrot.slane %v1480, 5
  %v1751 = vrot.slane %v1480, 6
  %v1752 = vrot.slane %v1480, 7
  %v1753 = vrot.slane %v1482, 1
  %v1754 = vrot.slane %v1482, 2
  %v1755 = vrot.slane %v1482, 3
  %v1756 = vrot.slane %v1482, 4
  %v1757 = vrot.slane %v1482, 5
  %v1758 = vrot.slane %v1482, 6
  %v1759 = vrot.slane %v1482, 7
  %v1760 = vrot.slane %v1484, 1
  %v1761 = vrot.slane %v1484, 2
  %v1762 = vrot.slane %v1484, 3
  %v1763 = vrot.slane %v1484, 4
  %v1764 = vrot.slane %v1484, 5
  %v1765 = vrot.slane %v1484, 6
  %v1766 = vrot.slane %v1484, 7
  %v1767 = vrot.slane %v1488, 1
  %v1768 = vrot.slane %v1488, 2
  %v1769 = vrot.slane %v1488, 3
  %v1770 = vrot.slane %v1488, 4
  %v1771 = vrot.slane %v1488, 5
  %v1772 = vrot.slane %v1488, 6
  %v1773 = vrot.slane %v1488, 7
  %v1774 = vrot.slane %v1490, 1
  %v1775 = vrot.slane %v1490, 2
  %v1776 = vrot.slane %v1490, 3
  %v1777 = vrot.slane %v1490, 4
  %v1778 = vrot.slane %v1490, 5
  %v1779 = vrot.slane %v1490, 6
  %v1780 = vrot.slane %v1490, 7
  %v1781 = vrot.slane %v1492, 1
  %v1782 = vrot.slane %v1492, 2
  %v1783 = vrot.slane %v1492, 3
  %v1784 = vrot.slane %v1492, 4
  %v1785 = vrot.slane %v1492, 5
  %v1786 = vrot.slane %v1492, 6
  %v1787 = vrot.slane %v1492, 7
  %v1788 = vrot.slane %v1496, 1
  %v1789 = vrot.slane %v1496, 2
  %v1790 = vrot.slane %v1496, 3
  %v1791 = vrot.slane %v1496, 4
  %v1792 = vrot.slane %v1496, 5
  %v1793 = vrot.slane %v1496, 6
  %v1794 = vrot.slane %v1496, 7
  %v1795 = vrot.slane %v1498, 1
  %v1796 = vrot.slane %v1498, 2
  %v1797 = vrot.slane %v1498, 3
  %v1798 = vrot.slane %v1498, 4
  %v1799 = vrot.slane %v1498, 5
  %v1800 = vrot.slane %v1498, 6
  %v1801 = vrot.slane %v1498, 7
  %v1802 = vrot.slane %v1500, 1
  %v1803 = vrot.slane %v1500, 2
  %v1804 = vrot.slane %v1500, 3
  %v1805 = vrot.slane %v1500, 4
  %v1806 = vrot.slane %v1500, 5
  %v1807 = vrot.slane %v1500, 6
  %v1808 = vrot.slane %v1500, 7
  %v1809 = vrot.slane %v1504, 1
  %v1810 = vrot.slane %v1504, 2
  %v1811 = vrot.slane %v1504, 3
  %v1812 = vrot.slane %v1504, 4
  %v1813 = vrot.slane %v1504, 5
  %v1814 = vrot.slane %v1504, 6
  %v1815 = vrot.slane %v1504, 7
  %v1816 = vrot.slane %v1506, 1
  %v1817 = vrot.slane %v1506, 2
  %v1818 = vrot.slane %v1506, 3
  %v1819 = vrot.slane %v1506, 4
  %v1820 = vrot.slane %v1506, 5
  %v1821 = vrot.slane %v1506, 6
  %v1822 = vrot.slane %v1506, 7
  %v1823 = vrot.slane %v1508, 1
  %v1824 = vrot.slane %v1508, 2
  %v1825 = vrot.slane %v1508, 3
  %v1826 = vrot.slane %v1508, 4
  %v1827 = vrot.slane %v1508, 5
  %v1828 = vrot.slane %v1508, 6
  %v1829 = vrot.slane %v1508, 7
  %v1830 = vrot.slane %v1512, 1
  %v1831 = vrot.slane %v1512, 2
  %v1832 = vrot.slane %v1512, 3
  %v1833 = vrot.slane %v1512, 4
  %v1834 = vrot.slane %v1512, 5
  %v1835 = vrot.slane %v1512, 6
  %v1836 = vrot.slane %v1512, 7
  %v1837 = vrot.slane %v1514, 1
  %v1838 = vrot.slane %v1514, 2
  %v1839 = vrot.slane %v1514, 3
  %v1840 = vrot.slane %v1514, 4
  %v1841 = vrot.slane %v1514, 5
  %v1842 = vrot.slane %v1514, 6
  %v1843 = vrot.slane %v1514, 7
  %v1844 = vrot.slane %v1516, 1
  %v1845 = vrot.slane %v1516, 2
  %v1846 = vrot.slane %v1516, 3
  %v1847 = vrot.slane %v1516, 4
  %v1848 = vrot.slane %v1516, 5
  %v1849 = vrot.slane %v1516, 6
  %v1850 = vrot.slane %v1516, 7
  %v1851 = vrot.slane %v1520, 1
  %v1852 = vrot.slane %v1520, 2
  %v1853 = vrot.slane %v1520, 3
  %v1854 = vrot.slane %v1520, 4
  %v1855 = vrot.slane %v1520, 5
  %v1856 = vrot.slane %v1520, 6
  %v1857 = vrot.slane %v1520, 7
  %v1858 = vrot.slane %v1522, 1
  %v1859 = vrot.slane %v1522, 2
  %v1860 = vrot.slane %v1522, 3
  %v1861 = vrot.slane %v1522, 4
  %v1862 = vrot.slane %v1522, 5
  %v1863 = vrot.slane %v1522, 6
  %v1864 = vrot.slane %v1522, 7
  %v1865 = vrot.slane %v1524, 1
  %v1866 = vrot.slane %v1524, 2
  %v1867 = vrot.slane %v1524, 3
  %v1868 = vrot.slane %v1524, 4
  %v1869 = vrot.slane %v1524, 5
  %v1870 = vrot.slane %v1524, 6
  %v1871 = vrot.slane %v1524, 7
  %v1872 = vrot.slane %v1528, 1
  %v1873 = vrot.slane %v1528, 2
  %v1874 = vrot.slane %v1528, 3
  %v1875 = vrot.slane %v1528, 4
  %v1876 = vrot.slane %v1528, 5
  %v1877 = vrot.slane %v1528, 6
  %v1878 = vrot.slane %v1528, 7
  %v1879 = vrot.slane %v1530, 1
  %v1880 = vrot.slane %v1530, 2
  %v1881 = vrot.slane %v1530, 3
  %v1882 = vrot.slane %v1530, 4
  %v1883 = vrot.slane %v1530, 5
  %v1884 = vrot.slane %v1530, 6
  %v1885 = vrot.slane %v1530, 7
  %v1886 = vrot.slane %v1532, 1
  %v1887 = vrot.slane %v1532, 2
  %v1888 = vrot.slane %v1532, 3
  %v1889 = vrot.slane %v1532, 4
  %v1890 = vrot.slane %v1532, 5
  %v1891 = vrot.slane %v1532, 6
  %v1892 = vrot.slane %v1532, 7
  %v1893 = vrot.slane %v1536, 1
  %v1894 = vrot.slane %v1536, 2
  %v1895 = vrot.slane %v1536, 3
  %v1896 = vrot.slane %v1536, 4
  %v1897 = vrot.slane %v1536, 5
  %v1898 = vrot.slane %v1536, 6
  %v1899 = vrot.slane %v1536, 7
  %v1900 = vrot.slane %v1538, 1
  %v1901 = vrot.slane %v1538, 2
  %v1902 = vrot.slane %v1538, 3
  %v1903 = vrot.slane %v1538, 4
  %v1904 = vrot.slane %v1538, 5
  %v1905 = vrot.slane %v1538, 6
  %v1906 = vrot.slane %v1538, 7
  %v1907 = vrot.slane %v1540, 1
  %v1908 = vrot.slane %v1540, 2
  %v1909 = vrot.slane %v1540, 3
  %v1910 = vrot.slane %v1540, 4
  %v1911 = vrot.slane %v1540, 5
  %v1912 = vrot.slane %v1540, 6
  %v1913 = vrot.slane %v1540, 7
  %v1914 = vrot.slane %v1544, 1
  %v1915 = vrot.slane %v1544, 2
  %v1916 = vrot.slane %v1544, 3
  %v1917 = vrot.slane %v1544, 4
  %v1918 = vrot.slane %v1544, 5
  %v1919 = vrot.slane %v1544, 6
  %v1920 = vrot.slane %v1544, 7
  %v1921 = vrot.slane %v1546, 1
  %v1922 = vrot.slane %v1546, 2
  %v1923 = vrot.slane %v1546, 3
  %v1924 = vrot.slane %v1546, 4
  %v1925 = vrot.slane %v1546, 5
  %v1926 = vrot.slane %v1546, 6
  %v1927 = vrot.slane %v1546, 7
  %v1928 = vrot.slane %v1548, 1
  %v1929 = vrot.slane %v1548, 2
  %v1930 = vrot.slane %v1548, 3
  %v1931 = vrot.slane %v1548, 4
  %v1932 = vrot.slane %v1548, 5
  %v1933 = vrot.slane %v1548, 6
  %v1934 = vrot.slane %v1548, 7
  %v1935 = vld [vmem:[%s1] sm:$0xff]
  %v1936 = vld [vmem:[%s1 + $0x8] sm:$0xff]
  %v1937 = vld [vmem:[%s1 + $0x10] sm:$0xff]
  %v1938 = vld [vmem:[%s1 + $0x18] sm:$0xff]
  %v1939 = vld [vmem:[%s1 + $0x20] sm:$0xff]
  %v1940 = vld [vmem:[%s1 + $0x28] sm:$0xff]
  %1941 = vst [vmem:[#allocation1] ss:$9 sm:$0xff] %v1424
  %s1943 = scalar_lea.vmem [#allocation1], 1
  %1944 = vst [vmem:[%s1943] ss:$9 sm:$0xff] %v1599
  %s1946 = scalar_lea.vmem [#allocation1], 2
  %1947 = vst [vmem:[%s1946] ss:$9 sm:$0xff] %v1600
  %s1949 = scalar_lea.vmem [#allocation1], 3
  %1950 = vst [vmem:[%s1949] ss:$9 sm:$0xff] %v1601
  %s1952 = scalar_lea.vmem [#allocation1], 4
  %1953 = vst [vmem:[%s1952] ss:$9 sm:$0xff] %v1602
  %s1955 = scalar_lea.vmem [#allocation1], 5
  %1956 = vst [vmem:[%s1955] ss:$9 sm:$0xff] %v1603
  %s1958 = scalar_lea.vmem [#allocation1], 6
  %1959 = vst [vmem:[%s1958] ss:$9 sm:$0xff] %v1604
  %s1961 = scalar_lea.vmem [#allocation1], 7
  %1962 = vst [vmem:[%s1961] ss:$9 sm:$0xff] %v1605
  %v1963 = vld [vmem:[#allocation1] sm:$0xff]
  %1964 = vst [vmem:[#allocation1] ss:$9 sm:$0xff] %v1426
  %1966 = vst [vmem:[%s1943] ss:$9 sm:$0xff] %v1606
  %1968 = vst [vmem:[%s1946] ss:$9 sm:$0xff] %v1607
  %1970 = vst [vmem:[%s1949] ss:$9 sm:$0xff] %v1608
  %1972 = vst [vmem:[%s1952] ss:$9 sm:$0xff] %v1609
  %1974 = vst [vmem:[%s1955] ss:$9 sm:$0xff] %v1610
  %1976 = vst [vmem:[%s1958] ss:$9 sm:$0xff] %v1611
  %1978 = vst [vmem:[%s1961] ss:$9 sm:$0xff] %v1612
  %v1979 = vld [vmem:[#allocation1] sm:$0xff]
  %1980 = vst [vmem:[#allocation1] ss:$9 sm:$0xff] %v1428
  %1982 = vst [vmem:[%s1943] ss:$9 sm:$0xff] %v1613
  %1984 = vst [vmem:[%s1946] ss:$9 sm:$0xff] %v1614
  %1986 = vst [vmem:[%s1949] ss:$9 sm:$0xff] %v1615
  %1988 = vst [vmem:[%s1952] ss:$9 sm:$0xff] %v1616
  %1990 = vst [vmem:[%s1955] ss:$9 sm:$0xff] %v1617
  %1992 = vst [vmem:[%s1958] ss:$9 sm:$0xff] %v1618
  %1994 = vst [vmem:[%s1961] ss:$9 sm:$0xff] %v1619
  %v1995 = vld [vmem:[#allocation1] sm:$0xff]
  %1996 = vst [vmem:[#allocation1] ss:$9 sm:$0xff] %v1430
  %1997 = vst [vmem:[%s1943] ss:$9 sm:$0xff] %v1432
  %1999 = vst [vmem:[%s1946] ss:$9 sm:$0xff] %v1620
  %2001 = vst [vmem:[%s1949] ss:$9 sm:$0xff] %v1621
  %2003 = vst [vmem:[%s1952] ss:$9 sm:$0xff] %v1622
  %2005 = vst [vmem:[%s1955] ss:$9 sm:$0xff] %v1623
  %2007 = vst [vmem:[%s1958] ss:$9 sm:$0xff] %v1624
  %2009 = vst [vmem:[%s1961] ss:$9 sm:$0xff] %v1625
  %v2010 = vld [vmem:[#allocation1] sm:$0xff]
  %2012 = vst [vmem:[#allocation1] ss:$9 sm:$0xff] %v1626
  %2013 = vst [vmem:[%s1943] ss:$9 sm:$0xff] %v1434
  %2015 = vst [vmem:[%s1946] ss:$9 sm:$0xff] %v1627
  %2017 = vst [vmem:[%s1949] ss:$9 sm:$0xff] %v1628
  %2019 = vst [vmem:[%s1952] ss:$9 sm:$0xff] %v1629
  %2021 = vst [vmem:[%s1955] ss:$9 sm:$0xff] %v1630
  %2023 = vst [vmem:[%s1958] ss:$9 sm:$0xff] %v1631
  %2025 = vst [vmem:[%s1961] ss:$9 sm:$0xff] %v1632
  %v2026 = vld [vmem:[#allocation1] sm:$0xff]
  %2028 = vst [vmem:[#allocation1] ss:$9 sm:$0xff] %v1633
  %2029 = vst [vmem:[%s1943] ss:$9 sm:$0xff] %v1436
  %2031 = vst [vmem:[%s1946] ss:$9 sm:$0xff] %v1634
  %2033 = vst [vmem:[%s1949] ss:$9 sm:$0xff] %v1635
  %2035 = vst [vmem:[%s1952] ss:$9 sm:$0xff] %v1636
  %2037 = vst [vmem:[%s1955] ss:$9 sm:$0xff] %v1637
  %2039 = vst [vmem:[%s1958] ss:$9 sm:$0xff] %v1638
  %2041 = vst [vmem:[%s1961] ss:$9 sm:$0xff] %v1639
  %v2042 = vld [vmem:[#allocation1] sm:$0xff]
  %2044 = vst [vmem:[#allocation1] ss:$9 sm:$0xff] %v1640
  %2045 = vst [vmem:[%s1943] ss:$9 sm:$0xff] %v1438
  %2046 = vst [vmem:[%s1946] ss:$9 sm:$0xff] %v1440
  %2048 = vst [vmem:[%s1949] ss:$9 sm:$0xff] %v1641
  %2050 = vst [vmem:[%s1952] ss:$9 sm:$0xff] %v1642
  %2052 = vst [vmem:[%s1955] ss:$9 sm:$0xff] %v1643
  %2054 = vst [vmem:[%s1958] ss:$9 sm:$0xff] %v1644
  %2056 = vst [vmem:[%s1961] ss:$9 sm:$0xff] %v1645
  %v2057 = vld [vmem:[#allocation1] sm:$0xff]
  %2059 = vst [vmem:[#allocation1] ss:$9 sm:$0xff] %v1646
  %2061 = vst [vmem:[%s1943] ss:$9 sm:$0xff] %v1647
  %2062 = vst [vmem:[%s1946] ss:$9 sm:$0xff] %v1442
  %2064 = vst [vmem:[%s1949] ss:$9 sm:$0xff] %v1648
  %2066 = vst [vmem:[%s1952] ss:$9 sm:$0xff] %v1649
  %2068 = vst [vmem:[%s1955] ss:$9 sm:$0xff] %v1650
  %2070 = vst [vmem:[%s1958] ss:$9 sm:$0xff] %v1651
  %2072 = vst [vmem:[%s1961] ss:$9 sm:$0xff] %v1652
  %v2073 = vld [vmem:[#allocation1] sm:$0xff]
  %2075 = vst [vmem:[#allocation1] ss:$9 sm:$0xff] %v1653
  %2077 = vst [vmem:[%s1943] ss:$9 sm:$0xff] %v1654
  %2078 = vst [vmem:[%s1946] ss:$9 sm:$0xff] %v1444
  %2080 = vst [vmem:[%s1949] ss:$9 sm:$0xff] %v1655
  %2082 = vst [vmem:[%s1952] ss:$9 sm:$0xff] %v1656
  %2084 = vst [vmem:[%s1955] ss:$9 sm:$0xff] %v1657
  %2086 = vst [vmem:[%s1958] ss:$9 sm:$0xff] %v1658
  %2088 = vst [vmem:[%s1961] ss:$9 sm:$0xff] %v1659
  %v2089 = vld [vmem:[#allocation1] sm:$0xff]
  %2091 = vst [vmem:[#allocation1] ss:$9 sm:$0xff] %v1660
  %2093 = vst [vmem:[%s1943] ss:$9 sm:$0xff] %v1661
  %2094 = vst [vmem:[%s1946] ss:$9 sm:$0xff] %v1446
  %2095 = vst [vmem:[%s1949] ss:$9 sm:$0xff] %v1448
  %2097 = vst [vmem:[%s1952] ss:$9 sm:$0xff] %v1662
  %2099 = vst [vmem:[%s1955] ss:$9 sm:$0xff] %v1663
  %2101 = vst [vmem:[%s1958] ss:$9 sm:$0xff] %v1664
  %2103 = vst [vmem:[%s1961] ss:$9 sm:$0xff] %v1665
  %v2104 = vld [vmem:[#allocation1] sm:$0xff]
  %2106 = vst [vmem:[#allocation1] ss:$9 sm:$0xff] %v1666
  %2108 = vst [vmem:[%s1943] ss:$9 sm:$0xff] %v1667
  %2110 = vst [vmem:[%s1946] ss:$9 sm:$0xff] %v1668
  %2111 = vst [vmem:[%s1949] ss:$9 sm:$0xff] %v1450
  %2113 = vst [vmem:[%s1952] ss:$9 sm:$0xff] %v1669
  %2115 = vst [vmem:[%s1955] ss:$9 sm:$0xff] %v1670
  %2117 = vst [vmem:[%s1958] ss:$9 sm:$0xff] %v1671
  %2119 = vst [vmem:[%s1961] ss:$9 sm:$0xff] %v1672
  %v2120 = vld [vmem:[#allocation1] sm:$0xff]
  %2122 = vst [vmem:[#allocation1] ss:$9 sm:$0xff] %v1673
  %2124 = vst [vmem:[%s1943] ss:$9 sm:$0xff] %v1674
  %2126 = vst [vmem:[%s1946] ss:$9 sm:$0xff] %v1675
  %2127 = vst [vmem:[%s1949] ss:$9 sm:$0xff] %v1452
  %2129 = vst [vmem:[%s1952] ss:$9 sm:$0xff] %v1676
  %2131 = vst [vmem:[%s1955] ss:$9 sm:$0xff] %v1677
  %2133 = vst [vmem:[%s1958] ss:$9 sm:$0xff] %v1678
  %2135 = vst [vmem:[%s1961] ss:$9 sm:$0xff] %v1679
  %v2136 = vld [vmem:[#allocation1] sm:$0xff]
  %2138 = vst [vmem:[#allocation1] ss:$9 sm:$0xff] %v1680
  %2140 = vst [vmem:[%s1943] ss:$9 sm:$0xff] %v1681
  %2142 = vst [vmem:[%s1946] ss:$9 sm:$0xff] %v1682
  %2143 = vst [vmem:[%s1949] ss:$9 sm:$0xff] %v1454
  %2144 = vst [vmem:[%s1952] ss:$9 sm:$0xff] %v1456
  %2146 = vst [vmem:[%s1955] ss:$9 sm:$0xff] %v1683
  %2148 = vst [vmem:[%s1958] ss:$9 sm:$0xff] %v1684
  %2150 = vst [vmem:[%s1961] ss:$9 sm:$0xff] %v1685
  %v2151 = vld [vmem:[#allocation1] sm:$0xff]
  %2153 = vst [vmem:[#allocation1] ss:$9 sm:$0xff] %v1686
  %2155 = vst [vmem:[%s1943] ss:$9 sm:$0xff] %v1687
  %2157 = vst [vmem:[%s1946] ss:$9 sm:$0xff] %v1688
  %2159 = vst [vmem:[%s1949] ss:$9 sm:$0xff] %v1689
  %2160 = vst [vmem:[%s1952] ss:$9 sm:$0xff] %v1458
  %2162 = vst [vmem:[%s1955] ss:$9 sm:$0xff] %v1690
  %2164 = vst [vmem:[%s1958] ss:$9 sm:$0xff] %v1691
  %2166 = vst [vmem:[%s1961] ss:$9 sm:$0xff] %v1692
  %v2167 = vld [vmem:[#allocation1] sm:$0xff]
  %2169 = vst [vmem:[#allocation1] ss:$9 sm:$0xff] %v1693
  %2171 = vst [vmem:[%s1943] ss:$9 sm:$0xff] %v1694
  %2173 = vst [vmem:[%s1946] ss:$9 sm:$0xff] %v1695
  %2175 = vst [vmem:[%s1949] ss:$9 sm:$0xff] %v1696
  %2176 = vst [vmem:[%s1952] ss:$9 sm:$0xff] %v1460
  %2178 = vst [vmem:[%s1955] ss:$9 sm:$0xff] %v1697
  %2180 = vst [vmem:[%s1958] ss:$9 sm:$0xff] %v1698
  %2182 = vst [vmem:[%s1961] ss:$9 sm:$0xff] %v1699
  %v2183 = vld [vmem:[#allocation1] sm:$0xff]
  %2185 = vst [vmem:[#allocation1] ss:$9 sm:$0xff] %v1700
  %2187 = vst [vmem:[%s1943] ss:$9 sm:$0xff] %v1701
  %2189 = vst [vmem:[%s1946] ss:$9 sm:$0xff] %v1702
  %2191 = vst [vmem:[%s1949] ss:$9 sm:$0xff] %v1703
  %2192 = vst [vmem:[%s1952] ss:$9 sm:$0xff] %v1462
  %2193 = vst [vmem:[%s1955] ss:$9 sm:$0xff] %v1464
  %2195 = vst [vmem:[%s1958] ss:$9 sm:$0xff] %v1704
  %2197 = vst [vmem:[%s1961] ss:$9 sm:$0xff] %v1705
  %v2198 = vld [vmem:[#allocation1] sm:$0xff]
  %2200 = vst [vmem:[#allocation1] ss:$9 sm:$0xff] %v1706
  %2202 = vst [vmem:[%s1943] ss:$9 sm:$0xff] %v1707
  %2204 = vst [vmem:[%s1946] ss:$9 sm:$0xff] %v1708
  %2206 = vst [vmem:[%s1949] ss:$9 sm:$0xff] %v1709
  %2208 = vst [vmem:[%s1952] ss:$9 sm:$0xff] %v1710
  %2209 = vst [vmem:[%s1955] ss:$9 sm:$0xff] %v1466
  %2211 = vst [vmem:[%s1958] ss:$9 sm:$0xff] %v1711
  %2213 = vst [vmem:[%s1961] ss:$9 sm:$0xff] %v1712
  %v2214 = vld [vmem:[#allocation1] sm:$0xff]
  %2216 = vst [vmem:[#allocation1] ss:$9 sm:$0xff] %v1713
  %2218 = vst [vmem:[%s1943] ss:$9 sm:$0xff] %v1714
  %2220 = vst [vmem:[%s1946] ss:$9 sm:$0xff] %v1715
  %2222 = vst [vmem:[%s1949] ss:$9 sm:$0xff] %v1716
  %2224 = vst [vmem:[%s1952] ss:$9 sm:$0xff] %v1717
  %2225 = vst [vmem:[%s1955] ss:$9 sm:$0xff] %v1468
  %2227 = vst [vmem:[%s1958] ss:$9 sm:$0xff] %v1718
  %2229 = vst [vmem:[%s1961] ss:$9 sm:$0xff] %v1719
  %v2230 = vld [vmem:[#allocation1] sm:$0xff]
  %2232 = vst [vmem:[#allocation1] ss:$9 sm:$0xff] %v1720
  %2234 = vst [vmem:[%s1943] ss:$9 sm:$0xff] %v1721
  %2236 = vst [vmem:[%s1946] ss:$9 sm:$0xff] %v1722
  %2238 = vst [vmem:[%s1949] ss:$9 sm:$0xff] %v1723
  %2240 = vst [vmem:[%s1952] ss:$9 sm:$0xff] %v1724
  %2241 = vst [vmem:[%s1955] ss:$9 sm:$0xff] %v1470
  %2242 = vst [vmem:[%s1958] ss:$9 sm:$0xff] %v1472
  %2244 = vst [vmem:[%s1961] ss:$9 sm:$0xff] %v1725
  %v2245 = vld [vmem:[#allocation1] sm:$0xff]
  %2247 = vst [vmem:[#allocation1] ss:$9 sm:$0xff] %v1726
  %2249 = vst [vmem:[%s1943] ss:$9 sm:$0xff] %v1727
  %2251 = vst [vmem:[%s1946] ss:$9 sm:$0xff] %v1728
  %2253 = vst [vmem:[%s1949] ss:$9 sm:$0xff] %v1729
  %2255 = vst [vmem:[%s1952] ss:$9 sm:$0xff] %v1730
  %2257 = vst [vmem:[%s1955] ss:$9 sm:$0xff] %v1731
  %2258 = vst [vmem:[%s1958] ss:$9 sm:$0xff] %v1474
  %2260 = vst [vmem:[%s1961] ss:$9 sm:$0xff] %v1732
  %v2261 = vld [vmem:[#allocation1] sm:$0xff]
  %2263 = vst [vmem:[#allocation1] ss:$9 sm:$0xff] %v1733
  %2265 = vst [vmem:[%s1943] ss:$9 sm:$0xff] %v1734
  %2267 = vst [vmem:[%s1946] ss:$9 sm:$0xff] %v1735
  %2269 = vst [vmem:[%s1949] ss:$9 sm:$0xff] %v1736
  %2271 = vst [vmem:[%s1952] ss:$9 sm:$0xff] %v1737
  %2273 = vst [vmem:[%s1955] ss:$9 sm:$0xff] %v1738
  %2274 = vst [vmem:[%s1958] ss:$9 sm:$0xff] %v1476
  %2276 = vst [vmem:[%s1961] ss:$9 sm:$0xff] %v1739
  %v2277 = vld [vmem:[#allocation1] sm:$0xff]
  %2279 = vst [vmem:[#allocation1] ss:$9 sm:$0xff] %v1740
  %2281 = vst [vmem:[%s1943] ss:$9 sm:$0xff] %v1741
  %2283 = vst [vmem:[%s1946] ss:$9 sm:$0xff] %v1742
  %2285 = vst [vmem:[%s1949] ss:$9 sm:$0xff] %v1743
  %2287 = vst [vmem:[%s1952] ss:$9 sm:$0xff] %v1744
  %2289 = vst [vmem:[%s1955] ss:$9 sm:$0xff] %v1745
  %2290 = vst [vmem:[%s1958] ss:$9 sm:$0xff] %v1478
  %2291 = vst [vmem:[%s1961] ss:$9 sm:$0xff] %v1480
  %v2292 = vld [vmem:[#allocation1] sm:$0xff]
  %2294 = vst [vmem:[#allocation1] ss:$9 sm:$0xff] %v1746
  %2296 = vst [vmem:[%s1943] ss:$9 sm:$0xff] %v1747
  %2298 = vst [vmem:[%s1946] ss:$9 sm:$0xff] %v1748
  %2300 = vst [vmem:[%s1949] ss:$9 sm:$0xff] %v1749
  %2302 = vst [vmem:[%s1952] ss:$9 sm:$0xff] %v1750
  %2304 = vst [vmem:[%s1955] ss:$9 sm:$0xff] %v1751
  %2306 = vst [vmem:[%s1958] ss:$9 sm:$0xff] %v1752
  %2307 = vst [vmem:[%s1961] ss:$9 sm:$0xff] %v1482
  %v2308 = vld [vmem:[#allocation1] sm:$0xff]
  %2310 = vst [vmem:[#allocation1] ss:$9 sm:$0xff] %v1753
  %2312 = vst [vmem:[%s1943] ss:$9 sm:$0xff] %v1754
  %2314 = vst [vmem:[%s1946] ss:$9 sm:$0xff] %v1755
  %2316 = vst [vmem:[%s1949] ss:$9 sm:$0xff] %v1756
  %2318 = vst [vmem:[%s1952] ss:$9 sm:$0xff] %v1757
  %2320 = vst [vmem:[%s1955] ss:$9 sm:$0xff] %v1758
  %2322 = vst [vmem:[%s1958] ss:$9 sm:$0xff] %v1759
  %2323 = vst [vmem:[%s1961] ss:$9 sm:$0xff] %v1484
  %v2324 = vld [vmem:[#allocation1] sm:$0xff]
  %2326 = vst [vmem:[#allocation1] ss:$9 sm:$0xff] %v1760
  %2328 = vst [vmem:[%s1943] ss:$9 sm:$0xff] %v1761
  %2330 = vst [vmem:[%s1946] ss:$9 sm:$0xff] %v1762
  %2332 = vst [vmem:[%s1949] ss:$9 sm:$0xff] %v1763
  %2334 = vst [vmem:[%s1952] ss:$9 sm:$0xff] %v1764
  %2336 = vst [vmem:[%s1955] ss:$9 sm:$0xff] %v1765
  %2338 = vst [vmem:[%s1958] ss:$9 sm:$0xff] %v1766
  %2339 = vst [vmem:[%s1961] ss:$9 sm:$0xff] %v1486
  %v2340 = vld [vmem:[#allocation1] sm:$0xff]
  %2341 = vst [vmem:[#allocation1] ss:$9 sm:$0xff] %v1488
  %2343 = vst [vmem:[%s1943] ss:$9 sm:$0xff] %v1767
  %2345 = vst [vmem:[%s1946] ss:$9 sm:$0xff] %v1768
  %2347 = vst [vmem:[%s1949] ss:$9 sm:$0xff] %v1769
  %2349 = vst [vmem:[%s1952] ss:$9 sm:$0xff] %v1770
  %2351 = vst [vmem:[%s1955] ss:$9 sm:$0xff] %v1771
  %2353 = vst [vmem:[%s1958] ss:$9 sm:$0xff] %v1772
  %2355 = vst [vmem:[%s1961] ss:$9 sm:$0xff] %v1773
  %v2356 = vld [vmem:[#allocation1] sm:$0xff]
  %2357 = vst [vmem:[#allocation1] ss:$9 sm:$0xff] %v1490
  %2359 = vst [vmem:[%s1943] ss:$9 sm:$0xff] %v1774
  %2361 = vst [vmem:[%s1946] ss:$9 sm:$0xff] %v1775
  %2363 = vst [vmem:[%s1949] ss:$9 sm:$0xff] %v1776
  %2365 = vst [vmem:[%s1952] ss:$9 sm:$0xff] %v1777
  %2367 = vst [vmem:[%s1955] ss:$9 sm:$0xff] %v1778
  %2369 = vst [vmem:[%s1958] ss:$9 sm:$0xff] %v1779
  %2371 = vst [vmem:[%s1961] ss:$9 sm:$0xff] %v1780
  %v2372 = vld [vmem:[#allocation1] sm:$0xff]
  %2373 = vst [vmem:[#allocation1] ss:$9 sm:$0xff] %v1492
  %2375 = vst [vmem:[%s1943] ss:$9 sm:$0xff] %v1781
  %2377 = vst [vmem:[%s1946] ss:$9 sm:$0xff] %v1782
  %2379 = vst [vmem:[%s1949] ss:$9 sm:$0xff] %v1783
  %2381 = vst [vmem:[%s1952] ss:$9 sm:$0xff] %v1784
  %2383 = vst [vmem:[%s1955] ss:$9 sm:$0xff] %v1785
  %2385 = vst [vmem:[%s1958] ss:$9 sm:$0xff] %v1786
  %2387 = vst [vmem:[%s1961] ss:$9 sm:$0xff] %v1787
  %v2388 = vld [vmem:[#allocation1] sm:$0xff]
  %2389 = vst [vmem:[#allocation1] ss:$9 sm:$0xff] %v1494
  %2390 = vst [vmem:[%s1943] ss:$9 sm:$0xff] %v1496
  %2392 = vst [vmem:[%s1946] ss:$9 sm:$0xff] %v1788
  %2394 = vst [vmem:[%s1949] ss:$9 sm:$0xff] %v1789
  %2396 = vst [vmem:[%s1952] ss:$9 sm:$0xff] %v1790
  %2398 = vst [vmem:[%s1955] ss:$9 sm:$0xff] %v1791
  %2400 = vst [vmem:[%s1958] ss:$9 sm:$0xff] %v1792
  %2402 = vst [vmem:[%s1961] ss:$9 sm:$0xff] %v1793
  %v2403 = vld [vmem:[#allocation1] sm:$0xff]
  %2405 = vst [vmem:[#allocation1] ss:$9 sm:$0xff] %v1794
  %2406 = vst [vmem:[%s1943] ss:$9 sm:$0xff] %v1498
  %2408 = vst [vmem:[%s1946] ss:$9 sm:$0xff] %v1795
  %2410 = vst [vmem:[%s1949] ss:$9 sm:$0xff] %v1796
  %2412 = vst [vmem:[%s1952] ss:$9 sm:$0xff] %v1797
  %2414 = vst [vmem:[%s1955] ss:$9 sm:$0xff] %v1798
  %2416 = vst [vmem:[%s1958] ss:$9 sm:$0xff] %v1799
  %2418 = vst [vmem:[%s1961] ss:$9 sm:$0xff] %v1800
  %v2419 = vld [vmem:[#allocation1] sm:$0xff]
  %2421 = vst [vmem:[#allocation1] ss:$9 sm:$0xff] %v1801
  %2422 = vst [vmem:[%s1943] ss:$9 sm:$0xff] %v1500
  %2424 = vst [vmem:[%s1946] ss:$9 sm:$0xff] %v1802
  %2426 = vst [vmem:[%s1949] ss:$9 sm:$0xff] %v1803
  %2428 = vst [vmem:[%s1952] ss:$9 sm:$0xff] %v1804
  %2430 = vst [vmem:[%s1955] ss:$9 sm:$0xff] %v1805
  %2432 = vst [vmem:[%s1958] ss:$9 sm:$0xff] %v1806
  %2434 = vst [vmem:[%s1961] ss:$9 sm:$0xff] %v1807
  %v2435 = vld [vmem:[#allocation1] sm:$0xff]
  %2437 = vst [vmem:[#allocation1] ss:$9 sm:$0xff] %v1808
  %2438 = vst [vmem:[%s1943] ss:$9 sm:$0xff] %v1502
  %2439 = vst [vmem:[%s1946] ss:$9 sm:$0xff] %v1504
  %2441 = vst [vmem:[%s1949] ss:$9 sm:$0xff] %v1809
  %2443 = vst [vmem:[%s1952] ss:$9 sm:$0xff] %v1810
  %2445 = vst [vmem:[%s1955] ss:$9 sm:$0xff] %v1811
  %2447 = vst [vmem:[%s1958] ss:$9 sm:$0xff] %v1812
  %2449 = vst [vmem:[%s1961] ss:$9 sm:$0xff] %v1813
  %v2450 = vld [vmem:[#allocation1] sm:$0xff]
  %2452 = vst [vmem:[#allocation1] ss:$9 sm:$0xff] %v1814
  %2454 = vst [vmem:[%s1943] ss:$9 sm:$0xff] %v1815
  %2455 = vst [vmem:[%s1946] ss:$9 sm:$0xff] %v1506
  %2457 = vst [vmem:[%s1949] ss:$9 sm:$0xff] %v1816
  %2459 = vst [vmem:[%s1952] ss:$9 sm:$0xff] %v1817
  %2461 = vst [vmem:[%s1955] ss:$9 sm:$0xff] %v1818
  %2463 = vst [vmem:[%s1958] ss:$9 sm:$0xff] %v1819
  %2465 = vst [vmem:[%s1961] ss:$9 sm:$0xff] %v1820
  %v2466 = vld [vmem:[#allocation1] sm:$0xff]
  %2468 = vst [vmem:[#allocation1] ss:$9 sm:$0xff] %v1821
  %2470 = vst [vmem:[%s1943] ss:$9 sm:$0xff] %v1822
  %2471 = vst [vmem:[%s1946] ss:$9 sm:$0xff] %v1508
  %2473 = vst [vmem:[%s1949] ss:$9 sm:$0xff] %v1823
  %2475 = vst [vmem:[%s1952] ss:$9 sm:$0xff] %v1824
  %2477 = vst [vmem:[%s1955] ss:$9 sm:$0xff] %v1825
  %2479 = vst [vmem:[%s1958] ss:$9 sm:$0xff] %v1826
  %2481 = vst [vmem:[%s1961] ss:$9 sm:$0xff] %v1827
  %v2482 = vld [vmem:[#allocation1] sm:$0xff]
  %2484 = vst [vmem:[#allocation1] ss:$9 sm:$0xff] %v1828
  %2486 = vst [vmem:[%s1943] ss:$9 sm:$0xff] %v1829
  %2487 = vst [vmem:[%s1946] ss:$9 sm:$0xff] %v1510
  %2488 = vst [vmem:[%s1949] ss:$9 sm:$0xff] %v1512
  %2490 = vst [vmem:[%s1952] ss:$9 sm:$0xff] %v1830
  %2492 = vst [vmem:[%s1955] ss:$9 sm:$0xff] %v1831
  %2494 = vst [vmem:[%s1958] ss:$9 sm:$0xff] %v1832
  %2496 = vst [vmem:[%s1961] ss:$9 sm:$0xff] %v1833
  %v2497 = vld [vmem:[#allocation1] sm:$0xff]
  %2499 = vst [vmem:[#allocation1] ss:$9 sm:$0xff] %v1834
  %2501 = vst [vmem:[%s1943] ss:$9 sm:$0xff] %v1835
  %2503 = vst [vmem:[%s1946] ss:$9 sm:$0xff] %v1836
  %2504 = vst [vmem:[%s1949] ss:$9 sm:$0xff] %v1514
  %2506 = vst [vmem:[%s1952] ss:$9 sm:$0xff] %v1837
  %2508 = vst [vmem:[%s1955] ss:$9 sm:$0xff] %v1838
  %2510 = vst [vmem:[%s1958] ss:$9 sm:$0xff] %v1839
  %2512 = vst [vmem:[%s1961] ss:$9 sm:$0xff] %v1840
  %v2513 = vld [vmem:[#allocation1] sm:$0xff]
  %2515 = vst [vmem:[#allocation1] ss:$9 sm:$0xff] %v1841
  %2517 = vst [vmem:[%s1943] ss:$9 sm:$0xff] %v1842
  %2519 = vst [vmem:[%s1946] ss:$9 sm:$0xff] %v1843
  %2520 = vst [vmem:[%s1949] ss:$9 sm:$0xff] %v1516
  %2522 = vst [vmem:[%s1952] ss:$9 sm:$0xff] %v1844
  %2524 = vst [vmem:[%s1955] ss:$9 sm:$0xff] %v1845
  %2526 = vst [vmem:[%s1958] ss:$9 sm:$0xff] %v1846
  %2528 = vst [vmem:[%s1961] ss:$9 sm:$0xff] %v1847
  %v2529 = vld [vmem:[#allocation1] sm:$0xff]
  %2531 = vst [vmem:[#allocation1] ss:$9 sm:$0xff] %v1848
  %2533 = vst [vmem:[%s1943] ss:$9 sm:$0xff] %v1849
  %2535 = vst [vmem:[%s1946] ss:$9 sm:$0xff] %v1850
  %2536 = vst [vmem:[%s1949] ss:$9 sm:$0xff] %v1518
  %2537 = vst [vmem:[%s1952] ss:$9 sm:$0xff] %v1520
  %2539 = vst [vmem:[%s1955] ss:$9 sm:$0xff] %v1851
  %2541 = vst [vmem:[%s1958] ss:$9 sm:$0xff] %v1852
  %2543 = vst [vmem:[%s1961] ss:$9 sm:$0xff] %v1853
  %v2544 = vld [vmem:[#allocation1] sm:$0xff]
  %2546 = vst [vmem:[#allocation1] ss:$9 sm:$0xff] %v1854
  %2548 = vst [vmem:[%s1943] ss:$9 sm:$0xff] %v1855
  %2550 = vst [vmem:[%s1946] ss:$9 sm:$0xff] %v1856
  %2552 = vst [vmem:[%s1949] ss:$9 sm:$0xff] %v1857
  %2553 = vst [vmem:[%s1952] ss:$9 sm:$0xff] %v1522
  %2555 = vst [vmem:[%s1955] ss:$9 sm:$0xff] %v1858
  %2557 = vst [vmem:[%s1958] ss:$9 sm:$0xff] %v1859
  %2559 = vst [vmem:[%s1961] ss:$9 sm:$0xff] %v1860
  %v2560 = vld [vmem:[#allocation1] sm:$0xff]
  %2562 = vst [vmem:[#allocation1] ss:$9 sm:$0xff] %v1861
  %2564 = vst [vmem:[%s1943] ss:$9 sm:$0xff] %v1862
  %2566 = vst [vmem:[%s1946] ss:$9 sm:$0xff] %v1863
  %2568 = vst [vmem:[%s1949] ss:$9 sm:$0xff] %v1864
  %2569 = vst [vmem:[%s1952] ss:$9 sm:$0xff] %v1524
  %2571 = vst [vmem:[%s1955] ss:$9 sm:$0xff] %v1865
  %2573 = vst [vmem:[%s1958] ss:$9 sm:$0xff] %v1866
  %2575 = vst [vmem:[%s1961] ss:$9 sm:$0xff] %v1867
  %v2576 = vld [vmem:[#allocation1] sm:$0xff]
  %2578 = vst [vmem:[#allocation1] ss:$9 sm:$0xff] %v1868
  %2580 = vst [vmem:[%s1943] ss:$9 sm:$0xff] %v1869
  %2582 = vst [vmem:[%s1946] ss:$9 sm:$0xff] %v1870
  %2584 = vst [vmem:[%s1949] ss:$9 sm:$0xff] %v1871
  %2585 = vst [vmem:[%s1952] ss:$9 sm:$0xff] %v1526
  %2586 = vst [vmem:[%s1955] ss:$9 sm:$0xff] %v1528
  %2588 = vst [vmem:[%s1958] ss:$9 sm:$0xff] %v1872
  %2590 = vst [vmem:[%s1961] ss:$9 sm:$0xff] %v1873
  %v2591 = vld [vmem:[#allocation1] sm:$0xff]
  %2593 = vst [vmem:[#allocation1] ss:$9 sm:$0xff] %v1874
  %2595 = vst [vmem:[%s1943] ss:$9 sm:$0xff] %v1875
  %2597 = vst [vmem:[%s1946] ss:$9 sm:$0xff] %v1876
  %2599 = vst [vmem:[%s1949] ss:$9 sm:$0xff] %v1877
  %2601 = vst [vmem:[%s1952] ss:$9 sm:$0xff] %v1878
  %2602 = vst [vmem:[%s1955] ss:$9 sm:$0xff] %v1530
  %2604 = vst [vmem:[%s1958] ss:$9 sm:$0xff] %v1879
  %2606 = vst [vmem:[%s1961] ss:$9 sm:$0xff] %v1880
  %v2607 = vld [vmem:[#allocation1] sm:$0xff]
  %2609 = vst [vmem:[#allocation1] ss:$9 sm:$0xff] %v1881
  %2611 = vst [vmem:[%s1943] ss:$9 sm:$0xff] %v1882
  %2613 = vst [vmem:[%s1946] ss:$9 sm:$0xff] %v1883
  %2615 = vst [vmem:[%s1949] ss:$9 sm:$0xff] %v1884
  %2617 = vst [vmem:[%s1952] ss:$9 sm:$0xff] %v1885
  %2618 = vst [vmem:[%s1955] ss:$9 sm:$0xff] %v1532
  %2620 = vst [vmem:[%s1958] ss:$9 sm:$0xff] %v1886
  %2622 = vst [vmem:[%s1961] ss:$9 sm:$0xff] %v1887
  %v2623 = vld [vmem:[#allocation1] sm:$0xff]
  %2625 = vst [vmem:[#allocation1] ss:$9 sm:$0xff] %v1888
  %2627 = vst [vmem:[%s1943] ss:$9 sm:$0xff] %v1889
  %2629 = vst [vmem:[%s1946] ss:$9 sm:$0xff] %v1890
  %2631 = vst [vmem:[%s1949] ss:$9 sm:$0xff] %v1891
  %2633 = vst [vmem:[%s1952] ss:$9 sm:$0xff] %v1892
  %2634 = vst [vmem:[%s1955] ss:$9 sm:$0xff] %v1534
  %2635 = vst [vmem:[%s1958] ss:$9 sm:$0xff] %v1536
  %2637 = vst [vmem:[%s1961] ss:$9 sm:$0xff] %v1893
  %v2638 = vld [vmem:[#allocation1] sm:$0xff]
  %2640 = vst [vmem:[#allocation1] ss:$9 sm:$0xff] %v1894
  %2642 = vst [vmem:[%s1943] ss:$9 sm:$0xff] %v1895
  %2644 = vst [vmem:[%s1946] ss:$9 sm:$0xff] %v1896
  %2646 = vst [vmem:[%s1949] ss:$9 sm:$0xff] %v1897
  %2648 = vst [vmem:[%s1952] ss:$9 sm:$0xff] %v1898
  %2650 = vst [vmem:[%s1955] ss:$9 sm:$0xff] %v1899
  %2651 = vst [vmem:[%s1958] ss:$9 sm:$0xff] %v1538
  %2653 = vst [vmem:[%s1961] ss:$9 sm:$0xff] %v1900
  %v2654 = vld [vmem:[#allocation1] sm:$0xff]
  %2656 = vst [vmem:[#allocation1] ss:$9 sm:$0xff] %v1901
  %2658 = vst [vmem:[%s1943] ss:$9 sm:$0xff] %v1902
  %2660 = vst [vmem:[%s1946] ss:$9 sm:$0xff] %v1903
  %2662 = vst [vmem:[%s1949] ss:$9 sm:$0xff] %v1904
  %2664 = vst [vmem:[%s1952] ss:$9 sm:$0xff] %v1905
  %2666 = vst [vmem:[%s1955] ss:$9 sm:$0xff] %v1906
  %2667 = vst [vmem:[%s1958] ss:$9 sm:$0xff] %v1540
  %2669 = vst [vmem:[%s1961] ss:$9 sm:$0xff] %v1907
  %v2670 = vld [vmem:[#allocation1] sm:$0xff]
  %2672 = vst [vmem:[#allocation1] ss:$9 sm:$0xff] %v1908
  %2674 = vst [vmem:[%s1943] ss:$9 sm:$0xff] %v1909
  %2676 = vst [vmem:[%s1946] ss:$9 sm:$0xff] %v1910
  %2678 = vst [vmem:[%s1949] ss:$9 sm:$0xff] %v1911
  %2680 = vst [vmem:[%s1952] ss:$9 sm:$0xff] %v1912
  %2682 = vst [vmem:[%s1955] ss:$9 sm:$0xff] %v1913
  %2683 = vst [vmem:[%s1958] ss:$9 sm:$0xff] %v1542
  %2684 = vst [vmem:[%s1961] ss:$9 sm:$0xff] %v1544
  %v2685 = vld [vmem:[#allocation1] sm:$0xff]
  %2687 = vst [vmem:[#allocation1] ss:$9 sm:$0xff] %v1914
  %2689 = vst [vmem:[%s1943] ss:$9 sm:$0xff] %v1915
  %2691 = vst [vmem:[%s1946] ss:$9 sm:$0xff] %v1916
  %2693 = vst [vmem:[%s1949] ss:$9 sm:$0xff] %v1917
  %2695 = vst [vmem:[%s1952] ss:$9 sm:$0xff] %v1918
  %2697 = vst [vmem:[%s1955] ss:$9 sm:$0xff] %v1919
  %2699 = vst [vmem:[%s1958] ss:$9 sm:$0xff] %v1920
  %2700 = vst [vmem:[%s1961] ss:$9 sm:$0xff] %v1546
  %v2701 = vld [vmem:[#allocation1] sm:$0xff]
  %2703 = vst [vmem:[#allocation1] ss:$9 sm:$0xff] %v1921
  %2705 = vst [vmem:[%s1943] ss:$9 sm:$0xff] %v1922
  %2707 = vst [vmem:[%s1946] ss:$9 sm:$0xff] %v1923
  %2709 = vst [vmem:[%s1949] ss:$9 sm:$0xff] %v1924
  %2711 = vst [vmem:[%s1952] ss:$9 sm:$0xff] %v1925
  %2713 = vst [vmem:[%s1955] ss:$9 sm:$0xff] %v1926
  %2715 = vst [vmem:[%s1958] ss:$9 sm:$0xff] %v1927
  %2716 = vst [vmem:[%s1961] ss:$9 sm:$0xff] %v1548
  %v2717 = vld [vmem:[#allocation1] sm:$0xff]
  %2719 = vst [vmem:[#allocation1] ss:$9 sm:$0xff] %v1928
  %2721 = vst [vmem:[%s1943] ss:$9 sm:$0xff] %v1929
  %2723 = vst [vmem:[%s1946] ss:$9 sm:$0xff] %v1930
  %2725 = vst [vmem:[%s1949] ss:$9 sm:$0xff] %v1931
  %2727 = vst [vmem:[%s1952] ss:$9 sm:$0xff] %v1932
  %2729 = vst [vmem:[%s1955] ss:$9 sm:$0xff] %v1933
  %2731 = vst [vmem:[%s1958] ss:$9 sm:$0xff] %v1934
  %2732 = vst [vmem:[%s1961] ss:$9 sm:$0xff] %v1550
  %v2733 = vld [vmem:[#allocation1] sm:$0xff]
  %v2740 = vunpack.c.l.b16 %v1935
  %v2741 = vunpack.c.h.b16 %v1935
  %v2742 = vunpack.c.l.b16 %v1936
  %v2743 = vunpack.c.h.b16 %v1936
  %v2744 = vunpack.c.l.b16 %v1937
  %v2745 = vunpack.c.h.b16 %v1937
  %v2746 = vunpack.c.l.b16 %v1938
  %v2747 = vunpack.c.h.b16 %v1938
  %v2748 = vunpack.c.l.b16 %v1939
  %v2749 = vunpack.c.h.b16 %v1939
  %v2750 = vunpack.c.l.b16 %v1940
  %v2751 = vunpack.c.h.b16 %v1940
  %v2752 = vpack.c.b16 %v2742, %v2740
  %v2753 = vpack.c.b16 %v2743, %v2741
  %v2754 = vpack.c.b16 %v2746, %v2744
  %v2755 = vpack.c.b16 %v2747, %v2745
  %v2756 = vpack.c.b16 %v2750, %v2748
  %v2757 = vpack.c.b16 %v2751, %v2749
  %vm2764 = vcmask 392192
  %v2765 = vsel %vm2764, %v1963, 0
  %v2767 = vsel %vm2764, %v1979, 0
  %v2769 = vsel %vm2764, %v1995, 0
  %v2771 = vsel %vm2764, %v2010, 0
  %v2773 = vsel %vm2764, %v2026, 0
  %v2775 = vsel %vm2764, %v2042, 0
  %v2777 = vsel %vm2764, %v2057, 0
  %v2779 = vsel %vm2764, %v2073, 0
  %v2781 = vsel %vm2764, %v2089, 0
  %v2783 = vsel %vm2764, %v2104, 0
  %v2785 = vsel %vm2764, %v2120, 0
  %v2787 = vsel %vm2764, %v2136, 0
  %v2789 = vsel %vm2764, %v2151, 0
  %v2791 = vsel %vm2764, %v2167, 0
  %v2793 = vsel %vm2764, %v2183, 0
  %v2795 = vsel %vm2764, %v2198, 0
  %v2797 = vsel %vm2764, %v2214, 0
  %v2799 = vsel %vm2764, %v2230, 0
  %v2801 = vsel %vm2764, %v2245, 0
  %v2803 = vsel %vm2764, %v2261, 0
  %v2805 = vsel %vm2764, %v2277, 0
  %v2807 = vsel %vm2764, %v2292, 0
  %v2809 = vsel %vm2764, %v2308, 0
  %v2811 = vsel %vm2764, %v2324, 0
  %v2813 = vsel %vm2764, %v2340, 0
  %v2815 = vsel %vm2764, %v2356, 0
  %v2817 = vsel %vm2764, %v2372, 0
  %v2819 = vsel %vm2764, %v2388, 0
  %v2821 = vsel %vm2764, %v2403, 0
  %v2823 = vsel %vm2764, %v2419, 0
  %v2825 = vsel %vm2764, %v2435, 0
  %v2827 = vsel %vm2764, %v2450, 0
  %v2829 = vsel %vm2764, %v2466, 0
  %v2831 = vsel %vm2764, %v2482, 0
  %v2833 = vsel %vm2764, %v2497, 0
  %v2835 = vsel %vm2764, %v2513, 0
  %v2837 = vsel %vm2764, %v2529, 0
  %v2839 = vsel %vm2764, %v2544, 0
  %v2841 = vsel %vm2764, %v2560, 0
  %v2843 = vsel %vm2764, %v2576, 0
  %v2845 = vsel %vm2764, %v2591, 0
  %v2847 = vsel %vm2764, %v2607, 0
  %v2849 = vsel %vm2764, %v2623, 0
  %v2851 = vsel %vm2764, %v2638, 0
  %v2853 = vsel %vm2764, %v2654, 0
  %v2855 = vsel %vm2764, %v2670, 0
  %v2857 = vsel %vm2764, %v2685, 0
  %v2859 = vsel %vm2764, %v2701, 0
  %v2861 = vsel %vm2764, %v2717, 0
  %v2863 = vsel %vm2764, %v2733, 0
  %2865 = vmatpush.bf16.msra.mxu0 0
  %2866 = vmatpush.bf16.msra.mxu0 0
  %2867 = vmatpush.bf16.msra.mxu0 0
  %2868 = vmatpush.bf16.msra.mxu0 0
  %2869 = vmatpush.bf16.msra.mxu0 0
  %2870 = vmatpush.bf16.msra.mxu0 %v2756
  %2871 = vmatpush.bf16.msra.mxu0 %v2754
  %2872 = vmatpush.bf16.msra.mxu0 %v2752
  %2873 = vmatmul.bf16.gmra.mxu0 %v2765
  %v2874 = vpop.f32.mrf.mxu0
  %v2875 = vadd.f32 0.0, %v2874
  %v2876 = vpop.f32.mrf.mxu0
  %v2877 = vadd.f32 0.0, %v2876
  %2878 = vmatmul.bf16.gmra.mxu0 %v2767
  %v2879 = vpop.f32.mrf.mxu0
  %v2880 = vadd.f32 0.0, %v2879
  %v2881 = vpop.f32.mrf.mxu0
  %v2882 = vadd.f32 0.0, %v2881
  %2883 = vmatmul.bf16.gmra.mxu0 %v2769
  %v2884 = vpop.f32.mrf.mxu0
  %v2885 = vadd.f32 0.0, %v2884
  %v2886 = vpop.f32.mrf.mxu0
  %v2887 = vadd.f32 0.0, %v2886
  %2888 = vmatmul.bf16.gmra.mxu0 %v2771
  %v2889 = vpop.f32.mrf.mxu0
  %v2890 = vadd.f32 0.0, %v2889
  %v2891 = vpop.f32.mrf.mxu0
  %v2892 = vadd.f32 0.0, %v2891
  %2893 = vmatmul.bf16.gmra.mxu0 %v2773
  %v2894 = vpop.f32.mrf.mxu0
  %v2895 = vadd.f32 0.0, %v2894
  %v2896 = vpop.f32.mrf.mxu0
  %v2897 = vadd.f32 0.0, %v2896
  %2898 = vmatmul.bf16.gmra.mxu0 %v2775
  %v2899 = vpop.f32.mrf.mxu0
  %v2900 = vadd.f32 0.0, %v2899
  %v2901 = vpop.f32.mrf.mxu0
  %v2902 = vadd.f32 0.0, %v2901
  %2903 = vmatmul.bf16.gmra.mxu0 %v2777
  %v2904 = vpop.f32.mrf.mxu0
  %v2905 = vadd.f32 0.0, %v2904
  %v2906 = vpop.f32.mrf.mxu0
  %v2907 = vadd.f32 0.0, %v2906
  %2908 = vmatmul.bf16.gmra.mxu0 %v2779
  %v2909 = vpop.f32.mrf.mxu0
  %v2910 = vadd.f32 0.0, %v2909
  %v2911 = vpop.f32.mrf.mxu0
  %v2912 = vadd.f32 0.0, %v2911
  %2913 = vmatmul.bf16.gmra.mxu0 %v2781
  %v2914 = vpop.f32.mrf.mxu0
  %v2915 = vadd.f32 0.0, %v2914
  %v2916 = vpop.f32.mrf.mxu0
  %v2917 = vadd.f32 0.0, %v2916
  %2918 = vmatmul.bf16.gmra.mxu0 %v2783
  %v2919 = vpop.f32.mrf.mxu0
  %v2920 = vadd.f32 0.0, %v2919
  %v2921 = vpop.f32.mrf.mxu0
  %v2922 = vadd.f32 0.0, %v2921
  %2923 = vmatmul.bf16.gmra.mxu0 %v2785
  %v2924 = vpop.f32.mrf.mxu0
  %v2925 = vadd.f32 0.0, %v2924
  %v2926 = vpop.f32.mrf.mxu0
  %v2927 = vadd.f32 0.0, %v2926
  %2928 = vmatmul.bf16.gmra.mxu0 %v2787
  %v2929 = vpop.f32.mrf.mxu0
  %v2930 = vadd.f32 0.0, %v2929
  %v2931 = vpop.f32.mrf.mxu0
  %v2932 = vadd.f32 0.0, %v2931
  %2933 = vmatmul.bf16.gmra.mxu0 %v2789
  %v2934 = vpop.f32.mrf.mxu0
  %v2935 = vadd.f32 0.0, %v2934
  %v2936 = vpop.f32.mrf.mxu0
  %v2937 = vadd.f32 0.0, %v2936
  %2938 = vmatmul.bf16.gmra.mxu0 %v2791
  %v2939 = vpop.f32.mrf.mxu0
  %v2940 = vadd.f32 0.0, %v2939
  %v2941 = vpop.f32.mrf.mxu0
  %v2942 = vadd.f32 0.0, %v2941
  %2943 = vmatmul.bf16.gmra.mxu0 %v2793
  %v2944 = vpop.f32.mrf.mxu0
  %v2945 = vadd.f32 0.0, %v2944
  %v2946 = vpop.f32.mrf.mxu0
  %v2947 = vadd.f32 0.0, %v2946
  %2948 = vmatmul.bf16.gmra.mxu0 %v2795
  %v2949 = vpop.f32.mrf.mxu0
  %v2950 = vadd.f32 0.0, %v2949
  %v2951 = vpop.f32.mrf.mxu0
  %v2952 = vadd.f32 0.0, %v2951
  %2953 = vmatmul.bf16.gmra.mxu0 %v2797
  %v2954 = vpop.f32.mrf.mxu0
  %v2955 = vadd.f32 0.0, %v2954
  %v2956 = vpop.f32.mrf.mxu0
  %v2957 = vadd.f32 0.0, %v2956
  %2958 = vmatmul.bf16.gmra.mxu0 %v2799
  %v2959 = vpop.f32.mrf.mxu0
  %v2960 = vadd.f32 0.0, %v2959
  %v2961 = vpop.f32.mrf.mxu0
  %v2962 = vadd.f32 0.0, %v2961
  %2963 = vmatmul.bf16.gmra.mxu0 %v2801
  %v2964 = vpop.f32.mrf.mxu0
  %v2965 = vadd.f32 0.0, %v2964
  %v2966 = vpop.f32.mrf.mxu0
  %v2967 = vadd.f32 0.0, %v2966
  %2968 = vmatmul.bf16.gmra.mxu0 %v2803
  %v2969 = vpop.f32.mrf.mxu0
  %v2970 = vadd.f32 0.0, %v2969
  %v2971 = vpop.f32.mrf.mxu0
  %v2972 = vadd.f32 0.0, %v2971
  %2973 = vmatmul.bf16.gmra.mxu0 %v2805
  %v2974 = vpop.f32.mrf.mxu0
  %v2975 = vadd.f32 0.0, %v2974
  %v2976 = vpop.f32.mrf.mxu0
  %v2977 = vadd.f32 0.0, %v2976
  %2978 = vmatmul.bf16.gmra.mxu0 %v2807
  %v2979 = vpop.f32.mrf.mxu0
  %v2980 = vadd.f32 0.0, %v2979
  %v2981 = vpop.f32.mrf.mxu0
  %v2982 = vadd.f32 0.0, %v2981
  %2983 = vmatmul.bf16.gmra.mxu0 %v2809
  %v2984 = vpop.f32.mrf.mxu0
  %v2985 = vadd.f32 0.0, %v2984
  %v2986 = vpop.f32.mrf.mxu0
  %v2987 = vadd.f32 0.0, %v2986
  %2988 = vmatmul.bf16.gmra.mxu0 %v2811
  %v2989 = vpop.f32.mrf.mxu0
  %v2990 = vadd.f32 0.0, %v2989
  %v2991 = vpop.f32.mrf.mxu0
  %v2992 = vadd.f32 0.0, %v2991
  %2993 = vmatmul.bf16.gmra.mxu0 %v2813
  %v2994 = vpop.f32.mrf.mxu0
  %v2995 = vadd.f32 0.0, %v2994
  %v2996 = vpop.f32.mrf.mxu0
  %v2997 = vadd.f32 0.0, %v2996
  %2998 = vmatmul.bf16.gmra.mxu0 %v2815
  %v2999 = vpop.f32.mrf.mxu0
  %v3000 = vadd.f32 0.0, %v2999
  %v3001 = vpop.f32.mrf.mxu0
  %v3002 = vadd.f32 0.0, %v3001
  %3003 = vmatmul.bf16.gmra.mxu0 %v2817
  %v3004 = vpop.f32.mrf.mxu0
  %v3005 = vadd.f32 0.0, %v3004
  %v3006 = vpop.f32.mrf.mxu0
  %v3007 = vadd.f32 0.0, %v3006
  %3008 = vmatmul.bf16.gmra.mxu0 %v2819
  %v3009 = vpop.f32.mrf.mxu0
  %v3010 = vadd.f32 0.0, %v3009
  %v3011 = vpop.f32.mrf.mxu0
  %v3012 = vadd.f32 0.0, %v3011
  %3013 = vmatmul.bf16.gmra.mxu0 %v2821
  %v3014 = vpop.f32.mrf.mxu0
  %v3015 = vadd.f32 0.0, %v3014
  %v3016 = vpop.f32.mrf.mxu0
  %v3017 = vadd.f32 0.0, %v3016
  %3018 = vmatmul.bf16.gmra.mxu0 %v2823
  %v3019 = vpop.f32.mrf.mxu0
  %v3020 = vadd.f32 0.0, %v3019
  %v3021 = vpop.f32.mrf.mxu0
  %v3022 = vadd.f32 0.0, %v3021
  %3023 = vmatmul.bf16.gmra.mxu0 %v2825
  %v3024 = vpop.f32.mrf.mxu0
  %v3025 = vadd.f32 0.0, %v3024
  %v3026 = vpop.f32.mrf.mxu0
  %v3027 = vadd.f32 0.0, %v3026
  %3028 = vmatmul.bf16.gmra.mxu0 %v2827
  %v3029 = vpop.f32.mrf.mxu0
  %v3030 = vadd.f32 0.0, %v3029
  %v3031 = vpop.f32.mrf.mxu0
  %v3032 = vadd.f32 0.0, %v3031
  %3033 = vmatmul.bf16.gmra.mxu0 %v2829
  %v3034 = vpop.f32.mrf.mxu0
  %v3035 = vadd.f32 0.0, %v3034
  %v3036 = vpop.f32.mrf.mxu0
  %v3037 = vadd.f32 0.0, %v3036
  %3038 = vmatmul.bf16.gmra.mxu0 %v2831
  %v3039 = vpop.f32.mrf.mxu0
  %v3040 = vadd.f32 0.0, %v3039
  %v3041 = vpop.f32.mrf.mxu0
  %v3042 = vadd.f32 0.0, %v3041
  %3043 = vmatmul.bf16.gmra.mxu0 %v2833
  %v3044 = vpop.f32.mrf.mxu0
  %v3045 = vadd.f32 0.0, %v3044
  %v3046 = vpop.f32.mrf.mxu0
  %v3047 = vadd.f32 0.0, %v3046
  %3048 = vmatmul.bf16.gmra.mxu0 %v2835
  %v3049 = vpop.f32.mrf.mxu0
  %v3050 = vadd.f32 0.0, %v3049
  %v3051 = vpop.f32.mrf.mxu0
  %v3052 = vadd.f32 0.0, %v3051
  %3053 = vmatmul.bf16.gmra.mxu0 %v2837
  %v3054 = vpop.f32.mrf.mxu0
  %v3055 = vadd.f32 0.0, %v3054
  %v3056 = vpop.f32.mrf.mxu0
  %v3057 = vadd.f32 0.0, %v3056
  %3058 = vmatmul.bf16.gmra.mxu0 %v2839
  %v3059 = vpop.f32.mrf.mxu0
  %v3060 = vadd.f32 0.0, %v3059
  %v3061 = vpop.f32.mrf.mxu0
  %v3062 = vadd.f32 0.0, %v3061
  %3063 = vmatmul.bf16.gmra.mxu0 %v2841
  %v3064 = vpop.f32.mrf.mxu0
  %v3065 = vadd.f32 0.0, %v3064
  %v3066 = vpop.f32.mrf.mxu0
  %v3067 = vadd.f32 0.0, %v3066
  %3068 = vmatmul.bf16.gmra.mxu0 %v2843
  %v3069 = vpop.f32.mrf.mxu0
  %v3070 = vadd.f32 0.0, %v3069
  %v3071 = vpop.f32.mrf.mxu0
  %v3072 = vadd.f32 0.0, %v3071
  %3073 = vmatmul.bf16.gmra.mxu0 %v2845
  %v3074 = vpop.f32.mrf.mxu0
  %v3075 = vadd.f32 0.0, %v3074
  %v3076 = vpop.f32.mrf.mxu0
  %v3077 = vadd.f32 0.0, %v3076
  %3078 = vmatmul.bf16.gmra.mxu0 %v2847
  %v3079 = vpop.f32.mrf.mxu0
  %v3080 = vadd.f32 0.0, %v3079
  %v3081 = vpop.f32.mrf.mxu0
  %v3082 = vadd.f32 0.0, %v3081
  %3083 = vmatmul.bf16.gmra.mxu0 %v2849
  %v3084 = vpop.f32.mrf.mxu0
  %v3085 = vadd.f32 0.0, %v3084
  %v3086 = vpop.f32.mrf.mxu0
  %v3087 = vadd.f32 0.0, %v3086
  %3088 = vmatmul.bf16.gmra.mxu0 %v2851
  %v3089 = vpop.f32.mrf.mxu0
  %v3090 = vadd.f32 0.0, %v3089
  %v3091 = vpop.f32.mrf.mxu0
  %v3092 = vadd.f32 0.0, %v3091
  %3093 = vmatmul.bf16.gmra.mxu0 %v2853
  %v3094 = vpop.f32.mrf.mxu0
  %v3095 = vadd.f32 0.0, %v3094
  %v3096 = vpop.f32.mrf.mxu0
  %v3097 = vadd.f32 0.0, %v3096
  %3098 = vmatmul.bf16.gmra.mxu0 %v2855
  %v3099 = vpop.f32.mrf.mxu0
  %v3100 = vadd.f32 0.0, %v3099
  %v3101 = vpop.f32.mrf.mxu0
  %v3102 = vadd.f32 0.0, %v3101
  %3103 = vmatmul.bf16.gmra.mxu0 %v2857
  %v3104 = vpop.f32.mrf.mxu0
  %v3105 = vadd.f32 0.0, %v3104
  %v3106 = vpop.f32.mrf.mxu0
  %v3107 = vadd.f32 0.0, %v3106
  %3108 = vmatmul.bf16.gmra.mxu0 %v2859
  %v3109 = vpop.f32.mrf.mxu0
  %v3110 = vadd.f32 0.0, %v3109
  %v3111 = vpop.f32.mrf.mxu0
  %v3112 = vadd.f32 0.0, %v3111
  %3113 = vmatmul.bf16.gmra.mxu0 %v2861
  %v3114 = vpop.f32.mrf.mxu0
  %v3115 = vadd.f32 0.0, %v3114
  %v3116 = vpop.f32.mrf.mxu0
  %v3117 = vadd.f32 0.0, %v3116
  %3118 = vmatmul.bf16.gmra.mxu0 %v2863
  %v3119 = vpop.f32.mrf.mxu0
  %v3120 = vadd.f32 0.0, %v3119
  %v3121 = vpop.f32.mrf.mxu0
  %v3122 = vadd.f32 0.0, %v3121
  %3123 = vdwg.mxu0
  %3124 = vmatpush.bf16.msra.mxu0 0
  %3125 = vmatpush.bf16.msra.mxu0 0
  %3126 = vmatpush.bf16.msra.mxu0 0
  %3127 = vmatpush.bf16.msra.mxu0 0
  %3128 = vmatpush.bf16.msra.mxu0 0
  %3129 = vmatpush.bf16.msra.mxu0 %v2757
  %3130 = vmatpush.bf16.msra.mxu0 %v2755
  %3131 = vmatpush.bf16.msra.mxu0 %v2753
  %3132 = vmatmul.bf16.gmra.mxu0 %v2765
  %v3133 = vpop.f32.mrf.mxu0
  %v3134 = vadd.f32 0.0, %v3133
  %v3135 = vpop.f32.mrf.mxu0
  %v3136 = vadd.f32 0.0, %v3135
  %3137 = vmatmul.bf16.gmra.mxu0 %v2767
  %v3138 = vpop.f32.mrf.mxu0
  %v3139 = vadd.f32 0.0, %v3138
  %v3140 = vpop.f32.mrf.mxu0
  %v3141 = vadd.f32 0.0, %v3140
  %3142 = vmatmul.bf16.gmra.mxu0 %v2769
  %v3143 = vpop.f32.mrf.mxu0
  %v3144 = vadd.f32 0.0, %v3143
  %v3145 = vpop.f32.mrf.mxu0
  %v3146 = vadd.f32 0.0, %v3145
  %3147 = vmatmul.bf16.gmra.mxu0 %v2771
  %v3148 = vpop.f32.mrf.mxu0
  %v3149 = vadd.f32 0.0, %v3148
  %v3150 = vpop.f32.mrf.mxu0
  %v3151 = vadd.f32 0.0, %v3150
  %3152 = vmatmul.bf16.gmra.mxu0 %v2773
  %v3153 = vpop.f32.mrf.mxu0
  %v3154 = vadd.f32 0.0, %v3153
  %v3155 = vpop.f32.mrf.mxu0
  %v3156 = vadd.f32 0.0, %v3155
  %3157 = vmatmul.bf16.gmra.mxu0 %v2775
  %v3158 = vpop.f32.mrf.mxu0
  %v3159 = vadd.f32 0.0, %v3158
  %v3160 = vpop.f32.mrf.mxu0
  %v3161 = vadd.f32 0.0, %v3160
  %3162 = vmatmul.bf16.gmra.mxu0 %v2777
  %v3163 = vpop.f32.mrf.mxu0
  %v3164 = vadd.f32 0.0, %v3163
  %v3165 = vpop.f32.mrf.mxu0
  %v3166 = vadd.f32 0.0, %v3165
  %3167 = vmatmul.bf16.gmra.mxu0 %v2779
  %v3168 = vpop.f32.mrf.mxu0
  %v3169 = vadd.f32 0.0, %v3168
  %v3170 = vpop.f32.mrf.mxu0
  %v3171 = vadd.f32 0.0, %v3170
  %3172 = vmatmul.bf16.gmra.mxu0 %v2781
  %v3173 = vpop.f32.mrf.mxu0
  %v3174 = vadd.f32 0.0, %v3173
  %v3175 = vpop.f32.mrf.mxu0
  %v3176 = vadd.f32 0.0, %v3175
  %3177 = vmatmul.bf16.gmra.mxu0 %v2783
  %v3178 = vpop.f32.mrf.mxu0
  %v3179 = vadd.f32 0.0, %v3178
  %v3180 = vpop.f32.mrf.mxu0
  %v3181 = vadd.f32 0.0, %v3180
  %3182 = vmatmul.bf16.gmra.mxu0 %v2785
  %v3183 = vpop.f32.mrf.mxu0
  %v3184 = vadd.f32 0.0, %v3183
  %v3185 = vpop.f32.mrf.mxu0
  %v3186 = vadd.f32 0.0, %v3185
  %3187 = vmatmul.bf16.gmra.mxu0 %v2787
  %v3188 = vpop.f32.mrf.mxu0
  %v3189 = vadd.f32 0.0, %v3188
  %v3190 = vpop.f32.mrf.mxu0
  %v3191 = vadd.f32 0.0, %v3190
  %3192 = vmatmul.bf16.gmra.mxu0 %v2789
  %v3193 = vpop.f32.mrf.mxu0
  %v3194 = vadd.f32 0.0, %v3193
  %v3195 = vpop.f32.mrf.mxu0
  %v3196 = vadd.f32 0.0, %v3195
  %3197 = vmatmul.bf16.gmra.mxu0 %v2791
  %v3198 = vpop.f32.mrf.mxu0
  %v3199 = vadd.f32 0.0, %v3198
  %v3200 = vpop.f32.mrf.mxu0
  %v3201 = vadd.f32 0.0, %v3200
  %3202 = vmatmul.bf16.gmra.mxu0 %v2793
  %v3203 = vpop.f32.mrf.mxu0
  %v3204 = vadd.f32 0.0, %v3203
  %v3205 = vpop.f32.mrf.mxu0
  %v3206 = vadd.f32 0.0, %v3205
  %3207 = vmatmul.bf16.gmra.mxu0 %v2795
  %v3208 = vpop.f32.mrf.mxu0
  %v3209 = vadd.f32 0.0, %v3208
  %v3210 = vpop.f32.mrf.mxu0
  %v3211 = vadd.f32 0.0, %v3210
  %3212 = vmatmul.bf16.gmra.mxu0 %v2797
  %v3213 = vpop.f32.mrf.mxu0
  %v3214 = vadd.f32 0.0, %v3213
  %v3215 = vpop.f32.mrf.mxu0
  %v3216 = vadd.f32 0.0, %v3215
  %3217 = vmatmul.bf16.gmra.mxu0 %v2799
  %v3218 = vpop.f32.mrf.mxu0
  %v3219 = vadd.f32 0.0, %v3218
  %v3220 = vpop.f32.mrf.mxu0
  %v3221 = vadd.f32 0.0, %v3220
  %3222 = vmatmul.bf16.gmra.mxu0 %v2801
  %v3223 = vpop.f32.mrf.mxu0
  %v3224 = vadd.f32 0.0, %v3223
  %v3225 = vpop.f32.mrf.mxu0
  %v3226 = vadd.f32 0.0, %v3225
  %3227 = vmatmul.bf16.gmra.mxu0 %v2803
  %v3228 = vpop.f32.mrf.mxu0
  %v3229 = vadd.f32 0.0, %v3228
  %v3230 = vpop.f32.mrf.mxu0
  %v3231 = vadd.f32 0.0, %v3230
  %3232 = vmatmul.bf16.gmra.mxu0 %v2805
  %v3233 = vpop.f32.mrf.mxu0
  %v3234 = vadd.f32 0.0, %v3233
  %v3235 = vpop.f32.mrf.mxu0
  %v3236 = vadd.f32 0.0, %v3235
  %3237 = vmatmul.bf16.gmra.mxu0 %v2807
  %v3238 = vpop.f32.mrf.mxu0
  %v3239 = vadd.f32 0.0, %v3238
  %v3240 = vpop.f32.mrf.mxu0
  %v3241 = vadd.f32 0.0, %v3240
  %3242 = vmatmul.bf16.gmra.mxu0 %v2809
  %v3243 = vpop.f32.mrf.mxu0
  %v3244 = vadd.f32 0.0, %v3243
  %v3245 = vpop.f32.mrf.mxu0
  %v3246 = vadd.f32 0.0, %v3245
  %3247 = vmatmul.bf16.gmra.mxu0 %v2811
  %v3248 = vpop.f32.mrf.mxu0
  %v3249 = vadd.f32 0.0, %v3248
  %v3250 = vpop.f32.mrf.mxu0
  %v3251 = vadd.f32 0.0, %v3250
  %3252 = vmatmul.bf16.gmra.mxu0 %v2813
  %v3253 = vpop.f32.mrf.mxu0
  %v3254 = vadd.f32 0.0, %v3253
  %v3255 = vpop.f32.mrf.mxu0
  %v3256 = vadd.f32 0.0, %v3255
  %3257 = vmatmul.bf16.gmra.mxu0 %v2815
  %v3258 = vpop.f32.mrf.mxu0
  %v3259 = vadd.f32 0.0, %v3258
  %v3260 = vpop.f32.mrf.mxu0
  %v3261 = vadd.f32 0.0, %v3260
  %3262 = vmatmul.bf16.gmra.mxu0 %v2817
  %v3263 = vpop.f32.mrf.mxu0
  %v3264 = vadd.f32 0.0, %v3263
  %v3265 = vpop.f32.mrf.mxu0
  %v3266 = vadd.f32 0.0, %v3265
  %3267 = vmatmul.bf16.gmra.mxu0 %v2819
  %v3268 = vpop.f32.mrf.mxu0
  %v3269 = vadd.f32 0.0, %v3268
  %v3270 = vpop.f32.mrf.mxu0
  %v3271 = vadd.f32 0.0, %v3270
  %3272 = vmatmul.bf16.gmra.mxu0 %v2821
  %v3273 = vpop.f32.mrf.mxu0
  %v3274 = vadd.f32 0.0, %v3273
  %v3275 = vpop.f32.mrf.mxu0
  %v3276 = vadd.f32 0.0, %v3275
  %3277 = vmatmul.bf16.gmra.mxu0 %v2823
  %v3278 = vpop.f32.mrf.mxu0
  %v3279 = vadd.f32 0.0, %v3278
  %v3280 = vpop.f32.mrf.mxu0
  %v3281 = vadd.f32 0.0, %v3280
  %3282 = vmatmul.bf16.gmra.mxu0 %v2825
  %v3283 = vpop.f32.mrf.mxu0
  %v3284 = vadd.f32 0.0, %v3283
  %v3285 = vpop.f32.mrf.mxu0
  %v3286 = vadd.f32 0.0, %v3285
  %3287 = vmatmul.bf16.gmra.mxu0 %v2827
  %v3288 = vpop.f32.mrf.mxu0
  %v3289 = vadd.f32 0.0, %v3288
  %v3290 = vpop.f32.mrf.mxu0
  %v3291 = vadd.f32 0.0, %v3290
  %3292 = vmatmul.bf16.gmra.mxu0 %v2829
  %v3293 = vpop.f32.mrf.mxu0
  %v3294 = vadd.f32 0.0, %v3293
  %v3295 = vpop.f32.mrf.mxu0
  %v3296 = vadd.f32 0.0, %v3295
  %3297 = vmatmul.bf16.gmra.mxu0 %v2831
  %v3298 = vpop.f32.mrf.mxu0
  %v3299 = vadd.f32 0.0, %v3298
  %v3300 = vpop.f32.mrf.mxu0
  %v3301 = vadd.f32 0.0, %v3300
  %3302 = vmatmul.bf16.gmra.mxu0 %v2833
  %v3303 = vpop.f32.mrf.mxu0
  %v3304 = vadd.f32 0.0, %v3303
  %v3305 = vpop.f32.mrf.mxu0
  %v3306 = vadd.f32 0.0, %v3305
  %3307 = vmatmul.bf16.gmra.mxu0 %v2835
  %v3308 = vpop.f32.mrf.mxu0
  %v3309 = vadd.f32 0.0, %v3308
  %v3310 = vpop.f32.mrf.mxu0
  %v3311 = vadd.f32 0.0, %v3310
  %3312 = vmatmul.bf16.gmra.mxu0 %v2837
  %v3313 = vpop.f32.mrf.mxu0
  %v3314 = vadd.f32 0.0, %v3313
  %v3315 = vpop.f32.mrf.mxu0
  %v3316 = vadd.f32 0.0, %v3315
  %3317 = vmatmul.bf16.gmra.mxu0 %v2839
  %v3318 = vpop.f32.mrf.mxu0
  %v3319 = vadd.f32 0.0, %v3318
  %v3320 = vpop.f32.mrf.mxu0
  %v3321 = vadd.f32 0.0, %v3320
  %3322 = vmatmul.bf16.gmra.mxu0 %v2841
  %v3323 = vpop.f32.mrf.mxu0
  %v3324 = vadd.f32 0.0, %v3323
  %v3325 = vpop.f32.mrf.mxu0
  %v3326 = vadd.f32 0.0, %v3325
  %3327 = vmatmul.bf16.gmra.mxu0 %v2843
  %v3328 = vpop.f32.mrf.mxu0
  %v3329 = vadd.f32 0.0, %v3328
  %v3330 = vpop.f32.mrf.mxu0
  %v3331 = vadd.f32 0.0, %v3330
  %3332 = vmatmul.bf16.gmra.mxu0 %v2845
  %v3333 = vpop.f32.mrf.mxu0
  %v3334 = vadd.f32 0.0, %v3333
  %v3335 = vpop.f32.mrf.mxu0
  %v3336 = vadd.f32 0.0, %v3335
  %3337 = vmatmul.bf16.gmra.mxu0 %v2847
  %v3338 = vpop.f32.mrf.mxu0
  %v3339 = vadd.f32 0.0, %v3338
  %v3340 = vpop.f32.mrf.mxu0
  %v3341 = vadd.f32 0.0, %v3340
  %3342 = vmatmul.bf16.gmra.mxu0 %v2849
  %v3343 = vpop.f32.mrf.mxu0
  %v3344 = vadd.f32 0.0, %v3343
  %v3345 = vpop.f32.mrf.mxu0
  %v3346 = vadd.f32 0.0, %v3345
  %3347 = vmatmul.bf16.gmra.mxu0 %v2851
  %v3348 = vpop.f32.mrf.mxu0
  %v3349 = vadd.f32 0.0, %v3348
  %v3350 = vpop.f32.mrf.mxu0
  %v3351 = vadd.f32 0.0, %v3350
  %3352 = vmatmul.bf16.gmra.mxu0 %v2853
  %v3353 = vpop.f32.mrf.mxu0
  %v3354 = vadd.f32 0.0, %v3353
  %v3355 = vpop.f32.mrf.mxu0
  %v3356 = vadd.f32 0.0, %v3355
  %3357 = vmatmul.bf16.gmra.mxu0 %v2855
  %v3358 = vpop.f32.mrf.mxu0
  %v3359 = vadd.f32 0.0, %v3358
  %v3360 = vpop.f32.mrf.mxu0
  %v3361 = vadd.f32 0.0, %v3360
  %3362 = vmatmul.bf16.gmra.mxu0 %v2857
  %v3363 = vpop.f32.mrf.mxu0
  %v3364 = vadd.f32 0.0, %v3363
  %v3365 = vpop.f32.mrf.mxu0
  %v3366 = vadd.f32 0.0, %v3365
  %3367 = vmatmul.bf16.gmra.mxu0 %v2859
  %v3368 = vpop.f32.mrf.mxu0
  %v3369 = vadd.f32 0.0, %v3368
  %v3370 = vpop.f32.mrf.mxu0
  %v3371 = vadd.f32 0.0, %v3370
  %3372 = vmatmul.bf16.gmra.mxu0 %v2861
  %v3373 = vpop.f32.mrf.mxu0
  %v3374 = vadd.f32 0.0, %v3373
  %v3375 = vpop.f32.mrf.mxu0
  %v3376 = vadd.f32 0.0, %v3375
  %3377 = vmatmul.bf16.gmra.mxu0 %v2863
  %v3378 = vpop.f32.mrf.mxu0
  %v3379 = vadd.f32 0.0, %v3378
  %v3380 = vpop.f32.mrf.mxu0
  %v3381 = vadd.f32 0.0, %v3380
  %3382 = vdwg.mxu0
  %v3583 = vrot.slane %v3134, 6
  %v3584 = vrot.slane %v3136, 6
  %v3585 = vrot.slane %v3139, 6
  %v3586 = vrot.slane %v3141, 6
  %v3587 = vrot.slane %v3144, 6
  %v3588 = vrot.slane %v3146, 6
  %v3589 = vrot.slane %v3149, 6
  %v3590 = vrot.slane %v3151, 6
  %v3591 = vrot.slane %v3154, 6
  %v3592 = vrot.slane %v3156, 6
  %v3593 = vrot.slane %v3159, 6
  %v3594 = vrot.slane %v3161, 6
  %v3595 = vrot.slane %v3164, 6
  %v3596 = vrot.slane %v3166, 6
  %v3597 = vrot.slane %v3169, 6
  %v3598 = vrot.slane %v3171, 6
  %v3599 = vrot.slane %v3174, 6
  %v3600 = vrot.slane %v3176, 6
  %v3601 = vrot.slane %v3179, 6
  %v3602 = vrot.slane %v3181, 6
  %v3603 = vrot.slane %v3184, 6
  %v3604 = vrot.slane %v3186, 6
  %v3605 = vrot.slane %v3189, 6
  %v3606 = vrot.slane %v3191, 6
  %v3607 = vrot.slane %v3194, 6
  %v3608 = vrot.slane %v3196, 6
  %v3609 = vrot.slane %v3199, 6
  %v3610 = vrot.slane %v3201, 6
  %v3611 = vrot.slane %v3204, 6
  %v3612 = vrot.slane %v3206, 6
  %v3613 = vrot.slane %v3209, 6
  %v3614 = vrot.slane %v3211, 6
  %v3615 = vrot.slane %v3214, 6
  %v3616 = vrot.slane %v3216, 6
  %v3617 = vrot.slane %v3219, 6
  %v3618 = vrot.slane %v3221, 6
  %v3619 = vrot.slane %v3224, 6
  %v3620 = vrot.slane %v3226, 6
  %v3621 = vrot.slane %v3229, 6
  %v3622 = vrot.slane %v3231, 6
  %v3623 = vrot.slane %v3234, 6
  %v3624 = vrot.slane %v3236, 6
  %v3625 = vrot.slane %v3239, 6
  %v3626 = vrot.slane %v3241, 6
  %v3627 = vrot.slane %v3244, 6
  %v3628 = vrot.slane %v3246, 6
  %v3629 = vrot.slane %v3249, 6
  %v3630 = vrot.slane %v3251, 6
  %v3631 = vrot.slane %v3254, 6
  %v3632 = vrot.slane %v3256, 6
  %v3633 = vrot.slane %v3259, 6
  %v3634 = vrot.slane %v3261, 6
  %v3635 = vrot.slane %v3264, 6
  %v3636 = vrot.slane %v3266, 6
  %v3637 = vrot.slane %v3269, 6
  %v3638 = vrot.slane %v3271, 6
  %v3639 = vrot.slane %v3274, 6
  %v3640 = vrot.slane %v3276, 6
  %v3641 = vrot.slane %v3279, 6
  %v3642 = vrot.slane %v3281, 6
  %v3643 = vrot.slane %v3284, 6
  %v3644 = vrot.slane %v3286, 6
  %v3645 = vrot.slane %v3289, 6
  %v3646 = vrot.slane %v3291, 6
  %v3647 = vrot.slane %v3294, 6
  %v3648 = vrot.slane %v3296, 6
  %v3649 = vrot.slane %v3299, 6
  %v3650 = vrot.slane %v3301, 6
  %v3651 = vrot.slane %v3304, 6
  %v3652 = vrot.slane %v3306, 6
  %v3653 = vrot.slane %v3309, 6
  %v3654 = vrot.slane %v3311, 6
  %v3655 = vrot.slane %v3314, 6
  %v3656 = vrot.slane %v3316, 6
  %v3657 = vrot.slane %v3319, 6
  %v3658 = vrot.slane %v3321, 6
  %v3659 = vrot.slane %v3324, 6
  %v3660 = vrot.slane %v3326, 6
  %v3661 = vrot.slane %v3329, 6
  %v3662 = vrot.slane %v3331, 6
  %v3663 = vrot.slane %v3334, 6
  %v3664 = vrot.slane %v3336, 6
  %v3665 = vrot.slane %v3339, 6
  %v3666 = vrot.slane %v3341, 6
  %v3667 = vrot.slane %v3344, 6
  %v3668 = vrot.slane %v3346, 6
  %v3669 = vrot.slane %v3349, 6
  %v3670 = vrot.slane %v3351, 6
  %v3671 = vrot.slane %v3354, 6
  %v3672 = vrot.slane %v3356, 6
  %v3673 = vrot.slane %v3359, 6
  %v3674 = vrot.slane %v3361, 6
  %v3675 = vrot.slane %v3364, 6
  %v3676 = vrot.slane %v3366, 6
  %v3677 = vrot.slane %v3369, 6
  %v3678 = vrot.slane %v3371, 6
  %v3679 = vrot.slane %v3374, 6
  %v3680 = vrot.slane %v3376, 6
  %v3681 = vrot.slane %v3379, 6
  %v3682 = vrot.slane %v3381, 6
  %vm3683 = vcmask 1041408
  %v3684 = vsel %vm3683, %v2875, %v3583
  %vm3685 = vcmask 1043458
  %v3686 = vsel %vm3685, %v2875, %v3583
  %v3687 = vrot.slane %v3686, 2
  %vm3688 = vcmask 1045508
  %v3689 = vsel %vm3688, %v2875, %v3583
  %v3690 = vrot.slane %v3689, 4
  %vm3691 = vcmask 1045504
  %v3692 = vsel %vm3691, %v3583, %v2875
  %v3693 = vrot.slane %v3692, 6
  %v3694 = vsel %vm3683, %v2877, %v3584
  %v3695 = vsel %vm3685, %v2877, %v3584
  %v3696 = vrot.slane %v3695, 2
  %v3697 = vsel %vm3688, %v2877, %v3584
  %v3698 = vrot.slane %v3697, 4
  %v3699 = vsel %vm3691, %v3584, %v2877
  %v3700 = vrot.slane %v3699, 6
  %v3701 = vsel %vm3683, %v2880, %v3585
  %v3702 = vsel %vm3685, %v2880, %v3585
  %v3703 = vrot.slane %v3702, 2
  %v3704 = vsel %vm3688, %v2880, %v3585
  %v3705 = vrot.slane %v3704, 4
  %v3706 = vsel %vm3691, %v3585, %v2880
  %v3707 = vrot.slane %v3706, 6
  %v3708 = vsel %vm3683, %v2882, %v3586
  %v3709 = vsel %vm3685, %v2882, %v3586
  %v3710 = vrot.slane %v3709, 2
  %v3711 = vsel %vm3688, %v2882, %v3586
  %v3712 = vrot.slane %v3711, 4
  %v3713 = vsel %vm3691, %v3586, %v2882
  %v3714 = vrot.slane %v3713, 6
  %v3715 = vsel %vm3683, %v2885, %v3587
  %v3716 = vsel %vm3685, %v2885, %v3587
  %v3717 = vrot.slane %v3716, 2
  %v3718 = vsel %vm3688, %v2885, %v3587
  %v3719 = vrot.slane %v3718, 4
  %v3720 = vsel %vm3691, %v3587, %v2885
  %v3721 = vrot.slane %v3720, 6
  %v3722 = vsel %vm3683, %v2887, %v3588
  %v3723 = vsel %vm3685, %v2887, %v3588
  %v3724 = vrot.slane %v3723, 2
  %v3725 = vsel %vm3688, %v2887, %v3588
  %v3726 = vrot.slane %v3725, 4
  %v3727 = vsel %vm3691, %v3588, %v2887
  %v3728 = vrot.slane %v3727, 6
  %v3729 = vsel %vm3683, %v2890, %v3589
  %v3730 = vsel %vm3685, %v2890, %v3589
  %v3731 = vrot.slane %v3730, 2
  %v3732 = vsel %vm3688, %v2890, %v3589
  %v3733 = vrot.slane %v3732, 4
  %v3734 = vsel %vm3691, %v3589, %v2890
  %v3735 = vrot.slane %v3734, 6
  %v3736 = vsel %vm3683, %v2892, %v3590
  %v3737 = vsel %vm3685, %v2892, %v3590
  %v3738 = vrot.slane %v3737, 2
  %v3739 = vsel %vm3688, %v2892, %v3590
  %v3740 = vrot.slane %v3739, 4
  %v3741 = vsel %vm3691, %v3590, %v2892
  %v3742 = vrot.slane %v3741, 6
  %v3743 = vsel %vm3683, %v2895, %v3591
  %v3744 = vsel %vm3685, %v2895, %v3591
  %v3745 = vrot.slane %v3744, 2
  %v3746 = vsel %vm3688, %v2895, %v3591
  %v3747 = vrot.slane %v3746, 4
  %v3748 = vsel %vm3691, %v3591, %v2895
  %v3749 = vrot.slane %v3748, 6
  %v3750 = vsel %vm3683, %v2897, %v3592
  %v3751 = vsel %vm3685, %v2897, %v3592
  %v3752 = vrot.slane %v3751, 2
  %v3753 = vsel %vm3688, %v2897, %v3592
  %v3754 = vrot.slane %v3753, 4
  %v3755 = vsel %vm3691, %v3592, %v2897
  %v3756 = vrot.slane %v3755, 6
  %v3757 = vsel %vm3683, %v2900, %v3593
  %v3758 = vsel %vm3685, %v2900, %v3593
  %v3759 = vrot.slane %v3758, 2
  %v3760 = vsel %vm3688, %v2900, %v3593
  %v3761 = vrot.slane %v3760, 4
  %v3762 = vsel %vm3691, %v3593, %v2900
  %v3763 = vrot.slane %v3762, 6
  %v3764 = vsel %vm3683, %v2902, %v3594
  %v3765 = vsel %vm3685, %v2902, %v3594
  %v3766 = vrot.slane %v3765, 2
  %v3767 = vsel %vm3688, %v2902, %v3594
  %v3768 = vrot.slane %v3767, 4
  %v3769 = vsel %vm3691, %v3594, %v2902
  %v3770 = vrot.slane %v3769, 6
  %v3771 = vsel %vm3683, %v2905, %v3595
  %v3772 = vsel %vm3685, %v2905, %v3595
  %v3773 = vrot.slane %v3772, 2
  %v3774 = vsel %vm3688, %v2905, %v3595
  %v3775 = vrot.slane %v3774, 4
  %v3776 = vsel %vm3691, %v3595, %v2905
  %v3777 = vrot.slane %v3776, 6
  %v3778 = vsel %vm3683, %v2907, %v3596
  %v3779 = vsel %vm3685, %v2907, %v3596
  %v3780 = vrot.slane %v3779, 2
  %v3781 = vsel %vm3688, %v2907, %v3596
  %v3782 = vrot.slane %v3781, 4
  %v3783 = vsel %vm3691, %v3596, %v2907
  %v3784 = vrot.slane %v3783, 6
  %v3785 = vsel %vm3683, %v2910, %v3597
  %v3786 = vsel %vm3685, %v2910, %v3597
  %v3787 = vrot.slane %v3786, 2
  %v3788 = vsel %vm3688, %v2910, %v3597
  %v3789 = vrot.slane %v3788, 4
  %v3790 = vsel %vm3691, %v3597, %v2910
  %v3791 = vrot.slane %v3790, 6
  %v3792 = vsel %vm3683, %v2912, %v3598
  %v3793 = vsel %vm3685, %v2912, %v3598
  %v3794 = vrot.slane %v3793, 2
  %v3795 = vsel %vm3688, %v2912, %v3598
  %v3796 = vrot.slane %v3795, 4
  %v3797 = vsel %vm3691, %v3598, %v2912
  %v3798 = vrot.slane %v3797, 6
  %v3799 = vsel %vm3683, %v2915, %v3599
  %v3800 = vsel %vm3685, %v2915, %v3599
  %v3801 = vrot.slane %v3800, 2
  %v3802 = vsel %vm3688, %v2915, %v3599
  %v3803 = vrot.slane %v3802, 4
  %v3804 = vsel %vm3691, %v3599, %v2915
  %v3805 = vrot.slane %v3804, 6
  %v3806 = vsel %vm3683, %v2917, %v3600
  %v3807 = vsel %vm3685, %v2917, %v3600
  %v3808 = vrot.slane %v3807, 2
  %v3809 = vsel %vm3688, %v2917, %v3600
  %v3810 = vrot.slane %v3809, 4
  %v3811 = vsel %vm3691, %v3600, %v2917
  %v3812 = vrot.slane %v3811, 6
  %v3813 = vsel %vm3683, %v2920, %v3601
  %v3814 = vsel %vm3685, %v2920, %v3601
  %v3815 = vrot.slane %v3814, 2
  %v3816 = vsel %vm3688, %v2920, %v3601
  %v3817 = vrot.slane %v3816, 4
  %v3818 = vsel %vm3691, %v3601, %v2920
  %v3819 = vrot.slane %v3818, 6
  %v3820 = vsel %vm3683, %v2922, %v3602
  %v3821 = vsel %vm3685, %v2922, %v3602
  %v3822 = vrot.slane %v3821, 2
  %v3823 = vsel %vm3688, %v2922, %v3602
  %v3824 = vrot.slane %v3823, 4
  %v3825 = vsel %vm3691, %v3602, %v2922
  %v3826 = vrot.slane %v3825, 6
  %v3827 = vsel %vm3683, %v2925, %v3603
  %v3828 = vsel %vm3685, %v2925, %v3603
  %v3829 = vrot.slane %v3828, 2
  %v3830 = vsel %vm3688, %v2925, %v3603
  %v3831 = vrot.slane %v3830, 4
  %v3832 = vsel %vm3691, %v3603, %v2925
  %v3833 = vrot.slane %v3832, 6
  %v3834 = vsel %vm3683, %v2927, %v3604
  %v3835 = vsel %vm3685, %v2927, %v3604
  %v3836 = vrot.slane %v3835, 2
  %v3837 = vsel %vm3688, %v2927, %v3604
  %v3838 = vrot.slane %v3837, 4
  %v3839 = vsel %vm3691, %v3604, %v2927
  %v3840 = vrot.slane %v3839, 6
  %v3841 = vsel %vm3683, %v2930, %v3605
  %v3842 = vsel %vm3685, %v2930, %v3605
  %v3843 = vrot.slane %v3842, 2
  %v3844 = vsel %vm3688, %v2930, %v3605
  %v3845 = vrot.slane %v3844, 4
  %v3846 = vsel %vm3691, %v3605, %v2930
  %v3847 = vrot.slane %v3846, 6
  %v3848 = vsel %vm3683, %v2932, %v3606
  %v3849 = vsel %vm3685, %v2932, %v3606
  %v3850 = vrot.slane %v3849, 2
  %v3851 = vsel %vm3688, %v2932, %v3606
  %v3852 = vrot.slane %v3851, 4
  %v3853 = vsel %vm3691, %v3606, %v2932
  %v3854 = vrot.slane %v3853, 6
  %v3855 = vsel %vm3683, %v2935, %v3607
  %v3856 = vsel %vm3685, %v2935, %v3607
  %v3857 = vrot.slane %v3856, 2
  %v3858 = vsel %vm3688, %v2935, %v3607
  %v3859 = vrot.slane %v3858, 4
  %v3860 = vsel %vm3691, %v3607, %v2935
  %v3861 = vrot.slane %v3860, 6
  %v3862 = vsel %vm3683, %v2937, %v3608
  %v3863 = vsel %vm3685, %v2937, %v3608
  %v3864 = vrot.slane %v3863, 2
  %v3865 = vsel %vm3688, %v2937, %v3608
  %v3866 = vrot.slane %v3865, 4
  %v3867 = vsel %vm3691, %v3608, %v2937
  %v3868 = vrot.slane %v3867, 6
  %v3869 = vsel %vm3683, %v2940, %v3609
  %v3870 = vsel %vm3685, %v2940, %v3609
  %v3871 = vrot.slane %v3870, 2
  %v3872 = vsel %vm3688, %v2940, %v3609
  %v3873 = vrot.slane %v3872, 4
  %v3874 = vsel %vm3691, %v3609, %v2940
  %v3875 = vrot.slane %v3874, 6
  %v3876 = vsel %vm3683, %v2942, %v3610
  %v3877 = vsel %vm3685, %v2942, %v3610
  %v3878 = vrot.slane %v3877, 2
  %v3879 = vsel %vm3688, %v2942, %v3610
  %v3880 = vrot.slane %v3879, 4
  %v3881 = vsel %vm3691, %v3610, %v2942
  %v3882 = vrot.slane %v3881, 6
  %v3883 = vsel %vm3683, %v2945, %v3611
  %v3884 = vsel %vm3685, %v2945, %v3611
  %v3885 = vrot.slane %v3884, 2
  %v3886 = vsel %vm3688, %v2945, %v3611
  %v3887 = vrot.slane %v3886, 4
  %v3888 = vsel %vm3691, %v3611, %v2945
  %v3889 = vrot.slane %v3888, 6
  %v3890 = vsel %vm3683, %v2947, %v3612
  %v3891 = vsel %vm3685, %v2947, %v3612
  %v3892 = vrot.slane %v3891, 2
  %v3893 = vsel %vm3688, %v2947, %v3612
  %v3894 = vrot.slane %v3893, 4
  %v3895 = vsel %vm3691, %v3612, %v2947
  %v3896 = vrot.slane %v3895, 6
  %v3897 = vsel %vm3683, %v2950, %v3613
  %v3898 = vsel %vm3685, %v2950, %v3613
  %v3899 = vrot.slane %v3898, 2
  %v3900 = vsel %vm3688, %v2950, %v3613
  %v3901 = vrot.slane %v3900, 4
  %v3902 = vsel %vm3691, %v3613, %v2950
  %v3903 = vrot.slane %v3902, 6
  %v3904 = vsel %vm3683, %v2952, %v3614
  %v3905 = vsel %vm3685, %v2952, %v3614
  %v3906 = vrot.slane %v3905, 2
  %v3907 = vsel %vm3688, %v2952, %v3614
  %v3908 = vrot.slane %v3907, 4
  %v3909 = vsel %vm3691, %v3614, %v2952
  %v3910 = vrot.slane %v3909, 6
  %v3911 = vsel %vm3683, %v2955, %v3615
  %v3912 = vsel %vm3685, %v2955, %v3615
  %v3913 = vrot.slane %v3912, 2
  %v3914 = vsel %vm3688, %v2955, %v3615
  %v3915 = vrot.slane %v3914, 4
  %v3916 = vsel %vm3691, %v3615, %v2955
  %v3917 = vrot.slane %v3916, 6
  %v3918 = vsel %vm3683, %v2957, %v3616
  %v3919 = vsel %vm3685, %v2957, %v3616
  %v3920 = vrot.slane %v3919, 2
  %v3921 = vsel %vm3688, %v2957, %v3616
  %v3922 = vrot.slane %v3921, 4
  %v3923 = vsel %vm3691, %v3616, %v2957
  %v3924 = vrot.slane %v3923, 6
  %v3925 = vsel %vm3683, %v2960, %v3617
  %v3926 = vsel %vm3685, %v2960, %v3617
  %v3927 = vrot.slane %v3926, 2
  %v3928 = vsel %vm3688, %v2960, %v3617
  %v3929 = vrot.slane %v3928, 4
  %v3930 = vsel %vm3691, %v3617, %v2960
  %v3931 = vrot.slane %v3930, 6
  %v3932 = vsel %vm3683, %v2962, %v3618
  %v3933 = vsel %vm3685, %v2962, %v3618
  %v3934 = vrot.slane %v3933, 2
  %v3935 = vsel %vm3688, %v2962, %v3618
  %v3936 = vrot.slane %v3935, 4
  %v3937 = vsel %vm3691, %v3618, %v2962
  %v3938 = vrot.slane %v3937, 6
  %v3939 = vsel %vm3683, %v2965, %v3619
  %v3940 = vsel %vm3685, %v2965, %v3619
  %v3941 = vrot.slane %v3940, 2
  %v3942 = vsel %vm3688, %v2965, %v3619
  %v3943 = vrot.slane %v3942, 4
  %v3944 = vsel %vm3691, %v3619, %v2965
  %v3945 = vrot.slane %v3944, 6
  %v3946 = vsel %vm3683, %v2967, %v3620
  %v3947 = vsel %vm3685, %v2967, %v3620
  %v3948 = vrot.slane %v3947, 2
  %v3949 = vsel %vm3688, %v2967, %v3620
  %v3950 = vrot.slane %v3949, 4
  %v3951 = vsel %vm3691, %v3620, %v2967
  %v3952 = vrot.slane %v3951, 6
  %v3953 = vsel %vm3683, %v2970, %v3621
  %v3954 = vsel %vm3685, %v2970, %v3621
  %v3955 = vrot.slane %v3954, 2
  %v3956 = vsel %vm3688, %v2970, %v3621
  %v3957 = vrot.slane %v3956, 4
  %v3958 = vsel %vm3691, %v3621, %v2970
  %v3959 = vrot.slane %v3958, 6
  %v3960 = vsel %vm3683, %v2972, %v3622
  %v3961 = vsel %vm3685, %v2972, %v3622
  %v3962 = vrot.slane %v3961, 2
  %v3963 = vsel %vm3688, %v2972, %v3622
  %v3964 = vrot.slane %v3963, 4
  %v3965 = vsel %vm3691, %v3622, %v2972
  %v3966 = vrot.slane %v3965, 6
  %v3967 = vsel %vm3683, %v2975, %v3623
  %v3968 = vsel %vm3685, %v2975, %v3623
  %v3969 = vrot.slane %v3968, 2
  %v3970 = vsel %vm3688, %v2975, %v3623
  %v3971 = vrot.slane %v3970, 4
  %v3972 = vsel %vm3691, %v3623, %v2975
  %v3973 = vrot.slane %v3972, 6
  %v3974 = vsel %vm3683, %v2977, %v3624
  %v3975 = vsel %vm3685, %v2977, %v3624
  %v3976 = vrot.slane %v3975, 2
  %v3977 = vsel %vm3688, %v2977, %v3624
  %v3978 = vrot.slane %v3977, 4
  %v3979 = vsel %vm3691, %v3624, %v2977
  %v3980 = vrot.slane %v3979, 6
  %v3981 = vsel %vm3683, %v2980, %v3625
  %v3982 = vsel %vm3685, %v2980, %v3625
  %v3983 = vrot.slane %v3982, 2
  %v3984 = vsel %vm3688, %v2980, %v3625
  %v3985 = vrot.slane %v3984, 4
  %v3986 = vsel %vm3691, %v3625, %v2980
  %v3987 = vrot.slane %v3986, 6
  %v3988 = vsel %vm3683, %v2982, %v3626
  %v3989 = vsel %vm3685, %v2982, %v3626
  %v3990 = vrot.slane %v3989, 2
  %v3991 = vsel %vm3688, %v2982, %v3626
  %v3992 = vrot.slane %v3991, 4
  %v3993 = vsel %vm3691, %v3626, %v2982
  %v3994 = vrot.slane %v3993, 6
  %v3995 = vsel %vm3683, %v2985, %v3627
  %v3996 = vsel %vm3685, %v2985, %v3627
  %v3997 = vrot.slane %v3996, 2
  %v3998 = vsel %vm3688, %v2985, %v3627
  %v3999 = vrot.slane %v3998, 4
  %v4000 = vsel %vm3691, %v3627, %v2985
  %v4001 = vrot.slane %v4000, 6
  %v4002 = vsel %vm3683, %v2987, %v3628
  %v4003 = vsel %vm3685, %v2987, %v3628
  %v4004 = vrot.slane %v4003, 2
  %v4005 = vsel %vm3688, %v2987, %v3628
  %v4006 = vrot.slane %v4005, 4
  %v4007 = vsel %vm3691, %v3628, %v2987
  %v4008 = vrot.slane %v4007, 6
  %v4009 = vsel %vm3683, %v2990, %v3629
  %v4010 = vsel %vm3685, %v2990, %v3629
  %v4011 = vrot.slane %v4010, 2
  %v4012 = vsel %vm3688, %v2990, %v3629
  %v4013 = vrot.slane %v4012, 4
  %v4014 = vsel %vm3691, %v3629, %v2990
  %v4015 = vrot.slane %v4014, 6
  %v4016 = vsel %vm3683, %v2992, %v3630
  %v4017 = vsel %vm3685, %v2992, %v3630
  %v4018 = vrot.slane %v4017, 2
  %v4019 = vsel %vm3688, %v2992, %v3630
  %v4020 = vrot.slane %v4019, 4
  %v4021 = vsel %vm3691, %v3630, %v2992
  %v4022 = vrot.slane %v4021, 6
  %v4023 = vsel %vm3683, %v2995, %v3631
  %v4024 = vsel %vm3685, %v2995, %v3631
  %v4025 = vrot.slane %v4024, 2
  %v4026 = vsel %vm3688, %v2995, %v3631
  %v4027 = vrot.slane %v4026, 4
  %v4028 = vsel %vm3691, %v3631, %v2995
  %v4029 = vrot.slane %v4028, 6
  %v4030 = vsel %vm3683, %v2997, %v3632
  %v4031 = vsel %vm3685, %v2997, %v3632
  %v4032 = vrot.slane %v4031, 2
  %v4033 = vsel %vm3688, %v2997, %v3632
  %v4034 = vrot.slane %v4033, 4
  %v4035 = vsel %vm3691, %v3632, %v2997
  %v4036 = vrot.slane %v4035, 6
  %v4037 = vsel %vm3683, %v3000, %v3633
  %v4038 = vsel %vm3685, %v3000, %v3633
  %v4039 = vrot.slane %v4038, 2
  %v4040 = vsel %vm3688, %v3000, %v3633
  %v4041 = vrot.slane %v4040, 4
  %v4042 = vsel %vm3691, %v3633, %v3000
  %v4043 = vrot.slane %v4042, 6
  %v4044 = vsel %vm3683, %v3002, %v3634
  %v4045 = vsel %vm3685, %v3002, %v3634
  %v4046 = vrot.slane %v4045, 2
  %v4047 = vsel %vm3688, %v3002, %v3634
  %v4048 = vrot.slane %v4047, 4
  %v4049 = vsel %vm3691, %v3634, %v3002
  %v4050 = vrot.slane %v4049, 6
  %v4051 = vsel %vm3683, %v3005, %v3635
  %v4052 = vsel %vm3685, %v3005, %v3635
  %v4053 = vrot.slane %v4052, 2
  %v4054 = vsel %vm3688, %v3005, %v3635
  %v4055 = vrot.slane %v4054, 4
  %v4056 = vsel %vm3691, %v3635, %v3005
  %v4057 = vrot.slane %v4056, 6
  %v4058 = vsel %vm3683, %v3007, %v3636
  %v4059 = vsel %vm3685, %v3007, %v3636
  %v4060 = vrot.slane %v4059, 2
  %v4061 = vsel %vm3688, %v3007, %v3636
  %v4062 = vrot.slane %v4061, 4
  %v4063 = vsel %vm3691, %v3636, %v3007
  %v4064 = vrot.slane %v4063, 6
  %v4065 = vsel %vm3683, %v3010, %v3637
  %v4066 = vsel %vm3685, %v3010, %v3637
  %v4067 = vrot.slane %v4066, 2
  %v4068 = vsel %vm3688, %v3010, %v3637
  %v4069 = vrot.slane %v4068, 4
  %v4070 = vsel %vm3691, %v3637, %v3010
  %v4071 = vrot.slane %v4070, 6
  %v4072 = vsel %vm3683, %v3012, %v3638
  %v4073 = vsel %vm3685, %v3012, %v3638
  %v4074 = vrot.slane %v4073, 2
  %v4075 = vsel %vm3688, %v3012, %v3638
  %v4076 = vrot.slane %v4075, 4
  %v4077 = vsel %vm3691, %v3638, %v3012
  %v4078 = vrot.slane %v4077, 6
  %v4079 = vsel %vm3683, %v3015, %v3639
  %v4080 = vsel %vm3685, %v3015, %v3639
  %v4081 = vrot.slane %v4080, 2
  %v4082 = vsel %vm3688, %v3015, %v3639
  %v4083 = vrot.slane %v4082, 4
  %v4084 = vsel %vm3691, %v3639, %v3015
  %v4085 = vrot.slane %v4084, 6
  %v4086 = vsel %vm3683, %v3017, %v3640
  %v4087 = vsel %vm3685, %v3017, %v3640
  %v4088 = vrot.slane %v4087, 2
  %v4089 = vsel %vm3688, %v3017, %v3640
  %v4090 = vrot.slane %v4089, 4
  %v4091 = vsel %vm3691, %v3640, %v3017
  %v4092 = vrot.slane %v4091, 6
  %v4093 = vsel %vm3683, %v3020, %v3641
  %v4094 = vsel %vm3685, %v3020, %v3641
  %v4095 = vrot.slane %v4094, 2
  %v4096 = vsel %vm3688, %v3020, %v3641
  %v4097 = vrot.slane %v4096, 4
  %v4098 = vsel %vm3691, %v3641, %v3020
  %v4099 = vrot.slane %v4098, 6
  %v4100 = vsel %vm3683, %v3022, %v3642
  %v4101 = vsel %vm3685, %v3022, %v3642
  %v4102 = vrot.slane %v4101, 2
  %v4103 = vsel %vm3688, %v3022, %v3642
  %v4104 = vrot.slane %v4103, 4
  %v4105 = vsel %vm3691, %v3642, %v3022
  %v4106 = vrot.slane %v4105, 6
  %v4107 = vsel %vm3683, %v3025, %v3643
  %v4108 = vsel %vm3685, %v3025, %v3643
  %v4109 = vrot.slane %v4108, 2
  %v4110 = vsel %vm3688, %v3025, %v3643
  %v4111 = vrot.slane %v4110, 4
  %v4112 = vsel %vm3691, %v3643, %v3025
  %v4113 = vrot.slane %v4112, 6
  %v4114 = vsel %vm3683, %v3027, %v3644
  %v4115 = vsel %vm3685, %v3027, %v3644
  %v4116 = vrot.slane %v4115, 2
  %v4117 = vsel %vm3688, %v3027, %v3644
  %v4118 = vrot.slane %v4117, 4
  %v4119 = vsel %vm3691, %v3644, %v3027
  %v4120 = vrot.slane %v4119, 6
  %v4121 = vsel %vm3683, %v3030, %v3645
  %v4122 = vsel %vm3685, %v3030, %v3645
  %v4123 = vrot.slane %v4122, 2
  %v4124 = vsel %vm3688, %v3030, %v3645
  %v4125 = vrot.slane %v4124, 4
  %v4126 = vsel %vm3691, %v3645, %v3030
  %v4127 = vrot.slane %v4126, 6
  %v4128 = vsel %vm3683, %v3032, %v3646
  %v4129 = vsel %vm3685, %v3032, %v3646
  %v4130 = vrot.slane %v4129, 2
  %v4131 = vsel %vm3688, %v3032, %v3646
  %v4132 = vrot.slane %v4131, 4
  %v4133 = vsel %vm3691, %v3646, %v3032
  %v4134 = vrot.slane %v4133, 6
  %v4135 = vsel %vm3683, %v3035, %v3647
  %v4136 = vsel %vm3685, %v3035, %v3647
  %v4137 = vrot.slane %v4136, 2
  %v4138 = vsel %vm3688, %v3035, %v3647
  %v4139 = vrot.slane %v4138, 4
  %v4140 = vsel %vm3691, %v3647, %v3035
  %v4141 = vrot.slane %v4140, 6
  %v4142 = vsel %vm3683, %v3037, %v3648
  %v4143 = vsel %vm3685, %v3037, %v3648
  %v4144 = vrot.slane %v4143, 2
  %v4145 = vsel %vm3688, %v3037, %v3648
  %v4146 = vrot.slane %v4145, 4
  %v4147 = vsel %vm3691, %v3648, %v3037
  %v4148 = vrot.slane %v4147, 6
  %v4149 = vsel %vm3683, %v3040, %v3649
  %v4150 = vsel %vm3685, %v3040, %v3649
  %v4151 = vrot.slane %v4150, 2
  %v4152 = vsel %vm3688, %v3040, %v3649
  %v4153 = vrot.slane %v4152, 4
  %v4154 = vsel %vm3691, %v3649, %v3040
  %v4155 = vrot.slane %v4154, 6
  %v4156 = vsel %vm3683, %v3042, %v3650
  %v4157 = vsel %vm3685, %v3042, %v3650
  %v4158 = vrot.slane %v4157, 2
  %v4159 = vsel %vm3688, %v3042, %v3650
  %v4160 = vrot.slane %v4159, 4
  %v4161 = vsel %vm3691, %v3650, %v3042
  %v4162 = vrot.slane %v4161, 6
  %v4163 = vsel %vm3683, %v3045, %v3651
  %v4164 = vsel %vm3685, %v3045, %v3651
  %v4165 = vrot.slane %v4164, 2
  %v4166 = vsel %vm3688, %v3045, %v3651
  %v4167 = vrot.slane %v4166, 4
  %v4168 = vsel %vm3691, %v3651, %v3045
  %v4169 = vrot.slane %v4168, 6
  %v4170 = vsel %vm3683, %v3047, %v3652
  %v4171 = vsel %vm3685, %v3047, %v3652
  %v4172 = vrot.slane %v4171, 2
  %v4173 = vsel %vm3688, %v3047, %v3652
  %v4174 = vrot.slane %v4173, 4
  %v4175 = vsel %vm3691, %v3652, %v3047
  %v4176 = vrot.slane %v4175, 6
  %v4177 = vsel %vm3683, %v3050, %v3653
  %v4178 = vsel %vm3685, %v3050, %v3653
  %v4179 = vrot.slane %v4178, 2
  %v4180 = vsel %vm3688, %v3050, %v3653
  %v4181 = vrot.slane %v4180, 4
  %v4182 = vsel %vm3691, %v3653, %v3050
  %v4183 = vrot.slane %v4182, 6
  %v4184 = vsel %vm3683, %v3052, %v3654
  %v4185 = vsel %vm3685, %v3052, %v3654
  %v4186 = vrot.slane %v4185, 2
  %v4187 = vsel %vm3688, %v3052, %v3654
  %v4188 = vrot.slane %v4187, 4
  %v4189 = vsel %vm3691, %v3654, %v3052
  %v4190 = vrot.slane %v4189, 6
  %v4191 = vsel %vm3683, %v3055, %v3655
  %v4192 = vsel %vm3685, %v3055, %v3655
  %v4193 = vrot.slane %v4192, 2
  %v4194 = vsel %vm3688, %v3055, %v3655
  %v4195 = vrot.slane %v4194, 4
  %v4196 = vsel %vm3691, %v3655, %v3055
  %v4197 = vrot.slane %v4196, 6
  %v4198 = vsel %vm3683, %v3057, %v3656
  %v4199 = vsel %vm3685, %v3057, %v3656
  %v4200 = vrot.slane %v4199, 2
  %v4201 = vsel %vm3688, %v3057, %v3656
  %v4202 = vrot.slane %v4201, 4
  %v4203 = vsel %vm3691, %v3656, %v3057
  %v4204 = vrot.slane %v4203, 6
  %v4205 = vsel %vm3683, %v3060, %v3657
  %v4206 = vsel %vm3685, %v3060, %v3657
  %v4207 = vrot.slane %v4206, 2
  %v4208 = vsel %vm3688, %v3060, %v3657
  %v4209 = vrot.slane %v4208, 4
  %v4210 = vsel %vm3691, %v3657, %v3060
  %v4211 = vrot.slane %v4210, 6
  %v4212 = vsel %vm3683, %v3062, %v3658
  %v4213 = vsel %vm3685, %v3062, %v3658
  %v4214 = vrot.slane %v4213, 2
  %v4215 = vsel %vm3688, %v3062, %v3658
  %v4216 = vrot.slane %v4215, 4
  %v4217 = vsel %vm3691, %v3658, %v3062
  %v4218 = vrot.slane %v4217, 6
  %v4219 = vsel %vm3683, %v3065, %v3659
  %v4220 = vsel %vm3685, %v3065, %v3659
  %v4221 = vrot.slane %v4220, 2
  %v4222 = vsel %vm3688, %v3065, %v3659
  %v4223 = vrot.slane %v4222, 4
  %v4224 = vsel %vm3691, %v3659, %v3065
  %v4225 = vrot.slane %v4224, 6
  %v4226 = vsel %vm3683, %v3067, %v3660
  %v4227 = vsel %vm3685, %v3067, %v3660
  %v4228 = vrot.slane %v4227, 2
  %v4229 = vsel %vm3688, %v3067, %v3660
  %v4230 = vrot.slane %v4229, 4
  %v4231 = vsel %vm3691, %v3660, %v3067
  %v4232 = vrot.slane %v4231, 6
  %v4233 = vsel %vm3683, %v3070, %v3661
  %v4234 = vsel %vm3685, %v3070, %v3661
  %v4235 = vrot.slane %v4234, 2
  %v4236 = vsel %vm3688, %v3070, %v3661
  %v4237 = vrot.slane %v4236, 4
  %v4238 = vsel %vm3691, %v3661, %v3070
  %v4239 = vrot.slane %v4238, 6
  %v4240 = vsel %vm3683, %v3072, %v3662
  %v4241 = vsel %vm3685, %v3072, %v3662
  %v4242 = vrot.slane %v4241, 2
  %v4243 = vsel %vm3688, %v3072, %v3662
  %v4244 = vrot.slane %v4243, 4
  %v4245 = vsel %vm3691, %v3662, %v3072
  %v4246 = vrot.slane %v4245, 6
  %v4247 = vsel %vm3683, %v3075, %v3663
  %v4248 = vsel %vm3685, %v3075, %v3663
  %v4249 = vrot.slane %v4248, 2
  %v4250 = vsel %vm3688, %v3075, %v3663
  %v4251 = vrot.slane %v4250, 4
  %v4252 = vsel %vm3691, %v3663, %v3075
  %v4253 = vrot.slane %v4252, 6
  %v4254 = vsel %vm3683, %v3077, %v3664
  %v4255 = vsel %vm3685, %v3077, %v3664
  %v4256 = vrot.slane %v4255, 2
  %v4257 = vsel %vm3688, %v3077, %v3664
  %v4258 = vrot.slane %v4257, 4
  %v4259 = vsel %vm3691, %v3664, %v3077
  %v4260 = vrot.slane %v4259, 6
  %v4261 = vsel %vm3683, %v3080, %v3665
  %v4262 = vsel %vm3685, %v3080, %v3665
  %v4263 = vrot.slane %v4262, 2
  %v4264 = vsel %vm3688, %v3080, %v3665
  %v4265 = vrot.slane %v4264, 4
  %v4266 = vsel %vm3691, %v3665, %v3080
  %v4267 = vrot.slane %v4266, 6
  %v4268 = vsel %vm3683, %v3082, %v3666
  %v4269 = vsel %vm3685, %v3082, %v3666
  %v4270 = vrot.slane %v4269, 2
  %v4271 = vsel %vm3688, %v3082, %v3666
  %v4272 = vrot.slane %v4271, 4
  %v4273 = vsel %vm3691, %v3666, %v3082
  %v4274 = vrot.slane %v4273, 6
  %v4275 = vsel %vm3683, %v3085, %v3667
  %v4276 = vsel %vm3685, %v3085, %v3667
  %v4277 = vrot.slane %v4276, 2
  %v4278 = vsel %vm3688, %v3085, %v3667
  %v4279 = vrot.slane %v4278, 4
  %v4280 = vsel %vm3691, %v3667, %v3085
  %v4281 = vrot.slane %v4280, 6
  %v4282 = vsel %vm3683, %v3087, %v3668
  %v4283 = vsel %vm3685, %v3087, %v3668
  %v4284 = vrot.slane %v4283, 2
  %v4285 = vsel %vm3688, %v3087, %v3668
  %v4286 = vrot.slane %v4285, 4
  %v4287 = vsel %vm3691, %v3668, %v3087
  %v4288 = vrot.slane %v4287, 6
  %v4289 = vsel %vm3683, %v3090, %v3669
  %v4290 = vsel %vm3685, %v3090, %v3669
  %v4291 = vrot.slane %v4290, 2
  %v4292 = vsel %vm3688, %v3090, %v3669
  %v4293 = vrot.slane %v4292, 4
  %v4294 = vsel %vm3691, %v3669, %v3090
  %v4295 = vrot.slane %v4294, 6
  %v4296 = vsel %vm3683, %v3092, %v3670
  %v4297 = vsel %vm3685, %v3092, %v3670
  %v4298 = vrot.slane %v4297, 2
  %v4299 = vsel %vm3688, %v3092, %v3670
  %v4300 = vrot.slane %v4299, 4
  %v4301 = vsel %vm3691, %v3670, %v3092
  %v4302 = vrot.slane %v4301, 6
  %v4303 = vsel %vm3683, %v3095, %v3671
  %v4304 = vsel %vm3685, %v3095, %v3671
  %v4305 = vrot.slane %v4304, 2
  %v4306 = vsel %vm3688, %v3095, %v3671
  %v4307 = vrot.slane %v4306, 4
  %v4308 = vsel %vm3691, %v3671, %v3095
  %v4309 = vrot.slane %v4308, 6
  %v4310 = vsel %vm3683, %v3097, %v3672
  %v4311 = vsel %vm3685, %v3097, %v3672
  %v4312 = vrot.slane %v4311, 2
  %v4313 = vsel %vm3688, %v3097, %v3672
  %v4314 = vrot.slane %v4313, 4
  %v4315 = vsel %vm3691, %v3672, %v3097
  %v4316 = vrot.slane %v4315, 6
  %v4317 = vsel %vm3683, %v3100, %v3673
  %v4318 = vsel %vm3685, %v3100, %v3673
  %v4319 = vrot.slane %v4318, 2
  %v4320 = vsel %vm3688, %v3100, %v3673
  %v4321 = vrot.slane %v4320, 4
  %v4322 = vsel %vm3691, %v3673, %v3100
  %v4323 = vrot.slane %v4322, 6
  %v4324 = vsel %vm3683, %v3102, %v3674
  %v4325 = vsel %vm3685, %v3102, %v3674
  %v4326 = vrot.slane %v4325, 2
  %v4327 = vsel %vm3688, %v3102, %v3674
  %v4328 = vrot.slane %v4327, 4
  %v4329 = vsel %vm3691, %v3674, %v3102
  %v4330 = vrot.slane %v4329, 6
  %v4331 = vsel %vm3683, %v3105, %v3675
  %v4332 = vsel %vm3685, %v3105, %v3675
  %v4333 = vrot.slane %v4332, 2
  %v4334 = vsel %vm3688, %v3105, %v3675
  %v4335 = vrot.slane %v4334, 4
  %v4336 = vsel %vm3691, %v3675, %v3105
  %v4337 = vrot.slane %v4336, 6
  %v4338 = vsel %vm3683, %v3107, %v3676
  %v4339 = vsel %vm3685, %v3107, %v3676
  %v4340 = vrot.slane %v4339, 2
  %v4341 = vsel %vm3688, %v3107, %v3676
  %v4342 = vrot.slane %v4341, 4
  %v4343 = vsel %vm3691, %v3676, %v3107
  %v4344 = vrot.slane %v4343, 6
  %v4345 = vsel %vm3683, %v3110, %v3677
  %v4346 = vsel %vm3685, %v3110, %v3677
  %v4347 = vrot.slane %v4346, 2
  %v4348 = vsel %vm3688, %v3110, %v3677
  %v4349 = vrot.slane %v4348, 4
  %v4350 = vsel %vm3691, %v3677, %v3110
  %v4351 = vrot.slane %v4350, 6
  %v4352 = vsel %vm3683, %v3112, %v3678
  %v4353 = vsel %vm3685, %v3112, %v3678
  %v4354 = vrot.slane %v4353, 2
  %v4355 = vsel %vm3688, %v3112, %v3678
  %v4356 = vrot.slane %v4355, 4
  %v4357 = vsel %vm3691, %v3678, %v3112
  %v4358 = vrot.slane %v4357, 6
  %v4359 = vsel %vm3683, %v3115, %v3679
  %v4360 = vsel %vm3685, %v3115, %v3679
  %v4361 = vrot.slane %v4360, 2
  %v4362 = vsel %vm3688, %v3115, %v3679
  %v4363 = vrot.slane %v4362, 4
  %v4364 = vsel %vm3691, %v3679, %v3115
  %v4365 = vrot.slane %v4364, 6
  %v4366 = vsel %vm3683, %v3117, %v3680
  %v4367 = vsel %vm3685, %v3117, %v3680
  %v4368 = vrot.slane %v4367, 2
  %v4369 = vsel %vm3688, %v3117, %v3680
  %v4370 = vrot.slane %v4369, 4
  %v4371 = vsel %vm3691, %v3680, %v3117
  %v4372 = vrot.slane %v4371, 6
  %v4373 = vsel %vm3683, %v3120, %v3681
  %v4374 = vsel %vm3685, %v3120, %v3681
  %v4375 = vrot.slane %v4374, 2
  %v4376 = vsel %vm3688, %v3120, %v3681
  %v4377 = vrot.slane %v4376, 4
  %v4378 = vsel %vm3691, %v3681, %v3120
  %v4379 = vrot.slane %v4378, 6
  %v4380 = vsel %vm3683, %v3122, %v3682
  %v4381 = vsel %vm3685, %v3122, %v3682
  %v4382 = vrot.slane %v4381, 2
  %v4383 = vsel %vm3688, %v3122, %v3682
  %v4384 = vrot.slane %v4383, 4
  %v4385 = vsel %vm3691, %v3682, %v3122
  %v4386 = vrot.slane %v4385, 6
  %4403 = vst [vmem:[#allocation1] ss:$4 sm:$0xff] %v3684
  %s4404 = scalar_lea.vmem [#allocation1], 1
  %4405 = vst [vmem:[%s4404] ss:$4 sm:$0xff] %v3687
  %s4406 = scalar_lea.vmem [#allocation1], 2
  %4407 = vst [vmem:[%s4406] ss:$4 sm:$0xff] %v3690
  %s4408 = scalar_lea.vmem [#allocation1], 3
  %4409 = vst [vmem:[%s4408] ss:$4 sm:$0xff] %v3693
  %s4410 = scalar_lea.vmem [#allocation1], 32
  %4411 = vst [vmem:[%s4410] ss:$4 sm:$0xff] %v3694
  %s4412 = scalar_lea.vmem [#allocation1], 33
  %4413 = vst [vmem:[%s4412] ss:$4 sm:$0xff] %v3696
  %s4414 = scalar_lea.vmem [#allocation1], 34
  %4415 = vst [vmem:[%s4414] ss:$4 sm:$0xff] %v3698
  %s4416 = scalar_lea.vmem [#allocation1], 35
  %4417 = vst [vmem:[%s4416] ss:$4 sm:$0xff] %v3700
  %v4418 = vld.sshfl [vmem:[#allocation1] sm:$0xff pattern:$0x73625140]
  %v4419 = vld.sshfl [vmem:[#allocation1 + $0x8] sm:$0xff pattern:$0x73625140]
  %v4420 = vld.sshfl [vmem:[#allocation1 + $0x20] sm:$0xff pattern:$0x73625140]
  %v4421 = vld.sshfl [vmem:[#allocation1 + $0x28] sm:$0xff pattern:$0x73625140]
  %4422 = vst [vmem:[#allocation1] ss:$4 sm:$0xff] %v3701
  %4423 = vst [vmem:[%s4404] ss:$4 sm:$0xff] %v3703
  %4424 = vst [vmem:[%s4406] ss:$4 sm:$0xff] %v3705
  %4425 = vst [vmem:[%s4408] ss:$4 sm:$0xff] %v3707
  %4426 = vst [vmem:[%s4410] ss:$4 sm:$0xff] %v3708
  %4427 = vst [vmem:[%s4412] ss:$4 sm:$0xff] %v3710
  %4428 = vst [vmem:[%s4414] ss:$4 sm:$0xff] %v3712
  %4429 = vst [vmem:[%s4416] ss:$4 sm:$0xff] %v3714
  %v4430 = vld.sshfl [vmem:[#allocation1] sm:$0xff pattern:$0x73625140]
  %v4431 = vld.sshfl [vmem:[#allocation1 + $0x8] sm:$0xff pattern:$0x73625140]
  %v4432 = vld.sshfl [vmem:[#allocation1 + $0x20] sm:$0xff pattern:$0x73625140]
  %v4433 = vld.sshfl [vmem:[#allocation1 + $0x28] sm:$0xff pattern:$0x73625140]
  %4434 = vst [vmem:[#allocation1] ss:$4 sm:$0xff] %v3715
  %4435 = vst [vmem:[%s4404] ss:$4 sm:$0xff] %v3717
  %4436 = vst [vmem:[%s4406] ss:$4 sm:$0xff] %v3719
  %4437 = vst [vmem:[%s4408] ss:$4 sm:$0xff] %v3721
  %4438 = vst [vmem:[%s4410] ss:$4 sm:$0xff] %v3722
  %4439 = vst [vmem:[%s4412] ss:$4 sm:$0xff] %v3724
  %4440 = vst [vmem:[%s4414] ss:$4 sm:$0xff] %v3726
  %4441 = vst [vmem:[%s4416] ss:$4 sm:$0xff] %v3728
  %v4442 = vld.sshfl [vmem:[#allocation1] sm:$0xff pattern:$0x73625140]
  %v4443 = vld.sshfl [vmem:[#allocation1 + $0x8] sm:$0xff pattern:$0x73625140]
  %v4444 = vld.sshfl [vmem:[#allocation1 + $0x20] sm:$0xff pattern:$0x73625140]
  %v4445 = vld.sshfl [vmem:[#allocation1 + $0x28] sm:$0xff pattern:$0x73625140]
  %4446 = vst [vmem:[#allocation1] ss:$4 sm:$0xff] %v3731
  %4447 = vst [vmem:[%s4404] ss:$4 sm:$0xff] %v3733
  %4448 = vst [vmem:[%s4406] ss:$4 sm:$0xff] %v3735
  %4449 = vst [vmem:[%s4408] ss:$4 sm:$0xff] %v3736
  %4450 = vst [vmem:[%s4410] ss:$4 sm:$0xff] %v3738
  %4451 = vst [vmem:[%s4412] ss:$4 sm:$0xff] %v3740
  %4452 = vst [vmem:[%s4414] ss:$4 sm:$0xff] %v3742
  %4453 = vst [vmem:[%s4416] ss:$4 sm:$0xff] %v3743
  %v4454 = vld.sshfl [vmem:[#allocation1] sm:$0xff pattern:$0x73625140]
  %v4455 = vld.sshfl [vmem:[#allocation1 + $0x8] sm:$0xff pattern:$0x73625140]
  %v4456 = vld.sshfl [vmem:[#allocation1 + $0x20] sm:$0xff pattern:$0x73625140]
  %v4457 = vld.sshfl [vmem:[#allocation1 + $0x28] sm:$0xff pattern:$0x73625140]
  %4458 = vst [vmem:[#allocation1] ss:$4 sm:$0xff] %v3745
  %4459 = vst [vmem:[%s4404] ss:$4 sm:$0xff] %v3747
  %4460 = vst [vmem:[%s4406] ss:$4 sm:$0xff] %v3749
  %4461 = vst [vmem:[%s4408] ss:$4 sm:$0xff] %v3750
  %4462 = vst [vmem:[%s4410] ss:$4 sm:$0xff] %v3752
  %4463 = vst [vmem:[%s4412] ss:$4 sm:$0xff] %v3754
  %4464 = vst [vmem:[%s4414] ss:$4 sm:$0xff] %v3756
  %4465 = vst [vmem:[%s4416] ss:$4 sm:$0xff] %v3757
  %v4466 = vld.sshfl [vmem:[#allocation1] sm:$0xff pattern:$0x73625140]
  %v4467 = vld.sshfl [vmem:[#allocation1 + $0x8] sm:$0xff pattern:$0x73625140]
  %v4468 = vld.sshfl [vmem:[#allocation1 + $0x20] sm:$0xff pattern:$0x73625140]
  %v4469 = vld.sshfl [vmem:[#allocation1 + $0x28] sm:$0xff pattern:$0x73625140]
  %4470 = vst [vmem:[#allocation1] ss:$4 sm:$0xff] %v3759
  %4471 = vst [vmem:[%s4404] ss:$4 sm:$0xff] %v3761
  %4472 = vst [vmem:[%s4406] ss:$4 sm:$0xff] %v3763
  %4473 = vst [vmem:[%s4408] ss:$4 sm:$0xff] %v3764
  %4474 = vst [vmem:[%s4410] ss:$4 sm:$0xff] %v3766
  %4475 = vst [vmem:[%s4412] ss:$4 sm:$0xff] %v3768
  %4476 = vst [vmem:[%s4414] ss:$4 sm:$0xff] %v3770
  %4477 = vst [vmem:[%s4416] ss:$4 sm:$0xff] %v3771
  %v4478 = vld.sshfl [vmem:[#allocation1] sm:$0xff pattern:$0x73625140]
  %v4479 = vld.sshfl [vmem:[#allocation1 + $0x8] sm:$0xff pattern:$0x73625140]
  %v4480 = vld.sshfl [vmem:[#allocation1 + $0x20] sm:$0xff pattern:$0x73625140]
  %v4481 = vld.sshfl [vmem:[#allocation1 + $0x28] sm:$0xff pattern:$0x73625140]
  %4482 = vst [vmem:[#allocation1] ss:$4 sm:$0xff] %v3775
  %4483 = vst [vmem:[%s4404] ss:$4 sm:$0xff] %v3777
  %4484 = vst [vmem:[%s4406] ss:$4 sm:$0xff] %v3778
  %4485 = vst [vmem:[%s4408] ss:$4 sm:$0xff] %v3780
  %4486 = vst [vmem:[%s4410] ss:$4 sm:$0xff] %v3782
  %4487 = vst [vmem:[%s4412] ss:$4 sm:$0xff] %v3784
  %4488 = vst [vmem:[%s4414] ss:$4 sm:$0xff] %v3785
  %4489 = vst [vmem:[%s4416] ss:$4 sm:$0xff] %v3787
  %v4490 = vld.sshfl [vmem:[#allocation1] sm:$0xff pattern:$0x73625140]
  %v4491 = vld.sshfl [vmem:[#allocation1 + $0x8] sm:$0xff pattern:$0x73625140]
  %v4492 = vld.sshfl [vmem:[#allocation1 + $0x20] sm:$0xff pattern:$0x73625140]
  %v4493 = vld.sshfl [vmem:[#allocation1 + $0x28] sm:$0xff pattern:$0x73625140]
  %4494 = vst [vmem:[#allocation1] ss:$4 sm:$0xff] %v3789
  %4495 = vst [vmem:[%s4404] ss:$4 sm:$0xff] %v3791
  %4496 = vst [vmem:[%s4406] ss:$4 sm:$0xff] %v3792
  %4497 = vst [vmem:[%s4408] ss:$4 sm:$0xff] %v3794
  %4498 = vst [vmem:[%s4410] ss:$4 sm:$0xff] %v3796
  %4499 = vst [vmem:[%s4412] ss:$4 sm:$0xff] %v3798
  %4500 = vst [vmem:[%s4414] ss:$4 sm:$0xff] %v3799
  %4501 = vst [vmem:[%s4416] ss:$4 sm:$0xff] %v3801
  %v4502 = vld.sshfl [vmem:[#allocation1] sm:$0xff pattern:$0x73625140]
  %v4503 = vld.sshfl [vmem:[#allocation1 + $0x8] sm:$0xff pattern:$0x73625140]
  %v4504 = vld.sshfl [vmem:[#allocation1 + $0x20] sm:$0xff pattern:$0x73625140]
  %v4505 = vld.sshfl [vmem:[#allocation1 + $0x28] sm:$0xff pattern:$0x73625140]
  %4506 = vst [vmem:[#allocation1] ss:$4 sm:$0xff] %v3803
  %4507 = vst [vmem:[%s4404] ss:$4 sm:$0xff] %v3805
  %4508 = vst [vmem:[%s4406] ss:$4 sm:$0xff] %v3806
  %4509 = vst [vmem:[%s4408] ss:$4 sm:$0xff] %v3808
  %4510 = vst [vmem:[%s4410] ss:$4 sm:$0xff] %v3810
  %4511 = vst [vmem:[%s4412] ss:$4 sm:$0xff] %v3812
  %4512 = vst [vmem:[%s4414] ss:$4 sm:$0xff] %v3813
  %4513 = vst [vmem:[%s4416] ss:$4 sm:$0xff] %v3815
  %v4514 = vld.sshfl [vmem:[#allocation1] sm:$0xff pattern:$0x73625140]
  %v4515 = vld.sshfl [vmem:[#allocation1 + $0x8] sm:$0xff pattern:$0x73625140]
  %v4516 = vld.sshfl [vmem:[#allocation1 + $0x20] sm:$0xff pattern:$0x73625140]
  %v4517 = vld.sshfl [vmem:[#allocation1 + $0x28] sm:$0xff pattern:$0x73625140]
  %4518 = vst [vmem:[#allocation1] ss:$4 sm:$0xff] %v3819
  %4519 = vst [vmem:[%s4404] ss:$4 sm:$0xff] %v3820
  %4520 = vst [vmem:[%s4406] ss:$4 sm:$0xff] %v3822
  %4521 = vst [vmem:[%s4408] ss:$4 sm:$0xff] %v3824
  %4522 = vst [vmem:[%s4410] ss:$4 sm:$0xff] %v3826
  %4523 = vst [vmem:[%s4412] ss:$4 sm:$0xff] %v3827
  %4524 = vst [vmem:[%s4414] ss:$4 sm:$0xff] %v3829
  %4525 = vst [vmem:[%s4416] ss:$4 sm:$0xff] %v3831
  %v4526 = vld.sshfl [vmem:[#allocation1] sm:$0xff pattern:$0x73625140]
  %v4527 = vld.sshfl [vmem:[#allocation1 + $0x8] sm:$0xff pattern:$0x73625140]
  %v4528 = vld.sshfl [vmem:[#allocation1 + $0x20] sm:$0xff pattern:$0x73625140]
  %v4529 = vld.sshfl [vmem:[#allocation1 + $0x28] sm:$0xff pattern:$0x73625140]
  %4530 = vst [vmem:[#allocation1] ss:$4 sm:$0xff] %v3833
  %4531 = vst [vmem:[%s4404] ss:$4 sm:$0xff] %v3834
  %4532 = vst [vmem:[%s4406] ss:$4 sm:$0xff] %v3836
  %4533 = vst [vmem:[%s4408] ss:$4 sm:$0xff] %v3838
  %4534 = vst [vmem:[%s4410] ss:$4 sm:$0xff] %v3840
  %4535 = vst [vmem:[%s4412] ss:$4 sm:$0xff] %v3841
  %4536 = vst [vmem:[%s4414] ss:$4 sm:$0xff] %v3843
  %4537 = vst [vmem:[%s4416] ss:$4 sm:$0xff] %v3845
  %v4538 = vld.sshfl [vmem:[#allocation1] sm:$0xff pattern:$0x73625140]
  %v4539 = vld.sshfl [vmem:[#allocation1 + $0x8] sm:$0xff pattern:$0x73625140]
  %v4540 = vld.sshfl [vmem:[#allocation1 + $0x20] sm:$0xff pattern:$0x73625140]
  %v4541 = vld.sshfl [vmem:[#allocation1 + $0x28] sm:$0xff pattern:$0x73625140]
  %4542 = vst [vmem:[#allocation1] ss:$4 sm:$0xff] %v3847
  %4543 = vst [vmem:[%s4404] ss:$4 sm:$0xff] %v3848
  %4544 = vst [vmem:[%s4406] ss:$4 sm:$0xff] %v3850
  %4545 = vst [vmem:[%s4408] ss:$4 sm:$0xff] %v3852
  %4546 = vst [vmem:[%s4410] ss:$4 sm:$0xff] %v3854
  %4547 = vst [vmem:[%s4412] ss:$4 sm:$0xff] %v3855
  %4548 = vst [vmem:[%s4414] ss:$4 sm:$0xff] %v3857
  %4549 = vst [vmem:[%s4416] ss:$4 sm:$0xff] %v3859
  %v4550 = vld.sshfl [vmem:[#allocation1] sm:$0xff pattern:$0x73625140]
  %v4551 = vld.sshfl [vmem:[#allocation1 + $0x8] sm:$0xff pattern:$0x73625140]
  %v4552 = vld.sshfl [vmem:[#allocation1 + $0x20] sm:$0xff pattern:$0x73625140]
  %v4553 = vld.sshfl [vmem:[#allocation1 + $0x28] sm:$0xff pattern:$0x73625140]
  %4554 = vst [vmem:[#allocation1] ss:$4 sm:$0xff] %v3862
  %4555 = vst [vmem:[%s4404] ss:$4 sm:$0xff] %v3864
  %4556 = vst [vmem:[%s4406] ss:$4 sm:$0xff] %v3866
  %4557 = vst [vmem:[%s4408] ss:$4 sm:$0xff] %v3868
  %4558 = vst [vmem:[%s4410] ss:$4 sm:$0xff] %v3869
  %4559 = vst [vmem:[%s4412] ss:$4 sm:$0xff] %v3871
  %4560 = vst [vmem:[%s4414] ss:$4 sm:$0xff] %v3873
  %4561 = vst [vmem:[%s4416] ss:$4 sm:$0xff] %v3875
  %v4562 = vld.sshfl [vmem:[#allocation1] sm:$0xff pattern:$0x73625140]
  %v4563 = vld.sshfl [vmem:[#allocation1 + $0x8] sm:$0xff pattern:$0x73625140]
  %v4564 = vld.sshfl [vmem:[#allocation1 + $0x20] sm:$0xff pattern:$0x73625140]
  %v4565 = vld.sshfl [vmem:[#allocation1 + $0x28] sm:$0xff pattern:$0x73625140]
  %4566 = vst [vmem:[#allocation1] ss:$4 sm:$0xff] %v3876
  %4567 = vst [vmem:[%s4404] ss:$4 sm:$0xff] %v3878
  %4568 = vst [vmem:[%s4406] ss:$4 sm:$0xff] %v3880
  %4569 = vst [vmem:[%s4408] ss:$4 sm:$0xff] %v3882
  %4570 = vst [vmem:[%s4410] ss:$4 sm:$0xff] %v3883
  %4571 = vst [vmem:[%s4412] ss:$4 sm:$0xff] %v3885
  %4572 = vst [vmem:[%s4414] ss:$4 sm:$0xff] %v3887
  %4573 = vst [vmem:[%s4416] ss:$4 sm:$0xff] %v3889
  %v4574 = vld.sshfl [vmem:[#allocation1] sm:$0xff pattern:$0x73625140]
  %v4575 = vld.sshfl [vmem:[#allocation1 + $0x8] sm:$0xff pattern:$0x73625140]
  %v4576 = vld.sshfl [vmem:[#allocation1 + $0x20] sm:$0xff pattern:$0x73625140]
  %v4577 = vld.sshfl [vmem:[#allocation1 + $0x28] sm:$0xff pattern:$0x73625140]
  %4578 = vst [vmem:[#allocation1] ss:$4 sm:$0xff] %v3890
  %4579 = vst [vmem:[%s4404] ss:$4 sm:$0xff] %v3892
  %4580 = vst [vmem:[%s4406] ss:$4 sm:$0xff] %v3894
  %4581 = vst [vmem:[%s4408] ss:$4 sm:$0xff] %v3896
  %4582 = vst [vmem:[%s4410] ss:$4 sm:$0xff] %v3897
  %4583 = vst [vmem:[%s4412] ss:$4 sm:$0xff] %v3899
  %4584 = vst [vmem:[%s4414] ss:$4 sm:$0xff] %v3901
  %4585 = vst [vmem:[%s4416] ss:$4 sm:$0xff] %v3903
  %v4586 = vld.sshfl [vmem:[#allocation1] sm:$0xff pattern:$0x73625140]
  %v4587 = vld.sshfl [vmem:[#allocation1 + $0x8] sm:$0xff pattern:$0x73625140]
  %v4588 = vld.sshfl [vmem:[#allocation1 + $0x20] sm:$0xff pattern:$0x73625140]
  %v4589 = vld.sshfl [vmem:[#allocation1 + $0x28] sm:$0xff pattern:$0x73625140]
  %4590 = vst [vmem:[#allocation1] ss:$4 sm:$0xff] %v3906
  %4591 = vst [vmem:[%s4404] ss:$4 sm:$0xff] %v3908
  %4592 = vst [vmem:[%s4406] ss:$4 sm:$0xff] %v3910
  %4593 = vst [vmem:[%s4408] ss:$4 sm:$0xff] %v3911
  %4594 = vst [vmem:[%s4410] ss:$4 sm:$0xff] %v3913
  %4595 = vst [vmem:[%s4412] ss:$4 sm:$0xff] %v3915
  %4596 = vst [vmem:[%s4414] ss:$4 sm:$0xff] %v3917
  %4597 = vst [vmem:[%s4416] ss:$4 sm:$0xff] %v3918
  %v4598 = vld.sshfl [vmem:[#allocation1] sm:$0xff pattern:$0x73625140]
  %v4599 = vld.sshfl [vmem:[#allocation1 + $0x8] sm:$0xff pattern:$0x73625140]
  %v4600 = vld.sshfl [vmem:[#allocation1 + $0x20] sm:$0xff pattern:$0x73625140]
  %v4601 = vld.sshfl [vmem:[#allocation1 + $0x28] sm:$0xff pattern:$0x73625140]
  %4602 = vst [vmem:[#allocation1] ss:$4 sm:$0xff] %v3920
  %4603 = vst [vmem:[%s4404] ss:$4 sm:$0xff] %v3922
  %4604 = vst [vmem:[%s4406] ss:$4 sm:$0xff] %v3924
  %4605 = vst [vmem:[%s4408] ss:$4 sm:$0xff] %v3925
  %4606 = vst [vmem:[%s4410] ss:$4 sm:$0xff] %v3927
  %4607 = vst [vmem:[%s4412] ss:$4 sm:$0xff] %v3929
  %4608 = vst [vmem:[%s4414] ss:$4 sm:$0xff] %v3931
  %4609 = vst [vmem:[%s4416] ss:$4 sm:$0xff] %v3932
  %v4610 = vld.sshfl [vmem:[#allocation1] sm:$0xff pattern:$0x73625140]
  %v4611 = vld.sshfl [vmem:[#allocation1 + $0x8] sm:$0xff pattern:$0x73625140]
  %v4612 = vld.sshfl [vmem:[#allocation1 + $0x20] sm:$0xff pattern:$0x73625140]
  %v4613 = vld.sshfl [vmem:[#allocation1 + $0x28] sm:$0xff pattern:$0x73625140]
  %4614 = vst [vmem:[#allocation1] ss:$4 sm:$0xff] %v3934
  %4615 = vst [vmem:[%s4404] ss:$4 sm:$0xff] %v3936
  %4616 = vst [vmem:[%s4406] ss:$4 sm:$0xff] %v3938
  %4617 = vst [vmem:[%s4408] ss:$4 sm:$0xff] %v3939
  %4618 = vst [vmem:[%s4410] ss:$4 sm:$0xff] %v3941
  %4619 = vst [vmem:[%s4412] ss:$4 sm:$0xff] %v3943
  %4620 = vst [vmem:[%s4414] ss:$4 sm:$0xff] %v3945
  %4621 = vst [vmem:[%s4416] ss:$4 sm:$0xff] %v3946
  %v4622 = vld.sshfl [vmem:[#allocation1] sm:$0xff pattern:$0x73625140]
  %v4623 = vld.sshfl [vmem:[#allocation1 + $0x8] sm:$0xff pattern:$0x73625140]
  %v4624 = vld.sshfl [vmem:[#allocation1 + $0x20] sm:$0xff pattern:$0x73625140]
  %v4625 = vld.sshfl [vmem:[#allocation1 + $0x28] sm:$0xff pattern:$0x73625140]
  %4626 = vst [vmem:[#allocation1] ss:$4 sm:$0xff] %v3950
  %4627 = vst [vmem:[%s4404] ss:$4 sm:$0xff] %v3952
  %4628 = vst [vmem:[%s4406] ss:$4 sm:$0xff] %v3953
  %4629 = vst [vmem:[%s4408] ss:$4 sm:$0xff] %v3955
  %4630 = vst [vmem:[%s4410] ss:$4 sm:$0xff] %v3957
  %4631 = vst [vmem:[%s4412] ss:$4 sm:$0xff] %v3959
  %4632 = vst [vmem:[%s4414] ss:$4 sm:$0xff] %v3960
  %4633 = vst [vmem:[%s4416] ss:$4 sm:$0xff] %v3962
  %v4634 = vld.sshfl [vmem:[#allocation1] sm:$0xff pattern:$0x73625140]
  %v4635 = vld.sshfl [vmem:[#allocation1 + $0x8] sm:$0xff pattern:$0x73625140]
  %v4636 = vld.sshfl [vmem:[#allocation1 + $0x20] sm:$0xff pattern:$0x73625140]
  %v4637 = vld.sshfl [vmem:[#allocation1 + $0x28] sm:$0xff pattern:$0x73625140]
  %4638 = vst [vmem:[#allocation1] ss:$4 sm:$0xff] %v3964
  %4639 = vst [vmem:[%s4404] ss:$4 sm:$0xff] %v3966
  %4640 = vst [vmem:[%s4406] ss:$4 sm:$0xff] %v3967
  %4641 = vst [vmem:[%s4408] ss:$4 sm:$0xff] %v3969
  %4642 = vst [vmem:[%s4410] ss:$4 sm:$0xff] %v3971
  %4643 = vst [vmem:[%s4412] ss:$4 sm:$0xff] %v3973
  %4644 = vst [vmem:[%s4414] ss:$4 sm:$0xff] %v3974
  %4645 = vst [vmem:[%s4416] ss:$4 sm:$0xff] %v3976
  %v4646 = vld.sshfl [vmem:[#allocation1] sm:$0xff pattern:$0x73625140]
  %v4647 = vld.sshfl [vmem:[#allocation1 + $0x8] sm:$0xff pattern:$0x73625140]
  %v4648 = vld.sshfl [vmem:[#allocation1 + $0x20] sm:$0xff pattern:$0x73625140]
  %v4649 = vld.sshfl [vmem:[#allocation1 + $0x28] sm:$0xff pattern:$0x73625140]
  %4650 = vst [vmem:[#allocation1] ss:$4 sm:$0xff] %v3978
  %4651 = vst [vmem:[%s4404] ss:$4 sm:$0xff] %v3980
  %4652 = vst [vmem:[%s4406] ss:$4 sm:$0xff] %v3981
  %4653 = vst [vmem:[%s4408] ss:$4 sm:$0xff] %v3983
  %4654 = vst [vmem:[%s4410] ss:$4 sm:$0xff] %v3985
  %4655 = vst [vmem:[%s4412] ss:$4 sm:$0xff] %v3987
  %4656 = vst [vmem:[%s4414] ss:$4 sm:$0xff] %v3988
  %4657 = vst [vmem:[%s4416] ss:$4 sm:$0xff] %v3990
  %v4658 = vld.sshfl [vmem:[#allocation1] sm:$0xff pattern:$0x73625140]
  %v4659 = vld.sshfl [vmem:[#allocation1 + $0x8] sm:$0xff pattern:$0x73625140]
  %v4660 = vld.sshfl [vmem:[#allocation1 + $0x20] sm:$0xff pattern:$0x73625140]
  %v4661 = vld.sshfl [vmem:[#allocation1 + $0x28] sm:$0xff pattern:$0x73625140]
  %4662 = vst [vmem:[#allocation1] ss:$4 sm:$0xff] %v3994
  %4663 = vst [vmem:[%s4404] ss:$4 sm:$0xff] %v3995
  %4664 = vst [vmem:[%s4406] ss:$4 sm:$0xff] %v3997
  %4665 = vst [vmem:[%s4408] ss:$4 sm:$0xff] %v3999
  %4666 = vst [vmem:[%s4410] ss:$4 sm:$0xff] %v4001
  %4667 = vst [vmem:[%s4412] ss:$4 sm:$0xff] %v4002
  %4668 = vst [vmem:[%s4414] ss:$4 sm:$0xff] %v4004
  %4669 = vst [vmem:[%s4416] ss:$4 sm:$0xff] %v4006
  %v4670 = vld.sshfl [vmem:[#allocation1] sm:$0xff pattern:$0x73625140]
  %v4671 = vld.sshfl [vmem:[#allocation1 + $0x8] sm:$0xff pattern:$0x73625140]
  %v4672 = vld.sshfl [vmem:[#allocation1 + $0x20] sm:$0xff pattern:$0x73625140]
  %v4673 = vld.sshfl [vmem:[#allocation1 + $0x28] sm:$0xff pattern:$0x73625140]
  %4674 = vst [vmem:[#allocation1] ss:$4 sm:$0xff] %v4008
  %4675 = vst [vmem:[%s4404] ss:$4 sm:$0xff] %v4009
  %4676 = vst [vmem:[%s4406] ss:$4 sm:$0xff] %v4011
  %4677 = vst [vmem:[%s4408] ss:$4 sm:$0xff] %v4013
  %4678 = vst [vmem:[%s4410] ss:$4 sm:$0xff] %v4015
  %4679 = vst [vmem:[%s4412] ss:$4 sm:$0xff] %v4016
  %4680 = vst [vmem:[%s4414] ss:$4 sm:$0xff] %v4018
  %4681 = vst [vmem:[%s4416] ss:$4 sm:$0xff] %v4020
  %v4682 = vld.sshfl [vmem:[#allocation1] sm:$0xff pattern:$0x73625140]
  %v4683 = vld.sshfl [vmem:[#allocation1 + $0x8] sm:$0xff pattern:$0x73625140]
  %v4684 = vld.sshfl [vmem:[#allocation1 + $0x20] sm:$0xff pattern:$0x73625140]
  %v4685 = vld.sshfl [vmem:[#allocation1 + $0x28] sm:$0xff pattern:$0x73625140]
  %4686 = vst [vmem:[#allocation1] ss:$4 sm:$0xff] %v4022
  %4687 = vst [vmem:[%s4404] ss:$4 sm:$0xff] %v4023
  %4688 = vst [vmem:[%s4406] ss:$4 sm:$0xff] %v4025
  %4689 = vst [vmem:[%s4408] ss:$4 sm:$0xff] %v4027
  %4690 = vst [vmem:[%s4410] ss:$4 sm:$0xff] %v4029
  %4691 = vst [vmem:[%s4412] ss:$4 sm:$0xff] %v4030
  %4692 = vst [vmem:[%s4414] ss:$4 sm:$0xff] %v4032
  %4693 = vst [vmem:[%s4416] ss:$4 sm:$0xff] %v4034
  %v4694 = vld.sshfl [vmem:[#allocation1] sm:$0xff pattern:$0x73625140]
  %v4695 = vld.sshfl [vmem:[#allocation1 + $0x8] sm:$0xff pattern:$0x73625140]
  %v4696 = vld.sshfl [vmem:[#allocation1 + $0x20] sm:$0xff pattern:$0x73625140]
  %v4697 = vld.sshfl [vmem:[#allocation1 + $0x28] sm:$0xff pattern:$0x73625140]
  %4698 = vst [vmem:[#allocation1] ss:$4 sm:$0xff] %v4037
  %4699 = vst [vmem:[%s4404] ss:$4 sm:$0xff] %v4039
  %4700 = vst [vmem:[%s4406] ss:$4 sm:$0xff] %v4041
  %4701 = vst [vmem:[%s4408] ss:$4 sm:$0xff] %v4043
  %4702 = vst [vmem:[%s4410] ss:$4 sm:$0xff] %v4044
  %4703 = vst [vmem:[%s4412] ss:$4 sm:$0xff] %v4046
  %4704 = vst [vmem:[%s4414] ss:$4 sm:$0xff] %v4048
  %4705 = vst [vmem:[%s4416] ss:$4 sm:$0xff] %v4050
  %v4706 = vld.sshfl [vmem:[#allocation1] sm:$0xff pattern:$0x73625140]
  %v4707 = vld.sshfl [vmem:[#allocation1 + $0x8] sm:$0xff pattern:$0x73625140]
  %v4708 = vld.sshfl [vmem:[#allocation1 + $0x20] sm:$0xff pattern:$0x73625140]
  %v4709 = vld.sshfl [vmem:[#allocation1 + $0x28] sm:$0xff pattern:$0x73625140]
  %4710 = vst [vmem:[#allocation1] ss:$4 sm:$0xff] %v4051
  %4711 = vst [vmem:[%s4404] ss:$4 sm:$0xff] %v4053
  %4712 = vst [vmem:[%s4406] ss:$4 sm:$0xff] %v4055
  %4713 = vst [vmem:[%s4408] ss:$4 sm:$0xff] %v4057
  %4714 = vst [vmem:[%s4410] ss:$4 sm:$0xff] %v4058
  %4715 = vst [vmem:[%s4412] ss:$4 sm:$0xff] %v4060
  %4716 = vst [vmem:[%s4414] ss:$4 sm:$0xff] %v4062
  %4717 = vst [vmem:[%s4416] ss:$4 sm:$0xff] %v4064
  %v4718 = vld.sshfl [vmem:[#allocation1] sm:$0xff pattern:$0x73625140]
  %v4719 = vld.sshfl [vmem:[#allocation1 + $0x8] sm:$0xff pattern:$0x73625140]
  %v4720 = vld.sshfl [vmem:[#allocation1 + $0x20] sm:$0xff pattern:$0x73625140]
  %v4721 = vld.sshfl [vmem:[#allocation1 + $0x28] sm:$0xff pattern:$0x73625140]
  %4722 = vst [vmem:[#allocation1] ss:$4 sm:$0xff] %v4065
  %4723 = vst [vmem:[%s4404] ss:$4 sm:$0xff] %v4067
  %4724 = vst [vmem:[%s4406] ss:$4 sm:$0xff] %v4069
  %4725 = vst [vmem:[%s4408] ss:$4 sm:$0xff] %v4071
  %4726 = vst [vmem:[%s4410] ss:$4 sm:$0xff] %v4072
  %4727 = vst [vmem:[%s4412] ss:$4 sm:$0xff] %v4074
  %4728 = vst [vmem:[%s4414] ss:$4 sm:$0xff] %v4076
  %4729 = vst [vmem:[%s4416] ss:$4 sm:$0xff] %v4078
  %v4730 = vld.sshfl [vmem:[#allocation1] sm:$0xff pattern:$0x73625140]
  %v4731 = vld.sshfl [vmem:[#allocation1 + $0x8] sm:$0xff pattern:$0x73625140]
  %v4732 = vld.sshfl [vmem:[#allocation1 + $0x20] sm:$0xff pattern:$0x73625140]
  %v4733 = vld.sshfl [vmem:[#allocation1 + $0x28] sm:$0xff pattern:$0x73625140]
  %4734 = vst [vmem:[#allocation1] ss:$4 sm:$0xff] %v4081
  %4735 = vst [vmem:[%s4404] ss:$4 sm:$0xff] %v4083
  %4736 = vst [vmem:[%s4406] ss:$4 sm:$0xff] %v4085
  %4737 = vst [vmem:[%s4408] ss:$4 sm:$0xff] %v4086
  %4738 = vst [vmem:[%s4410] ss:$4 sm:$0xff] %v4088
  %4739 = vst [vmem:[%s4412] ss:$4 sm:$0xff] %v4090
  %4740 = vst [vmem:[%s4414] ss:$4 sm:$0xff] %v4092
  %4741 = vst [vmem:[%s4416] ss:$4 sm:$0xff] %v4093
  %v4742 = vld.sshfl [vmem:[#allocation1] sm:$0xff pattern:$0x73625140]
  %v4743 = vld.sshfl [vmem:[#allocation1 + $0x8] sm:$0xff pattern:$0x73625140]
  %v4744 = vld.sshfl [vmem:[#allocation1 + $0x20] sm:$0xff pattern:$0x73625140]
  %v4745 = vld.sshfl [vmem:[#allocation1 + $0x28] sm:$0xff pattern:$0x73625140]
  %4746 = vst [vmem:[#allocation1] ss:$4 sm:$0xff] %v4095
  %4747 = vst [vmem:[%s4404] ss:$4 sm:$0xff] %v4097
  %4748 = vst [vmem:[%s4406] ss:$4 sm:$0xff] %v4099
  %4749 = vst [vmem:[%s4408] ss:$4 sm:$0xff] %v4100
  %4750 = vst [vmem:[%s4410] ss:$4 sm:$0xff] %v4102
  %4751 = vst [vmem:[%s4412] ss:$4 sm:$0xff] %v4104
  %4752 = vst [vmem:[%s4414] ss:$4 sm:$0xff] %v4106
  %4753 = vst [vmem:[%s4416] ss:$4 sm:$0xff] %v4107
  %v4754 = vld.sshfl [vmem:[#allocation1] sm:$0xff pattern:$0x73625140]
  %v4755 = vld.sshfl [vmem:[#allocation1 + $0x8] sm:$0xff pattern:$0x73625140]
  %v4756 = vld.sshfl [vmem:[#allocation1 + $0x20] sm:$0xff pattern:$0x73625140]
  %v4757 = vld.sshfl [vmem:[#allocation1 + $0x28] sm:$0xff pattern:$0x73625140]
  %4758 = vst [vmem:[#allocation1] ss:$4 sm:$0xff] %v4109
  %4759 = vst [vmem:[%s4404] ss:$4 sm:$0xff] %v4111
  %4760 = vst [vmem:[%s4406] ss:$4 sm:$0xff] %v4113
  %4761 = vst [vmem:[%s4408] ss:$4 sm:$0xff] %v4114
  %4762 = vst [vmem:[%s4410] ss:$4 sm:$0xff] %v4116
  %4763 = vst [vmem:[%s4412] ss:$4 sm:$0xff] %v4118
  %4764 = vst [vmem:[%s4414] ss:$4 sm:$0xff] %v4120
  %4765 = vst [vmem:[%s4416] ss:$4 sm:$0xff] %v4121
  %v4766 = vld.sshfl [vmem:[#allocation1] sm:$0xff pattern:$0x73625140]
  %v4767 = vld.sshfl [vmem:[#allocation1 + $0x8] sm:$0xff pattern:$0x73625140]
  %v4768 = vld.sshfl [vmem:[#allocation1 + $0x20] sm:$0xff pattern:$0x73625140]
  %v4769 = vld.sshfl [vmem:[#allocation1 + $0x28] sm:$0xff pattern:$0x73625140]
  %4770 = vst [vmem:[#allocation1] ss:$4 sm:$0xff] %v4125
  %4771 = vst [vmem:[%s4404] ss:$4 sm:$0xff] %v4127
  %4772 = vst [vmem:[%s4406] ss:$4 sm:$0xff] %v4128
  %4773 = vst [vmem:[%s4408] ss:$4 sm:$0xff] %v4130
  %4774 = vst [vmem:[%s4410] ss:$4 sm:$0xff] %v4132
  %4775 = vst [vmem:[%s4412] ss:$4 sm:$0xff] %v4134
  %4776 = vst [vmem:[%s4414] ss:$4 sm:$0xff] %v4135
  %4777 = vst [vmem:[%s4416] ss:$4 sm:$0xff] %v4137
  %v4778 = vld.sshfl [vmem:[#allocation1] sm:$0xff pattern:$0x73625140]
  %v4779 = vld.sshfl [vmem:[#allocation1 + $0x8] sm:$0xff pattern:$0x73625140]
  %v4780 = vld.sshfl [vmem:[#allocation1 + $0x20] sm:$0xff pattern:$0x73625140]
  %v4781 = vld.sshfl [vmem:[#allocation1 + $0x28] sm:$0xff pattern:$0x73625140]
  %4782 = vst [vmem:[#allocation1] ss:$4 sm:$0xff] %v4139
  %4783 = vst [vmem:[%s4404] ss:$4 sm:$0xff] %v4141
  %4784 = vst [vmem:[%s4406] ss:$4 sm:$0xff] %v4142
  %4785 = vst [vmem:[%s4408] ss:$4 sm:$0xff] %v4144
  %4786 = vst [vmem:[%s4410] ss:$4 sm:$0xff] %v4146
  %4787 = vst [vmem:[%s4412] ss:$4 sm:$0xff] %v4148
  %4788 = vst [vmem:[%s4414] ss:$4 sm:$0xff] %v4149
  %4789 = vst [vmem:[%s4416] ss:$4 sm:$0xff] %v4151
  %v4790 = vld.sshfl [vmem:[#allocation1] sm:$0xff pattern:$0x73625140]
  %v4791 = vld.sshfl [vmem:[#allocation1 + $0x8] sm:$0xff pattern:$0x73625140]
  %v4792 = vld.sshfl [vmem:[#allocation1 + $0x20] sm:$0xff pattern:$0x73625140]
  %v4793 = vld.sshfl [vmem:[#allocation1 + $0x28] sm:$0xff pattern:$0x73625140]
  %4794 = vst [vmem:[#allocation1] ss:$4 sm:$0xff] %v4153
  %4795 = vst [vmem:[%s4404] ss:$4 sm:$0xff] %v4155
  %4796 = vst [vmem:[%s4406] ss:$4 sm:$0xff] %v4156
  %4797 = vst [vmem:[%s4408] ss:$4 sm:$0xff] %v4158
  %4798 = vst [vmem:[%s4410] ss:$4 sm:$0xff] %v4160
  %4799 = vst [vmem:[%s4412] ss:$4 sm:$0xff] %v4162
  %4800 = vst [vmem:[%s4414] ss:$4 sm:$0xff] %v4163
  %4801 = vst [vmem:[%s4416] ss:$4 sm:$0xff] %v4165
  %v4802 = vld.sshfl [vmem:[#allocation1] sm:$0xff pattern:$0x73625140]
  %v4803 = vld.sshfl [vmem:[#allocation1 + $0x8] sm:$0xff pattern:$0x73625140]
  %v4804 = vld.sshfl [vmem:[#allocation1 + $0x20] sm:$0xff pattern:$0x73625140]
  %v4805 = vld.sshfl [vmem:[#allocation1 + $0x28] sm:$0xff pattern:$0x73625140]
  %4806 = vst [vmem:[#allocation1] ss:$4 sm:$0xff] %v4169
  %4807 = vst [vmem:[%s4404] ss:$4 sm:$0xff] %v4170
  %4808 = vst [vmem:[%s4406] ss:$4 sm:$0xff] %v4172
  %4809 = vst [vmem:[%s4408] ss:$4 sm:$0xff] %v4174
  %4810 = vst [vmem:[%s4410] ss:$4 sm:$0xff] %v4176
  %4811 = vst [vmem:[%s4412] ss:$4 sm:$0xff] %v4177
  %4812 = vst [vmem:[%s4414] ss:$4 sm:$0xff] %v4179
  %4813 = vst [vmem:[%s4416] ss:$4 sm:$0xff] %v4181
  %v4814 = vld.sshfl [vmem:[#allocation1] sm:$0xff pattern:$0x73625140]
  %v4815 = vld.sshfl [vmem:[#allocation1 + $0x8] sm:$0xff pattern:$0x73625140]
  %v4816 = vld.sshfl [vmem:[#allocation1 + $0x20] sm:$0xff pattern:$0x73625140]
  %v4817 = vld.sshfl [vmem:[#allocation1 + $0x28] sm:$0xff pattern:$0x73625140]
  %4818 = vst [vmem:[#allocation1] ss:$4 sm:$0xff] %v4183
  %4819 = vst [vmem:[%s4404] ss:$4 sm:$0xff] %v4184
  %4820 = vst [vmem:[%s4406] ss:$4 sm:$0xff] %v4186
  %4821 = vst [vmem:[%s4408] ss:$4 sm:$0xff] %v4188
  %4822 = vst [vmem:[%s4410] ss:$4 sm:$0xff] %v4190
  %4823 = vst [vmem:[%s4412] ss:$4 sm:$0xff] %v4191
  %4824 = vst [vmem:[%s4414] ss:$4 sm:$0xff] %v4193
  %4825 = vst [vmem:[%s4416] ss:$4 sm:$0xff] %v4195
  %v4826 = vld.sshfl [vmem:[#allocation1] sm:$0xff pattern:$0x73625140]
  %v4827 = vld.sshfl [vmem:[#allocation1 + $0x8] sm:$0xff pattern:$0x73625140]
  %v4828 = vld.sshfl [vmem:[#allocation1 + $0x20] sm:$0xff pattern:$0x73625140]
  %v4829 = vld.sshfl [vmem:[#allocation1 + $0x28] sm:$0xff pattern:$0x73625140]
  %4830 = vst [vmem:[#allocation1] ss:$4 sm:$0xff] %v4197
  %4831 = vst [vmem:[%s4404] ss:$4 sm:$0xff] %v4198
  %4832 = vst [vmem:[%s4406] ss:$4 sm:$0xff] %v4200
  %4833 = vst [vmem:[%s4408] ss:$4 sm:$0xff] %v4202
  %4834 = vst [vmem:[%s4410] ss:$4 sm:$0xff] %v4204
  %4835 = vst [vmem:[%s4412] ss:$4 sm:$0xff] %v4205
  %4836 = vst [vmem:[%s4414] ss:$4 sm:$0xff] %v4207
  %4837 = vst [vmem:[%s4416] ss:$4 sm:$0xff] %v4209
  %v4838 = vld.sshfl [vmem:[#allocation1] sm:$0xff pattern:$0x73625140]
  %v4839 = vld.sshfl [vmem:[#allocation1 + $0x8] sm:$0xff pattern:$0x73625140]
  %v4840 = vld.sshfl [vmem:[#allocation1 + $0x20] sm:$0xff pattern:$0x73625140]
  %v4841 = vld.sshfl [vmem:[#allocation1 + $0x28] sm:$0xff pattern:$0x73625140]
  %4842 = vst [vmem:[#allocation1] ss:$4 sm:$0xff] %v4212
  %4843 = vst [vmem:[%s4404] ss:$4 sm:$0xff] %v4214
  %4844 = vst [vmem:[%s4406] ss:$4 sm:$0xff] %v4216
  %4845 = vst [vmem:[%s4408] ss:$4 sm:$0xff] %v4218
  %4846 = vst [vmem:[%s4410] ss:$4 sm:$0xff] %v4219
  %4847 = vst [vmem:[%s4412] ss:$4 sm:$0xff] %v4221
  %4848 = vst [vmem:[%s4414] ss:$4 sm:$0xff] %v4223
  %4849 = vst [vmem:[%s4416] ss:$4 sm:$0xff] %v4225
  %v4850 = vld.sshfl [vmem:[#allocation1] sm:$0xff pattern:$0x73625140]
  %v4851 = vld.sshfl [vmem:[#allocation1 + $0x8] sm:$0xff pattern:$0x73625140]
  %v4852 = vld.sshfl [vmem:[#allocation1 + $0x20] sm:$0xff pattern:$0x73625140]
  %v4853 = vld.sshfl [vmem:[#allocation1 + $0x28] sm:$0xff pattern:$0x73625140]
  %4854 = vst [vmem:[#allocation1] ss:$4 sm:$0xff] %v4226
  %4855 = vst [vmem:[%s4404] ss:$4 sm:$0xff] %v4228
  %4856 = vst [vmem:[%s4406] ss:$4 sm:$0xff] %v4230
  %4857 = vst [vmem:[%s4408] ss:$4 sm:$0xff] %v4232
  %4858 = vst [vmem:[%s4410] ss:$4 sm:$0xff] %v4233
  %4859 = vst [vmem:[%s4412] ss:$4 sm:$0xff] %v4235
  %4860 = vst [vmem:[%s4414] ss:$4 sm:$0xff] %v4237
  %4861 = vst [vmem:[%s4416] ss:$4 sm:$0xff] %v4239
  %v4862 = vld.sshfl [vmem:[#allocation1] sm:$0xff pattern:$0x73625140]
  %v4863 = vld.sshfl [vmem:[#allocation1 + $0x8] sm:$0xff pattern:$0x73625140]
  %v4864 = vld.sshfl [vmem:[#allocation1 + $0x20] sm:$0xff pattern:$0x73625140]
  %v4865 = vld.sshfl [vmem:[#allocation1 + $0x28] sm:$0xff pattern:$0x73625140]
  %4866 = vst [vmem:[#allocation1] ss:$4 sm:$0xff] %v4240
  %4867 = vst [vmem:[%s4404] ss:$4 sm:$0xff] %v4242
  %4868 = vst [vmem:[%s4406] ss:$4 sm:$0xff] %v4244
  %4869 = vst [vmem:[%s4408] ss:$4 sm:$0xff] %v4246
  %4870 = vst [vmem:[%s4410] ss:$4 sm:$0xff] %v4247
  %4871 = vst [vmem:[%s4412] ss:$4 sm:$0xff] %v4249
  %4872 = vst [vmem:[%s4414] ss:$4 sm:$0xff] %v4251
  %4873 = vst [vmem:[%s4416] ss:$4 sm:$0xff] %v4253
  %v4874 = vld.sshfl [vmem:[#allocation1] sm:$0xff pattern:$0x73625140]
  %v4875 = vld.sshfl [vmem:[#allocation1 + $0x8] sm:$0xff pattern:$0x73625140]
  %v4876 = vld.sshfl [vmem:[#allocation1 + $0x20] sm:$0xff pattern:$0x73625140]
  %v4877 = vld.sshfl [vmem:[#allocation1 + $0x28] sm:$0xff pattern:$0x73625140]
  %4878 = vst [vmem:[#allocation1] ss:$4 sm:$0xff] %v4256
  %4879 = vst [vmem:[%s4404] ss:$4 sm:$0xff] %v4258
  %4880 = vst [vmem:[%s4406] ss:$4 sm:$0xff] %v4260
  %4881 = vst [vmem:[%s4408] ss:$4 sm:$0xff] %v4261
  %4882 = vst [vmem:[%s4410] ss:$4 sm:$0xff] %v4263
  %4883 = vst [vmem:[%s4412] ss:$4 sm:$0xff] %v4265
  %4884 = vst [vmem:[%s4414] ss:$4 sm:$0xff] %v4267
  %4885 = vst [vmem:[%s4416] ss:$4 sm:$0xff] %v4268
  %v4886 = vld.sshfl [vmem:[#allocation1] sm:$0xff pattern:$0x73625140]
  %v4887 = vld.sshfl [vmem:[#allocation1 + $0x8] sm:$0xff pattern:$0x73625140]
  %v4888 = vld.sshfl [vmem:[#allocation1 + $0x20] sm:$0xff pattern:$0x73625140]
  %v4889 = vld.sshfl [vmem:[#allocation1 + $0x28] sm:$0xff pattern:$0x73625140]
  %4890 = vst [vmem:[#allocation1] ss:$4 sm:$0xff] %v4270
  %4891 = vst [vmem:[%s4404] ss:$4 sm:$0xff] %v4272
  %4892 = vst [vmem:[%s4406] ss:$4 sm:$0xff] %v4274
  %4893 = vst [vmem:[%s4408] ss:$4 sm:$0xff] %v4275
  %4894 = vst [vmem:[%s4410] ss:$4 sm:$0xff] %v4277
  %4895 = vst [vmem:[%s4412] ss:$4 sm:$0xff] %v4279
  %4896 = vst [vmem:[%s4414] ss:$4 sm:$0xff] %v4281
  %4897 = vst [vmem:[%s4416] ss:$4 sm:$0xff] %v4282
  %v4898 = vld.sshfl [vmem:[#allocation1] sm:$0xff pattern:$0x73625140]
  %v4899 = vld.sshfl [vmem:[#allocation1 + $0x8] sm:$0xff pattern:$0x73625140]
  %v4900 = vld.sshfl [vmem:[#allocation1 + $0x20] sm:$0xff pattern:$0x73625140]
  %v4901 = vld.sshfl [vmem:[#allocation1 + $0x28] sm:$0xff pattern:$0x73625140]
  %4902 = vst [vmem:[#allocation1] ss:$4 sm:$0xff] %v4284
  %4903 = vst [vmem:[%s4404] ss:$4 sm:$0xff] %v4286
  %4904 = vst [vmem:[%s4406] ss:$4 sm:$0xff] %v4288
  %4905 = vst [vmem:[%s4408] ss:$4 sm:$0xff] %v4289
  %4906 = vst [vmem:[%s4410] ss:$4 sm:$0xff] %v4291
  %4907 = vst [vmem:[%s4412] ss:$4 sm:$0xff] %v4293
  %4908 = vst [vmem:[%s4414] ss:$4 sm:$0xff] %v4295
  %4909 = vst [vmem:[%s4416] ss:$4 sm:$0xff] %v4296
  %v4910 = vld.sshfl [vmem:[#allocation1] sm:$0xff pattern:$0x73625140]
  %v4911 = vld.sshfl [vmem:[#allocation1 + $0x8] sm:$0xff pattern:$0x73625140]
  %v4912 = vld.sshfl [vmem:[#allocation1 + $0x20] sm:$0xff pattern:$0x73625140]
  %v4913 = vld.sshfl [vmem:[#allocation1 + $0x28] sm:$0xff pattern:$0x73625140]
  %4914 = vst [vmem:[#allocation1] ss:$4 sm:$0xff] %v4300
  %4915 = vst [vmem:[%s4404] ss:$4 sm:$0xff] %v4302
  %4916 = vst [vmem:[%s4406] ss:$4 sm:$0xff] %v4303
  %4917 = vst [vmem:[%s4408] ss:$4 sm:$0xff] %v4305
  %4918 = vst [vmem:[%s4410] ss:$4 sm:$0xff] %v4307
  %4919 = vst [vmem:[%s4412] ss:$4 sm:$0xff] %v4309
  %4920 = vst [vmem:[%s4414] ss:$4 sm:$0xff] %v4310
  %4921 = vst [vmem:[%s4416] ss:$4 sm:$0xff] %v4312
  %v4922 = vld.sshfl [vmem:[#allocation1] sm:$0xff pattern:$0x73625140]
  %v4923 = vld.sshfl [vmem:[#allocation1 + $0x8] sm:$0xff pattern:$0x73625140]
  %v4924 = vld.sshfl [vmem:[#allocation1 + $0x20] sm:$0xff pattern:$0x73625140]
  %v4925 = vld.sshfl [vmem:[#allocation1 + $0x28] sm:$0xff pattern:$0x73625140]
  %4926 = vst [vmem:[#allocation1] ss:$4 sm:$0xff] %v4314
  %4927 = vst [vmem:[%s4404] ss:$4 sm:$0xff] %v4316
  %4928 = vst [vmem:[%s4406] ss:$4 sm:$0xff] %v4317
  %4929 = vst [vmem:[%s4408] ss:$4 sm:$0xff] %v4319
  %4930 = vst [vmem:[%s4410] ss:$4 sm:$0xff] %v4321
  %4931 = vst [vmem:[%s4412] ss:$4 sm:$0xff] %v4323
  %4932 = vst [vmem:[%s4414] ss:$4 sm:$0xff] %v4324
  %4933 = vst [vmem:[%s4416] ss:$4 sm:$0xff] %v4326
  %v4934 = vld.sshfl [vmem:[#allocation1] sm:$0xff pattern:$0x73625140]
  %v4935 = vld.sshfl [vmem:[#allocation1 + $0x8] sm:$0xff pattern:$0x73625140]
  %v4936 = vld.sshfl [vmem:[#allocation1 + $0x20] sm:$0xff pattern:$0x73625140]
  %v4937 = vld.sshfl [vmem:[#allocation1 + $0x28] sm:$0xff pattern:$0x73625140]
  %4938 = vst [vmem:[#allocation1] ss:$4 sm:$0xff] %v4328
  %4939 = vst [vmem:[%s4404] ss:$4 sm:$0xff] %v4330
  %4940 = vst [vmem:[%s4406] ss:$4 sm:$0xff] %v4331
  %4941 = vst [vmem:[%s4408] ss:$4 sm:$0xff] %v4333
  %4942 = vst [vmem:[%s4410] ss:$4 sm:$0xff] %v4335
  %4943 = vst [vmem:[%s4412] ss:$4 sm:$0xff] %v4337
  %4944 = vst [vmem:[%s4414] ss:$4 sm:$0xff] %v4338
  %4945 = vst [vmem:[%s4416] ss:$4 sm:$0xff] %v4340
  %v4946 = vld.sshfl [vmem:[#allocation1] sm:$0xff pattern:$0x73625140]
  %v4947 = vld.sshfl [vmem:[#allocation1 + $0x8] sm:$0xff pattern:$0x73625140]
  %v4948 = vld.sshfl [vmem:[#allocation1 + $0x20] sm:$0xff pattern:$0x73625140]
  %v4949 = vld.sshfl [vmem:[#allocation1 + $0x28] sm:$0xff pattern:$0x73625140]
  %4950 = vst [vmem:[#allocation1] ss:$4 sm:$0xff] %v4344
  %4951 = vst [vmem:[%s4404] ss:$4 sm:$0xff] %v4345
  %4952 = vst [vmem:[%s4406] ss:$4 sm:$0xff] %v4347
  %4953 = vst [vmem:[%s4408] ss:$4 sm:$0xff] %v4349
  %4954 = vst [vmem:[%s4410] ss:$4 sm:$0xff] %v4351
  %4955 = vst [vmem:[%s4412] ss:$4 sm:$0xff] %v4352
  %4956 = vst [vmem:[%s4414] ss:$4 sm:$0xff] %v4354
  %4957 = vst [vmem:[%s4416] ss:$4 sm:$0xff] %v4356
  %v4958 = vld.sshfl [vmem:[#allocation1] sm:$0xff pattern:$0x73625140]
  %v4959 = vld.sshfl [vmem:[#allocation1 + $0x8] sm:$0xff pattern:$0x73625140]
  %v4960 = vld.sshfl [vmem:[#allocation1 + $0x20] sm:$0xff pattern:$0x73625140]
  %v4961 = vld.sshfl [vmem:[#allocation1 + $0x28] sm:$0xff pattern:$0x73625140]
  %4962 = vst [vmem:[#allocation1] ss:$4 sm:$0xff] %v4358
  %4963 = vst [vmem:[%s4404] ss:$4 sm:$0xff] %v4359
  %4964 = vst [vmem:[%s4406] ss:$4 sm:$0xff] %v4361
  %4965 = vst [vmem:[%s4408] ss:$4 sm:$0xff] %v4363
  %4966 = vst [vmem:[%s4410] ss:$4 sm:$0xff] %v4365
  %4967 = vst [vmem:[%s4412] ss:$4 sm:$0xff] %v4366
  %4968 = vst [vmem:[%s4414] ss:$4 sm:$0xff] %v4368
  %4969 = vst [vmem:[%s4416] ss:$4 sm:$0xff] %v4370
  %v4970 = vld.sshfl [vmem:[#allocation1] sm:$0xff pattern:$0x73625140]
  %v4971 = vld.sshfl [vmem:[#allocation1 + $0x8] sm:$0xff pattern:$0x73625140]
  %v4972 = vld.sshfl [vmem:[#allocation1 + $0x20] sm:$0xff pattern:$0x73625140]
  %v4973 = vld.sshfl [vmem:[#allocation1 + $0x28] sm:$0xff pattern:$0x73625140]
  %4974 = vst [vmem:[#allocation1] ss:$4 sm:$0xff] %v4372
  %4975 = vst [vmem:[%s4404] ss:$4 sm:$0xff] %v4373
  %4976 = vst [vmem:[%s4406] ss:$4 sm:$0xff] %v4375
  %4977 = vst [vmem:[%s4408] ss:$4 sm:$0xff] %v4377
  %4978 = vst [vmem:[%s4410] ss:$4 sm:$0xff] %v4379
  %4979 = vst [vmem:[%s4412] ss:$4 sm:$0xff] %v4380
  %4980 = vst [vmem:[%s4414] ss:$4 sm:$0xff] %v4382
  %4981 = vst [vmem:[%s4416] ss:$4 sm:$0xff] %v4384
  %v4982 = vld.sshfl [vmem:[#allocation1] sm:$0xff pattern:$0x73625140]
  %v4983 = vld.sshfl [vmem:[#allocation1 + $0x8] sm:$0xff pattern:$0x73625140]
  %v4984 = vld.sshfl [vmem:[#allocation1 + $0x20] sm:$0xff pattern:$0x73625140]
  %v4985 = vld.sshfl [vmem:[#allocation1 + $0x28] sm:$0xff pattern:$0x73625140]
  %v5178 = vmax.f32 %v4418, %v4420
  %v5179 = vmax.f32 %v5178, %v4430
  %v5180 = vmax.f32 %v5179, %v4432
  %v5181 = vmax.f32 %v5180, %v4442
  %v5182 = vmax.f32 %v5181, %v4444
  %v5183 = vrot.slane %v5182, 4
  %v5184 = vmax.f32 %v5182, %v5183
  %v5185 = vrot.slane %v5184, 2
  %v5186 = vmax.f32 %v5184, %v5185
  %v5187 = vrot.slane %v5186, 1
  %v5188 = vmax.f32 %v5186, %v5187
  %v5189 = vmax.f32 %v4419, %v4421
  %v5190 = vmax.f32 %v5189, %v4431
  %v5191 = vmax.f32 %v5190, %v4433
  %v5192 = vmax.f32 %v5191, %v4443
  %v5193 = vmax.f32 %v5192, %v4445
  %v5194 = vrot.slane %v5193, 4
  %v5195 = vmax.f32 %v5193, %v5194
  %v5196 = vrot.slane %v5195, 2
  %v5197 = vmax.f32 %v5195, %v5196
  %v5198 = vrot.slane %v5197, 1
  %v5199 = vmax.f32 %v5197, %v5198
  %v5200 = vmax.f32 %v4454, %v4456
  %v5201 = vmax.f32 %v5200, %v4466
  %v5202 = vmax.f32 %v5201, %v4468
  %v5203 = vmax.f32 %v5202, %v4478
  %v5204 = vmax.f32 %v5203, %v4480
  %v5205 = vrot.slane %v5204, 4
  %v5206 = vmax.f32 %v5204, %v5205
  %v5207 = vrot.slane %v5206, 2
  %v5208 = vmax.f32 %v5206, %v5207
  %v5209 = vrot.slane %v5208, 1
  %v5210 = vmax.f32 %v5208, %v5209
  %v5211 = vmax.f32 %v4455, %v4457
  %v5212 = vmax.f32 %v5211, %v4467
  %v5213 = vmax.f32 %v5212, %v4469
  %v5214 = vmax.f32 %v5213, %v4479
  %v5215 = vmax.f32 %v5214, %v4481
  %v5216 = vrot.slane %v5215, 4
  %v5217 = vmax.f32 %v5215, %v5216
  %v5218 = vrot.slane %v5217, 2
  %v5219 = vmax.f32 %v5217, %v5218
  %v5220 = vrot.slane %v5219, 1
  %v5221 = vmax.f32 %v5219, %v5220
  %v5222 = vmax.f32 %v4490, %v4492
  %v5223 = vmax.f32 %v5222, %v4502
  %v5224 = vmax.f32 %v5223, %v4504
  %v5225 = vmax.f32 %v5224, %v4514
  %v5226 = vmax.f32 %v5225, %v4516
  %v5227 = vrot.slane %v5226, 4
  %v5228 = vmax.f32 %v5226, %v5227
  %v5229 = vrot.slane %v5228, 2
  %v5230 = vmax.f32 %v5228, %v5229
  %v5231 = vrot.slane %v5230, 1
  %v5232 = vmax.f32 %v5230, %v5231
  %v5233 = vmax.f32 %v4491, %v4493
  %v5234 = vmax.f32 %v5233, %v4503
  %v5235 = vmax.f32 %v5234, %v4505
  %v5236 = vmax.f32 %v5235, %v4515
  %v5237 = vmax.f32 %v5236, %v4517
  %v5238 = vrot.slane %v5237, 4
  %v5239 = vmax.f32 %v5237, %v5238
  %v5240 = vrot.slane %v5239, 2
  %v5241 = vmax.f32 %v5239, %v5240
  %v5242 = vrot.slane %v5241, 1
  %v5243 = vmax.f32 %v5241, %v5242
  %v5244 = vmax.f32 %v4526, %v4528
  %v5245 = vmax.f32 %v5244, %v4538
  %v5246 = vmax.f32 %v5245, %v4540
  %v5247 = vmax.f32 %v5246, %v4550
  %v5248 = vmax.f32 %v5247, %v4552
  %v5249 = vrot.slane %v5248, 4
  %v5250 = vmax.f32 %v5248, %v5249
  %v5251 = vrot.slane %v5250, 2
  %v5252 = vmax.f32 %v5250, %v5251
  %v5253 = vrot.slane %v5252, 1
  %v5254 = vmax.f32 %v5252, %v5253
  %v5255 = vmax.f32 %v4527, %v4529
  %v5256 = vmax.f32 %v5255, %v4539
  %v5257 = vmax.f32 %v5256, %v4541
  %v5258 = vmax.f32 %v5257, %v4551
  %v5259 = vmax.f32 %v5258, %v4553
  %v5260 = vrot.slane %v5259, 4
  %v5261 = vmax.f32 %v5259, %v5260
  %v5262 = vrot.slane %v5261, 2
  %v5263 = vmax.f32 %v5261, %v5262
  %v5264 = vrot.slane %v5263, 1
  %v5265 = vmax.f32 %v5263, %v5264
  %v5266 = vmax.f32 %v4562, %v4564
  %v5267 = vmax.f32 %v5266, %v4574
  %v5268 = vmax.f32 %v5267, %v4576
  %v5269 = vmax.f32 %v5268, %v4586
  %v5270 = vmax.f32 %v5269, %v4588
  %v5271 = vrot.slane %v5270, 4
  %v5272 = vmax.f32 %v5270, %v5271
  %v5273 = vrot.slane %v5272, 2
  %v5274 = vmax.f32 %v5272, %v5273
  %v5275 = vrot.slane %v5274, 1
  %v5276 = vmax.f32 %v5274, %v5275
  %v5277 = vmax.f32 %v4563, %v4565
  %v5278 = vmax.f32 %v5277, %v4575
  %v5279 = vmax.f32 %v5278, %v4577
  %v5280 = vmax.f32 %v5279, %v4587
  %v5281 = vmax.f32 %v5280, %v4589
  %v5282 = vrot.slane %v5281, 4
  %v5283 = vmax.f32 %v5281, %v5282
  %v5284 = vrot.slane %v5283, 2
  %v5285 = vmax.f32 %v5283, %v5284
  %v5286 = vrot.slane %v5285, 1
  %v5287 = vmax.f32 %v5285, %v5286
  %v5288 = vmax.f32 %v4598, %v4600
  %v5289 = vmax.f32 %v5288, %v4610
  %v5290 = vmax.f32 %v5289, %v4612
  %v5291 = vmax.f32 %v5290, %v4622
  %v5292 = vmax.f32 %v5291, %v4624
  %v5293 = vrot.slane %v5292, 4
  %v5294 = vmax.f32 %v5292, %v5293
  %v5295 = vrot.slane %v5294, 2
  %v5296 = vmax.f32 %v5294, %v5295
  %v5297 = vrot.slane %v5296, 1
  %v5298 = vmax.f32 %v5296, %v5297
  %v5299 = vmax.f32 %v4599, %v4601
  %v5300 = vmax.f32 %v5299, %v4611
  %v5301 = vmax.f32 %v5300, %v4613
  %v5302 = vmax.f32 %v5301, %v4623
  %v5303 = vmax.f32 %v5302, %v4625
  %v5304 = vrot.slane %v5303, 4
  %v5305 = vmax.f32 %v5303, %v5304
  %v5306 = vrot.slane %v5305, 2
  %v5307 = vmax.f32 %v5305, %v5306
  %v5308 = vrot.slane %v5307, 1
  %v5309 = vmax.f32 %v5307, %v5308
  %v5310 = vmax.f32 %v4634, %v4636
  %v5311 = vmax.f32 %v5310, %v4646
  %v5312 = vmax.f32 %v5311, %v4648
  %v5313 = vmax.f32 %v5312, %v4658
  %v5314 = vmax.f32 %v5313, %v4660
  %v5315 = vrot.slane %v5314, 4
  %v5316 = vmax.f32 %v5314, %v5315
  %v5317 = vrot.slane %v5316, 2
  %v5318 = vmax.f32 %v5316, %v5317
  %v5319 = vrot.slane %v5318, 1
  %v5320 = vmax.f32 %v5318, %v5319
  %v5321 = vmax.f32 %v4635, %v4637
  %v5322 = vmax.f32 %v5321, %v4647
  %v5323 = vmax.f32 %v5322, %v4649
  %v5324 = vmax.f32 %v5323, %v4659
  %v5325 = vmax.f32 %v5324, %v4661
  %v5326 = vrot.slane %v5325, 4
  %v5327 = vmax.f32 %v5325, %v5326
  %v5328 = vrot.slane %v5327, 2
  %v5329 = vmax.f32 %v5327, %v5328
  %v5330 = vrot.slane %v5329, 1
  %v5331 = vmax.f32 %v5329, %v5330
  %v5332 = vmax.f32 %v4670, %v4672
  %v5333 = vmax.f32 %v5332, %v4682
  %v5334 = vmax.f32 %v5333, %v4684
  %v5335 = vmax.f32 %v5334, %v4694
  %v5336 = vmax.f32 %v5335, %v4696
  %v5337 = vrot.slane %v5336, 4
  %v5338 = vmax.f32 %v5336, %v5337
  %v5339 = vrot.slane %v5338, 2
  %v5340 = vmax.f32 %v5338, %v5339
  %v5341 = vrot.slane %v5340, 1
  %v5342 = vmax.f32 %v5340, %v5341
  %v5343 = vmax.f32 %v4671, %v4673
  %v5344 = vmax.f32 %v5343, %v4683
  %v5345 = vmax.f32 %v5344, %v4685
  %v5346 = vmax.f32 %v5345, %v4695
  %v5347 = vmax.f32 %v5346, %v4697
  %v5348 = vrot.slane %v5347, 4
  %v5349 = vmax.f32 %v5347, %v5348
  %v5350 = vrot.slane %v5349, 2
  %v5351 = vmax.f32 %v5349, %v5350
  %v5352 = vrot.slane %v5351, 1
  %v5353 = vmax.f32 %v5351, %v5352
  %v5354 = vmax.f32 %v4706, %v4708
  %v5355 = vmax.f32 %v5354, %v4718
  %v5356 = vmax.f32 %v5355, %v4720
  %v5357 = vmax.f32 %v5356, %v4730
  %v5358 = vmax.f32 %v5357, %v4732
  %v5359 = vrot.slane %v5358, 4
  %v5360 = vmax.f32 %v5358, %v5359
  %v5361 = vrot.slane %v5360, 2
  %v5362 = vmax.f32 %v5360, %v5361
  %v5363 = vrot.slane %v5362, 1
  %v5364 = vmax.f32 %v5362, %v5363
  %v5365 = vmax.f32 %v4707, %v4709
  %v5366 = vmax.f32 %v5365, %v4719
  %v5367 = vmax.f32 %v5366, %v4721
  %v5368 = vmax.f32 %v5367, %v4731
  %v5369 = vmax.f32 %v5368, %v4733
  %v5370 = vrot.slane %v5369, 4
  %v5371 = vmax.f32 %v5369, %v5370
  %v5372 = vrot.slane %v5371, 2
  %v5373 = vmax.f32 %v5371, %v5372
  %v5374 = vrot.slane %v5373, 1
  %v5375 = vmax.f32 %v5373, %v5374
  %v5376 = vmax.f32 %v4742, %v4744
  %v5377 = vmax.f32 %v5376, %v4754
  %v5378 = vmax.f32 %v5377, %v4756
  %v5379 = vmax.f32 %v5378, %v4766
  %v5380 = vmax.f32 %v5379, %v4768
  %v5381 = vrot.slane %v5380, 4
  %v5382 = vmax.f32 %v5380, %v5381
  %v5383 = vrot.slane %v5382, 2
  %v5384 = vmax.f32 %v5382, %v5383
  %v5385 = vrot.slane %v5384, 1
  %v5386 = vmax.f32 %v5384, %v5385
  %v5387 = vmax.f32 %v4743, %v4745
  %v5388 = vmax.f32 %v5387, %v4755
  %v5389 = vmax.f32 %v5388, %v4757
  %v5390 = vmax.f32 %v5389, %v4767
  %v5391 = vmax.f32 %v5390, %v4769
  %v5392 = vrot.slane %v5391, 4
  %v5393 = vmax.f32 %v5391, %v5392
  %v5394 = vrot.slane %v5393, 2
  %v5395 = vmax.f32 %v5393, %v5394
  %v5396 = vrot.slane %v5395, 1
  %v5397 = vmax.f32 %v5395, %v5396
  %v5398 = vmax.f32 %v4778, %v4780
  %v5399 = vmax.f32 %v5398, %v4790
  %v5400 = vmax.f32 %v5399, %v4792
  %v5401 = vmax.f32 %v5400, %v4802
  %v5402 = vmax.f32 %v5401, %v4804
  %v5403 = vrot.slane %v5402, 4
  %v5404 = vmax.f32 %v5402, %v5403
  %v5405 = vrot.slane %v5404, 2
  %v5406 = vmax.f32 %v5404, %v5405
  %v5407 = vrot.slane %v5406, 1
  %v5408 = vmax.f32 %v5406, %v5407
  %v5409 = vmax.f32 %v4779, %v4781
  %v5410 = vmax.f32 %v5409, %v4791
  %v5411 = vmax.f32 %v5410, %v4793
  %v5412 = vmax.f32 %v5411, %v4803
  %v5413 = vmax.f32 %v5412, %v4805
  %v5414 = vrot.slane %v5413, 4
  %v5415 = vmax.f32 %v5413, %v5414
  %v5416 = vrot.slane %v5415, 2
  %v5417 = vmax.f32 %v5415, %v5416
  %v5418 = vrot.slane %v5417, 1
  %v5419 = vmax.f32 %v5417, %v5418
  %v5420 = vmax.f32 %v4814, %v4816
  %v5421 = vmax.f32 %v5420, %v4826
  %v5422 = vmax.f32 %v5421, %v4828
  %v5423 = vmax.f32 %v5422, %v4838
  %v5424 = vmax.f32 %v5423, %v4840
  %v5425 = vrot.slane %v5424, 4
  %v5426 = vmax.f32 %v5424, %v5425
  %v5427 = vrot.slane %v5426, 2
  %v5428 = vmax.f32 %v5426, %v5427
  %v5429 = vrot.slane %v5428, 1
  %v5430 = vmax.f32 %v5428, %v5429
  %v5431 = vmax.f32 %v4815, %v4817
  %v5432 = vmax.f32 %v5431, %v4827
  %v5433 = vmax.f32 %v5432, %v4829
  %v5434 = vmax.f32 %v5433, %v4839
  %v5435 = vmax.f32 %v5434, %v4841
  %v5436 = vrot.slane %v5435, 4
  %v5437 = vmax.f32 %v5435, %v5436
  %v5438 = vrot.slane %v5437, 2
  %v5439 = vmax.f32 %v5437, %v5438
  %v5440 = vrot.slane %v5439, 1
  %v5441 = vmax.f32 %v5439, %v5440
  %v5442 = vmax.f32 %v4850, %v4852
  %v5443 = vmax.f32 %v5442, %v4862
  %v5444 = vmax.f32 %v5443, %v4864
  %v5445 = vmax.f32 %v5444, %v4874
  %v5446 = vmax.f32 %v5445, %v4876
  %v5447 = vrot.slane %v5446, 4
  %v5448 = vmax.f32 %v5446, %v5447
  %v5449 = vrot.slane %v5448, 2
  %v5450 = vmax.f32 %v5448, %v5449
  %v5451 = vrot.slane %v5450, 1
  %v5452 = vmax.f32 %v5450, %v5451
  %v5453 = vmax.f32 %v4851, %v4853
  %v5454 = vmax.f32 %v5453, %v4863
  %v5455 = vmax.f32 %v5454, %v4865
  %v5456 = vmax.f32 %v5455, %v4875
  %v5457 = vmax.f32 %v5456, %v4877
  %v5458 = vrot.slane %v5457, 4
  %v5459 = vmax.f32 %v5457, %v5458
  %v5460 = vrot.slane %v5459, 2
  %v5461 = vmax.f32 %v5459, %v5460
  %v5462 = vrot.slane %v5461, 1
  %v5463 = vmax.f32 %v5461, %v5462
  %v5464 = vmax.f32 %v4886, %v4888
  %v5465 = vmax.f32 %v5464, %v4898
  %v5466 = vmax.f32 %v5465, %v4900
  %v5467 = vmax.f32 %v5466, %v4910
  %v5468 = vmax.f32 %v5467, %v4912
  %v5469 = vrot.slane %v5468, 4
  %v5470 = vmax.f32 %v5468, %v5469
  %v5471 = vrot.slane %v5470, 2
  %v5472 = vmax.f32 %v5470, %v5471
  %v5473 = vrot.slane %v5472, 1
  %v5474 = vmax.f32 %v5472, %v5473
  %v5475 = vmax.f32 %v4887, %v4889
  %v5476 = vmax.f32 %v5475, %v4899
  %v5477 = vmax.f32 %v5476, %v4901
  %v5478 = vmax.f32 %v5477, %v4911
  %v5479 = vmax.f32 %v5478, %v4913
  %v5480 = vrot.slane %v5479, 4
  %v5481 = vmax.f32 %v5479, %v5480
  %v5482 = vrot.slane %v5481, 2
  %v5483 = vmax.f32 %v5481, %v5482
  %v5484 = vrot.slane %v5483, 1
  %v5485 = vmax.f32 %v5483, %v5484
  %v5486 = vmax.f32 %v4922, %v4924
  %v5487 = vmax.f32 %v5486, %v4934
  %v5488 = vmax.f32 %v5487, %v4936
  %v5489 = vmax.f32 %v5488, %v4946
  %v5490 = vmax.f32 %v5489, %v4948
  %v5491 = vrot.slane %v5490, 4
  %v5492 = vmax.f32 %v5490, %v5491
  %v5493 = vrot.slane %v5492, 2
  %v5494 = vmax.f32 %v5492, %v5493
  %v5495 = vrot.slane %v5494, 1
  %v5496 = vmax.f32 %v5494, %v5495
  %v5497 = vmax.f32 %v4923, %v4925
  %v5498 = vmax.f32 %v5497, %v4935
  %v5499 = vmax.f32 %v5498, %v4937
  %v5500 = vmax.f32 %v5499, %v4947
  %v5501 = vmax.f32 %v5500, %v4949
  %v5502 = vrot.slane %v5501, 4
  %v5503 = vmax.f32 %v5501, %v5502
  %v5504 = vrot.slane %v5503, 2
  %v5505 = vmax.f32 %v5503, %v5504
  %v5506 = vrot.slane %v5505, 1
  %v5507 = vmax.f32 %v5505, %v5506
  %v5508 = vmax.f32 %v4958, %v4960
  %v5509 = vmax.f32 %v5508, %v4970
  %v5510 = vmax.f32 %v5509, %v4972
  %v5511 = vmax.f32 %v5510, %v4982
  %v5512 = vmax.f32 %v5511, %v4984
  %v5513 = vrot.slane %v5512, 4
  %v5514 = vmax.f32 %v5512, %v5513
  %v5515 = vrot.slane %v5514, 2
  %v5516 = vmax.f32 %v5514, %v5515
  %v5517 = vrot.slane %v5516, 1
  %v5518 = vmax.f32 %v5516, %v5517
  %v5519 = vmax.f32 %v4959, %v4961
  %v5520 = vmax.f32 %v5519, %v4971
  %v5521 = vmax.f32 %v5520, %v4973
  %v5522 = vmax.f32 %v5521, %v4983
  %v5523 = vmax.f32 %v5522, %v4985
  %v5524 = vrot.slane %v5523, 4
  %v5525 = vmax.f32 %v5523, %v5524
  %v5526 = vrot.slane %v5525, 2
  %v5527 = vmax.f32 %v5525, %v5526
  %v5528 = vrot.slane %v5527, 1
  %v5529 = vmax.f32 %v5527, %v5528
  %vm5530 = vcmask 517120
  %v5531 = vsel %vm5530, %v3729, -inf
  %v5532 = vrot.slane %v5531, 4
  %v5533 = vmax.f32 %v5531, %v5532
  %v5534 = vrot.slane %v5533, 2
  %v5535 = vmax.f32 %v5533, %v5534
  %v5536 = vrot.slane %v5535, 1
  %v5537 = vmax.f32 %v5535, %v5536
  %v5538 = vsel %vm5530, %v3773, -inf
  %v5539 = vrot.slane %v5538, 4
  %v5540 = vmax.f32 %v5538, %v5539
  %v5541 = vrot.slane %v5540, 2
  %v5542 = vmax.f32 %v5540, %v5541
  %v5543 = vrot.slane %v5542, 1
  %v5544 = vmax.f32 %v5542, %v5543
  %v5545 = vsel %vm5530, %v3817, -inf
  %v5546 = vrot.slane %v5545, 4
  %v5547 = vmax.f32 %v5545, %v5546
  %v5548 = vrot.slane %v5547, 2
  %v5549 = vmax.f32 %v5547, %v5548
  %v5550 = vrot.slane %v5549, 1
  %v5551 = vmax.f32 %v5549, %v5550
  %v5552 = vsel %vm5530, %v3861, -inf
  %v5553 = vrot.slane %v5552, 4
  %v5554 = vmax.f32 %v5552, %v5553
  %v5555 = vrot.slane %v5554, 2
  %v5556 = vmax.f32 %v5554, %v5555
  %v5557 = vrot.slane %v5556, 1
  %v5558 = vmax.f32 %v5556, %v5557
  %v5559 = vsel %vm5530, %v3904, -inf
  %v5560 = vrot.slane %v5559, 4
  %v5561 = vmax.f32 %v5559, %v5560
  %v5562 = vrot.slane %v5561, 2
  %v5563 = vmax.f32 %v5561, %v5562
  %v5564 = vrot.slane %v5563, 1
  %v5565 = vmax.f32 %v5563, %v5564
  %v5566 = vsel %vm5530, %v3948, -inf
  %v5567 = vrot.slane %v5566, 4
  %v5568 = vmax.f32 %v5566, %v5567
  %v5569 = vrot.slane %v5568, 2
  %v5570 = vmax.f32 %v5568, %v5569
  %v5571 = vrot.slane %v5570, 1
  %v5572 = vmax.f32 %v5570, %v5571
  %v5573 = vsel %vm5530, %v3992, -inf
  %v5574 = vrot.slane %v5573, 4
  %v5575 = vmax.f32 %v5573, %v5574
  %v5576 = vrot.slane %v5575, 2
  %v5577 = vmax.f32 %v5575, %v5576
  %v5578 = vrot.slane %v5577, 1
  %v5579 = vmax.f32 %v5577, %v5578
  %v5580 = vsel %vm5530, %v4036, -inf
  %v5581 = vrot.slane %v5580, 4
  %v5582 = vmax.f32 %v5580, %v5581
  %v5583 = vrot.slane %v5582, 2
  %v5584 = vmax.f32 %v5582, %v5583
  %v5585 = vrot.slane %v5584, 1
  %v5586 = vmax.f32 %v5584, %v5585
  %v5587 = vsel %vm5530, %v4079, -inf
  %v5588 = vrot.slane %v5587, 4
  %v5589 = vmax.f32 %v5587, %v5588
  %v5590 = vrot.slane %v5589, 2
  %v5591 = vmax.f32 %v5589, %v5590
  %v5592 = vrot.slane %v5591, 1
  %v5593 = vmax.f32 %v5591, %v5592
  %v5594 = vsel %vm5530, %v4123, -inf
  %v5595 = vrot.slane %v5594, 4
  %v5596 = vmax.f32 %v5594, %v5595
  %v5597 = vrot.slane %v5596, 2
  %v5598 = vmax.f32 %v5596, %v5597
  %v5599 = vrot.slane %v5598, 1
  %v5600 = vmax.f32 %v5598, %v5599
  %v5601 = vsel %vm5530, %v4167, -inf
  %v5602 = vrot.slane %v5601, 4
  %v5603 = vmax.f32 %v5601, %v5602
  %v5604 = vrot.slane %v5603, 2
  %v5605 = vmax.f32 %v5603, %v5604
  %v5606 = vrot.slane %v5605, 1
  %v5607 = vmax.f32 %v5605, %v5606
  %v5608 = vsel %vm5530, %v4211, -inf
  %v5609 = vrot.slane %v5608, 4
  %v5610 = vmax.f32 %v5608, %v5609
  %v5611 = vrot.slane %v5610, 2
  %v5612 = vmax.f32 %v5610, %v5611
  %v5613 = vrot.slane %v5612, 1
  %v5614 = vmax.f32 %v5612, %v5613
  %v5615 = vsel %vm5530, %v4254, -inf
  %v5616 = vrot.slane %v5615, 4
  %v5617 = vmax.f32 %v5615, %v5616
  %v5618 = vrot.slane %v5617, 2
  %v5619 = vmax.f32 %v5617, %v5618
  %v5620 = vrot.slane %v5619, 1
  %v5621 = vmax.f32 %v5619, %v5620
  %v5622 = vsel %vm5530, %v4298, -inf
  %v5623 = vrot.slane %v5622, 4
  %v5624 = vmax.f32 %v5622, %v5623
  %v5625 = vrot.slane %v5624, 2
  %v5626 = vmax.f32 %v5624, %v5625
  %v5627 = vrot.slane %v5626, 1
  %v5628 = vmax.f32 %v5626, %v5627
  %v5629 = vsel %vm5530, %v4342, -inf
  %v5630 = vrot.slane %v5629, 4
  %v5631 = vmax.f32 %v5629, %v5630
  %v5632 = vrot.slane %v5631, 2
  %v5633 = vmax.f32 %v5631, %v5632
  %v5634 = vrot.slane %v5633, 1
  %v5635 = vmax.f32 %v5633, %v5634
  %v5636 = vsel %vm5530, %v4386, -inf
  %v5637 = vrot.slane %v5636, 4
  %v5638 = vmax.f32 %v5636, %v5637
  %v5639 = vrot.slane %v5638, 2
  %v5640 = vmax.f32 %v5638, %v5639
  %v5641 = vrot.slane %v5640, 1
  %v5642 = vmax.f32 %v5640, %v5641
  %v5643 = vmax.f32 %v5188, %v5537
  %v5644 = vmax.f32 %v5210, %v5544
  %v5645 = vmax.f32 %v5232, %v5551
  %v5646 = vmax.f32 %v5254, %v5558
  %v5647 = vmax.f32 %v5276, %v5565
  %v5648 = vmax.f32 %v5298, %v5572
  %v5649 = vmax.f32 %v5320, %v5579
  %v5650 = vmax.f32 %v5342, %v5586
  %v5651 = vmax.f32 %v5364, %v5593
  %v5652 = vmax.f32 %v5386, %v5600
  %v5653 = vmax.f32 %v5408, %v5607
  %v5654 = vmax.f32 %v5430, %v5614
  %v5655 = vmax.f32 %v5452, %v5621
  %v5656 = vmax.f32 %v5474, %v5628
  %v5657 = vmax.f32 %v5496, %v5635
  %v5658 = vmax.f32 %v5518, %v5642
  %v5659 = vmax.f32 %v5188, %v3729
  %v5660 = vmax.f32 %v5210, %v3773
  %v5661 = vmax.f32 %v5232, %v3817
  %v5662 = vmax.f32 %v5254, %v3861
  %v5663 = vmax.f32 %v5276, %v3904
  %v5664 = vmax.f32 %v5298, %v3948
  %v5665 = vmax.f32 %v5320, %v3992
  %v5666 = vmax.f32 %v5342, %v4036
  %v5667 = vmax.f32 %v5364, %v4079
  %v5668 = vmax.f32 %v5386, %v4123
  %v5669 = vmax.f32 %v5408, %v4167
  %v5670 = vmax.f32 %v5430, %v4211
  %v5671 = vmax.f32 %v5452, %v4254
  %v5672 = vmax.f32 %v5474, %v4298
  %v5673 = vmax.f32 %v5496, %v4342
  %v5674 = vmax.f32 %v5518, %v4386
  %vm5691 = vcmask 1041409
  %v5692 = vsel %vm5691, %v5644, %v5643
  %vm5693 = vcmask 1042434
  %v5694 = vsel %vm5693, %v5645, %v5692
  %vm5695 = vcmask 1043459
  %v5696 = vsel %vm5695, %v5646, %v5694
  %vm5697 = vcmask 1044484
  %v5698 = vsel %vm5697, %v5647, %v5696
  %vm5699 = vcmask 1045509
  %v5700 = vsel %vm5699, %v5648, %v5698
  %vm5701 = vcmask 1046534
  %v5702 = vsel %vm5701, %v5649, %v5700
  %vm5703 = vcmask 1047559
  %v5704 = vsel %vm5703, %v5650, %v5702
  %v5705 = vsel %vm5691, %v5652, %v5651
  %v5706 = vsel %vm5693, %v5653, %v5705
  %v5707 = vsel %vm5695, %v5654, %v5706
  %v5708 = vsel %vm5697, %v5655, %v5707
  %v5709 = vsel %vm5699, %v5656, %v5708
  %v5710 = vsel %vm5701, %v5657, %v5709
  %v5711 = vsel %vm5703, %v5658, %v5710
  %v5730 = vrot.slane %v5660, 7
  %v5731 = vsel %vm5691, %v5730, %v5659
  %v5732 = vrot.slane %v5661, 6
  %v5733 = vsel %vm5693, %v5732, %v5731
  %v5734 = vrot.slane %v5662, 5
  %v5735 = vsel %vm5695, %v5734, %v5733
  %v5736 = vrot.slane %v5663, 4
  %v5737 = vsel %vm5697, %v5736, %v5735
  %v5738 = vrot.slane %v5664, 3
  %v5739 = vsel %vm5699, %v5738, %v5737
  %v5740 = vrot.slane %v5665, 2
  %v5741 = vsel %vm5701, %v5740, %v5739
  %v5742 = vrot.slane %v5666, 1
  %v5743 = vsel %vm5703, %v5742, %v5741
  %v5744 = vrot.slane %v5668, 7
  %v5745 = vsel %vm5691, %v5744, %v5667
  %v5746 = vrot.slane %v5669, 6
  %v5747 = vsel %vm5693, %v5746, %v5745
  %v5748 = vrot.slane %v5670, 5
  %v5749 = vsel %vm5695, %v5748, %v5747
  %v5750 = vrot.slane %v5671, 4
  %v5751 = vsel %vm5697, %v5750, %v5749
  %v5752 = vrot.slane %v5672, 3
  %v5753 = vsel %vm5699, %v5752, %v5751
  %v5754 = vrot.slane %v5673, 2
  %v5755 = vsel %vm5701, %v5754, %v5753
  %v5756 = vrot.slane %v5674, 1
  %v5757 = vsel %vm5703, %v5756, %v5755
  %v5776 = vsel %vm5691, %v5221, %v5199
  %v5777 = vsel %vm5693, %v5243, %v5776
  %v5778 = vsel %vm5695, %v5265, %v5777
  %v5779 = vsel %vm5697, %v5287, %v5778
  %v5780 = vsel %vm5699, %v5309, %v5779
  %v5781 = vsel %vm5701, %v5331, %v5780
  %v5782 = vsel %vm5703, %v5353, %v5781
  %v5783 = vsel %vm5691, %v5397, %v5375
  %v5784 = vsel %vm5693, %v5419, %v5783
  %v5785 = vsel %vm5695, %v5441, %v5784
  %v5786 = vsel %vm5697, %v5463, %v5785
  %v5787 = vsel %vm5699, %v5485, %v5786
  %v5788 = vsel %vm5701, %v5507, %v5787
  %v5789 = vsel %vm5703, %v5529, %v5788
  %vm5792 = vcmask 523264
  %v5793 = vsel %vm5792, %v5704, %v5743
  %v5794 = vsel %vm5792, %v5711, %v5757
  %v5795 = vld [vmem:[%s2] sm:$0x3]
  %v5797 = vperm.slane %v5795, 0
  %v5798 = vperm.slane %v5795, 1
  %v5801 = vadd.f32 %v5793, %v5797
  %v5802 = vadd.f32 %v5782, %v5798
  %v5803 = vadd.f32 %v5794, %v5797
  %v5804 = vadd.f32 %v5789, %v5798
  %v5805 = vtanh.pop %v5801
  %v5806 = vtanh.pop %v5802
  %v5807 = vtanh.pop %v5803
  %v5808 = vtanh.pop %v5804
  %v5809 = vpack.c.bf16 %v5807, %v5805
  %v5810 = vpack.c.bf16 %v5808, %v5806
  %v5811 = vld [vmem:[%s3] sm:$0xff]
  %v5812 = vld [vmem:[%s3 + $0x8] sm:$0xff]
  %v5813 = vld [vmem:[%s3 + $0x10] sm:$0xff]
  %v5814 = vld [vmem:[%s3 + $0x18] sm:$0xff]
  %v5815 = vld [vmem:[%s3 + $0x20] sm:$0xff]
  %v5816 = vld [vmem:[%s3 + $0x28] sm:$0xff]
  %v5817 = vld [vmem:[%s3 + $0x30] sm:$0xff]
  %v5818 = vld [vmem:[%s3 + $0x38] sm:$0xff]
  %v5819 = vld [vmem:[%s3 + $0x40] sm:$0xff]
  %v5820 = vld [vmem:[%s3 + $0x48] sm:$0xff]
  %v5821 = vld [vmem:[%s3 + $0x50] sm:$0xff]
  %v5822 = vld [vmem:[%s3 + $0x58] sm:$0xff]
  %v5823 = vld [vmem:[%s3 + $0x60] sm:$0xff]
  %v5824 = vld [vmem:[%s3 + $0x68] sm:$0xff]
  %v5825 = vld [vmem:[%s3 + $0x70] sm:$0xff]
  %v5826 = vld [vmem:[%s3 + $0x78] sm:$0xff]
  %v5827 = vld [vmem:[%s3 + $0x80] sm:$0xff]
  %v5828 = vld [vmem:[%s3 + $0x88] sm:$0xff]
  %v5829 = vld [vmem:[%s3 + $0x90] sm:$0xff]
  %v5830 = vld [vmem:[%s3 + $0x98] sm:$0xff]
  %v5831 = vld [vmem:[%s3 + $0xa0] sm:$0xff]
  %v5832 = vld [vmem:[%s3 + $0xa8] sm:$0xff]
  %v5833 = vld [vmem:[%s3 + $0xb0] sm:$0xff]
  %v5834 = vld [vmem:[%s3 + $0xb8] sm:$0xff]
  %v5835 = vld [vmem:[%s3 + $0xc0] sm:$0xff]
  %v5836 = vld [vmem:[%s3 + $0xc8] sm:$0xff]
  %v5837 = vld [vmem:[%s3 + $0xd0] sm:$0xff]
  %v5838 = vld [vmem:[%s3 + $0xd8] sm:$0xff]
  %v5839 = vld [vmem:[%s3 + $0xe0] sm:$0xff]
  %v5840 = vld [vmem:[%s3 + $0xe8] sm:$0xff]
  %v5841 = vld [vmem:[%s3 + $0xf0] sm:$0xff]
  %v5842 = vld [vmem:[%s3 + $0xf8] sm:$0xff]
  %v5843 = vld [vmem:[%s3 + $0x100] sm:$0xff]
  %v5844 = vld [vmem:[%s3 + $0x108] sm:$0xff]
  %v5845 = vld [vmem:[%s3 + $0x110] sm:$0xff]
  %v5846 = vld [vmem:[%s3 + $0x118] sm:$0xff]
  %v5847 = vld [vmem:[%s3 + $0x120] sm:$0xff]
  %v5848 = vld [vmem:[%s3 + $0x128] sm:$0xff]
  %v5849 = vld [vmem:[%s3 + $0x130] sm:$0xff]
  %v5850 = vld [vmem:[%s3 + $0x138] sm:$0xff]
  %v5851 = vld [vmem:[%s3 + $0x140] sm:$0xff]
  %v5852 = vld [vmem:[%s3 + $0x148] sm:$0xff]
  %v5853 = vld [vmem:[%s3 + $0x150] sm:$0xff]
  %v5854 = vld [vmem:[%s3 + $0x158] sm:$0xff]
  %v5855 = vld [vmem:[%s3 + $0x160] sm:$0xff]
  %v5856 = vld [vmem:[%s3 + $0x168] sm:$0xff]
  %v5857 = vld [vmem:[%s3 + $0x170] sm:$0xff]
  %v5858 = vld [vmem:[%s3 + $0x178] sm:$0xff]
  %v5859 = vld [vmem:[%s3 + $0x180] sm:$0xff]
  %v5860 = vld [vmem:[%s3 + $0x188] sm:$0xff]
  %v5861 = vld [vmem:[%s3 + $0x190] sm:$0xff]
  %v5862 = vld [vmem:[%s3 + $0x198] sm:$0xff]
  %v5863 = vld [vmem:[%s3 + $0x1a0] sm:$0xff]
  %v5864 = vld [vmem:[%s3 + $0x1a8] sm:$0xff]
  %v5865 = vld [vmem:[%s3 + $0x1b0] sm:$0xff]
  %v5866 = vld [vmem:[%s3 + $0x1b8] sm:$0xff]
  %v5867 = vld [vmem:[%s3 + $0x1c0] sm:$0xff]
  %v5868 = vld [vmem:[%s3 + $0x1c8] sm:$0xff]
  %v5869 = vld [vmem:[%s3 + $0x1d0] sm:$0xff]
  %v5870 = vld [vmem:[%s3 + $0x1d8] sm:$0xff]
  %v5871 = vld [vmem:[%s3 + $0x1e0] sm:$0xff]
  %v5872 = vld [vmem:[%s3 + $0x1e8] sm:$0xff]
  %v5873 = vld [vmem:[%s3 + $0x1f0] sm:$0xff]
  %v5874 = vld [vmem:[%s3 + $0x1f8] sm:$0xff]
  %v5875 = vld [vmem:[%s4] sm:$0xf]
  %v5877 = vperm.slane %v5875, 0
  %v5878 = vperm.slane %v5875, 1
  %v5879 = vperm.slane %v5875, 2
  %v5880 = vperm.slane %v5875, 3
  %v5949 = vunpack.c.l.b16 %v5811
  %v5950 = vunpack.c.h.b16 %v5811
  %v5951 = vunpack.c.l.b16 %v5812
  %v5952 = vunpack.c.h.b16 %v5812
  %v5953 = vunpack.c.l.b16 %v5813
  %v5954 = vunpack.c.h.b16 %v5813
  %v5955 = vunpack.c.l.b16 %v5814
  %v5956 = vunpack.c.h.b16 %v5814
  %v5957 = vunpack.c.l.b16 %v5815
  %v5958 = vunpack.c.h.b16 %v5815
  %v5959 = vunpack.c.l.b16 %v5816
  %v5960 = vunpack.c.h.b16 %v5816
  %v5961 = vunpack.c.l.b16 %v5817
  %v5962 = vunpack.c.h.b16 %v5817
  %v5963 = vunpack.c.l.b16 %v5818
  %v5964 = vunpack.c.h.b16 %v5818
  %v5965 = vunpack.c.l.b16 %v5819
  %v5966 = vunpack.c.h.b16 %v5819
  %v5967 = vunpack.c.l.b16 %v5820
  %v5968 = vunpack.c.h.b16 %v5820
  %v5969 = vunpack.c.l.b16 %v5821
  %v5970 = vunpack.c.h.b16 %v5821
  %v5971 = vunpack.c.l.b16 %v5822
  %v5972 = vunpack.c.h.b16 %v5822
  %v5973 = vunpack.c.l.b16 %v5823
  %v5974 = vunpack.c.h.b16 %v5823
  %v5975 = vunpack.c.l.b16 %v5824
  %v5976 = vunpack.c.h.b16 %v5824
  %v5977 = vunpack.c.l.b16 %v5825
  %v5978 = vunpack.c.h.b16 %v5825
  %v5979 = vunpack.c.l.b16 %v5826
  %v5980 = vunpack.c.h.b16 %v5826
  %v5981 = vunpack.c.l.b16 %v5827
  %v5982 = vunpack.c.h.b16 %v5827
  %v5983 = vunpack.c.l.b16 %v5828
  %v5984 = vunpack.c.h.b16 %v5828
  %v5985 = vunpack.c.l.b16 %v5829
  %v5986 = vunpack.c.h.b16 %v5829
  %v5987 = vunpack.c.l.b16 %v5830
  %v5988 = vunpack.c.h.b16 %v5830
  %v5989 = vunpack.c.l.b16 %v5831
  %v5990 = vunpack.c.h.b16 %v5831
  %v5991 = vunpack.c.l.b16 %v5832
  %v5992 = vunpack.c.h.b16 %v5832
  %v5993 = vunpack.c.l.b16 %v5833
  %v5994 = vunpack.c.h.b16 %v5833
  %v5995 = vunpack.c.l.b16 %v5834
  %v5996 = vunpack.c.h.b16 %v5834
  %v5997 = vunpack.c.l.b16 %v5835
  %v5998 = vunpack.c.h.b16 %v5835
  %v5999 = vunpack.c.l.b16 %v5836
  %v6000 = vunpack.c.h.b16 %v5836
  %v6001 = vunpack.c.l.b16 %v5837
  %v6002 = vunpack.c.h.b16 %v5837
  %v6003 = vunpack.c.l.b16 %v5838
  %v6004 = vunpack.c.h.b16 %v5838
  %v6005 = vunpack.c.l.b16 %v5839
  %v6006 = vunpack.c.h.b16 %v5839
  %v6007 = vunpack.c.l.b16 %v5840
  %v6008 = vunpack.c.h.b16 %v5840
  %v6009 = vunpack.c.l.b16 %v5841
  %v6010 = vunpack.c.h.b16 %v5841
  %v6011 = vunpack.c.l.b16 %v5842
  %v6012 = vunpack.c.h.b16 %v5842
  %v6013 = vunpack.c.l.b16 %v5843
  %v6014 = vunpack.c.h.b16 %v5843
  %v6015 = vunpack.c.l.b16 %v5844
  %v6016 = vunpack.c.h.b16 %v5844
  %v6017 = vunpack.c.l.b16 %v5845
  %v6018 = vunpack.c.h.b16 %v5845
  %v6019 = vunpack.c.l.b16 %v5846
  %v6020 = vunpack.c.h.b16 %v5846
  %v6021 = vunpack.c.l.b16 %v5847
  %v6022 = vunpack.c.h.b16 %v5847
  %v6023 = vunpack.c.l.b16 %v5848
  %v6024 = vunpack.c.h.b16 %v5848
  %v6025 = vunpack.c.l.b16 %v5849
  %v6026 = vunpack.c.h.b16 %v5849
  %v6027 = vunpack.c.l.b16 %v5850
  %v6028 = vunpack.c.h.b16 %v5850
  %v6029 = vunpack.c.l.b16 %v5851
  %v6030 = vunpack.c.h.b16 %v5851
  %v6031 = vunpack.c.l.b16 %v5852
  %v6032 = vunpack.c.h.b16 %v5852
  %v6033 = vunpack.c.l.b16 %v5853
  %v6034 = vunpack.c.h.b16 %v5853
  %v6035 = vunpack.c.l.b16 %v5854
  %v6036 = vunpack.c.h.b16 %v5854
  %v6037 = vunpack.c.l.b16 %v5855
  %v6038 = vunpack.c.h.b16 %v5855
  %v6039 = vunpack.c.l.b16 %v5856
  %v6040 = vunpack.c.h.b16 %v5856
  %v6041 = vunpack.c.l.b16 %v5857
  %v6042 = vunpack.c.h.b16 %v5857
  %v6043 = vunpack.c.l.b16 %v5858
  %v6044 = vunpack.c.h.b16 %v5858
  %v6045 = vunpack.c.l.b16 %v5859
  %v6046 = vunpack.c.h.b16 %v5859
  %v6047 = vunpack.c.l.b16 %v5860
  %v6048 = vunpack.c.h.b16 %v5860
  %v6049 = vunpack.c.l.b16 %v5861
  %v6050 = vunpack.c.h.b16 %v5861
  %v6051 = vunpack.c.l.b16 %v5862
  %v6052 = vunpack.c.h.b16 %v5862
  %v6053 = vunpack.c.l.b16 %v5863
  %v6054 = vunpack.c.h.b16 %v5863
  %v6055 = vunpack.c.l.b16 %v5864
  %v6056 = vunpack.c.h.b16 %v5864
  %v6057 = vunpack.c.l.b16 %v5865
  %v6058 = vunpack.c.h.b16 %v5865
  %v6059 = vunpack.c.l.b16 %v5866
  %v6060 = vunpack.c.h.b16 %v5866
  %v6061 = vunpack.c.l.b16 %v5867
  %v6062 = vunpack.c.h.b16 %v5867
  %v6063 = vunpack.c.l.b16 %v5868
  %v6064 = vunpack.c.h.b16 %v5868
  %v6065 = vunpack.c.l.b16 %v5869
  %v6066 = vunpack.c.h.b16 %v5869
  %v6067 = vunpack.c.l.b16 %v5870
  %v6068 = vunpack.c.h.b16 %v5870
  %v6069 = vunpack.c.l.b16 %v5871
  %v6070 = vunpack.c.h.b16 %v5871
  %v6071 = vunpack.c.l.b16 %v5872
  %v6072 = vunpack.c.h.b16 %v5872
  %v6073 = vunpack.c.l.b16 %v5873
  %v6074 = vunpack.c.h.b16 %v5873
  %v6075 = vunpack.c.l.b16 %v5874
  %v6076 = vunpack.c.h.b16 %v5874
  %v6077 = vpack.c.b16 %v5953, %v5949
  %v6078 = vpack.c.b16 %v5954, %v5950
  %v6079 = vpack.c.b16 %v5955, %v5951
  %v6080 = vpack.c.b16 %v5956, %v5952
  %v6081 = vpack.c.b16 %v5961, %v5957
  %v6082 = vpack.c.b16 %v5962, %v5958
  %v6083 = vpack.c.b16 %v5963, %v5959
  %v6084 = vpack.c.b16 %v5964, %v5960
  %v6085 = vpack.c.b16 %v5969, %v5965
  %v6086 = vpack.c.b16 %v5970, %v5966
  %v6087 = vpack.c.b16 %v5971, %v5967
  %v6088 = vpack.c.b16 %v5972, %v5968
  %v6089 = vpack.c.b16 %v5977, %v5973
  %v6090 = vpack.c.b16 %v5978, %v5974
  %v6091 = vpack.c.b16 %v5979, %v5975
  %v6092 = vpack.c.b16 %v5980, %v5976
  %v6093 = vpack.c.b16 %v5985, %v5981
  %v6094 = vpack.c.b16 %v5986, %v5982
  %v6095 = vpack.c.b16 %v5987, %v5983
  %v6096 = vpack.c.b16 %v5988, %v5984
  %v6097 = vpack.c.b16 %v5993, %v5989
  %v6098 = vpack.c.b16 %v5994, %v5990
  %v6099 = vpack.c.b16 %v5995, %v5991
  %v6100 = vpack.c.b16 %v5996, %v5992
  %v6101 = vpack.c.b16 %v6001, %v5997
  %v6102 = vpack.c.b16 %v6002, %v5998
  %v6103 = vpack.c.b16 %v6003, %v5999
  %v6104 = vpack.c.b16 %v6004, %v6000
  %v6105 = vpack.c.b16 %v6009, %v6005
  %v6106 = vpack.c.b16 %v6010, %v6006
  %v6107 = vpack.c.b16 %v6011, %v6007
  %v6108 = vpack.c.b16 %v6012, %v6008
  %v6109 = vpack.c.b16 %v6017, %v6013
  %v6110 = vpack.c.b16 %v6018, %v6014
  %v6111 = vpack.c.b16 %v6019, %v6015
  %v6112 = vpack.c.b16 %v6020, %v6016
  %v6113 = vpack.c.b16 %v6025, %v6021
  %v6114 = vpack.c.b16 %v6026, %v6022
  %v6115 = vpack.c.b16 %v6027, %v6023
  %v6116 = vpack.c.b16 %v6028, %v6024
  %v6117 = vpack.c.b16 %v6033, %v6029
  %v6118 = vpack.c.b16 %v6034, %v6030
  %v6119 = vpack.c.b16 %v6035, %v6031
  %v6120 = vpack.c.b16 %v6036, %v6032
  %v6121 = vpack.c.b16 %v6041, %v6037
  %v6122 = vpack.c.b16 %v6042, %v6038
  %v6123 = vpack.c.b16 %v6043, %v6039
  %v6124 = vpack.c.b16 %v6044, %v6040
  %v6125 = vpack.c.b16 %v6049, %v6045
  %v6126 = vpack.c.b16 %v6050, %v6046
  %v6127 = vpack.c.b16 %v6051, %v6047
  %v6128 = vpack.c.b16 %v6052, %v6048
  %v6129 = vpack.c.b16 %v6057, %v6053
  %v6130 = vpack.c.b16 %v6058, %v6054
  %v6131 = vpack.c.b16 %v6059, %v6055
  %v6132 = vpack.c.b16 %v6060, %v6056
  %v6133 = vpack.c.b16 %v6065, %v6061
  %v6134 = vpack.c.b16 %v6066, %v6062
  %v6135 = vpack.c.b16 %v6067, %v6063
  %v6136 = vpack.c.b16 %v6068, %v6064
  %v6137 = vpack.c.b16 %v6073, %v6069
  %v6138 = vpack.c.b16 %v6074, %v6070
  %v6139 = vpack.c.b16 %v6075, %v6071
  %v6140 = vpack.c.b16 %v6076, %v6072
  %6205 = vmatpush.bf16.msra.mxu0 %v6105
  %6206 = vmatpush.bf16.msra.mxu0 %v6101
  %6207 = vmatpush.bf16.msra.mxu0 %v6097
  %6208 = vmatpush.bf16.msra.mxu0 %v6093
  %6209 = vmatpush.bf16.msra.mxu0 %v6089
  %6210 = vmatpush.bf16.msra.mxu0 %v6085
  %6211 = vmatpush.bf16.msra.mxu0 %v6081
  %6212 = vmatpush.bf16.msra.mxu0 %v6077
  %6213 = vmatmul.bf16.gmra.mxu0 %v5809
  %v6214 = vpop.f32.mrf.mxu0
  %v6215 = vadd.f32 %v5877, %v6214
  %v6216 = vpop.f32.mrf.mxu0
  %v6217 = vadd.f32 %v5877, %v6216
  %6218 = vdwg.mxu0
  %6219 = vmatpush.bf16.msra.mxu0 %v6137
  %6220 = vmatpush.bf16.msra.mxu0 %v6133
  %6221 = vmatpush.bf16.msra.mxu0 %v6129
  %6222 = vmatpush.bf16.msra.mxu0 %v6125
  %6223 = vmatpush.bf16.msra.mxu0 %v6121
  %6224 = vmatpush.bf16.msra.mxu0 %v6117
  %6225 = vmatpush.bf16.msra.mxu0 %v6113
  %6226 = vmatpush.bf16.msra.mxu0 %v6109
  %6227 = vmatmul.bf16.gmra.mxu0 %v5810
  %v6228 = vpop.f32.mrf.mxu0
  %v6229 = vadd.f32 %v6215, %v6228
  %v6230 = vpop.f32.mrf.mxu0
  %v6231 = vadd.f32 %v6217, %v6230
  %6232 = vdwg.mxu0
  %6233 = vmatpush.bf16.msra.mxu0 %v6106
  %6234 = vmatpush.bf16.msra.mxu0 %v6102
  %6235 = vmatpush.bf16.msra.mxu0 %v6098
  %6236 = vmatpush.bf16.msra.mxu0 %v6094
  %6237 = vmatpush.bf16.msra.mxu0 %v6090
  %6238 = vmatpush.bf16.msra.mxu0 %v6086
  %6239 = vmatpush.bf16.msra.mxu0 %v6082
  %6240 = vmatpush.bf16.msra.mxu0 %v6078
  %6241 = vmatmul.bf16.gmra.mxu0 %v5809
  %v6242 = vpop.f32.mrf.mxu0
  %v6243 = vadd.f32 %v5878, %v6242
  %v6244 = vpop.f32.mrf.mxu0
  %v6245 = vadd.f32 %v5878, %v6244
  %6246 = vdwg.mxu0
  %6247 = vmatpush.bf16.msra.mxu0 %v6138
  %6248 = vmatpush.bf16.msra.mxu0 %v6134
  %6249 = vmatpush.bf16.msra.mxu0 %v6130
  %6250 = vmatpush.bf16.msra.mxu0 %v6126
  %6251 = vmatpush.bf16.msra.mxu0 %v6122
  %6252 = vmatpush.bf16.msra.mxu0 %v6118
  %6253 = vmatpush.bf16.msra.mxu0 %v6114
  %6254 = vmatpush.bf16.msra.mxu0 %v6110
  %6255 = vmatmul.bf16.gmra.mxu0 %v5810
  %v6256 = vpop.f32.mrf.mxu0
  %v6257 = vadd.f32 %v6243, %v6256
  %v6258 = vpop.f32.mrf.mxu0
  %v6259 = vadd.f32 %v6245, %v6258
  %6260 = vdwg.mxu0
  %6261 = vmatpush.bf16.msra.mxu0 %v6107
  %6262 = vmatpush.bf16.msra.mxu0 %v6103
  %6263 = vmatpush.bf16.msra.mxu0 %v6099
  %6264 = vmatpush.bf16.msra.mxu0 %v6095
  %6265 = vmatpush.bf16.msra.mxu0 %v6091
  %6266 = vmatpush.bf16.msra.mxu0 %v6087
  %6267 = vmatpush.bf16.msra.mxu0 %v6083
  %6268 = vmatpush.bf16.msra.mxu0 %v6079
  %6269 = vmatmul.bf16.gmra.mxu0 %v5809
  %v6270 = vpop.f32.mrf.mxu0
  %v6271 = vadd.f32 %v5879, %v6270
  %v6272 = vpop.f32.mrf.mxu0
  %v6273 = vadd.f32 %v5879, %v6272
  %6274 = vdwg.mxu0
  %6275 = vmatpush.bf16.msra.mxu0 %v6139
  %6276 = vmatpush.bf16.msra.mxu0 %v6135
  %6277 = vmatpush.bf16.msra.mxu0 %v6131
  %6278 = vmatpush.bf16.msra.mxu0 %v6127
  %6279 = vmatpush.bf16.msra.mxu0 %v6123
  %6280 = vmatpush.bf16.msra.mxu0 %v6119
  %6281 = vmatpush.bf16.msra.mxu0 %v6115
  %6282 = vmatpush.bf16.msra.mxu0 %v6111
  %6283 = vmatmul.bf16.gmra.mxu0 %v5810
  %v6284 = vpop.f32.mrf.mxu0
  %v6285 = vadd.f32 %v6271, %v6284
  %v6286 = vpop.f32.mrf.mxu0
  %v6287 = vadd.f32 %v6273, %v6286
  %6288 = vdwg.mxu0
  %6289 = vmatpush.bf16.msra.mxu0 %v6108
  %6290 = vmatpush.bf16.msra.mxu0 %v6104
  %6291 = vmatpush.bf16.msra.mxu0 %v6100
  %6292 = vmatpush.bf16.msra.mxu0 %v6096
  %6293 = vmatpush.bf16.msra.mxu0 %v6092
  %6294 = vmatpush.bf16.msra.mxu0 %v6088
  %6295 = vmatpush.bf16.msra.mxu0 %v6084
  %6296 = vmatpush.bf16.msra.mxu0 %v6080
  %6297 = vmatmul.bf16.gmra.mxu0 %v5809
  %v6298 = vpop.f32.mrf.mxu0
  %v6299 = vadd.f32 %v5880, %v6298
  %v6300 = vpop.f32.mrf.mxu0
  %v6301 = vadd.f32 %v5880, %v6300
  %6302 = vdwg.mxu0
  %6303 = vmatpush.bf16.msra.mxu0 %v6140
  %6304 = vmatpush.bf16.msra.mxu0 %v6136
  %6305 = vmatpush.bf16.msra.mxu0 %v6132
  %6306 = vmatpush.bf16.msra.mxu0 %v6128
  %6307 = vmatpush.bf16.msra.mxu0 %v6124
  %6308 = vmatpush.bf16.msra.mxu0 %v6120
  %6309 = vmatpush.bf16.msra.mxu0 %v6116
  %6310 = vmatpush.bf16.msra.mxu0 %v6112
  %6311 = vmatmul.bf16.gmra.mxu0 %v5810
  %v6312 = vpop.f32.mrf.mxu0
  %v6313 = vadd.f32 %v6299, %v6312
  %v6314 = vpop.f32.mrf.mxu0
  %v6315 = vadd.f32 %v6301, %v6314
  %6316 = vdwg.mxu0
  %v6317 = vmax.f32 %v6229, 0.0
  %v6318 = vmax.f32 %v6257, 0.0
  %v6319 = vmax.f32 %v6231, 0.0
  %v6320 = vmax.f32 %v6259, 0.0
  %v6321 = vxor.u32 %v6285, 2147483648
  %v6322 = vxor.u32 %v6313, 2147483648
  %v6323 = vxor.u32 %v6287, 2147483648
  %v6324 = vxor.u32 %v6315, 2147483648
  %v6325 = vmul.f32 %v6321, 1.442695
  %v6326 = vpow.pop %v6325
  %v6327 = vmul.f32 %v6322, 1.442695
  %v6328 = vpow.pop %v6327
  %v6329 = vmul.f32 %v6323, 1.442695
  %v6330 = vpow.pop %v6329
  %v6331 = vmul.f32 %v6324, 1.442695
  %v6332 = vpow.pop %v6331
  %v6333 = vadd.f32 %v6326, 1.0
  %v6334 = vadd.f32 %v6328, 1.0
  %v6335 = vadd.f32 %v6330, 1.0
  %v6336 = vadd.f32 %v6332, 1.0
  %v6337 = vrcp.pop %v6333
  %v6338 = vmul.f32 %v6333, %v6337
  %v6339 = vsub.f32 1.0, %v6338
  %v6340 = vmul.f32 %v6337, %v6339
  %v6341 = vadd.f32 %v6337, %v6340
  %vm6342 = vweird.f32 %v6333
  %vm6343 = vweird.f32 %v6337
  %vm6344 = vmor %vm6342, %vm6343
  %v6345 = vsel %vm6344, %v6337, %v6341
  %v6346 = vand.u32 2147483647, %v6333
  %vm6347 = vcmp.eq.f32.partialorder %v6346, 8.507059e+37
  %v6348 = vand.u32 %v6333, 2147483648
  %v6349 = vor.u32 1.1754944e-38, %v6348
  %v6350 = vsel %vm6347, %v6349, %v6345
  %v6351 = vmul.f32 1.0, %v6350
  %v6352 = vrcp.pop %v6334
  %v6353 = vmul.f32 %v6334, %v6352
  %v6354 = vsub.f32 1.0, %v6353
  %v6355 = vmul.f32 %v6352, %v6354
  %v6356 = vadd.f32 %v6352, %v6355
  %vm6357 = vweird.f32 %v6334
  %vm6358 = vweird.f32 %v6352
  %vm6359 = vmor %vm6357, %vm6358
  %v6360 = vsel %vm6359, %v6352, %v6356
  %v6361 = vand.u32 2147483647, %v6334
  %vm6362 = vcmp.eq.f32.partialorder %v6361, 8.507059e+37
  %v6363 = vand.u32 %v6334, 2147483648
  %v6364 = vor.u32 1.1754944e-38, %v6363
  %v6365 = vsel %vm6362, %v6364, %v6360
  %v6366 = vmul.f32 1.0, %v6365
  %v6367 = vrcp.pop %v6335
  %v6368 = vmul.f32 %v6335, %v6367
  %v6369 = vsub.f32 1.0, %v6368
  %v6370 = vmul.f32 %v6367, %v6369
  %v6371 = vadd.f32 %v6367, %v6370
  %vm6372 = vweird.f32 %v6335
  %vm6373 = vweird.f32 %v6367
  %vm6374 = vmor %vm6372, %vm6373
  %v6375 = vsel %vm6374, %v6367, %v6371
  %v6376 = vand.u32 2147483647, %v6335
  %vm6377 = vcmp.eq.f32.partialorder %v6376, 8.507059e+37
  %v6378 = vand.u32 %v6335, 2147483648
  %v6379 = vor.u32 1.1754944e-38, %v6378
  %v6380 = vsel %vm6377, %v6379, %v6375
  %v6381 = vmul.f32 1.0, %v6380
  %v6382 = vrcp.pop %v6336
  %v6383 = vmul.f32 %v6336, %v6382
  %v6384 = vsub.f32 1.0, %v6383
  %v6385 = vmul.f32 %v6382, %v6384
  %v6386 = vadd.f32 %v6382, %v6385
  %vm6387 = vweird.f32 %v6336
  %vm6388 = vweird.f32 %v6382
  %vm6389 = vmor %vm6387, %vm6388
  %v6390 = vsel %vm6389, %v6382, %v6386
  %v6391 = vand.u32 2147483647, %v6336
  %vm6392 = vcmp.eq.f32.partialorder %v6391, 8.507059e+37
  %v6393 = vand.u32 %v6336, 2147483648
  %v6394 = vor.u32 1.1754944e-38, %v6393
  %v6395 = vsel %vm6392, %v6394, %v6390
  %v6396 = vmul.f32 1.0, %v6395
  %v6397 = vmul.f32 %v6351, %v5805
  %v6398 = vmul.f32 %v6366, %v5806
  %v6399 = vmul.f32 %v6381, %v5807
  %v6400 = vmul.f32 %v6396, %v5808
  %v6401 = vsub.f32 1.0, %v6351
  %v6402 = vsub.f32 1.0, %v6366
  %v6403 = vsub.f32 1.0, %v6381
  %v6404 = vsub.f32 1.0, %v6396
  %v6405 = vmul.f32 %v6401, %v6317
  %v6406 = vmul.f32 %v6402, %v6318
  %v6407 = vmul.f32 %v6403, %v6319
  %v6408 = vmul.f32 %v6404, %v6320
  %v6409 = vadd.f32 %v6397, %v6405
  %v6410 = vadd.f32 %v6398, %v6406
  %v6411 = vadd.f32 %v6399, %v6407
  %v6412 = vadd.f32 %v6400, %v6408
  %v6413 = vpack.c.bf16 %v6411, %v6409
  %v6414 = vpack.c.bf16 %v6412, %v6410
  %s6415 = scalar_lea.vmem %s3, 512
  %v6416 = vld [vmem:[%s6415] sm:$0xff]
  %v6417 = vld [vmem:[%s6415 + $0x8] sm:$0xff]
  %v6418 = vld [vmem:[%s6415 + $0x10] sm:$0xff]
  %v6419 = vld [vmem:[%s6415 + $0x18] sm:$0xff]
  %v6420 = vld [vmem:[%s6415 + $0x20] sm:$0xff]
  %v6421 = vld [vmem:[%s6415 + $0x28] sm:$0xff]
  %v6422 = vld [vmem:[%s6415 + $0x30] sm:$0xff]
  %v6423 = vld [vmem:[%s6415 + $0x38] sm:$0xff]
  %v6424 = vld [vmem:[%s6415 + $0x40] sm:$0xff]
  %v6425 = vld [vmem:[%s6415 + $0x48] sm:$0xff]
  %v6426 = vld [vmem:[%s6415 + $0x50] sm:$0xff]
  %v6427 = vld [vmem:[%s6415 + $0x58] sm:$0xff]
  %v6428 = vld [vmem:[%s6415 + $0x60] sm:$0xff]
  %v6429 = vld [vmem:[%s6415 + $0x68] sm:$0xff]
  %v6430 = vld [vmem:[%s6415 + $0x70] sm:$0xff]
  %v6431 = vld [vmem:[%s6415 + $0x78] sm:$0xff]
  %v6432 = vld [vmem:[%s6415 + $0x80] sm:$0xff]
  %v6433 = vld [vmem:[%s6415 + $0x88] sm:$0xff]
  %v6434 = vld [vmem:[%s6415 + $0x90] sm:$0xff]
  %v6435 = vld [vmem:[%s6415 + $0x98] sm:$0xff]
  %v6436 = vld [vmem:[%s6415 + $0xa0] sm:$0xff]
  %v6437 = vld [vmem:[%s6415 + $0xa8] sm:$0xff]
  %v6438 = vld [vmem:[%s6415 + $0xb0] sm:$0xff]
  %v6439 = vld [vmem:[%s6415 + $0xb8] sm:$0xff]
  %v6440 = vld [vmem:[%s6415 + $0xc0] sm:$0xff]
  %v6441 = vld [vmem:[%s6415 + $0xc8] sm:$0xff]
  %v6442 = vld [vmem:[%s6415 + $0xd0] sm:$0xff]
  %v6443 = vld [vmem:[%s6415 + $0xd8] sm:$0xff]
  %v6444 = vld [vmem:[%s6415 + $0xe0] sm:$0xff]
  %v6445 = vld [vmem:[%s6415 + $0xe8] sm:$0xff]
  %v6446 = vld [vmem:[%s6415 + $0xf0] sm:$0xff]
  %v6447 = vld [vmem:[%s6415 + $0xf8] sm:$0xff]
  %v6448 = vld [vmem:[%s6415 + $0x100] sm:$0xff]
  %v6449 = vld [vmem:[%s6415 + $0x108] sm:$0xff]
  %v6450 = vld [vmem:[%s6415 + $0x110] sm:$0xff]
  %v6451 = vld [vmem:[%s6415 + $0x118] sm:$0xff]
  %v6452 = vld [vmem:[%s6415 + $0x120] sm:$0xff]
  %v6453 = vld [vmem:[%s6415 + $0x128] sm:$0xff]
  %v6454 = vld [vmem:[%s6415 + $0x130] sm:$0xff]
  %v6455 = vld [vmem:[%s6415 + $0x138] sm:$0xff]
  %v6456 = vld [vmem:[%s6415 + $0x140] sm:$0xff]
  %v6457 = vld [vmem:[%s6415 + $0x148] sm:$0xff]
  %v6458 = vld [vmem:[%s6415 + $0x150] sm:$0xff]
  %v6459 = vld [vmem:[%s6415 + $0x158] sm:$0xff]
  %v6460 = vld [vmem:[%s6415 + $0x160] sm:$0xff]
  %v6461 = vld [vmem:[%s6415 + $0x168] sm:$0xff]
  %v6462 = vld [vmem:[%s6415 + $0x170] sm:$0xff]
  %v6463 = vld [vmem:[%s6415 + $0x178] sm:$0xff]
  %v6464 = vld [vmem:[%s6415 + $0x180] sm:$0xff]
  %v6465 = vld [vmem:[%s6415 + $0x188] sm:$0xff]
  %v6466 = vld [vmem:[%s6415 + $0x190] sm:$0xff]
  %v6467 = vld [vmem:[%s6415 + $0x198] sm:$0xff]
  %v6468 = vld [vmem:[%s6415 + $0x1a0] sm:$0xff]
  %v6469 = vld [vmem:[%s6415 + $0x1a8] sm:$0xff]
  %v6470 = vld [vmem:[%s6415 + $0x1b0] sm:$0xff]
  %v6471 = vld [vmem:[%s6415 + $0x1b8] sm:$0xff]
  %v6472 = vld [vmem:[%s6415 + $0x1c0] sm:$0xff]
  %v6473 = vld [vmem:[%s6415 + $0x1c8] sm:$0xff]
  %v6474 = vld [vmem:[%s6415 + $0x1d0] sm:$0xff]
  %v6475 = vld [vmem:[%s6415 + $0x1d8] sm:$0xff]
  %v6476 = vld [vmem:[%s6415 + $0x1e0] sm:$0xff]
  %v6477 = vld [vmem:[%s6415 + $0x1e8] sm:$0xff]
  %v6478 = vld [vmem:[%s6415 + $0x1f0] sm:$0xff]
  %v6479 = vld [vmem:[%s6415 + $0x1f8] sm:$0xff]
  %s6480 = scalar_lea.vmem %s4, 4
  %v6481 = vld [vmem:[%s6480] sm:$0xf]
  %v6483 = vperm.slane %v6481, 0
  %v6484 = vperm.slane %v6481, 1
  %v6485 = vperm.slane %v6481, 2
  %v6486 = vperm.slane %v6481, 3
  %v6555 = vunpack.c.l.b16 %v6416
  %v6556 = vunpack.c.h.b16 %v6416
  %v6557 = vunpack.c.l.b16 %v6417
  %v6558 = vunpack.c.h.b16 %v6417
  %v6559 = vunpack.c.l.b16 %v6418
  %v6560 = vunpack.c.h.b16 %v6418
  %v6561 = vunpack.c.l.b16 %v6419
  %v6562 = vunpack.c.h.b16 %v6419
  %v6563 = vunpack.c.l.b16 %v6420
  %v6564 = vunpack.c.h.b16 %v6420
  %v6565 = vunpack.c.l.b16 %v6421
  %v6566 = vunpack.c.h.b16 %v6421
  %v6567 = vunpack.c.l.b16 %v6422
  %v6568 = vunpack.c.h.b16 %v6422
  %v6569 = vunpack.c.l.b16 %v6423
  %v6570 = vunpack.c.h.b16 %v6423
  %v6571 = vunpack.c.l.b16 %v6424
  %v6572 = vunpack.c.h.b16 %v6424
  %v6573 = vunpack.c.l.b16 %v6425
  %v6574 = vunpack.c.h.b16 %v6425
  %v6575 = vunpack.c.l.b16 %v6426
  %v6576 = vunpack.c.h.b16 %v6426
  %v6577 = vunpack.c.l.b16 %v6427
  %v6578 = vunpack.c.h.b16 %v6427
  %v6579 = vunpack.c.l.b16 %v6428
  %v6580 = vunpack.c.h.b16 %v6428
  %v6581 = vunpack.c.l.b16 %v6429
  %v6582 = vunpack.c.h.b16 %v6429
  %v6583 = vunpack.c.l.b16 %v6430
  %v6584 = vunpack.c.h.b16 %v6430
  %v6585 = vunpack.c.l.b16 %v6431
  %v6586 = vunpack.c.h.b16 %v6431
  %v6587 = vunpack.c.l.b16 %v6432
  %v6588 = vunpack.c.h.b16 %v6432
  %v6589 = vunpack.c.l.b16 %v6433
  %v6590 = vunpack.c.h.b16 %v6433
  %v6591 = vunpack.c.l.b16 %v6434
  %v6592 = vunpack.c.h.b16 %v6434
  %v6593 = vunpack.c.l.b16 %v6435
  %v6594 = vunpack.c.h.b16 %v6435
  %v6595 = vunpack.c.l.b16 %v6436
  %v6596 = vunpack.c.h.b16 %v6436
  %v6597 = vunpack.c.l.b16 %v6437
  %v6598 = vunpack.c.h.b16 %v6437
  %v6599 = vunpack.c.l.b16 %v6438
  %v6600 = vunpack.c.h.b16 %v6438
  %v6601 = vunpack.c.l.b16 %v6439
  %v6602 = vunpack.c.h.b16 %v6439
  %v6603 = vunpack.c.l.b16 %v6440
  %v6604 = vunpack.c.h.b16 %v6440
  %v6605 = vunpack.c.l.b16 %v6441
  %v6606 = vunpack.c.h.b16 %v6441
  %v6607 = vunpack.c.l.b16 %v6442
  %v6608 = vunpack.c.h.b16 %v6442
  %v6609 = vunpack.c.l.b16 %v6443
  %v6610 = vunpack.c.h.b16 %v6443
  %v6611 = vunpack.c.l.b16 %v6444
  %v6612 = vunpack.c.h.b16 %v6444
  %v6613 = vunpack.c.l.b16 %v6445
  %v6614 = vunpack.c.h.b16 %v6445
  %v6615 = vunpack.c.l.b16 %v6446
  %v6616 = vunpack.c.h.b16 %v6446
  %v6617 = vunpack.c.l.b16 %v6447
  %v6618 = vunpack.c.h.b16 %v6447
  %v6619 = vunpack.c.l.b16 %v6448
  %v6620 = vunpack.c.h.b16 %v6448
  %v6621 = vunpack.c.l.b16 %v6449
  %v6622 = vunpack.c.h.b16 %v6449
  %v6623 = vunpack.c.l.b16 %v6450
  %v6624 = vunpack.c.h.b16 %v6450
  %v6625 = vunpack.c.l.b16 %v6451
  %v6626 = vunpack.c.h.b16 %v6451
  %v6627 = vunpack.c.l.b16 %v6452
  %v6628 = vunpack.c.h.b16 %v6452
  %v6629 = vunpack.c.l.b16 %v6453
  %v6630 = vunpack.c.h.b16 %v6453
  %v6631 = vunpack.c.l.b16 %v6454
  %v6632 = vunpack.c.h.b16 %v6454
  %v6633 = vunpack.c.l.b16 %v6455
  %v6634 = vunpack.c.h.b16 %v6455
  %v6635 = vunpack.c.l.b16 %v6456
  %v6636 = vunpack.c.h.b16 %v6456
  %v6637 = vunpack.c.l.b16 %v6457
  %v6638 = vunpack.c.h.b16 %v6457
  %v6639 = vunpack.c.l.b16 %v6458
  %v6640 = vunpack.c.h.b16 %v6458
  %v6641 = vunpack.c.l.b16 %v6459
  %v6642 = vunpack.c.h.b16 %v6459
  %v6643 = vunpack.c.l.b16 %v6460
  %v6644 = vunpack.c.h.b16 %v6460
  %v6645 = vunpack.c.l.b16 %v6461
  %v6646 = vunpack.c.h.b16 %v6461
  %v6647 = vunpack.c.l.b16 %v6462
  %v6648 = vunpack.c.h.b16 %v6462
  %v6649 = vunpack.c.l.b16 %v6463
  %v6650 = vunpack.c.h.b16 %v6463
  %v6651 = vunpack.c.l.b16 %v6464
  %v6652 = vunpack.c.h.b16 %v6464
  %v6653 = vunpack.c.l.b16 %v6465
  %v6654 = vunpack.c.h.b16 %v6465
  %v6655 = vunpack.c.l.b16 %v6466
  %v6656 = vunpack.c.h.b16 %v6466
  %v6657 = vunpack.c.l.b16 %v6467
  %v6658 = vunpack.c.h.b16 %v6467
  %v6659 = vunpack.c.l.b16 %v6468
  %v6660 = vunpack.c.h.b16 %v6468
  %v6661 = vunpack.c.l.b16 %v6469
  %v6662 = vunpack.c.h.b16 %v6469
  %v6663 = vunpack.c.l.b16 %v6470
  %v6664 = vunpack.c.h.b16 %v6470
  %v6665 = vunpack.c.l.b16 %v6471
  %v6666 = vunpack.c.h.b16 %v6471
  %v6667 = vunpack.c.l.b16 %v6472
  %v6668 = vunpack.c.h.b16 %v6472
  %v6669 = vunpack.c.l.b16 %v6473
  %v6670 = vunpack.c.h.b16 %v6473
  %v6671 = vunpack.c.l.b16 %v6474
  %v6672 = vunpack.c.h.b16 %v6474
  %v6673 = vunpack.c.l.b16 %v6475
  %v6674 = vunpack.c.h.b16 %v6475
  %v6675 = vunpack.c.l.b16 %v6476
  %v6676 = vunpack.c.h.b16 %v6476
  %v6677 = vunpack.c.l.b16 %v6477
  %v6678 = vunpack.c.h.b16 %v6477
  %v6679 = vunpack.c.l.b16 %v6478
  %v6680 = vunpack.c.h.b16 %v6478
  %v6681 = vunpack.c.l.b16 %v6479
  %v6682 = vunpack.c.h.b16 %v6479
  %v6683 = vpack.c.b16 %v6559, %v6555
  %v6684 = vpack.c.b16 %v6560, %v6556
  %v6685 = vpack.c.b16 %v6561, %v6557
  %v6686 = vpack.c.b16 %v6562, %v6558
  %v6687 = vpack.c.b16 %v6567, %v6563
  %v6688 = vpack.c.b16 %v6568, %v6564
  %v6689 = vpack.c.b16 %v6569, %v6565
  %v6690 = vpack.c.b16 %v6570, %v6566
  %v6691 = vpack.c.b16 %v6575, %v6571
  %v6692 = vpack.c.b16 %v6576, %v6572
  %v6693 = vpack.c.b16 %v6577, %v6573
  %v6694 = vpack.c.b16 %v6578, %v6574
  %v6695 = vpack.c.b16 %v6583, %v6579
  %v6696 = vpack.c.b16 %v6584, %v6580
  %v6697 = vpack.c.b16 %v6585, %v6581
  %v6698 = vpack.c.b16 %v6586, %v6582
  %v6699 = vpack.c.b16 %v6591, %v6587
  %v6700 = vpack.c.b16 %v6592, %v6588
  %v6701 = vpack.c.b16 %v6593, %v6589
  %v6702 = vpack.c.b16 %v6594, %v6590
  %v6703 = vpack.c.b16 %v6599, %v6595
  %v6704 = vpack.c.b16 %v6600, %v6596
  %v6705 = vpack.c.b16 %v6601, %v6597
  %v6706 = vpack.c.b16 %v6602, %v6598
  %v6707 = vpack.c.b16 %v6607, %v6603
  %v6708 = vpack.c.b16 %v6608, %v6604
  %v6709 = vpack.c.b16 %v6609, %v6605
  %v6710 = vpack.c.b16 %v6610, %v6606
  %v6711 = vpack.c.b16 %v6615, %v6611
  %v6712 = vpack.c.b16 %v6616, %v6612
  %v6713 = vpack.c.b16 %v6617, %v6613
  %v6714 = vpack.c.b16 %v6618, %v6614
  %v6715 = vpack.c.b16 %v6623, %v6619
  %v6716 = vpack.c.b16 %v6624, %v6620
  %v6717 = vpack.c.b16 %v6625, %v6621
  %v6718 = vpack.c.b16 %v6626, %v6622
  %v6719 = vpack.c.b16 %v6631, %v6627
  %v6720 = vpack.c.b16 %v6632, %v6628
  %v6721 = vpack.c.b16 %v6633, %v6629
  %v6722 = vpack.c.b16 %v6634, %v6630
  %v6723 = vpack.c.b16 %v6639, %v6635
  %v6724 = vpack.c.b16 %v6640, %v6636
  %v6725 = vpack.c.b16 %v6641, %v6637
  %v6726 = vpack.c.b16 %v6642, %v6638
  %v6727 = vpack.c.b16 %v6647, %v6643
  %v6728 = vpack.c.b16 %v6648, %v6644
  %v6729 = vpack.c.b16 %v6649, %v6645
  %v6730 = vpack.c.b16 %v6650, %v6646
  %v6731 = vpack.c.b16 %v6655, %v6651
  %v6732 = vpack.c.b16 %v6656, %v6652
  %v6733 = vpack.c.b16 %v6657, %v6653
  %v6734 = vpack.c.b16 %v6658, %v6654
  %v6735 = vpack.c.b16 %v6663, %v6659
  %v6736 = vpack.c.b16 %v6664, %v6660
  %v6737 = vpack.c.b16 %v6665, %v6661
  %v6738 = vpack.c.b16 %v6666, %v6662
  %v6739 = vpack.c.b16 %v6671, %v6667
  %v6740 = vpack.c.b16 %v6672, %v6668
  %v6741 = vpack.c.b16 %v6673, %v6669
  %v6742 = vpack.c.b16 %v6674, %v6670
  %v6743 = vpack.c.b16 %v6679, %v6675
  %v6744 = vpack.c.b16 %v6680, %v6676
  %v6745 = vpack.c.b16 %v6681, %v6677
  %v6746 = vpack.c.b16 %v6682, %v6678
  %6811 = vmatpush.bf16.msra.mxu0 %v6711
  %6812 = vmatpush.bf16.msra.mxu0 %v6707
  %6813 = vmatpush.bf16.msra.mxu0 %v6703
  %6814 = vmatpush.bf16.msra.mxu0 %v6699
  %6815 = vmatpush.bf16.msra.mxu0 %v6695
  %6816 = vmatpush.bf16.msra.mxu0 %v6691
  %6817 = vmatpush.bf16.msra.mxu0 %v6687
  %6818 = vmatpush.bf16.msra.mxu0 %v6683
  %6819 = vmatmul.bf16.gmra.mxu0 %v6413
  %v6820 = vpop.f32.mrf.mxu0
  %v6821 = vadd.f32 %v6483, %v6820
  %v6822 = vpop.f32.mrf.mxu0
  %v6823 = vadd.f32 %v6483, %v6822
  %6824 = vdwg.mxu0
  %6825 = vmatpush.bf16.msra.mxu0 %v6743
  %6826 = vmatpush.bf16.msra.mxu0 %v6739
  %6827 = vmatpush.bf16.msra.mxu0 %v6735
  %6828 = vmatpush.bf16.msra.mxu0 %v6731
  %6829 = vmatpush.bf16.msra.mxu0 %v6727
  %6830 = vmatpush.bf16.msra.mxu0 %v6723
  %6831 = vmatpush.bf16.msra.mxu0 %v6719
  %6832 = vmatpush.bf16.msra.mxu0 %v6715
  %6833 = vmatmul.bf16.gmra.mxu0 %v6414
  %v6834 = vpop.f32.mrf.mxu0
  %v6835 = vadd.f32 %v6821, %v6834
  %v6836 = vpop.f32.mrf.mxu0
  %v6837 = vadd.f32 %v6823, %v6836
  %6838 = vdwg.mxu0
  %6839 = vmatpush.bf16.msra.mxu0 %v6712
  %6840 = vmatpush.bf16.msra.mxu0 %v6708
  %6841 = vmatpush.bf16.msra.mxu0 %v6704
  %6842 = vmatpush.bf16.msra.mxu0 %v6700
  %6843 = vmatpush.bf16.msra.mxu0 %v6696
  %6844 = vmatpush.bf16.msra.mxu0 %v6692
  %6845 = vmatpush.bf16.msra.mxu0 %v6688
  %6846 = vmatpush.bf16.msra.mxu0 %v6684
  %6847 = vmatmul.bf16.gmra.mxu0 %v6413
  %v6848 = vpop.f32.mrf.mxu0
  %v6849 = vadd.f32 %v6484, %v6848
  %v6850 = vpop.f32.mrf.mxu0
  %v6851 = vadd.f32 %v6484, %v6850
  %6852 = vdwg.mxu0
  %6853 = vmatpush.bf16.msra.mxu0 %v6744
  %6854 = vmatpush.bf16.msra.mxu0 %v6740
  %6855 = vmatpush.bf16.msra.mxu0 %v6736
  %6856 = vmatpush.bf16.msra.mxu0 %v6732
  %6857 = vmatpush.bf16.msra.mxu0 %v6728
  %6858 = vmatpush.bf16.msra.mxu0 %v6724
  %6859 = vmatpush.bf16.msra.mxu0 %v6720
  %6860 = vmatpush.bf16.msra.mxu0 %v6716
  %6861 = vmatmul.bf16.gmra.mxu0 %v6414
  %v6862 = vpop.f32.mrf.mxu0
  %v6863 = vadd.f32 %v6849, %v6862
  %v6864 = vpop.f32.mrf.mxu0
  %v6865 = vadd.f32 %v6851, %v6864
  %6866 = vdwg.mxu0
  %6867 = vmatpush.bf16.msra.mxu0 %v6713
  %6868 = vmatpush.bf16.msra.mxu0 %v6709
  %6869 = vmatpush.bf16.msra.mxu0 %v6705
  %6870 = vmatpush.bf16.msra.mxu0 %v6701
  %6871 = vmatpush.bf16.msra.mxu0 %v6697
  %6872 = vmatpush.bf16.msra.mxu0 %v6693
  %6873 = vmatpush.bf16.msra.mxu0 %v6689
  %6874 = vmatpush.bf16.msra.mxu0 %v6685
  %6875 = vmatmul.bf16.gmra.mxu0 %v6413
  %v6876 = vpop.f32.mrf.mxu0
  %v6877 = vadd.f32 %v6485, %v6876
  %v6878 = vpop.f32.mrf.mxu0
  %v6879 = vadd.f32 %v6485, %v6878
  %6880 = vdwg.mxu0
  %6881 = vmatpush.bf16.msra.mxu0 %v6745
  %6882 = vmatpush.bf16.msra.mxu0 %v6741
  %6883 = vmatpush.bf16.msra.mxu0 %v6737
  %6884 = vmatpush.bf16.msra.mxu0 %v6733
  %6885 = vmatpush.bf16.msra.mxu0 %v6729
  %6886 = vmatpush.bf16.msra.mxu0 %v6725
  %6887 = vmatpush.bf16.msra.mxu0 %v6721
  %6888 = vmatpush.bf16.msra.mxu0 %v6717
  %6889 = vmatmul.bf16.gmra.mxu0 %v6414
  %v6890 = vpop.f32.mrf.mxu0
  %v6891 = vadd.f32 %v6877, %v6890
  %v6892 = vpop.f32.mrf.mxu0
  %v6893 = vadd.f32 %v6879, %v6892
  %6894 = vdwg.mxu0
  %6895 = vmatpush.bf16.msra.mxu0 %v6714
  %6896 = vmatpush.bf16.msra.mxu0 %v6710
  %6897 = vmatpush.bf16.msra.mxu0 %v6706
  %6898 = vmatpush.bf16.msra.mxu0 %v6702
  %6899 = vmatpush.bf16.msra.mxu0 %v6698
  %6900 = vmatpush.bf16.msra.mxu0 %v6694
  %6901 = vmatpush.bf16.msra.mxu0 %v6690
  %6902 = vmatpush.bf16.msra.mxu0 %v6686
  %6903 = vmatmul.bf16.gmra.mxu0 %v6413
  %v6904 = vpop.f32.mrf.mxu0
  %v6905 = vadd.f32 %v6486, %v6904
  %v6906 = vpop.f32.mrf.mxu0
  %v6907 = vadd.f32 %v6486, %v6906
  %6908 = vdwg.mxu0
  %6909 = vmatpush.bf16.msra.mxu0 %v6746
  %6910 = vmatpush.bf16.msra.mxu0 %v6742
  %6911 = vmatpush.bf16.msra.mxu0 %v6738
  %6912 = vmatpush.bf16.msra.mxu0 %v6734
  %6913 = vmatpush.bf16.msra.mxu0 %v6730
  %6914 = vmatpush.bf16.msra.mxu0 %v6726
  %6915 = vmatpush.bf16.msra.mxu0 %v6722
  %6916 = vmatpush.bf16.msra.mxu0 %v6718
  %6917 = vmatmul.bf16.gmra.mxu0 %v6414
  %v6918 = vpop.f32.mrf.mxu0
  %v6919 = vadd.f32 %v6905, %v6918
  %v6920 = vpop.f32.mrf.mxu0
  %v6921 = vadd.f32 %v6907, %v6920
  %6922 = vdwg.mxu0
  %v6923 = vmax.f32 %v6835, 0.0
  %v6924 = vmax.f32 %v6863, 0.0
  %v6925 = vmax.f32 %v6837, 0.0
  %v6926 = vmax.f32 %v6865, 0.0
  %v6927 = vxor.u32 %v6891, 2147483648
  %v6928 = vxor.u32 %v6919, 2147483648
  %v6929 = vxor.u32 %v6893, 2147483648
  %v6930 = vxor.u32 %v6921, 2147483648
  %v6931 = vmul.f32 %v6927, 1.442695
  %v6932 = vpow.pop %v6931
  %v6933 = vmul.f32 %v6928, 1.442695
  %v6934 = vpow.pop %v6933
  %v6935 = vmul.f32 %v6929, 1.442695
  %v6936 = vpow.pop %v6935
  %v6937 = vmul.f32 %v6930, 1.442695
  %v6938 = vpow.pop %v6937
  %v6939 = vadd.f32 %v6932, 1.0
  %v6940 = vadd.f32 %v6934, 1.0
  %v6941 = vadd.f32 %v6936, 1.0
  %v6942 = vadd.f32 %v6938, 1.0
  %v6943 = vrcp.pop %v6939
  %v6944 = vmul.f32 %v6939, %v6943
  %v6945 = vsub.f32 1.0, %v6944
  %v6946 = vmul.f32 %v6943, %v6945
  %v6947 = vadd.f32 %v6943, %v6946
  %vm6948 = vweird.f32 %v6939
  %vm6949 = vweird.f32 %v6943
  %vm6950 = vmor %vm6948, %vm6949
  %v6951 = vsel %vm6950, %v6943, %v6947
  %v6952 = vand.u32 2147483647, %v6939
  %vm6953 = vcmp.eq.f32.partialorder %v6952, 8.507059e+37
  %v6954 = vand.u32 %v6939, 2147483648
  %v6955 = vor.u32 1.1754944e-38, %v6954
  %v6956 = vsel %vm6953, %v6955, %v6951
  %v6957 = vmul.f32 1.0, %v6956
  %v6958 = vrcp.pop %v6940
  %v6959 = vmul.f32 %v6940, %v6958
  %v6960 = vsub.f32 1.0, %v6959
  %v6961 = vmul.f32 %v6958, %v6960
  %v6962 = vadd.f32 %v6958, %v6961
  %vm6963 = vweird.f32 %v6940
  %vm6964 = vweird.f32 %v6958
  %vm6965 = vmor %vm6963, %vm6964
  %v6966 = vsel %vm6965, %v6958, %v6962
  %v6967 = vand.u32 2147483647, %v6940
  %vm6968 = vcmp.eq.f32.partialorder %v6967, 8.507059e+37
  %v6969 = vand.u32 %v6940, 2147483648
  %v6970 = vor.u32 1.1754944e-38, %v6969
  %v6971 = vsel %vm6968, %v6970, %v6966
  %v6972 = vmul.f32 1.0, %v6971
  %v6973 = vrcp.pop %v6941
  %v6974 = vmul.f32 %v6941, %v6973
  %v6975 = vsub.f32 1.0, %v6974
  %v6976 = vmul.f32 %v6973, %v6975
  %v6977 = vadd.f32 %v6973, %v6976
  %vm6978 = vweird.f32 %v6941
  %vm6979 = vweird.f32 %v6973
  %vm6980 = vmor %vm6978, %vm6979
  %v6981 = vsel %vm6980, %v6973, %v6977
  %v6982 = vand.u32 2147483647, %v6941
  %vm6983 = vcmp.eq.f32.partialorder %v6982, 8.507059e+37
  %v6984 = vand.u32 %v6941, 2147483648
  %v6985 = vor.u32 1.1754944e-38, %v6984
  %v6986 = vsel %vm6983, %v6985, %v6981
  %v6987 = vmul.f32 1.0, %v6986
  %v6988 = vrcp.pop %v6942
  %v6989 = vmul.f32 %v6942, %v6988
  %v6990 = vsub.f32 1.0, %v6989
  %v6991 = vmul.f32 %v6988, %v6990
  %v6992 = vadd.f32 %v6988, %v6991
  %vm6993 = vweird.f32 %v6942
  %vm6994 = vweird.f32 %v6988
  %vm6995 = vmor %vm6993, %vm6994
  %v6996 = vsel %vm6995, %v6988, %v6992
  %v6997 = vand.u32 2147483647, %v6942
  %vm6998 = vcmp.eq.f32.partialorder %v6997, 8.507059e+37
  %v6999 = vand.u32 %v6942, 2147483648
  %v7000 = vor.u32 1.1754944e-38, %v6999
  %v7001 = vsel %vm6998, %v7000, %v6996
  %v7002 = vmul.f32 1.0, %v7001
  %v7003 = vmul.f32 %v6957, %v6409
  %v7004 = vmul.f32 %v6972, %v6410
  %v7005 = vmul.f32 %v6987, %v6411
  %v7006 = vmul.f32 %v7002, %v6412
  %v7007 = vsub.f32 1.0, %v6957
  %v7008 = vsub.f32 1.0, %v6972
  %v7009 = vsub.f32 1.0, %v6987
  %v7010 = vsub.f32 1.0, %v7002
  %v7011 = vmul.f32 %v7007, %v6923
  %v7012 = vmul.f32 %v7008, %v6924
  %v7013 = vmul.f32 %v7009, %v6925
  %v7014 = vmul.f32 %v7010, %v6926
  %v7015 = vadd.f32 %v7003, %v7011
  %v7016 = vadd.f32 %v7004, %v7012
  %v7017 = vadd.f32 %v7005, %v7013
  %v7018 = vadd.f32 %v7006, %v7014
  %v7019 = vpack.c.bf16 %v7017, %v7015
  %v7020 = vpack.c.bf16 %v7018, %v7016
  %v7021 = vld [vmem:[%s5] sm:$0xf]
  %v7022 = vld [vmem:[%s5 + $0x4] sm:$0xf]
  %v7023 = vld [vmem:[%s5 + $0x8] sm:$0xf]
  %v7024 = vld [vmem:[%s5 + $0xc] sm:$0xf]
  %v7025 = vld [vmem:[%s5 + $0x10] sm:$0xf]
  %v7026 = vld [vmem:[%s5 + $0x14] sm:$0xf]
  %v7027 = vld [vmem:[%s5 + $0x18] sm:$0xf]
  %v7028 = vld [vmem:[%s5 + $0x1c] sm:$0xf]
  %v7029 = vld [vmem:[%s5 + $0x20] sm:$0xf]
  %v7030 = vld [vmem:[%s5 + $0x24] sm:$0xf]
  %v7031 = vld [vmem:[%s5 + $0x28] sm:$0xf]
  %v7032 = vld [vmem:[%s5 + $0x2c] sm:$0xf]
  %v7033 = vld [vmem:[%s5 + $0x30] sm:$0xf]
  %v7034 = vld [vmem:[%s5 + $0x34] sm:$0xf]
  %v7035 = vld [vmem:[%s5 + $0x38] sm:$0xf]
  %v7036 = vld [vmem:[%s5 + $0x3c] sm:$0xf]
  %v7037 = vld [vmem:[%s5 + $0x40] sm:$0xf]
  %v7038 = vld [vmem:[%s5 + $0x44] sm:$0xf]
  %v7039 = vld [vmem:[%s5 + $0x48] sm:$0xf]
  %v7040 = vld [vmem:[%s5 + $0x4c] sm:$0xf]
  %v7041 = vld [vmem:[%s5 + $0x50] sm:$0xf]
  %v7042 = vld [vmem:[%s5 + $0x54] sm:$0xf]
  %v7043 = vld [vmem:[%s5 + $0x58] sm:$0xf]
  %v7044 = vld [vmem:[%s5 + $0x5c] sm:$0xf]
  %v7045 = vld [vmem:[%s5 + $0x60] sm:$0xf]
  %v7046 = vld [vmem:[%s5 + $0x64] sm:$0xf]
  %v7047 = vld [vmem:[%s5 + $0x68] sm:$0xf]
  %v7048 = vld [vmem:[%s5 + $0x6c] sm:$0xf]
  %v7049 = vld [vmem:[%s5 + $0x70] sm:$0xf]
  %v7050 = vld [vmem:[%s5 + $0x74] sm:$0xf]
  %v7051 = vld [vmem:[%s5 + $0x78] sm:$0xf]
  %v7052 = vld [vmem:[%s5 + $0x7c] sm:$0xf]
  %v7053 = vld [vmem:[%s6] sm:$0x1]
  %v7055 = vperm.slane %v7053, 0
  %v7089 = vunpack.c.l.b16 %v7021
  %v7090 = vunpack.c.l.b16 %v7022
  %v7091 = vunpack.c.l.b16 %v7023
  %v7092 = vunpack.c.l.b16 %v7024
  %v7093 = vunpack.c.l.b16 %v7025
  %v7094 = vunpack.c.l.b16 %v7026
  %v7095 = vunpack.c.l.b16 %v7027
  %v7096 = vunpack.c.l.b16 %v7028
  %v7097 = vunpack.c.l.b16 %v7029
  %v7098 = vunpack.c.l.b16 %v7030
  %v7099 = vunpack.c.l.b16 %v7031
  %v7100 = vunpack.c.l.b16 %v7032
  %v7101 = vunpack.c.l.b16 %v7033
  %v7102 = vunpack.c.l.b16 %v7034
  %v7103 = vunpack.c.l.b16 %v7035
  %v7104 = vunpack.c.l.b16 %v7036
  %v7105 = vunpack.c.l.b16 %v7037
  %v7106 = vunpack.c.l.b16 %v7038
  %v7107 = vunpack.c.l.b16 %v7039
  %v7108 = vunpack.c.l.b16 %v7040
  %v7109 = vunpack.c.l.b16 %v7041
  %v7110 = vunpack.c.l.b16 %v7042
  %v7111 = vunpack.c.l.b16 %v7043
  %v7112 = vunpack.c.l.b16 %v7044
  %v7113 = vunpack.c.l.b16 %v7045
  %v7114 = vunpack.c.l.b16 %v7046
  %v7115 = vunpack.c.l.b16 %v7047
  %v7116 = vunpack.c.l.b16 %v7048
  %v7117 = vunpack.c.l.b16 %v7049
  %v7118 = vunpack.c.l.b16 %v7050
  %v7119 = vunpack.c.l.b16 %v7051
  %v7120 = vunpack.c.l.b16 %v7052
  %v7121 = vpack.c.b16 %v7090, %v7089
  %v7122 = vpack.c.b16 %v7092, %v7091
  %v7123 = vpack.c.b16 %v7094, %v7093
  %v7124 = vpack.c.b16 %v7096, %v7095
  %v7125 = vpack.c.b16 %v7098, %v7097
  %v7126 = vpack.c.b16 %v7100, %v7099
  %v7127 = vpack.c.b16 %v7102, %v7101
  %v7128 = vpack.c.b16 %v7104, %v7103
  %v7129 = vpack.c.b16 %v7106, %v7105
  %v7130 = vpack.c.b16 %v7108, %v7107
  %v7131 = vpack.c.b16 %v7110, %v7109
  %v7132 = vpack.c.b16 %v7112, %v7111
  %v7133 = vpack.c.b16 %v7114, %v7113
  %v7134 = vpack.c.b16 %v7116, %v7115
  %v7135 = vpack.c.b16 %v7118, %v7117
  %v7136 = vpack.c.b16 %v7120, %v7119
  %7153 = vmatpush.bf16.msra.mxu0 %v7128
  %7154 = vmatpush.bf16.msra.mxu0 %v7127
  %7155 = vmatpush.bf16.msra.mxu0 %v7126
  %7156 = vmatpush.bf16.msra.mxu0 %v7125
  %7157 = vmatpush.bf16.msra.mxu0 %v7124
  %7158 = vmatpush.bf16.msra.mxu0 %v7123
  %7159 = vmatpush.bf16.msra.mxu0 %v7122
  %7160 = vmatpush.bf16.msra.mxu0 %v7121
  %7161 = vmatmul.bf16.gmra.mxu0 %v7019
  %v7162 = vpop.f32.mrf.mxu0
  %v7163 = vadd.f32 %v7055, %v7162
  %v7164 = vpop.f32.mrf.mxu0
  %v7165 = vadd.f32 %v7055, %v7164
  %7166 = vdwg.mxu0
  %7167 = vmatpush.bf16.msra.mxu0 %v7136
  %7168 = vmatpush.bf16.msra.mxu0 %v7135
  %7169 = vmatpush.bf16.msra.mxu0 %v7134
  %7170 = vmatpush.bf16.msra.mxu0 %v7133
  %7171 = vmatpush.bf16.msra.mxu0 %v7132
  %7172 = vmatpush.bf16.msra.mxu0 %v7131
  %7173 = vmatpush.bf16.msra.mxu0 %v7130
  %7174 = vmatpush.bf16.msra.mxu0 %v7129
  %7175 = vmatmul.bf16.gmra.mxu0 %v7020
  %v7176 = vpop.f32.mrf.mxu0
  %v7177 = vadd.f32 %v7163, %v7176
  %v7178 = vpop.f32.mrf.mxu0
  %v7179 = vadd.f32 %v7165, %v7178
  %7180 = vdwg.mxu0
  %7181 = vst [vmem:[%s7] sm:$0xff] %v7177
  %7182 = vst [vmem:[%s7 + $0x8] sm:$0xff] %v7179
  // Predicated region
  $region30: #{elmo_layer_forward.5} parent=0 // pred_check
    _
  $region31: #{elmo_layer_forward.5} parent=0 // pred_check_branch
    %7184 = sbr.rel (0) target = $region33
  $region32: #{elmo_layer_forward.5} parent=0 // pred_region
    _
  $region33: #{elmo_layer_forward.5} parent=0 // pred_fallthru
    _
  // Predicated region
  $region34: #{elmo_layer_forward.5} parent=0 // pred_check
    _
  $region35: #{elmo_layer_forward.5} parent=0 // pred_check_branch
    %7186 = sbr.rel (0) target = $region37
  $region36: #{elmo_layer_forward.5} parent=0 // pred_region
    _
  $region37: #{elmo_layer_forward.5} parent=0 // pred_fallthru
    _

</llo_original>
